<compile_context>
chip_gen: v7x
topology: tpu7x:2x2x1
jax: 0.10.0
libtpu: 0.0.40
codegen_flags: <defaults>
</compile_context>

<pallas_src>
from functools import partial

import jax
import jax.numpy as jnp
from jax.experimental import pallas as pl
from jax.experimental.pallas import tpu as pltpu


# ----------------------------------------------------------------------------
# BlockSpec helpers
# ----------------------------------------------------------------------------
def _full_spec(shape):
    """Whole-array block, same block for every grid step (weights / shifts)."""
    nd = len(shape)
    return pl.BlockSpec(tuple(shape), lambda b: (0,) * nd)


def _batched_spec(shape_tail):
    """Per-batch-sample block: leading batch dim squeezed, rest full-extent."""
    nd = len(shape_tail)
    return pl.BlockSpec((None,) + tuple(shape_tail), lambda b: (b,) + (0,) * nd)


def _fold_conv_bn(w, scale):
    """PyTorch (Cout, Cin, K) conv weight -> (K, Cin, Cout) with BN scale folded, bf16."""
    return (jnp.transpose(w, (2, 1, 0)) * scale[None, None, :]).astype(jnp.bfloat16)


# ----------------------------------------------------------------------------
# Pallas kernels
# ----------------------------------------------------------------------------
def _stem_kernel(l_pool, cout, taps_ref, w_ref, s_ref, o_ref, oprev_ref):
    """Fused conv1(k=7,s=2,p=3) + BN + ReLU + MaxPool1d(k=3,s=2,p=1), one batch sample.

    taps_ref : (9, l_pool, cin) bf16   taps_ref[m][u] = x_pad[4u + m]
    w_ref    : (7, cin, cout)   bf16   BN scale folded in
    s_ref    : (1, cout)        f32    BN shift
    o_ref    : (l_pool, cout)   bf16
    oprev_ref: (l_pool, cout)   f32    scratch (odd conv rows shifted down by one)
    """
    f32 = jnp.float32
    # even conv rows: conv[2u]   = sum_k x_pad[4u + k]     @ w[k]
    # odd  conv rows: conv[2u+1] = sum_k x_pad[4u + 2 + k] @ w[k]
    acc_e = jnp.dot(taps_ref[0], w_ref[0], preferred_element_type=f32)
    acc_o = jnp.dot(taps_ref[2], w_ref[0], preferred_element_type=f32)
    for k in range(1, 7):
        acc_e = acc_e + jnp.dot(taps_ref[k], w_ref[k], preferred_element_type=f32)
        acc_o = acc_o + jnp.dot(taps_ref[k + 2], w_ref[k], preferred_element_type=f32)
    even = jnp.maximum(acc_e + s_ref[...], 0.0)  # conv rows 0,2,...,2*l_pool-2
    odd = jnp.maximum(acc_o + s_ref[...], 0.0)   # conv rows 1,3,...,2*l_pool-1

    # maxpool(k=3,s=2,p=1): out[t] = max(conv[2t-1], conv[2t], conv[2t+1])
    #                              = max(odd[t-1], even[t], odd[t])
    # left pad uses 0 instead of -inf (identical after ReLU).
    oprev_ref[0:1, :] = jnp.zeros((1, cout), f32)
    oprev_ref[1:l_pool, :] = odd[0 : l_pool - 1, :]
    pooled = jnp.maximum(jnp.maximum(oprev_ref[...], even), odd)
    o_ref[...] = pooled.astype(o_ref.dtype)


def _block_kernel(stride, has_ds, has_head, l_out, cout, *refs):
    """One BasicBlock (+optional 1x1 downsample, +optional avgpool/fc head), one sample."""
    f32 = jnp.float32
    refs = list(refs)
    if stride == 1:
        xp = refs.pop(0)                       # (l_out + 2, cin) zero-padded input
        x0 = xp[0:l_out, :]
        x1 = xp[1:l_out + 1, :]
        x2 = xp[2:l_out + 2, :]
    else:  # stride == 2: even/odd phases of the padded input (contiguous in-kernel slices)
        xe = refs.pop(0)                       # (l_out + 1, cin)
        xo = refs.pop(0)                       # (l_out + 1, cin)
        x0 = xe[0:l_out, :]
        x1 = xo[0:l_out, :]                    # == x[:, ::stride]  -> also the downsample input
        x2 = xe[1:l_out + 1, :]
    w1 = refs.pop(0)
    s1 = refs.pop(0)
    w2 = refs.pop(0)
    s2 = refs.pop(0)
    if has_ds:
        wd = refs.pop(0)
        sd = refs.pop(0)
    if has_head:
        fw = refs.pop(0)
        fb = refs.pop(0)
    o_ref = refs.pop(0)
    mid = refs.pop(0)                          # (l_out + 2, cout) bf16 VMEM scratch

    # conv1 (k=3, pad=1; stride folded into the taps) + bn1 + relu
    acc = jnp.dot(x0, w1[0], preferred_element_type=f32)
    acc = acc + jnp.dot(x1, w1[1], preferred_element_type=f32)
    acc = acc + jnp.dot(x2, w1[2], preferred_element_type=f32)
    h = jnp.maximum(acc + s1[...], 0.0)

    # stage into zero-padded VMEM scratch for conv2 (never leaves VMEM)
    mid[0:1, :] = jnp.zeros((1, cout), mid.dtype)
    mid[l_out + 1:l_out + 2, :] = jnp.zeros((1, cout), mid.dtype)
    mid[1:l_out + 1, :] = h.astype(mid.dtype)

    # conv2 (k=3, s=1, pad=1) + bn2
    acc2 = jnp.dot(mid[0:l_out, :], w2[0], preferred_element_type=f32)
    acc2 = acc2 + jnp.dot(mid[1:l_out + 1, :], w2[1], preferred_element_type=f32)
    acc2 = acc2 + jnp.dot(mid[2:l_out + 2, :], w2[2], preferred_element_type=f32)

    # residual path (1x1 strided conv + bn when shapes change, else identity)
    if has_ds:
        ident = jnp.dot(x1, wd[...], preferred_element_type=f32) + sd[...]
    else:
        ident = x1.astype(f32)

    out = jnp.maximum(acc2 + s2[...] + ident, 0.0)          # (l_out, cout) f32

    if has_head:
        # AdaptiveAvgPool1d(1) + flatten + Linear fused into the last block.
        xm = jnp.mean(out, axis=0, keepdims=True)            # (1, cout)
        logits = jnp.dot(xm, fw[...], preferred_element_type=f32) + fb[...]
        o_ref[...] = logits.astype(o_ref.dtype)
    else:
        o_ref[...] = out.astype(o_ref.dtype)


# ----------------------------------------------------------------------------
# Wrappers
# ----------------------------------------------------------------------------
def stem_forward(x, conv_w, bn_scale, bn_shift):
    """conv1(k7,s2,p3)+BN+ReLU+MaxPool(k3,s2,p1) fused. x: (B, L, Cin) -> (B, L//4, 64)."""
    B, L, Cin = x.shape
    Cout = conv_w.shape[0]
    L_conv = (L + 2 * 3 - 7) // 2 + 1
    assert L_conv % 2 == 0, "stem fusion assumes an even conv output length"
    L_pool = (L_conv + 2 - 3) // 2 + 1

    wf = _fold_conv_bn(conv_w, bn_scale)                     # (7, Cin, Cout) bf16
    sh = bn_shift.reshape(1, Cout).astype(jnp.float32)
    x_pad = jnp.pad(x.astype(jnp.bfloat16), ((0, 0), (3, 3), (0, 0)))
    # stride-4 taps: taps[:, m, u, :] = x_pad[:, 4u + m, :]  (m = 0..8), tiny stem glue
    span = 4 * (L_pool - 1) + 1
    taps = jnp.stack([x_pad[:, m:m + span:4, :] for m in range(9)], axis=1)

    return pl.pallas_call(
        partial(_stem_kernel, L_pool, Cout),
        grid=(B,),
        in_specs=[
            _batched_spec((9, L_pool, Cin)),
            _full_spec((7, Cin, Cout)),
            _full_spec((1, Cout)),
        ],
        out_specs=_batched_spec((L_pool, Cout)),
        out_shape=jax.ShapeDtypeStruct((B, L_pool, Cout), jnp.bfloat16),
        scratch_shapes=[pltpu.VMEM((L_pool, Cout), jnp.float32)],
        compiler_params=pltpu.CompilerParams(dimension_semantics=("parallel",)),
    )(taps, wf, sh)


def block_forward(x, p, head=None):
    """One fused BasicBlock. x: (B, L_in, Cin) bf16. head: optional (fc_w, fc_b) epilogue."""
    B, L_in, Cin = x.shape
    stride = p["stride"]
    Cout = p["conv1_w"].shape[0]
    L_out = (L_in + 2 - 3) // stride + 1
    has_ds = "ds_w" in p

    s1, sh1 = p["bn1"]
    s2, sh2 = p["bn2"]
    w1 = _fold_conv_bn(p["conv1_w"], s1)                     # (3, Cin, Cout)
    w2 = _fold_conv_bn(p["conv2_w"], s2)                     # (3, Cout, Cout)
    sh1 = sh1.reshape(1, Cout).astype(jnp.float32)
    sh2 = sh2.reshape(1, Cout).astype(jnp.float32)

    x_pad = jnp.pad(x, ((0, 0), (1, 1), (0, 0)))
    if stride == 1:
        acts = [x_pad]                                       # contiguous taps in-kernel
    else:
        assert stride == 2 and (L_in + 2) % 2 == 0
        acts = [x_pad[:, 0::2, :], x_pad[:, 1::2, :]]        # even / odd phases
    inputs = list(acts) + [w1, sh1, w2, sh2]
    specs = [_batched_spec(a.shape[1:]) for a in acts] + [
        _full_spec((3, Cin, Cout)),
        _full_spec((1, Cout)),
        _full_spec((3, Cout, Cout)),
        _full_spec((1, Cout)),
    ]
    if has_ds:
        sd, shd = p["ds_bn"]
        wd = (p["ds_w"][:, :, 0].T * sd[None, :]).astype(jnp.bfloat16)   # (Cin, Cout)
        inputs += [wd, shd.reshape(1, Cout).astype(jnp.float32)]
        specs += [_full_spec((Cin, Cout)), _full_spec((1, Cout))]
    if head is not None:
        fc_w, fc_b = head
        NC = fc_w.shape[1]
        inputs += [fc_w.astype(jnp.float32), fc_b.reshape(1, NC).astype(jnp.float32)]
        specs += [_full_spec((Cout, NC)), _full_spec((1, NC))]
        out_shape = jax.ShapeDtypeStruct((B, 1, NC), jnp.float32)
        out_spec = _batched_spec((1, NC))
    else:
        out_shape = jax.ShapeDtypeStruct((B, L_out, Cout), jnp.bfloat16)
        out_spec = _batched_spec((L_out, Cout))

    out = pl.pallas_call(
        partial(_block_kernel, stride, has_ds, head is not None, L_out, Cout),
        grid=(B,),
        in_specs=specs,
        out_specs=out_spec,
        out_shape=out_shape,
        scratch_shapes=[pltpu.VMEM((L_out + 2, Cout), jnp.bfloat16)],
        compiler_params=pltpu.CompilerParams(dimension_semantics=("parallel",)),
    )(*inputs)
    if head is not None:
        return out.reshape(B, NC)
    return out


# ----------------------------------------------------------------------------
# Parameter construction (deterministic, synthetic, PyTorch layouts)
# ----------------------------------------------------------------------------
def _init_conv(key, cout, cin, k):
    fan_in = cin * k
    std = (2.0 / fan_in) ** 0.5
    return std * jax.random.normal(key, (cout, cin, k), jnp.float32)


def _init_bn(key, c, eps=1e-5):
    k1, k2, k3, k4 = jax.random.split(key, 4)
    gamma = 1.0 + 0.1 * jax.random.normal(k1, (c,), jnp.float32)
    beta = 0.1 * jax.random.normal(k2, (c,), jnp.float32)
    mean = 0.1 * jax.random.normal(k3, (c,), jnp.float32)
    var = 1.0 + 0.1 * jax.random.uniform(k4, (c,), jnp.float32)
    scale = gamma / jnp.sqrt(var + eps)
    shift = beta - mean * scale
    return scale, shift


def _make_block_params(key, cin, cout, stride):
    ks = jax.random.split(key, 6)
    p = {
        "stride": stride,
        "conv1_w": _init_conv(ks[0], cout, cin, 3),
        "conv2_w": _init_conv(ks[1], cout, cout, 3),
        "bn1": _init_bn(ks[2], cout),
        "bn2": _init_bn(ks[3], cout),
    }
    if stride != 1 or cin != cout:  # BasicBlock expansion == 1
        p["ds_w"] = _init_conv(ks[4], cout, cin, 1)
        p["ds_bn"] = _init_bn(ks[5], cout)
    return p


def make_resnet1d_params(key, input_dim=4, num_classes=10, layers=(1, 1, 1, 1)):
    keys = jax.random.split(key, 7)
    params = {
        "conv1_w": _init_conv(keys[0], 64, input_dim, 7),
        "bn1": _init_bn(keys[1], 64),
    }
    plan = [(64, 1), (128, 2), (256, 2), (512, 2)]
    cin = 64
    all_layers = []
    for li, ((cout, stride), nblocks) in enumerate(zip(plan, layers)):
        lkeys = jax.random.split(keys[2 + li], nblocks)
        blks = []
        for bi in range(nblocks):
            s = stride if bi == 0 else 1
            blks.append(_make_block_params(lkeys[bi], cin, cout, s))
            cin = cout
        all_layers.append(blks)
    params["layers"] = all_layers
    kfc_w, kfc_b = jax.random.split(keys[6], 2)
    params["fc_w"] = (1.0 / 512.0) ** 0.5 * jax.random.normal(
        kfc_w, (512, num_classes), jnp.float32
    )
    params["fc_b"] = 0.01 * jax.random.normal(kfc_b, (1, num_classes), jnp.float32)
    return params


# ----------------------------------------------------------------------------
# Forward pass (matches ResNet1D.forward with use_embedding=False)
# ----------------------------------------------------------------------------
def resnet1d_forward(params, x):
    # x: (B, L, input_dim); PyTorch permutes to NCL, we keep channels-last NLC.
    h = stem_forward(x, params["conv1_w"], *params["bn1"])
    blocks = [blk for layer in params["layers"] for blk in layer]
    head = (params["fc_w"], params["fc_b"])
    for i, blk in enumerate(blocks):
        h = block_forward(h, blk, head=head if i == len(blocks) - 1 else None)
    return h  # (B, num_classes) f32


# ----------------------------------------------------------------------------
if __name__ == "__main__":
    key = jax.random.PRNGKey(0)
    kp, kx = jax.random.split(key)

    INPUT_DIM = 4
    NUM_CLASSES = 10
    B, L = 2, 64

    params = make_resnet1d_params(
        kp, input_dim=INPUT_DIM, num_classes=NUM_CLASSES, layers=(1, 1, 1, 1)
    )
    x = jax.random.normal(kx, (B, L, INPUT_DIM), jnp.float32)

    fwd = jax.jit(partial(resnet1d_forward, params))
    out = jax.block_until_ready(fwd(x))
    assert out.shape == (B, NUM_CLASSES), out.shape
    assert bool(jnp.all(jnp.isfinite(out)))
    print("KERNEL_OK")
</pallas_src>

<mosaic_0001>
module attributes {stable_mosaic.version = 11 : i64} {
  func.func @_block_kernel(%arg0: i32, %arg1: memref<1x18x64xbf16, #tpu.memory_space<vmem>>, %arg2: memref<3x64x64xbf16, #tpu.memory_space<vmem>>, %arg3: memref<1x64xf32, #tpu.memory_space<vmem>>, %arg4: memref<3x64x64xbf16, #tpu.memory_space<vmem>>, %arg5: memref<1x64xf32, #tpu.memory_space<vmem>>, %arg6: memref<1x16x64xbf16, #tpu.memory_space<vmem>>, %arg7: memref<18x64xbf16, #tpu.memory_space<vmem>>) attributes {dimension_semantics = [#tpu.dimension_semantics<parallel>], iteration_bounds = array<i64: 2>, scalar_prefetch = 0 : i64, scratch_operands = 1 : i64, tpu.core_type = #tpu.core_type<tc>, window_params = [{transform_indices = @transform_0, window_bounds = array<i64: 1, 18, 64>}, {pipeline_mode = #tpu.pipeline_mode<synchronous>, transform_indices = @transform_1, window_bounds = array<i64: 3, 64, 64>}, {pipeline_mode = #tpu.pipeline_mode<synchronous>, transform_indices = @transform_2, window_bounds = array<i64: 1, 64>}, {pipeline_mode = #tpu.pipeline_mode<synchronous>, transform_indices = @transform_3, window_bounds = array<i64: 3, 64, 64>}, {pipeline_mode = #tpu.pipeline_mode<synchronous>, transform_indices = @transform_4, window_bounds = array<i64: 1, 64>}, {transform_indices = @transform_5, window_bounds = array<i64: 1, 16, 64>}]} {
    %c0 = arith.constant 0 : index
    %c0_0 = arith.constant 0 : index
    %c0_1 = arith.constant 0 : index
    %0 = vector.load %arg1[%c0, %c0_0, %c0_1] : memref<1x18x64xbf16, #tpu.memory_space<vmem>>, vector<1x16x64xbf16>
    %1 = vector.shape_cast %0 : vector<1x16x64xbf16> to vector<16x64xbf16>
    %c0_2 = arith.constant 0 : index
    %c1 = arith.constant 1 : index
    %c0_3 = arith.constant 0 : index
    %2 = vector.load %arg1[%c0_2, %c1, %c0_3] : memref<1x18x64xbf16, #tpu.memory_space<vmem>>, vector<1x16x64xbf16>
    %3 = vector.shape_cast %2 : vector<1x16x64xbf16> to vector<16x64xbf16>
    %c0_4 = arith.constant 0 : index
    %c2 = arith.constant 2 : index
    %c0_5 = arith.constant 0 : index
    %4 = vector.load %arg1[%c0_4, %c2, %c0_5] : memref<1x18x64xbf16, #tpu.memory_space<vmem>>, vector<1x16x64xbf16>
    %5 = vector.shape_cast %4 : vector<1x16x64xbf16> to vector<16x64xbf16>
    %c0_6 = arith.constant 0 : index
    %c0_7 = arith.constant 0 : index
    %c0_8 = arith.constant 0 : index
    %6 = vector.load %arg2[%c0_6, %c0_7, %c0_8] : memref<3x64x64xbf16, #tpu.memory_space<vmem>>, vector<1x64x64xbf16>
    %7 = vector.shape_cast %6 : vector<1x64x64xbf16> to vector<64x64xbf16>
    %cst = arith.constant dense<0.000000e+00> : vector<16x64xf32>
    %8 = tpu.matmul %1, %7, %cst {dimension_numbers = #tpu.dot_dimension_numbers<[1], [0], [0], [1], [0, 0, 1, 1], [], []>} : vector<16x64xbf16>, vector<64x64xbf16>, vector<16x64xf32> -> vector<16x64xf32>
    %c1_9 = arith.constant 1 : index
    %c0_10 = arith.constant 0 : index
    %c0_11 = arith.constant 0 : index
    %9 = vector.load %arg2[%c1_9, %c0_10, %c0_11] : memref<3x64x64xbf16, #tpu.memory_space<vmem>>, vector<1x64x64xbf16>
    %10 = vector.shape_cast %9 : vector<1x64x64xbf16> to vector<64x64xbf16>
    %cst_12 = arith.constant dense<0.000000e+00> : vector<16x64xf32>
    %11 = tpu.matmul %3, %10, %cst_12 {dimension_numbers = #tpu.dot_dimension_numbers<[1], [0], [0], [1], [0, 0, 1, 1], [], []>} : vector<16x64xbf16>, vector<64x64xbf16>, vector<16x64xf32> -> vector<16x64xf32>
    %12 = arith.addf %8, %11 : vector<16x64xf32>
    %c2_13 = arith.constant 2 : index
    %c0_14 = arith.constant 0 : index
    %c0_15 = arith.constant 0 : index
    %13 = vector.load %arg2[%c2_13, %c0_14, %c0_15] : memref<3x64x64xbf16, #tpu.memory_space<vmem>>, vector<1x64x64xbf16>
    %14 = vector.shape_cast %13 : vector<1x64x64xbf16> to vector<64x64xbf16>
    %cst_16 = arith.constant dense<0.000000e+00> : vector<16x64xf32>
    %15 = tpu.matmul %5, %14, %cst_16 {dimension_numbers = #tpu.dot_dimension_numbers<[1], [0], [0], [1], [0, 0, 1, 1], [], []>} : vector<16x64xbf16>, vector<64x64xbf16>, vector<16x64xf32> -> vector<16x64xf32>
    %16 = arith.addf %12, %15 : vector<16x64xf32>
    %c0_17 = arith.constant 0 : index
    %c0_18 = arith.constant 0 : index
    %17 = vector.load %arg3[%c0_17, %c0_18] : memref<1x64xf32, #tpu.memory_space<vmem>>, vector<1x64xf32>
    %18 = vector.broadcast %17 : vector<1x64xf32> to vector<16x64xf32>
    %19 = arith.addf %16, %18 : vector<16x64xf32>
    %cst_19 = arith.constant 0.000000e+00 : f32
    %20 = vector.broadcast %cst_19 : f32 to vector<16x64xf32>
    %21 = arith.maximumf %19, %20 : vector<16x64xf32>
    %cst_20 = arith.constant 0.000000e+00 : bf16
    %22 = vector.broadcast %cst_20 : bf16 to vector<1x64xbf16>
    %c0_21 = arith.constant 0 : index
    %c0_22 = arith.constant 0 : index
    %23 = vector.load %arg7[%c0_21, %c0_22] : memref<18x64xbf16, #tpu.memory_space<vmem>>, vector<1x64xbf16>
    tpu.vector_store %arg7[%c0_21, %c0_22], %22 {strides = array<i32>} : memref<18x64xbf16, #tpu.memory_space<vmem>>, vector<1x64xbf16>,
    %cst_23 = arith.constant 0.000000e+00 : bf16
    %24 = vector.broadcast %cst_23 : bf16 to vector<1x64xbf16>
    %c17 = arith.constant 17 : index
    %c0_24 = arith.constant 0 : index
    %25 = vector.load %arg7[%c17, %c0_24] : memref<18x64xbf16, #tpu.memory_space<vmem>>, vector<1x64xbf16>
    tpu.vector_store %arg7[%c17, %c0_24], %24 {strides = array<i32>} : memref<18x64xbf16, #tpu.memory_space<vmem>>, vector<1x64xbf16>,
    %26 = arith.truncf %21 : vector<16x64xf32> to vector<16x64xbf16>
    %c1_25 = arith.constant 1 : index
    %c0_26 = arith.constant 0 : index
    %27 = vector.load %arg7[%c1_25, %c0_26] : memref<18x64xbf16, #tpu.memory_space<vmem>>, vector<16x64xbf16>
    tpu.vector_store %arg7[%c1_25, %c0_26], %26 {strides = array<i32>} : memref<18x64xbf16, #tpu.memory_space<vmem>>, vector<16x64xbf16>,
    %c0_27 = arith.constant 0 : index
    %c0_28 = arith.constant 0 : index
    %28 = vector.load %arg7[%c0_27, %c0_28] : memref<18x64xbf16, #tpu.memory_space<vmem>>, vector<16x64xbf16>
    %c0_29 = arith.constant 0 : index
    %c0_30 = arith.constant 0 : index
    %c0_31 = arith.constant 0 : index
    %29 = vector.load %arg4[%c0_29, %c0_30, %c0_31] : memref<3x64x64xbf16, #tpu.memory_space<vmem>>, vector<1x64x64xbf16>
    %30 = vector.shape_cast %29 : vector<1x64x64xbf16> to vector<64x64xbf16>
    %cst_32 = arith.constant dense<0.000000e+00> : vector<16x64xf32>
    %31 = tpu.matmul %28, %30, %cst_32 {dimension_numbers = #tpu.dot_dimension_numbers<[1], [0], [0], [1], [0, 0, 1, 1], [], []>} : vector<16x64xbf16>, vector<64x64xbf16>, vector<16x64xf32> -> vector<16x64xf32>
    %c1_33 = arith.constant 1 : index
    %c0_34 = arith.constant 0 : index
    %32 = vector.load %arg7[%c1_33, %c0_34] : memref<18x64xbf16, #tpu.memory_space<vmem>>, vector<16x64xbf16>
    %c1_35 = arith.constant 1 : index
    %c0_36 = arith.constant 0 : index
    %c0_37 = arith.constant 0 : index
    %33 = vector.load %arg4[%c1_35, %c0_36, %c0_37] : memref<3x64x64xbf16, #tpu.memory_space<vmem>>, vector<1x64x64xbf16>
    %34 = vector.shape_cast %33 : vector<1x64x64xbf16> to vector<64x64xbf16>
    %cst_38 = arith.constant dense<0.000000e+00> : vector<16x64xf32>
    %35 = tpu.matmul %32, %34, %cst_38 {dimension_numbers = #tpu.dot_dimension_numbers<[1], [0], [0], [1], [0, 0, 1, 1], [], []>} : vector<16x64xbf16>, vector<64x64xbf16>, vector<16x64xf32> -> vector<16x64xf32>
    %36 = arith.addf %31, %35 : vector<16x64xf32>
    %c2_39 = arith.constant 2 : index
    %c0_40 = arith.constant 0 : index
    %37 = vector.load %arg7[%c2_39, %c0_40] : memref<18x64xbf16, #tpu.memory_space<vmem>>, vector<16x64xbf16>
    %c2_41 = arith.constant 2 : index
    %c0_42 = arith.constant 0 : index
    %c0_43 = arith.constant 0 : index
    %38 = vector.load %arg4[%c2_41, %c0_42, %c0_43] : memref<3x64x64xbf16, #tpu.memory_space<vmem>>, vector<1x64x64xbf16>
    %39 = vector.shape_cast %38 : vector<1x64x64xbf16> to vector<64x64xbf16>
    %cst_44 = arith.constant dense<0.000000e+00> : vector<16x64xf32>
    %40 = tpu.matmul %37, %39, %cst_44 {dimension_numbers = #tpu.dot_dimension_numbers<[1], [0], [0], [1], [0, 0, 1, 1], [], []>} : vector<16x64xbf16>, vector<64x64xbf16>, vector<16x64xf32> -> vector<16x64xf32>
    %41 = arith.addf %36, %40 : vector<16x64xf32>
    %42 = arith.extf %3 : vector<16x64xbf16> to vector<16x64xf32>
    %c0_45 = arith.constant 0 : index
    %c0_46 = arith.constant 0 : index
    %43 = vector.load %arg5[%c0_45, %c0_46] : memref<1x64xf32, #tpu.memory_space<vmem>>, vector<1x64xf32>
    %44 = vector.broadcast %43 : vector<1x64xf32> to vector<16x64xf32>
    %45 = arith.addf %41, %44 : vector<16x64xf32>
    %46 = arith.addf %45, %42 : vector<16x64xf32>
    %cst_47 = arith.constant 0.000000e+00 : f32
    %47 = vector.broadcast %cst_47 : f32 to vector<16x64xf32>
    %48 = arith.maximumf %46, %47 : vector<16x64xf32>
    %49 = arith.truncf %48 : vector<16x64xf32> to vector<16x64xbf16>
    %c0_48 = arith.constant 0 : index
    %c0_49 = arith.constant 0 : index
    %c0_50 = arith.constant 0 : index
    %50 = vector.load %arg6[%c0_48, %c0_49, %c0_50] : memref<1x16x64xbf16, #tpu.memory_space<vmem>>, vector<1x16x64xbf16>
    %51 = vector.shape_cast %50 : vector<1x16x64xbf16> to vector<16x64xbf16>
    %52 = vector.shape_cast %49 : vector<16x64xbf16> to vector<1x16x64xbf16>
    tpu.vector_store %arg6[%c0_48, %c0_49, %c0_50], %52 {strides = array<i32>} : memref<1x16x64xbf16, #tpu.memory_space<vmem>>, vector<1x16x64xbf16>,
    return
  }
  func.func @transform_0(%arg0: i32) -> (i32, i32, i32) {
    %c0_i32 = arith.constant 0 : i32
    %c0_i32_0 = arith.constant 0 : i32
    %c0_i32_1 = arith.constant 0 : i32
    return %arg0, %c0_i32, %c0_i32_0 : i32, i32, i32
  }
  func.func @transform_1(%arg0: i32) -> (i32, i32, i32) {
    %c0_i32 = arith.constant 0 : i32
    %c0_i32_0 = arith.constant 0 : i32
    %c0_i32_1 = arith.constant 0 : i32
    %c0_i32_2 = arith.constant 0 : i32
    return %c0_i32, %c0_i32_0, %c0_i32_1 : i32, i32, i32
  }
  func.func @transform_2(%arg0: i32) -> (i32, i32) {
    %c0_i32 = arith.constant 0 : i32
    %c0_i32_0 = arith.constant 0 : i32
    %c0_i32_1 = arith.constant 0 : i32
    return %c0_i32, %c0_i32_0 : i32, i32
  }
  func.func @transform_3(%arg0: i32) -> (i32, i32, i32) {
    %c0_i32 = arith.constant 0 : i32
    %c0_i32_0 = arith.constant 0 : i32
    %c0_i32_1 = arith.constant 0 : i32
    %c0_i32_2 = arith.constant 0 : i32
    return %c0_i32, %c0_i32_0, %c0_i32_1 : i32, i32, i32
  }
  func.func @transform_4(%arg0: i32) -> (i32, i32) {
    %c0_i32 = arith.constant 0 : i32
    %c0_i32_0 = arith.constant 0 : i32
    %c0_i32_1 = arith.constant 0 : i32
    return %c0_i32, %c0_i32_0 : i32, i32
  }
  func.func @transform_5(%arg0: i32) -> (i32, i32, i32) {
    %c0_i32 = arith.constant 0 : i32
    %c0_i32_0 = arith.constant 0 : i32
    %c0_i32_1 = arith.constant 0 : i32
    return %arg0, %c0_i32, %c0_i32_0 : i32, i32, i32
  }
}

module attributes {stable_mosaic.version = 11 : i64} {
  func.func @_stem_kernel(%arg0: i32, %arg1: memref<1x9x16x4xbf16, #tpu.memory_space<vmem>>, %arg2: memref<7x4x64xbf16, #tpu.memory_space<vmem>>, %arg3: memref<1x64xf32, #tpu.memory_space<vmem>>, %arg4: memref<1x16x64xbf16, #tpu.memory_space<vmem>>, %arg5: memref<16x64xf32, #tpu.memory_space<vmem>>) attributes {dimension_semantics = [#tpu.dimension_semantics<parallel>], iteration_bounds = array<i64: 2>, scalar_prefetch = 0 : i64, scratch_operands = 1 : i64, tpu.core_type = #tpu.core_type<tc>, window_params = [{transform_indices = @transform_0, window_bounds = array<i64: 1, 9, 16, 4>}, {pipeline_mode = #tpu.pipeline_mode<synchronous>, transform_indices = @transform_1, window_bounds = array<i64: 7, 4, 64>}, {pipeline_mode = #tpu.pipeline_mode<synchronous>, transform_indices = @transform_2, window_bounds = array<i64: 1, 64>}, {transform_indices = @transform_3, window_bounds = array<i64: 1, 16, 64>}]} {
    %c0 = arith.constant 0 : index
    %c0_0 = arith.constant 0 : index
    %c0_1 = arith.constant 0 : index
    %c0_2 = arith.constant 0 : index
    %0 = vector.load %arg1[%c0, %c0_0, %c0_1, %c0_2] : memref<1x9x16x4xbf16, #tpu.memory_space<vmem>>, vector<1x1x16x4xbf16>
    %1 = vector.shape_cast %0 : vector<1x1x16x4xbf16> to vector<16x4xbf16>
    %c0_3 = arith.constant 0 : index
    %c0_4 = arith.constant 0 : index
    %c0_5 = arith.constant 0 : index
    %2 = vector.load %arg2[%c0_3, %c0_4, %c0_5] : memref<7x4x64xbf16, #tpu.memory_space<vmem>>, vector<1x4x64xbf16>
    %3 = vector.shape_cast %2 : vector<1x4x64xbf16> to vector<4x64xbf16>
    %cst = arith.constant dense<0.000000e+00> : vector<16x64xf32>
    %4 = tpu.matmul %1, %3, %cst {dimension_numbers = #tpu.dot_dimension_numbers<[1], [0], [0], [1], [0, 0, 1, 1], [], []>} : vector<16x4xbf16>, vector<4x64xbf16>, vector<16x64xf32> -> vector<16x64xf32>
    %c0_6 = arith.constant 0 : index
    %c2 = arith.constant 2 : index
    %c0_7 = arith.constant 0 : index
    %c0_8 = arith.constant 0 : index
    %5 = vector.load %arg1[%c0_6, %c2, %c0_7, %c0_8] : memref<1x9x16x4xbf16, #tpu.memory_space<vmem>>, vector<1x1x16x4xbf16>
    %6 = vector.shape_cast %5 : vector<1x1x16x4xbf16> to vector<16x4xbf16>
    %c0_9 = arith.constant 0 : index
    %c0_10 = arith.constant 0 : index
    %c0_11 = arith.constant 0 : index
    %7 = vector.load %arg2[%c0_9, %c0_10, %c0_11] : memref<7x4x64xbf16, #tpu.memory_space<vmem>>, vector<1x4x64xbf16>
    %8 = vector.shape_cast %7 : vector<1x4x64xbf16> to vector<4x64xbf16>
    %cst_12 = arith.constant dense<0.000000e+00> : vector<16x64xf32>
    %9 = tpu.matmul %6, %8, %cst_12 {dimension_numbers = #tpu.dot_dimension_numbers<[1], [0], [0], [1], [0, 0, 1, 1], [], []>} : vector<16x4xbf16>, vector<4x64xbf16>, vector<16x64xf32> -> vector<16x64xf32>
    %c0_13 = arith.constant 0 : index
    %c1 = arith.constant 1 : index
    %c0_14 = arith.constant 0 : index
    %c0_15 = arith.constant 0 : index
    %10 = vector.load %arg1[%c0_13, %c1, %c0_14, %c0_15] : memref<1x9x16x4xbf16, #tpu.memory_space<vmem>>, vector<1x1x16x4xbf16>
    %11 = vector.shape_cast %10 : vector<1x1x16x4xbf16> to vector<16x4xbf16>
    %c1_16 = arith.constant 1 : index
    %c0_17 = arith.constant 0 : index
    %c0_18 = arith.constant 0 : index
    %12 = vector.load %arg2[%c1_16, %c0_17, %c0_18] : memref<7x4x64xbf16, #tpu.memory_space<vmem>>, vector<1x4x64xbf16>
    %13 = vector.shape_cast %12 : vector<1x4x64xbf16> to vector<4x64xbf16>
    %cst_19 = arith.constant dense<0.000000e+00> : vector<16x64xf32>
    %14 = tpu.matmul %11, %13, %cst_19 {dimension_numbers = #tpu.dot_dimension_numbers<[1], [0], [0], [1], [0, 0, 1, 1], [], []>} : vector<16x4xbf16>, vector<4x64xbf16>, vector<16x64xf32> -> vector<16x64xf32>
    %15 = arith.addf %4, %14 : vector<16x64xf32>
    %c0_20 = arith.constant 0 : index
    %c3 = arith.constant 3 : index
    %c0_21 = arith.constant 0 : index
    %c0_22 = arith.constant 0 : index
    %16 = vector.load %arg1[%c0_20, %c3, %c0_21, %c0_22] : memref<1x9x16x4xbf16, #tpu.memory_space<vmem>>, vector<1x1x16x4xbf16>
    %17 = vector.shape_cast %16 : vector<1x1x16x4xbf16> to vector<16x4xbf16>
    %c1_23 = arith.constant 1 : index
    %c0_24 = arith.constant 0 : index
    %c0_25 = arith.constant 0 : index
    %18 = vector.load %arg2[%c1_23, %c0_24, %c0_25] : memref<7x4x64xbf16, #tpu.memory_space<vmem>>, vector<1x4x64xbf16>
    %19 = vector.shape_cast %18 : vector<1x4x64xbf16> to vector<4x64xbf16>
    %cst_26 = arith.constant dense<0.000000e+00> : vector<16x64xf32>
    %20 = tpu.matmul %17, %19, %cst_26 {dimension_numbers = #tpu.dot_dimension_numbers<[1], [0], [0], [1], [0, 0, 1, 1], [], []>} : vector<16x4xbf16>, vector<4x64xbf16>, vector<16x64xf32> -> vector<16x64xf32>
    %21 = arith.addf %9, %20 : vector<16x64xf32>
    %c0_27 = arith.constant 0 : index
    %c2_28 = arith.constant 2 : index
    %c0_29 = arith.constant 0 : index
    %c0_30 = arith.constant 0 : index
    %22 = vector.load %arg1[%c0_27, %c2_28, %c0_29, %c0_30] : memref<1x9x16x4xbf16, #tpu.memory_space<vmem>>, vector<1x1x16x4xbf16>
    %23 = vector.shape_cast %22 : vector<1x1x16x4xbf16> to vector<16x4xbf16>
    %c2_31 = arith.constant 2 : index
    %c0_32 = arith.constant 0 : index
    %c0_33 = arith.constant 0 : index
    %24 = vector.load %arg2[%c2_31, %c0_32, %c0_33] : memref<7x4x64xbf16, #tpu.memory_space<vmem>>, vector<1x4x64xbf16>
    %25 = vector.shape_cast %24 : vector<1x4x64xbf16> to vector<4x64xbf16>
    %cst_34 = arith.constant dense<0.000000e+00> : vector<16x64xf32>
    %26 = tpu.matmul %23, %25, %cst_34 {dimension_numbers = #tpu.dot_dimension_numbers<[1], [0], [0], [1], [0, 0, 1, 1], [], []>} : vector<16x4xbf16>, vector<4x64xbf16>, vector<16x64xf32> -> vector<16x64xf32>
    %27 = arith.addf %15, %26 : vector<16x64xf32>
    %c0_35 = arith.constant 0 : index
    %c4 = arith.constant 4 : index
    %c0_36 = arith.constant 0 : index
    %c0_37 = arith.constant 0 : index
    %28 = vector.load %arg1[%c0_35, %c4, %c0_36, %c0_37] : memref<1x9x16x4xbf16, #tpu.memory_space<vmem>>, vector<1x1x16x4xbf16>
    %29 = vector.shape_cast %28 : vector<1x1x16x4xbf16> to vector<16x4xbf16>
    %c2_38 = arith.constant 2 : index
    %c0_39 = arith.constant 0 : index
    %c0_40 = arith.constant 0 : index
    %30 = vector.load %arg2[%c2_38, %c0_39, %c0_40] : memref<7x4x64xbf16, #tpu.memory_space<vmem>>, vector<1x4x64xbf16>
    %31 = vector.shape_cast %30 : vector<1x4x64xbf16> to vector<4x64xbf16>
    %cst_41 = arith.constant dense<0.000000e+00> : vector<16x64xf32>
    %32 = tpu.matmul %29, %31, %cst_41 {dimension_numbers = #tpu.dot_dimension_numbers<[1], [0], [0], [1], [0, 0, 1, 1], [], []>} : vector<16x4xbf16>, vector<4x64xbf16>, vector<16x64xf32> -> vector<16x64xf32>
    %33 = arith.addf %21, %32 : vector<16x64xf32>
    %c0_42 = arith.constant 0 : index
    %c3_43 = arith.constant 3 : index
    %c0_44 = arith.constant 0 : index
    %c0_45 = arith.constant 0 : index
    %34 = vector.load %arg1[%c0_42, %c3_43, %c0_44, %c0_45] : memref<1x9x16x4xbf16, #tpu.memory_space<vmem>>, vector<1x1x16x4xbf16>
    %35 = vector.shape_cast %34 : vector<1x1x16x4xbf16> to vector<16x4xbf16>
    %c3_46 = arith.constant 3 : index
    %c0_47 = arith.constant 0 : index
    %c0_48 = arith.constant 0 : index
    %36 = vector.load %arg2[%c3_46, %c0_47, %c0_48] : memref<7x4x64xbf16, #tpu.memory_space<vmem>>, vector<1x4x64xbf16>
    %37 = vector.shape_cast %36 : vector<1x4x64xbf16> to vector<4x64xbf16>
    %cst_49 = arith.constant dense<0.000000e+00> : vector<16x64xf32>
    %38 = tpu.matmul %35, %37, %cst_49 {dimension_numbers = #tpu.dot_dimension_numbers<[1], [0], [0], [1], [0, 0, 1, 1], [], []>} : vector<16x4xbf16>, vector<4x64xbf16>, vector<16x64xf32> -> vector<16x64xf32>
    %39 = arith.addf %27, %38 : vector<16x64xf32>
    %c0_50 = arith.constant 0 : index
    %c5 = arith.constant 5 : index
    %c0_51 = arith.constant 0 : index
    %c0_52 = arith.constant 0 : index
    %40 = vector.load %arg1[%c0_50, %c5, %c0_51, %c0_52] : memref<1x9x16x4xbf16, #tpu.memory_space<vmem>>, vector<1x1x16x4xbf16>
    %41 = vector.shape_cast %40 : vector<1x1x16x4xbf16> to vector<16x4xbf16>
    %c3_53 = arith.constant 3 : index
    %c0_54 = arith.constant 0 : index
    %c0_55 = arith.constant 0 : index
    %42 = vector.load %arg2[%c3_53, %c0_54, %c0_55] : memref<7x4x64xbf16, #tpu.memory_space<vmem>>, vector<1x4x64xbf16>
    %43 = vector.shape_cast %42 : vector<1x4x64xbf16> to vector<4x64xbf16>
    %cst_56 = arith.constant dense<0.000000e+00> : vector<16x64xf32>
    %44 = tpu.matmul %41, %43, %cst_56 {dimension_numbers = #tpu.dot_dimension_numbers<[1], [0], [0], [1], [0, 0, 1, 1], [], []>} : vector<16x4xbf16>, vector<4x64xbf16>, vector<16x64xf32> -> vector<16x64xf32>
    %45 = arith.addf %33, %44 : vector<16x64xf32>
    %c0_57 = arith.constant 0 : index
    %c4_58 = arith.constant 4 : index
    %c0_59 = arith.constant 0 : index
    %c0_60 = arith.constant 0 : index
    %46 = vector.load %arg1[%c0_57, %c4_58, %c0_59, %c0_60] : memref<1x9x16x4xbf16, #tpu.memory_space<vmem>>, vector<1x1x16x4xbf16>
    %47 = vector.shape_cast %46 : vector<1x1x16x4xbf16> to vector<16x4xbf16>
    %c4_61 = arith.constant 4 : index
    %c0_62 = arith.constant 0 : index
    %c0_63 = arith.constant 0 : index
    %48 = vector.load %arg2[%c4_61, %c0_62, %c0_63] : memref<7x4x64xbf16, #tpu.memory_space<vmem>>, vector<1x4x64xbf16>
    %49 = vector.shape_cast %48 : vector<1x4x64xbf16> to vector<4x64xbf16>
    %cst_64 = arith.constant dense<0.000000e+00> : vector<16x64xf32>
    %50 = tpu.matmul %47, %49, %cst_64 {dimension_numbers = #tpu.dot_dimension_numbers<[1], [0], [0], [1], [0, 0, 1, 1], [], []>} : vector<16x4xbf16>, vector<4x64xbf16>, vector<16x64xf32> -> vector<16x64xf32>
    %51 = arith.addf %39, %50 : vector<16x64xf32>
    %c0_65 = arith.constant 0 : index
    %c6 = arith.constant 6 : index
    %c0_66 = arith.constant 0 : index
    %c0_67 = arith.constant 0 : index
    %52 = vector.load %arg1[%c0_65, %c6, %c0_66, %c0_67] : memref<1x9x16x4xbf16, #tpu.memory_space<vmem>>, vector<1x1x16x4xbf16>
    %53 = vector.shape_cast %52 : vector<1x1x16x4xbf16> to vector<16x4xbf16>
    %c4_68 = arith.constant 4 : index
    %c0_69 = arith.constant 0 : index
    %c0_70 = arith.constant 0 : index
    %54 = vector.load %arg2[%c4_68, %c0_69, %c0_70] : memref<7x4x64xbf16, #tpu.memory_space<vmem>>, vector<1x4x64xbf16>
    %55 = vector.shape_cast %54 : vector<1x4x64xbf16> to vector<4x64xbf16>
    %cst_71 = arith.constant dense<0.000000e+00> : vector<16x64xf32>
    %56 = tpu.matmul %53, %55, %cst_71 {dimension_numbers = #tpu.dot_dimension_numbers<[1], [0], [0], [1], [0, 0, 1, 1], [], []>} : vector<16x4xbf16>, vector<4x64xbf16>, vector<16x64xf32> -> vector<16x64xf32>
    %57 = arith.addf %45, %56 : vector<16x64xf32>
    %c0_72 = arith.constant 0 : index
    %c5_73 = arith.constant 5 : index
    %c0_74 = arith.constant 0 : index
    %c0_75 = arith.constant 0 : index
    %58 = vector.load %arg1[%c0_72, %c5_73, %c0_74, %c0_75] : memref<1x9x16x4xbf16, #tpu.memory_space<vmem>>, vector<1x1x16x4xbf16>
    %59 = vector.shape_cast %58 : vector<1x1x16x4xbf16> to vector<16x4xbf16>
    %c5_76 = arith.constant 5 : index
    %c0_77 = arith.constant 0 : index
    %c0_78 = arith.constant 0 : index
    %60 = vector.load %arg2[%c5_76, %c0_77, %c0_78] : memref<7x4x64xbf16, #tpu.memory_space<vmem>>, vector<1x4x64xbf16>
    %61 = vector.shape_cast %60 : vector<1x4x64xbf16> to vector<4x64xbf16>
    %cst_79 = arith.constant dense<0.000000e+00> : vector<16x64xf32>
    %62 = tpu.matmul %59, %61, %cst_79 {dimension_numbers = #tpu.dot_dimension_numbers<[1], [0], [0], [1], [0, 0, 1, 1], [], []>} : vector<16x4xbf16>, vector<4x64xbf16>, vector<16x64xf32> -> vector<16x64xf32>
    %63 = arith.addf %51, %62 : vector<16x64xf32>
    %c0_80 = arith.constant 0 : index
    %c7 = arith.constant 7 : index
    %c0_81 = arith.constant 0 : index
    %c0_82 = arith.constant 0 : index
    %64 = vector.load %arg1[%c0_80, %c7, %c0_81, %c0_82] : memref<1x9x16x4xbf16, #tpu.memory_space<vmem>>, vector<1x1x16x4xbf16>
    %65 = vector.shape_cast %64 : vector<1x1x16x4xbf16> to vector<16x4xbf16>
    %c5_83 = arith.constant 5 : index
    %c0_84 = arith.constant 0 : index
    %c0_85 = arith.constant 0 : index
    %66 = vector.load %arg2[%c5_83, %c0_84, %c0_85] : memref<7x4x64xbf16, #tpu.memory_space<vmem>>, vector<1x4x64xbf16>
    %67 = vector.shape_cast %66 : vector<1x4x64xbf16> to vector<4x64xbf16>
    %cst_86 = arith.constant dense<0.000000e+00> : vector<16x64xf32>
    %68 = tpu.matmul %65, %67, %cst_86 {dimension_numbers = #tpu.dot_dimension_numbers<[1], [0], [0], [1], [0, 0, 1, 1], [], []>} : vector<16x4xbf16>, vector<4x64xbf16>, vector<16x64xf32> -> vector<16x64xf32>
    %69 = arith.addf %57, %68 : vector<16x64xf32>
    %c0_87 = arith.constant 0 : index
    %c6_88 = arith.constant 6 : index
    %c0_89 = arith.constant 0 : index
    %c0_90 = arith.constant 0 : index
    %70 = vector.load %arg1[%c0_87, %c6_88, %c0_89, %c0_90] : memref<1x9x16x4xbf16, #tpu.memory_space<vmem>>, vector<1x1x16x4xbf16>
    %71 = vector.shape_cast %70 : vector<1x1x16x4xbf16> to vector<16x4xbf16>
    %c6_91 = arith.constant 6 : index
    %c0_92 = arith.constant 0 : index
    %c0_93 = arith.constant 0 : index
    %72 = vector.load %arg2[%c6_91, %c0_92, %c0_93] : memref<7x4x64xbf16, #tpu.memory_space<vmem>>, vector<1x4x64xbf16>
    %73 = vector.shape_cast %72 : vector<1x4x64xbf16> to vector<4x64xbf16>
    %cst_94 = arith.constant dense<0.000000e+00> : vector<16x64xf32>
    %74 = tpu.matmul %71, %73, %cst_94 {dimension_numbers = #tpu.dot_dimension_numbers<[1], [0], [0], [1], [0, 0, 1, 1], [], []>} : vector<16x4xbf16>, vector<4x64xbf16>, vector<16x64xf32> -> vector<16x64xf32>
    %75 = arith.addf %63, %74 : vector<16x64xf32>
    %c0_95 = arith.constant 0 : index
    %c8 = arith.constant 8 : index
    %c0_96 = arith.constant 0 : index
    %c0_97 = arith.constant 0 : index
    %76 = vector.load %arg1[%c0_95, %c8, %c0_96, %c0_97] : memref<1x9x16x4xbf16, #tpu.memory_space<vmem>>, vector<1x1x16x4xbf16>
    %77 = vector.shape_cast %76 : vector<1x1x16x4xbf16> to vector<16x4xbf16>
    %c6_98 = arith.constant 6 : index
    %c0_99 = arith.constant 0 : index
    %c0_100 = arith.constant 0 : index
    %78 = vector.load %arg2[%c6_98, %c0_99, %c0_100] : memref<7x4x64xbf16, #tpu.memory_space<vmem>>, vector<1x4x64xbf16>
    %79 = vector.shape_cast %78 : vector<1x4x64xbf16> to vector<4x64xbf16>
    %cst_101 = arith.constant dense<0.000000e+00> : vector<16x64xf32>
    %80 = tpu.matmul %77, %79, %cst_101 {dimension_numbers = #tpu.dot_dimension_numbers<[1], [0], [0], [1], [0, 0, 1, 1], [], []>} : vector<16x4xbf16>, vector<4x64xbf16>, vector<16x64xf32> -> vector<16x64xf32>
    %81 = arith.addf %69, %80 : vector<16x64xf32>
    %c0_102 = arith.constant 0 : index
    %c0_103 = arith.constant 0 : index
    %82 = vector.load %arg3[%c0_102, %c0_103] : memref<1x64xf32, #tpu.memory_space<vmem>>, vector<1x64xf32>
    %83 = vector.broadcast %82 : vector<1x64xf32> to vector<16x64xf32>
    %84 = arith.addf %75, %83 : vector<16x64xf32>
    %cst_104 = arith.constant 0.000000e+00 : f32
    %85 = vector.broadcast %cst_104 : f32 to vector<16x64xf32>
    %86 = arith.maximumf %84, %85 : vector<16x64xf32>
    %c0_105 = arith.constant 0 : index
    %c0_106 = arith.constant 0 : index
    %87 = vector.load %arg3[%c0_105, %c0_106] : memref<1x64xf32, #tpu.memory_space<vmem>>, vector<1x64xf32>
    %88 = vector.broadcast %87 : vector<1x64xf32> to vector<16x64xf32>
    %89 = arith.addf %81, %88 : vector<16x64xf32>
    %cst_107 = arith.constant 0.000000e+00 : f32
    %90 = vector.broadcast %cst_107 : f32 to vector<16x64xf32>
    %91 = arith.maximumf %89, %90 : vector<16x64xf32>
    %cst_108 = arith.constant 0.000000e+00 : f32
    %92 = vector.broadcast %cst_108 : f32 to vector<1x64xf32>
    %c0_109 = arith.constant 0 : index
    %c0_110 = arith.constant 0 : index
    %93 = vector.load %arg5[%c0_109, %c0_110] : memref<16x64xf32, #tpu.memory_space<vmem>>, vector<1x64xf32>
    tpu.vector_store %arg5[%c0_109, %c0_110], %92 {strides = array<i32>} : memref<16x64xf32, #tpu.memory_space<vmem>>, vector<1x64xf32>,
    %94 = vector.extract_strided_slice %91 {offsets = [0, 0], sizes = [15, 64], strides = [1, 1]} : vector<16x64xf32> to vector<15x64xf32>
    %c1_111 = arith.constant 1 : index
    %c0_112 = arith.constant 0 : index
    %95 = vector.load %arg5[%c1_111, %c0_112] : memref<16x64xf32, #tpu.memory_space<vmem>>, vector<15x64xf32>
    tpu.vector_store %arg5[%c1_111, %c0_112], %94 {strides = array<i32>} : memref<16x64xf32, #tpu.memory_space<vmem>>, vector<15x64xf32>,
    %c0_113 = arith.constant 0 : index
    %c0_114 = arith.constant 0 : index
    %96 = vector.load %arg5[%c0_113, %c0_114] : memref<16x64xf32, #tpu.memory_space<vmem>>, vector<16x64xf32>
    %97 = arith.maximumf %96, %86 : vector<16x64xf32>
    %98 = arith.maximumf %97, %91 : vector<16x64xf32>
    %99 = arith.truncf %98 : vector<16x64xf32> to vector<16x64xbf16>
    %c0_115 = arith.constant 0 : index
    %c0_116 = arith.constant 0 : index
    %c0_117 = arith.constant 0 : index
    %100 = vector.load %arg4[%c0_115, %c0_116, %c0_117] : memref<1x16x64xbf16, #tpu.memory_space<vmem>>, vector<1x16x64xbf16>
    %101 = vector.shape_cast %100 : vector<1x16x64xbf16> to vector<16x64xbf16>
    %102 = vector.shape_cast %99 : vector<16x64xbf16> to vector<1x16x64xbf16>
    tpu.vector_store %arg4[%c0_115, %c0_116, %c0_117], %102 {strides = array<i32>} : memref<1x16x64xbf16, #tpu.memory_space<vmem>>, vector<1x16x64xbf16>,
    return
  }
  func.func @transform_0(%arg0: i32) -> (i32, i32, i32, i32) {
    %c0_i32 = arith.constant 0 : i32
    %c0_i32_0 = arith.constant 0 : i32
    %c0_i32_1 = arith.constant 0 : i32
    %c0_i32_2 = arith.constant 0 : i32
    return %arg0, %c0_i32, %c0_i32_0, %c0_i32_1 : i32, i32, i32, i32
  }
  func.func @transform_1(%arg0: i32) -> (i32, i32, i32) {
    %c0_i32 = arith.constant 0 : i32
    %c0_i32_0 = arith.constant 0 : i32
    %c0_i32_1 = arith.constant 0 : i32
    %c0_i32_2 = arith.constant 0 : i32
    return %c0_i32, %c0_i32_0, %c0_i32_1 : i32, i32, i32
  }
  func.func @transform_2(%arg0: i32) -> (i32, i32) {
    %c0_i32 = arith.constant 0 : i32
    %c0_i32_0 = arith.constant 0 : i32
    %c0_i32_1 = arith.constant 0 : i32
    return %c0_i32, %c0_i32_0 : i32, i32
  }
  func.func @transform_3(%arg0: i32) -> (i32, i32, i32) {
    %c0_i32 = arith.constant 0 : i32
    %c0_i32_0 = arith.constant 0 : i32
    %c0_i32_1 = arith.constant 0 : i32
    return %arg0, %c0_i32, %c0_i32_0 : i32, i32, i32
  }
}

module attributes {stable_mosaic.version = 11 : i64} {
  func.func @_block_kernel(%arg0: i32, %arg1: memref<1x9x64xbf16, #tpu.memory_space<vmem>>, %arg2: memref<1x9x64xbf16, #tpu.memory_space<vmem>>, %arg3: memref<3x64x128xbf16, #tpu.memory_space<vmem>>, %arg4: memref<1x128xf32, #tpu.memory_space<vmem>>, %arg5: memref<3x128x128xbf16, #tpu.memory_space<vmem>>, %arg6: memref<1x128xf32, #tpu.memory_space<vmem>>, %arg7: memref<64x128xbf16, #tpu.memory_space<vmem>>, %arg8: memref<1x128xf32, #tpu.memory_space<vmem>>, %arg9: memref<1x8x128xbf16, #tpu.memory_space<vmem>>, %arg10: memref<10x128xbf16, #tpu.memory_space<vmem>>) attributes {dimension_semantics = [#tpu.dimension_semantics<parallel>], iteration_bounds = array<i64: 2>, scalar_prefetch = 0 : i64, scratch_operands = 1 : i64, tpu.core_type = #tpu.core_type<tc>, window_params = [{transform_indices = @transform_0, window_bounds = array<i64: 1, 9, 64>}, {transform_indices = @transform_1, window_bounds = array<i64: 1, 9, 64>}, {pipeline_mode = #tpu.pipeline_mode<synchronous>, transform_indices = @transform_2, window_bounds = array<i64: 3, 64, 128>}, {pipeline_mode = #tpu.pipeline_mode<synchronous>, transform_indices = @transform_3, window_bounds = array<i64: 1, 128>}, {pipeline_mode = #tpu.pipeline_mode<synchronous>, transform_indices = @transform_4, window_bounds = array<i64: 3, 128, 128>}, {pipeline_mode = #tpu.pipeline_mode<synchronous>, transform_indices = @transform_5, window_bounds = array<i64: 1, 128>}, {pipeline_mode = #tpu.pipeline_mode<synchronous>, transform_indices = @transform_6, window_bounds = array<i64: 64, 128>}, {pipeline_mode = #tpu.pipeline_mode<synchronous>, transform_indices = @transform_7, window_bounds = array<i64: 1, 128>}, {transform_indices = @transform_8, window_bounds = array<i64: 1, 8, 128>}]} {
    %c0 = arith.constant 0 : index
    %c0_0 = arith.constant 0 : index
    %c0_1 = arith.constant 0 : index
    %0 = vector.load %arg1[%c0, %c0_0, %c0_1] : memref<1x9x64xbf16, #tpu.memory_space<vmem>>, vector<1x8x64xbf16>
    %1 = vector.shape_cast %0 : vector<1x8x64xbf16> to vector<8x64xbf16>
    %c0_2 = arith.constant 0 : index
    %c0_3 = arith.constant 0 : index
    %c0_4 = arith.constant 0 : index
    %2 = vector.load %arg2[%c0_2, %c0_3, %c0_4] : memref<1x9x64xbf16, #tpu.memory_space<vmem>>, vector<1x8x64xbf16>
    %3 = vector.shape_cast %2 : vector<1x8x64xbf16> to vector<8x64xbf16>
    %c0_5 = arith.constant 0 : index
    %c1 = arith.constant 1 : index
    %c0_6 = arith.constant 0 : index
    %4 = vector.load %arg1[%c0_5, %c1, %c0_6] : memref<1x9x64xbf16, #tpu.memory_space<vmem>>, vector<1x8x64xbf16>
    %5 = vector.shape_cast %4 : vector<1x8x64xbf16> to vector<8x64xbf16>
    %c0_7 = arith.constant 0 : index
    %c0_8 = arith.constant 0 : index
    %c0_9 = arith.constant 0 : index
    %6 = vector.load %arg3[%c0_7, %c0_8, %c0_9] : memref<3x64x128xbf16, #tpu.memory_space<vmem>>, vector<1x64x128xbf16>
    %7 = vector.shape_cast %6 : vector<1x64x128xbf16> to vector<64x128xbf16>
    %cst = arith.constant dense<0.000000e+00> : vector<8x128xf32>
    %8 = tpu.matmul %1, %7, %cst {dimension_numbers = #tpu.dot_dimension_numbers<[1], [0], [0], [1], [0, 0, 1, 1], [], []>} : vector<8x64xbf16>, vector<64x128xbf16>, vector<8x128xf32> -> vector<8x128xf32>
    %c1_10 = arith.constant 1 : index
    %c0_11 = arith.constant 0 : index
    %c0_12 = arith.constant 0 : index
    %9 = vector.load %arg3[%c1_10, %c0_11, %c0_12] : memref<3x64x128xbf16, #tpu.memory_space<vmem>>, vector<1x64x128xbf16>
    %10 = vector.shape_cast %9 : vector<1x64x128xbf16> to vector<64x128xbf16>
    %cst_13 = arith.constant dense<0.000000e+00> : vector<8x128xf32>
    %11 = tpu.matmul %3, %10, %cst_13 {dimension_numbers = #tpu.dot_dimension_numbers<[1], [0], [0], [1], [0, 0, 1, 1], [], []>} : vector<8x64xbf16>, vector<64x128xbf16>, vector<8x128xf32> -> vector<8x128xf32>
    %12 = arith.addf %8, %11 : vector<8x128xf32>
    %c2 = arith.constant 2 : index
    %c0_14 = arith.constant 0 : index
    %c0_15 = arith.constant 0 : index
    %13 = vector.load %arg3[%c2, %c0_14, %c0_15] : memref<3x64x128xbf16, #tpu.memory_space<vmem>>, vector<1x64x128xbf16>
    %14 = vector.shape_cast %13 : vector<1x64x128xbf16> to vector<64x128xbf16>
    %cst_16 = arith.constant dense<0.000000e+00> : vector<8x128xf32>
    %15 = tpu.matmul %5, %14, %cst_16 {dimension_numbers = #tpu.dot_dimension_numbers<[1], [0], [0], [1], [0, 0, 1, 1], [], []>} : vector<8x64xbf16>, vector<64x128xbf16>, vector<8x128xf32> -> vector<8x128xf32>
    %16 = arith.addf %12, %15 : vector<8x128xf32>
    %c0_17 = arith.constant 0 : index
    %c0_18 = arith.constant 0 : index
    %17 = vector.load %arg4[%c0_17, %c0_18] : memref<1x128xf32, #tpu.memory_space<vmem>>, vector<1x128xf32>
    %18 = vector.broadcast %17 : vector<1x128xf32> to vector<8x128xf32>
    %19 = arith.addf %16, %18 : vector<8x128xf32>
    %cst_19 = arith.constant 0.000000e+00 : f32
    %20 = vector.broadcast %cst_19 : f32 to vector<8x128xf32>
    %21 = arith.maximumf %19, %20 : vector<8x128xf32>
    %cst_20 = arith.constant 0.000000e+00 : bf16
    %22 = vector.broadcast %cst_20 : bf16 to vector<1x128xbf16>
    %c0_21 = arith.constant 0 : index
    %c0_22 = arith.constant 0 : index
    %23 = vector.load %arg10[%c0_21, %c0_22] : memref<10x128xbf16, #tpu.memory_space<vmem>>, vector<1x128xbf16>
    tpu.vector_store %arg10[%c0_21, %c0_22], %22 {strides = array<i32>} : memref<10x128xbf16, #tpu.memory_space<vmem>>, vector<1x128xbf16>,
    %cst_23 = arith.constant 0.000000e+00 : bf16
    %24 = vector.broadcast %cst_23 : bf16 to vector<1x128xbf16>
    %c9 = arith.constant 9 : index
    %c0_24 = arith.constant 0 : index
    %25 = vector.load %arg10[%c9, %c0_24] : memref<10x128xbf16, #tpu.memory_space<vmem>>, vector<1x128xbf16>
    tpu.vector_store %arg10[%c9, %c0_24], %24 {strides = array<i32>} : memref<10x128xbf16, #tpu.memory_space<vmem>>, vector<1x128xbf16>,
    %26 = arith.truncf %21 : vector<8x128xf32> to vector<8x128xbf16>
    %c1_25 = arith.constant 1 : index
    %c0_26 = arith.constant 0 : index
    %27 = vector.load %arg10[%c1_25, %c0_26] : memref<10x128xbf16, #tpu.memory_space<vmem>>, vector<8x128xbf16>
    tpu.vector_store %arg10[%c1_25, %c0_26], %26 {strides = array<i32>} : memref<10x128xbf16, #tpu.memory_space<vmem>>, vector<8x128xbf16>,
    %c0_27 = arith.constant 0 : index
    %c0_28 = arith.constant 0 : index
    %28 = vector.load %arg10[%c0_27, %c0_28] : memref<10x128xbf16, #tpu.memory_space<vmem>>, vector<8x128xbf16>
    %c0_29 = arith.constant 0 : index
    %c0_30 = arith.constant 0 : index
    %c0_31 = arith.constant 0 : index
    %29 = vector.load %arg5[%c0_29, %c0_30, %c0_31] : memref<3x128x128xbf16, #tpu.memory_space<vmem>>, vector<1x128x128xbf16>
    %30 = vector.shape_cast %29 : vector<1x128x128xbf16> to vector<128x128xbf16>
    %cst_32 = arith.constant dense<0.000000e+00> : vector<8x128xf32>
    %31 = tpu.matmul %28, %30, %cst_32 {dimension_numbers = #tpu.dot_dimension_numbers<[1], [0], [0], [1], [0, 0, 1, 1], [], []>} : vector<8x128xbf16>, vector<128x128xbf16>, vector<8x128xf32> -> vector<8x128xf32>
    %c1_33 = arith.constant 1 : index
    %c0_34 = arith.constant 0 : index
    %32 = vector.load %arg10[%c1_33, %c0_34] : memref<10x128xbf16, #tpu.memory_space<vmem>>, vector<8x128xbf16>
    %c1_35 = arith.constant 1 : index
    %c0_36 = arith.constant 0 : index
    %c0_37 = arith.constant 0 : index
    %33 = vector.load %arg5[%c1_35, %c0_36, %c0_37] : memref<3x128x128xbf16, #tpu.memory_space<vmem>>, vector<1x128x128xbf16>
    %34 = vector.shape_cast %33 : vector<1x128x128xbf16> to vector<128x128xbf16>
    %cst_38 = arith.constant dense<0.000000e+00> : vector<8x128xf32>
    %35 = tpu.matmul %32, %34, %cst_38 {dimension_numbers = #tpu.dot_dimension_numbers<[1], [0], [0], [1], [0, 0, 1, 1], [], []>} : vector<8x128xbf16>, vector<128x128xbf16>, vector<8x128xf32> -> vector<8x128xf32>
    %36 = arith.addf %31, %35 : vector<8x128xf32>
    %c2_39 = arith.constant 2 : index
    %c0_40 = arith.constant 0 : index
    %37 = vector.load %arg10[%c2_39, %c0_40] : memref<10x128xbf16, #tpu.memory_space<vmem>>, vector<8x128xbf16>
    %c2_41 = arith.constant 2 : index
    %c0_42 = arith.constant 0 : index
    %c0_43 = arith.constant 0 : index
    %38 = vector.load %arg5[%c2_41, %c0_42, %c0_43] : memref<3x128x128xbf16, #tpu.memory_space<vmem>>, vector<1x128x128xbf16>
    %39 = vector.shape_cast %38 : vector<1x128x128xbf16> to vector<128x128xbf16>
    %cst_44 = arith.constant dense<0.000000e+00> : vector<8x128xf32>
    %40 = tpu.matmul %37, %39, %cst_44 {dimension_numbers = #tpu.dot_dimension_numbers<[1], [0], [0], [1], [0, 0, 1, 1], [], []>} : vector<8x128xbf16>, vector<128x128xbf16>, vector<8x128xf32> -> vector<8x128xf32>
    %41 = arith.addf %36, %40 : vector<8x128xf32>
    %c0_45 = arith.constant 0 : index
    %c0_46 = arith.constant 0 : index
    %42 = vector.load %arg7[%c0_45, %c0_46] : memref<64x128xbf16, #tpu.memory_space<vmem>>, vector<64x128xbf16>
    %cst_47 = arith.constant dense<0.000000e+00> : vector<8x128xf32>
    %43 = tpu.matmul %3, %42, %cst_47 {dimension_numbers = #tpu.dot_dimension_numbers<[1], [0], [0], [1], [0, 0, 1, 1], [], []>} : vector<8x64xbf16>, vector<64x128xbf16>, vector<8x128xf32> -> vector<8x128xf32>
    %c0_48 = arith.constant 0 : index
    %c0_49 = arith.constant 0 : index
    %44 = vector.load %arg8[%c0_48, %c0_49] : memref<1x128xf32, #tpu.memory_space<vmem>>, vector<1x128xf32>
    %45 = vector.broadcast %44 : vector<1x128xf32> to vector<8x128xf32>
    %46 = arith.addf %43, %45 : vector<8x128xf32>
    %c0_50 = arith.constant 0 : index
    %c0_51 = arith.constant 0 : index
    %47 = vector.load %arg6[%c0_50, %c0_51] : memref<1x128xf32, #tpu.memory_space<vmem>>, vector<1x128xf32>
    %48 = vector.broadcast %47 : vector<1x128xf32> to vector<8x128xf32>
    %49 = arith.addf %41, %48 : vector<8x128xf32>
    %50 = arith.addf %49, %46 : vector<8x128xf32>
    %cst_52 = arith.constant 0.000000e+00 : f32
    %51 = vector.broadcast %cst_52 : f32 to vector<8x128xf32>
    %52 = arith.maximumf %50, %51 : vector<8x128xf32>
    %53 = arith.truncf %52 : vector<8x128xf32> to vector<8x128xbf16>
    %c0_53 = arith.constant 0 : index
    %c0_54 = arith.constant 0 : index
    %c0_55 = arith.constant 0 : index
    %54 = vector.load %arg9[%c0_53, %c0_54, %c0_55] : memref<1x8x128xbf16, #tpu.memory_space<vmem>>, vector<1x8x128xbf16>
    %55 = vector.shape_cast %54 : vector<1x8x128xbf16> to vector<8x128xbf16>
    %56 = vector.shape_cast %53 : vector<8x128xbf16> to vector<1x8x128xbf16>
    tpu.vector_store %arg9[%c0_53, %c0_54, %c0_55], %56 {strides = array<i32>} : memref<1x8x128xbf16, #tpu.memory_space<vmem>>, vector<1x8x128xbf16>,
    return
  }
  func.func @transform_0(%arg0: i32) -> (i32, i32, i32) {
    %c0_i32 = arith.constant 0 : i32
    %c0_i32_0 = arith.constant 0 : i32
    %c0_i32_1 = arith.constant 0 : i32
    return %arg0, %c0_i32, %c0_i32_0 : i32, i32, i32
  }
  func.func @transform_1(%arg0: i32) -> (i32, i32, i32) {
    %c0_i32 = arith.constant 0 : i32
    %c0_i32_0 = arith.constant 0 : i32
    %c0_i32_1 = arith.constant 0 : i32
    return %arg0, %c0_i32, %c0_i32_0 : i32, i32, i32
  }
  func.func @transform_2(%arg0: i32) -> (i32, i32, i32) {
    %c0_i32 = arith.constant 0 : i32
    %c0_i32_0 = arith.constant 0 : i32
    %c0_i32_1 = arith.constant 0 : i32
    %c0_i32_2 = arith.constant 0 : i32
    return %c0_i32, %c0_i32_0, %c0_i32_1 : i32, i32, i32
  }
  func.func @transform_3(%arg0: i32) -> (i32, i32) {
    %c0_i32 = arith.constant 0 : i32
    %c0_i32_0 = arith.constant 0 : i32
    %c0_i32_1 = arith.constant 0 : i32
    return %c0_i32, %c0_i32_0 : i32, i32
  }
  func.func @transform_4(%arg0: i32) -> (i32, i32, i32) {
    %c0_i32 = arith.constant 0 : i32
    %c0_i32_0 = arith.constant 0 : i32
    %c0_i32_1 = arith.constant 0 : i32
    %c0_i32_2 = arith.constant 0 : i32
    return %c0_i32, %c0_i32_0, %c0_i32_1 : i32, i32, i32
  }
  func.func @transform_5(%arg0: i32) -> (i32, i32) {
    %c0_i32 = arith.constant 0 : i32
    %c0_i32_0 = arith.constant 0 : i32
    %c0_i32_1 = arith.constant 0 : i32
    return %c0_i32, %c0_i32_0 : i32, i32
  }
  func.func @transform_6(%arg0: i32) -> (i32, i32) {
    %c0_i32 = arith.constant 0 : i32
    %c0_i32_0 = arith.constant 0 : i32
    %c0_i32_1 = arith.constant 0 : i32
    return %c0_i32, %c0_i32_0 : i32, i32
  }
  func.func @transform_7(%arg0: i32) -> (i32, i32) {
    %c0_i32 = arith.constant 0 : i32
    %c0_i32_0 = arith.constant 0 : i32
    %c0_i32_1 = arith.constant 0 : i32
    return %c0_i32, %c0_i32_0 : i32, i32
  }
  func.func @transform_8(%arg0: i32) -> (i32, i32, i32) {
    %c0_i32 = arith.constant 0 : i32
    %c0_i32_0 = arith.constant 0 : i32
    %c0_i32_1 = arith.constant 0 : i32
    return %arg0, %c0_i32, %c0_i32_0 : i32, i32, i32
  }
}

module attributes {stable_mosaic.version = 11 : i64} {
  func.func @_block_kernel(%arg0: i32, %arg1: memref<1x5x128xbf16, #tpu.memory_space<vmem>>, %arg2: memref<1x5x128xbf16, #tpu.memory_space<vmem>>, %arg3: memref<3x128x256xbf16, #tpu.memory_space<vmem>>, %arg4: memref<1x256xf32, #tpu.memory_space<vmem>>, %arg5: memref<3x256x256xbf16, #tpu.memory_space<vmem>>, %arg6: memref<1x256xf32, #tpu.memory_space<vmem>>, %arg7: memref<128x256xbf16, #tpu.memory_space<vmem>>, %arg8: memref<1x256xf32, #tpu.memory_space<vmem>>, %arg9: memref<1x4x256xbf16, #tpu.memory_space<vmem>>, %arg10: memref<6x256xbf16, #tpu.memory_space<vmem>>) attributes {dimension_semantics = [#tpu.dimension_semantics<parallel>], iteration_bounds = array<i64: 2>, scalar_prefetch = 0 : i64, scratch_operands = 1 : i64, tpu.core_type = #tpu.core_type<tc>, window_params = [{transform_indices = @transform_0, window_bounds = array<i64: 1, 5, 128>}, {transform_indices = @transform_1, window_bounds = array<i64: 1, 5, 128>}, {pipeline_mode = #tpu.pipeline_mode<synchronous>, transform_indices = @transform_2, window_bounds = array<i64: 3, 128, 256>}, {pipeline_mode = #tpu.pipeline_mode<synchronous>, transform_indices = @transform_3, window_bounds = array<i64: 1, 256>}, {pipeline_mode = #tpu.pipeline_mode<synchronous>, transform_indices = @transform_4, window_bounds = array<i64: 3, 256, 256>}, {pipeline_mode = #tpu.pipeline_mode<synchronous>, transform_indices = @transform_5, window_bounds = array<i64: 1, 256>}, {pipeline_mode = #tpu.pipeline_mode<synchronous>, transform_indices = @transform_6, window_bounds = array<i64: 128, 256>}, {pipeline_mode = #tpu.pipeline_mode<synchronous>, transform_indices = @transform_7, window_bounds = array<i64: 1, 256>}, {transform_indices = @transform_8, window_bounds = array<i64: 1, 4, 256>}]} {
    %c0 = arith.constant 0 : index
    %c0_0 = arith.constant 0 : index
    %c0_1 = arith.constant 0 : index
    %0 = vector.load %arg1[%c0, %c0_0, %c0_1] : memref<1x5x128xbf16, #tpu.memory_space<vmem>>, vector<1x4x128xbf16>
    %1 = vector.shape_cast %0 : vector<1x4x128xbf16> to vector<4x128xbf16>
    %c0_2 = arith.constant 0 : index
    %c0_3 = arith.constant 0 : index
    %c0_4 = arith.constant 0 : index
    %2 = vector.load %arg2[%c0_2, %c0_3, %c0_4] : memref<1x5x128xbf16, #tpu.memory_space<vmem>>, vector<1x4x128xbf16>
    %3 = vector.shape_cast %2 : vector<1x4x128xbf16> to vector<4x128xbf16>
    %c0_5 = arith.constant 0 : index
    %c1 = arith.constant 1 : index
    %c0_6 = arith.constant 0 : index
    %4 = vector.load %arg1[%c0_5, %c1, %c0_6] : memref<1x5x128xbf16, #tpu.memory_space<vmem>>, vector<1x4x128xbf16>
    %5 = vector.shape_cast %4 : vector<1x4x128xbf16> to vector<4x128xbf16>
    %c0_7 = arith.constant 0 : index
    %c0_8 = arith.constant 0 : index
    %c0_9 = arith.constant 0 : index
    %6 = vector.load %arg3[%c0_7, %c0_8, %c0_9] : memref<3x128x256xbf16, #tpu.memory_space<vmem>>, vector<1x128x256xbf16>
    %7 = vector.shape_cast %6 : vector<1x128x256xbf16> to vector<128x256xbf16>
    %cst = arith.constant dense<0.000000e+00> : vector<4x256xf32>
    %8 = tpu.matmul %1, %7, %cst {dimension_numbers = #tpu.dot_dimension_numbers<[1], [0], [0], [1], [0, 0, 1, 1], [], []>} : vector<4x128xbf16>, vector<128x256xbf16>, vector<4x256xf32> -> vector<4x256xf32>
    %c1_10 = arith.constant 1 : index
    %c0_11 = arith.constant 0 : index
    %c0_12 = arith.constant 0 : index
    %9 = vector.load %arg3[%c1_10, %c0_11, %c0_12] : memref<3x128x256xbf16, #tpu.memory_space<vmem>>, vector<1x128x256xbf16>
    %10 = vector.shape_cast %9 : vector<1x128x256xbf16> to vector<128x256xbf16>
    %cst_13 = arith.constant dense<0.000000e+00> : vector<4x256xf32>
    %11 = tpu.matmul %3, %10, %cst_13 {dimension_numbers = #tpu.dot_dimension_numbers<[1], [0], [0], [1], [0, 0, 1, 1], [], []>} : vector<4x128xbf16>, vector<128x256xbf16>, vector<4x256xf32> -> vector<4x256xf32>
    %12 = arith.addf %8, %11 : vector<4x256xf32>
    %c2 = arith.constant 2 : index
    %c0_14 = arith.constant 0 : index
    %c0_15 = arith.constant 0 : index
    %13 = vector.load %arg3[%c2, %c0_14, %c0_15] : memref<3x128x256xbf16, #tpu.memory_space<vmem>>, vector<1x128x256xbf16>
    %14 = vector.shape_cast %13 : vector<1x128x256xbf16> to vector<128x256xbf16>
    %cst_16 = arith.constant dense<0.000000e+00> : vector<4x256xf32>
    %15 = tpu.matmul %5, %14, %cst_16 {dimension_numbers = #tpu.dot_dimension_numbers<[1], [0], [0], [1], [0, 0, 1, 1], [], []>} : vector<4x128xbf16>, vector<128x256xbf16>, vector<4x256xf32> -> vector<4x256xf32>
    %16 = arith.addf %12, %15 : vector<4x256xf32>
    %c0_17 = arith.constant 0 : index
    %c0_18 = arith.constant 0 : index
    %17 = vector.load %arg4[%c0_17, %c0_18] : memref<1x256xf32, #tpu.memory_space<vmem>>, vector<1x256xf32>
    %18 = vector.broadcast %17 : vector<1x256xf32> to vector<4x256xf32>
    %19 = arith.addf %16, %18 : vector<4x256xf32>
    %cst_19 = arith.constant 0.000000e+00 : f32
    %20 = vector.broadcast %cst_19 : f32 to vector<4x256xf32>
    %21 = arith.maximumf %19, %20 : vector<4x256xf32>
    %cst_20 = arith.constant 0.000000e+00 : bf16
    %22 = vector.broadcast %cst_20 : bf16 to vector<1x256xbf16>
    %c0_21 = arith.constant 0 : index
    %c0_22 = arith.constant 0 : index
    %23 = vector.load %arg10[%c0_21, %c0_22] : memref<6x256xbf16, #tpu.memory_space<vmem>>, vector<1x256xbf16>
    tpu.vector_store %arg10[%c0_21, %c0_22], %22 {strides = array<i32>} : memref<6x256xbf16, #tpu.memory_space<vmem>>, vector<1x256xbf16>,
    %cst_23 = arith.constant 0.000000e+00 : bf16
    %24 = vector.broadcast %cst_23 : bf16 to vector<1x256xbf16>
    %c5 = arith.constant 5 : index
    %c0_24 = arith.constant 0 : index
    %25 = vector.load %arg10[%c5, %c0_24] : memref<6x256xbf16, #tpu.memory_space<vmem>>, vector<1x256xbf16>
    tpu.vector_store %arg10[%c5, %c0_24], %24 {strides = array<i32>} : memref<6x256xbf16, #tpu.memory_space<vmem>>, vector<1x256xbf16>,
    %26 = arith.truncf %21 : vector<4x256xf32> to vector<4x256xbf16>
    %c1_25 = arith.constant 1 : index
    %c0_26 = arith.constant 0 : index
    %27 = vector.load %arg10[%c1_25, %c0_26] : memref<6x256xbf16, #tpu.memory_space<vmem>>, vector<4x256xbf16>
    tpu.vector_store %arg10[%c1_25, %c0_26], %26 {strides = array<i32>} : memref<6x256xbf16, #tpu.memory_space<vmem>>, vector<4x256xbf16>,
    %c0_27 = arith.constant 0 : index
    %c0_28 = arith.constant 0 : index
    %28 = vector.load %arg10[%c0_27, %c0_28] : memref<6x256xbf16, #tpu.memory_space<vmem>>, vector<4x256xbf16>
    %c0_29 = arith.constant 0 : index
    %c0_30 = arith.constant 0 : index
    %c0_31 = arith.constant 0 : index
    %29 = vector.load %arg5[%c0_29, %c0_30, %c0_31] : memref<3x256x256xbf16, #tpu.memory_space<vmem>>, vector<1x256x256xbf16>
    %30 = vector.shape_cast %29 : vector<1x256x256xbf16> to vector<256x256xbf16>
    %cst_32 = arith.constant dense<0.000000e+00> : vector<4x256xf32>
    %31 = tpu.matmul %28, %30, %cst_32 {dimension_numbers = #tpu.dot_dimension_numbers<[1], [0], [0], [1], [0, 0, 1, 1], [], []>} : vector<4x256xbf16>, vector<256x256xbf16>, vector<4x256xf32> -> vector<4x256xf32>
    %c1_33 = arith.constant 1 : index
    %c0_34 = arith.constant 0 : index
    %32 = vector.load %arg10[%c1_33, %c0_34] : memref<6x256xbf16, #tpu.memory_space<vmem>>, vector<4x256xbf16>
    %c1_35 = arith.constant 1 : index
    %c0_36 = arith.constant 0 : index
    %c0_37 = arith.constant 0 : index
    %33 = vector.load %arg5[%c1_35, %c0_36, %c0_37] : memref<3x256x256xbf16, #tpu.memory_space<vmem>>, vector<1x256x256xbf16>
    %34 = vector.shape_cast %33 : vector<1x256x256xbf16> to vector<256x256xbf16>
    %cst_38 = arith.constant dense<0.000000e+00> : vector<4x256xf32>
    %35 = tpu.matmul %32, %34, %cst_38 {dimension_numbers = #tpu.dot_dimension_numbers<[1], [0], [0], [1], [0, 0, 1, 1], [], []>} : vector<4x256xbf16>, vector<256x256xbf16>, vector<4x256xf32> -> vector<4x256xf32>
    %36 = arith.addf %31, %35 : vector<4x256xf32>
    %c2_39 = arith.constant 2 : index
    %c0_40 = arith.constant 0 : index
    %37 = vector.load %arg10[%c2_39, %c0_40] : memref<6x256xbf16, #tpu.memory_space<vmem>>, vector<4x256xbf16>
    %c2_41 = arith.constant 2 : index
    %c0_42 = arith.constant 0 : index
    %c0_43 = arith.constant 0 : index
    %38 = vector.load %arg5[%c2_41, %c0_42, %c0_43] : memref<3x256x256xbf16, #tpu.memory_space<vmem>>, vector<1x256x256xbf16>
    %39 = vector.shape_cast %38 : vector<1x256x256xbf16> to vector<256x256xbf16>
    %cst_44 = arith.constant dense<0.000000e+00> : vector<4x256xf32>
    %40 = tpu.matmul %37, %39, %cst_44 {dimension_numbers = #tpu.dot_dimension_numbers<[1], [0], [0], [1], [0, 0, 1, 1], [], []>} : vector<4x256xbf16>, vector<256x256xbf16>, vector<4x256xf32> -> vector<4x256xf32>
    %41 = arith.addf %36, %40 : vector<4x256xf32>
    %c0_45 = arith.constant 0 : index
    %c0_46 = arith.constant 0 : index
    %42 = vector.load %arg7[%c0_45, %c0_46] : memref<128x256xbf16, #tpu.memory_space<vmem>>, vector<128x256xbf16>
    %cst_47 = arith.constant dense<0.000000e+00> : vector<4x256xf32>
    %43 = tpu.matmul %3, %42, %cst_47 {dimension_numbers = #tpu.dot_dimension_numbers<[1], [0], [0], [1], [0, 0, 1, 1], [], []>} : vector<4x128xbf16>, vector<128x256xbf16>, vector<4x256xf32> -> vector<4x256xf32>
    %c0_48 = arith.constant 0 : index
    %c0_49 = arith.constant 0 : index
    %44 = vector.load %arg8[%c0_48, %c0_49] : memref<1x256xf32, #tpu.memory_space<vmem>>, vector<1x256xf32>
    %45 = vector.broadcast %44 : vector<1x256xf32> to vector<4x256xf32>
    %46 = arith.addf %43, %45 : vector<4x256xf32>
    %c0_50 = arith.constant 0 : index
    %c0_51 = arith.constant 0 : index
    %47 = vector.load %arg6[%c0_50, %c0_51] : memref<1x256xf32, #tpu.memory_space<vmem>>, vector<1x256xf32>
    %48 = vector.broadcast %47 : vector<1x256xf32> to vector<4x256xf32>
    %49 = arith.addf %41, %48 : vector<4x256xf32>
    %50 = arith.addf %49, %46 : vector<4x256xf32>
    %cst_52 = arith.constant 0.000000e+00 : f32
    %51 = vector.broadcast %cst_52 : f32 to vector<4x256xf32>
    %52 = arith.maximumf %50, %51 : vector<4x256xf32>
    %53 = arith.truncf %52 : vector<4x256xf32> to vector<4x256xbf16>
    %c0_53 = arith.constant 0 : index
    %c0_54 = arith.constant 0 : index
    %c0_55 = arith.constant 0 : index
    %54 = vector.load %arg9[%c0_53, %c0_54, %c0_55] : memref<1x4x256xbf16, #tpu.memory_space<vmem>>, vector<1x4x256xbf16>
    %55 = vector.shape_cast %54 : vector<1x4x256xbf16> to vector<4x256xbf16>
    %56 = vector.shape_cast %53 : vector<4x256xbf16> to vector<1x4x256xbf16>
    tpu.vector_store %arg9[%c0_53, %c0_54, %c0_55], %56 {strides = array<i32>} : memref<1x4x256xbf16, #tpu.memory_space<vmem>>, vector<1x4x256xbf16>,
    return
  }
  func.func @transform_0(%arg0: i32) -> (i32, i32, i32) {
    %c0_i32 = arith.constant 0 : i32
    %c0_i32_0 = arith.constant 0 : i32
    %c0_i32_1 = arith.constant 0 : i32
    return %arg0, %c0_i32, %c0_i32_0 : i32, i32, i32
  }
  func.func @transform_1(%arg0: i32) -> (i32, i32, i32) {
    %c0_i32 = arith.constant 0 : i32
    %c0_i32_0 = arith.constant 0 : i32
    %c0_i32_1 = arith.constant 0 : i32
    return %arg0, %c0_i32, %c0_i32_0 : i32, i32, i32
  }
  func.func @transform_2(%arg0: i32) -> (i32, i32, i32) {
    %c0_i32 = arith.constant 0 : i32
    %c0_i32_0 = arith.constant 0 : i32
    %c0_i32_1 = arith.constant 0 : i32
    %c0_i32_2 = arith.constant 0 : i32
    return %c0_i32, %c0_i32_0, %c0_i32_1 : i32, i32, i32
  }
  func.func @transform_3(%arg0: i32) -> (i32, i32) {
    %c0_i32 = arith.constant 0 : i32
    %c0_i32_0 = arith.constant 0 : i32
    %c0_i32_1 = arith.constant 0 : i32
    return %c0_i32, %c0_i32_0 : i32, i32
  }
  func.func @transform_4(%arg0: i32) -> (i32, i32, i32) {
    %c0_i32 = arith.constant 0 : i32
    %c0_i32_0 = arith.constant 0 : i32
    %c0_i32_1 = arith.constant 0 : i32
    %c0_i32_2 = arith.constant 0 : i32
    return %c0_i32, %c0_i32_0, %c0_i32_1 : i32, i32, i32
  }
  func.func @transform_5(%arg0: i32) -> (i32, i32) {
    %c0_i32 = arith.constant 0 : i32
    %c0_i32_0 = arith.constant 0 : i32
    %c0_i32_1 = arith.constant 0 : i32
    return %c0_i32, %c0_i32_0 : i32, i32
  }
  func.func @transform_6(%arg0: i32) -> (i32, i32) {
    %c0_i32 = arith.constant 0 : i32
    %c0_i32_0 = arith.constant 0 : i32
    %c0_i32_1 = arith.constant 0 : i32
    return %c0_i32, %c0_i32_0 : i32, i32
  }
  func.func @transform_7(%arg0: i32) -> (i32, i32) {
    %c0_i32 = arith.constant 0 : i32
    %c0_i32_0 = arith.constant 0 : i32
    %c0_i32_1 = arith.constant 0 : i32
    return %c0_i32, %c0_i32_0 : i32, i32
  }
  func.func @transform_8(%arg0: i32) -> (i32, i32, i32) {
    %c0_i32 = arith.constant 0 : i32
    %c0_i32_0 = arith.constant 0 : i32
    %c0_i32_1 = arith.constant 0 : i32
    return %arg0, %c0_i32, %c0_i32_0 : i32, i32, i32
  }
}

module attributes {stable_mosaic.version = 11 : i64} {
  func.func @_block_kernel(%arg0: i32, %arg1: memref<1x3x256xbf16, #tpu.memory_space<vmem>>, %arg2: memref<1x3x256xbf16, #tpu.memory_space<vmem>>, %arg3: memref<3x256x512xbf16, #tpu.memory_space<vmem>>, %arg4: memref<1x512xf32, #tpu.memory_space<vmem>>, %arg5: memref<3x512x512xbf16, #tpu.memory_space<vmem>>, %arg6: memref<1x512xf32, #tpu.memory_space<vmem>>, %arg7: memref<256x512xbf16, #tpu.memory_space<vmem>>, %arg8: memref<1x512xf32, #tpu.memory_space<vmem>>, %arg9: memref<512x10xf32, #tpu.memory_space<vmem>>, %arg10: memref<1x10xf32, #tpu.memory_space<vmem>>, %arg11: memref<1x1x10xf32, #tpu.memory_space<vmem>>, %arg12: memref<4x512xbf16, #tpu.memory_space<vmem>>) attributes {dimension_semantics = [#tpu.dimension_semantics<parallel>], iteration_bounds = array<i64: 2>, scalar_prefetch = 0 : i64, scratch_operands = 1 : i64, tpu.core_type = #tpu.core_type<tc>, window_params = [{transform_indices = @transform_0, window_bounds = array<i64: 1, 3, 256>}, {transform_indices = @transform_1, window_bounds = array<i64: 1, 3, 256>}, {pipeline_mode = #tpu.pipeline_mode<synchronous>, transform_indices = @transform_2, window_bounds = array<i64: 3, 256, 512>}, {pipeline_mode = #tpu.pipeline_mode<synchronous>, transform_indices = @transform_3, window_bounds = array<i64: 1, 512>}, {pipeline_mode = #tpu.pipeline_mode<synchronous>, transform_indices = @transform_4, window_bounds = array<i64: 3, 512, 512>}, {pipeline_mode = #tpu.pipeline_mode<synchronous>, transform_indices = @transform_5, window_bounds = array<i64: 1, 512>}, {pipeline_mode = #tpu.pipeline_mode<synchronous>, transform_indices = @transform_6, window_bounds = array<i64: 256, 512>}, {pipeline_mode = #tpu.pipeline_mode<synchronous>, transform_indices = @transform_7, window_bounds = array<i64: 1, 512>}, {pipeline_mode = #tpu.pipeline_mode<synchronous>, transform_indices = @transform_8, window_bounds = array<i64: 512, 10>}, {pipeline_mode = #tpu.pipeline_mode<synchronous>, transform_indices = @transform_9, window_bounds = array<i64: 1, 10>}, {transform_indices = @transform_10, window_bounds = array<i64: 1, 1, 10>}]} {
    %c0 = arith.constant 0 : index
    %c0_0 = arith.constant 0 : index
    %c0_1 = arith.constant 0 : index
    %0 = vector.load %arg1[%c0, %c0_0, %c0_1] : memref<1x3x256xbf16, #tpu.memory_space<vmem>>, vector<1x2x256xbf16>
    %1 = vector.shape_cast %0 : vector<1x2x256xbf16> to vector<2x256xbf16>
    %c0_2 = arith.constant 0 : index
    %c0_3 = arith.constant 0 : index
    %c0_4 = arith.constant 0 : index
    %2 = vector.load %arg2[%c0_2, %c0_3, %c0_4] : memref<1x3x256xbf16, #tpu.memory_space<vmem>>, vector<1x2x256xbf16>
    %3 = vector.shape_cast %2 : vector<1x2x256xbf16> to vector<2x256xbf16>
    %c0_5 = arith.constant 0 : index
    %c1 = arith.constant 1 : index
    %c0_6 = arith.constant 0 : index
    %4 = vector.load %arg1[%c0_5, %c1, %c0_6] : memref<1x3x256xbf16, #tpu.memory_space<vmem>>, vector<1x2x256xbf16>
    %5 = vector.shape_cast %4 : vector<1x2x256xbf16> to vector<2x256xbf16>
    %c0_7 = arith.constant 0 : index
    %c0_8 = arith.constant 0 : index
    %c0_9 = arith.constant 0 : index
    %6 = vector.load %arg3[%c0_7, %c0_8, %c0_9] : memref<3x256x512xbf16, #tpu.memory_space<vmem>>, vector<1x256x512xbf16>
    %7 = vector.shape_cast %6 : vector<1x256x512xbf16> to vector<256x512xbf16>
    %cst = arith.constant dense<0.000000e+00> : vector<2x512xf32>
    %8 = tpu.matmul %1, %7, %cst {dimension_numbers = #tpu.dot_dimension_numbers<[1], [0], [0], [1], [0, 0, 1, 1], [], []>} : vector<2x256xbf16>, vector<256x512xbf16>, vector<2x512xf32> -> vector<2x512xf32>
    %c1_10 = arith.constant 1 : index
    %c0_11 = arith.constant 0 : index
    %c0_12 = arith.constant 0 : index
    %9 = vector.load %arg3[%c1_10, %c0_11, %c0_12] : memref<3x256x512xbf16, #tpu.memory_space<vmem>>, vector<1x256x512xbf16>
    %10 = vector.shape_cast %9 : vector<1x256x512xbf16> to vector<256x512xbf16>
    %cst_13 = arith.constant dense<0.000000e+00> : vector<2x512xf32>
    %11 = tpu.matmul %3, %10, %cst_13 {dimension_numbers = #tpu.dot_dimension_numbers<[1], [0], [0], [1], [0, 0, 1, 1], [], []>} : vector<2x256xbf16>, vector<256x512xbf16>, vector<2x512xf32> -> vector<2x512xf32>
    %12 = arith.addf %8, %11 : vector<2x512xf32>
    %c2 = arith.constant 2 : index
    %c0_14 = arith.constant 0 : index
    %c0_15 = arith.constant 0 : index
    %13 = vector.load %arg3[%c2, %c0_14, %c0_15] : memref<3x256x512xbf16, #tpu.memory_space<vmem>>, vector<1x256x512xbf16>
    %14 = vector.shape_cast %13 : vector<1x256x512xbf16> to vector<256x512xbf16>
    %cst_16 = arith.constant dense<0.000000e+00> : vector<2x512xf32>
    %15 = tpu.matmul %5, %14, %cst_16 {dimension_numbers = #tpu.dot_dimension_numbers<[1], [0], [0], [1], [0, 0, 1, 1], [], []>} : vector<2x256xbf16>, vector<256x512xbf16>, vector<2x512xf32> -> vector<2x512xf32>
    %16 = arith.addf %12, %15 : vector<2x512xf32>
    %c0_17 = arith.constant 0 : index
    %c0_18 = arith.constant 0 : index
    %17 = vector.load %arg4[%c0_17, %c0_18] : memref<1x512xf32, #tpu.memory_space<vmem>>, vector<1x512xf32>
    %18 = vector.broadcast %17 : vector<1x512xf32> to vector<2x512xf32>
    %19 = arith.addf %16, %18 : vector<2x512xf32>
    %cst_19 = arith.constant 0.000000e+00 : f32
    %20 = vector.broadcast %cst_19 : f32 to vector<2x512xf32>
    %21 = arith.maximumf %19, %20 : vector<2x512xf32>
    %cst_20 = arith.constant 0.000000e+00 : bf16
    %22 = vector.broadcast %cst_20 : bf16 to vector<1x512xbf16>
    %c0_21 = arith.constant 0 : index
    %c0_22 = arith.constant 0 : index
    %23 = vector.load %arg12[%c0_21, %c0_22] : memref<4x512xbf16, #tpu.memory_space<vmem>>, vector<1x512xbf16>
    tpu.vector_store %arg12[%c0_21, %c0_22], %22 {strides = array<i32>} : memref<4x512xbf16, #tpu.memory_space<vmem>>, vector<1x512xbf16>,
    %cst_23 = arith.constant 0.000000e+00 : bf16
    %24 = vector.broadcast %cst_23 : bf16 to vector<1x512xbf16>
    %c3 = arith.constant 3 : index
    %c0_24 = arith.constant 0 : index
    %25 = vector.load %arg12[%c3, %c0_24] : memref<4x512xbf16, #tpu.memory_space<vmem>>, vector<1x512xbf16>
    tpu.vector_store %arg12[%c3, %c0_24], %24 {strides = array<i32>} : memref<4x512xbf16, #tpu.memory_space<vmem>>, vector<1x512xbf16>,
    %26 = arith.truncf %21 : vector<2x512xf32> to vector<2x512xbf16>
    %c1_25 = arith.constant 1 : index
    %c0_26 = arith.constant 0 : index
    %27 = vector.load %arg12[%c1_25, %c0_26] : memref<4x512xbf16, #tpu.memory_space<vmem>>, vector<2x512xbf16>
    tpu.vector_store %arg12[%c1_25, %c0_26], %26 {strides = array<i32>} : memref<4x512xbf16, #tpu.memory_space<vmem>>, vector<2x512xbf16>,
    %c0_27 = arith.constant 0 : index
    %c0_28 = arith.constant 0 : index
    %28 = vector.load %arg12[%c0_27, %c0_28] : memref<4x512xbf16, #tpu.memory_space<vmem>>, vector<2x512xbf16>
    %c0_29 = arith.constant 0 : index
    %c0_30 = arith.constant 0 : index
    %c0_31 = arith.constant 0 : index
    %29 = vector.load %arg5[%c0_29, %c0_30, %c0_31] : memref<3x512x512xbf16, #tpu.memory_space<vmem>>, vector<1x512x512xbf16>
    %30 = vector.shape_cast %29 : vector<1x512x512xbf16> to vector<512x512xbf16>
    %cst_32 = arith.constant dense<0.000000e+00> : vector<2x512xf32>
    %31 = tpu.matmul %28, %30, %cst_32 {dimension_numbers = #tpu.dot_dimension_numbers<[1], [0], [0], [1], [0, 0, 1, 1], [], []>} : vector<2x512xbf16>, vector<512x512xbf16>, vector<2x512xf32> -> vector<2x512xf32>
    %c1_33 = arith.constant 1 : index
    %c0_34 = arith.constant 0 : index
    %32 = vector.load %arg12[%c1_33, %c0_34] : memref<4x512xbf16, #tpu.memory_space<vmem>>, vector<2x512xbf16>
    %c1_35 = arith.constant 1 : index
    %c0_36 = arith.constant 0 : index
    %c0_37 = arith.constant 0 : index
    %33 = vector.load %arg5[%c1_35, %c0_36, %c0_37] : memref<3x512x512xbf16, #tpu.memory_space<vmem>>, vector<1x512x512xbf16>
    %34 = vector.shape_cast %33 : vector<1x512x512xbf16> to vector<512x512xbf16>
    %cst_38 = arith.constant dense<0.000000e+00> : vector<2x512xf32>
    %35 = tpu.matmul %32, %34, %cst_38 {dimension_numbers = #tpu.dot_dimension_numbers<[1], [0], [0], [1], [0, 0, 1, 1], [], []>} : vector<2x512xbf16>, vector<512x512xbf16>, vector<2x512xf32> -> vector<2x512xf32>
    %36 = arith.addf %31, %35 : vector<2x512xf32>
    %c2_39 = arith.constant 2 : index
    %c0_40 = arith.constant 0 : index
    %37 = vector.load %arg12[%c2_39, %c0_40] : memref<4x512xbf16, #tpu.memory_space<vmem>>, vector<2x512xbf16>
    %c2_41 = arith.constant 2 : index
    %c0_42 = arith.constant 0 : index
    %c0_43 = arith.constant 0 : index
    %38 = vector.load %arg5[%c2_41, %c0_42, %c0_43] : memref<3x512x512xbf16, #tpu.memory_space<vmem>>, vector<1x512x512xbf16>
    %39 = vector.shape_cast %38 : vector<1x512x512xbf16> to vector<512x512xbf16>
    %cst_44 = arith.constant dense<0.000000e+00> : vector<2x512xf32>
    %40 = tpu.matmul %37, %39, %cst_44 {dimension_numbers = #tpu.dot_dimension_numbers<[1], [0], [0], [1], [0, 0, 1, 1], [], []>} : vector<2x512xbf16>, vector<512x512xbf16>, vector<2x512xf32> -> vector<2x512xf32>
    %41 = arith.addf %36, %40 : vector<2x512xf32>
    %c0_45 = arith.constant 0 : index
    %c0_46 = arith.constant 0 : index
    %42 = vector.load %arg7[%c0_45, %c0_46] : memref<256x512xbf16, #tpu.memory_space<vmem>>, vector<256x512xbf16>
    %cst_47 = arith.constant dense<0.000000e+00> : vector<2x512xf32>
    %43 = tpu.matmul %3, %42, %cst_47 {dimension_numbers = #tpu.dot_dimension_numbers<[1], [0], [0], [1], [0, 0, 1, 1], [], []>} : vector<2x256xbf16>, vector<256x512xbf16>, vector<2x512xf32> -> vector<2x512xf32>
    %c0_48 = arith.constant 0 : index
    %c0_49 = arith.constant 0 : index
    %44 = vector.load %arg8[%c0_48, %c0_49] : memref<1x512xf32, #tpu.memory_space<vmem>>, vector<1x512xf32>
    %45 = vector.broadcast %44 : vector<1x512xf32> to vector<2x512xf32>
    %46 = arith.addf %43, %45 : vector<2x512xf32>
    %c0_50 = arith.constant 0 : index
    %c0_51 = arith.constant 0 : index
    %47 = vector.load %arg6[%c0_50, %c0_51] : memref<1x512xf32, #tpu.memory_space<vmem>>, vector<1x512xf32>
    %48 = vector.broadcast %47 : vector<1x512xf32> to vector<2x512xf32>
    %49 = arith.addf %41, %48 : vector<2x512xf32>
    %50 = arith.addf %49, %46 : vector<2x512xf32>
    %cst_52 = arith.constant 0.000000e+00 : f32
    %51 = vector.broadcast %cst_52 : f32 to vector<2x512xf32>
    %52 = arith.maximumf %50, %51 : vector<2x512xf32>
    %cst_53 = arith.constant dense<0.000000e+00> : vector<512xf32>
    %53 = vector.multi_reduction <add>, %52, %cst_53 [0] : vector<2x512xf32> to vector<512xf32>
    %54 = vector.shape_cast %53 : vector<512xf32> to vector<1x512xf32>
    %cst_54 = arith.constant 2.000000e+00 : f32
    %55 = vector.broadcast %cst_54 : f32 to vector<1x512xf32>
    %56 = arith.divf %54, %55 : vector<1x512xf32>
    %c0_55 = arith.constant 0 : index
    %c0_56 = arith.constant 0 : index
    %57 = vector.load %arg9[%c0_55, %c0_56] : memref<512x10xf32, #tpu.memory_space<vmem>>, vector<512x10xf32>
    %cst_57 = arith.constant dense<0.000000e+00> : vector<1x10xf32>
    %58 = tpu.matmul %56, %57, %cst_57 {dimension_numbers = #tpu.dot_dimension_numbers<[1], [0], [0], [1], [0, 0, 1, 1], [], []>} : vector<1x512xf32>, vector<512x10xf32>, vector<1x10xf32> -> vector<1x10xf32>
    %c0_58 = arith.constant 0 : index
    %c0_59 = arith.constant 0 : index
    %59 = vector.load %arg10[%c0_58, %c0_59] : memref<1x10xf32, #tpu.memory_space<vmem>>, vector<1x10xf32>
    %60 = arith.addf %58, %59 : vector<1x10xf32>
    %c0_60 = arith.constant 0 : index
    %c0_61 = arith.constant 0 : index
    %c0_62 = arith.constant 0 : index
    %61 = vector.load %arg11[%c0_60, %c0_61, %c0_62] : memref<1x1x10xf32, #tpu.memory_space<vmem>>, vector<1x1x10xf32>
    %62 = vector.shape_cast %61 : vector<1x1x10xf32> to vector<1x10xf32>
    %63 = vector.shape_cast %60 : vector<1x10xf32> to vector<1x1x10xf32>
    tpu.vector_store %arg11[%c0_60, %c0_61, %c0_62], %63 {strides = array<i32>} : memref<1x1x10xf32, #tpu.memory_space<vmem>>, vector<1x1x10xf32>,
    return
  }
  func.func @transform_0(%arg0: i32) -> (i32, i32, i32) {
    %c0_i32 = arith.constant 0 : i32
    %c0_i32_0 = arith.constant 0 : i32
    %c0_i32_1 = arith.constant 0 : i32
    return %arg0, %c0_i32, %c0_i32_0 : i32, i32, i32
  }
  func.func @transform_1(%arg0: i32) -> (i32, i32, i32) {
    %c0_i32 = arith.constant 0 : i32
    %c0_i32_0 = arith.constant 0 : i32
    %c0_i32_1 = arith.constant 0 : i32
    return %arg0, %c0_i32, %c0_i32_0 : i32, i32, i32
  }
  func.func @transform_2(%arg0: i32) -> (i32, i32, i32) {
    %c0_i32 = arith.constant 0 : i32
    %c0_i32_0 = arith.constant 0 : i32
    %c0_i32_1 = arith.constant 0 : i32
    %c0_i32_2 = arith.constant 0 : i32
    return %c0_i32, %c0_i32_0, %c0_i32_1 : i32, i32, i32
  }
  func.func @transform_3(%arg0: i32) -> (i32, i32) {
    %c0_i32 = arith.constant 0 : i32
    %c0_i32_0 = arith.constant 0 : i32
    %c0_i32_1 = arith.constant 0 : i32
    return %c0_i32, %c0_i32_0 : i32, i32
  }
  func.func @transform_4(%arg0: i32) -> (i32, i32, i32) {
    %c0_i32 = arith.constant 0 : i32
    %c0_i32_0 = arith.constant 0 : i32
    %c0_i32_1 = arith.constant 0 : i32
    %c0_i32_2 = arith.constant 0 : i32
    return %c0_i32, %c0_i32_0, %c0_i32_1 : i32, i32, i32
  }
  func.func @transform_5(%arg0: i32) -> (i32, i32) {
    %c0_i32 = arith.constant 0 : i32
    %c0_i32_0 = arith.constant 0 : i32
    %c0_i32_1 = arith.constant 0 : i32
    return %c0_i32, %c0_i32_0 : i32, i32
  }
  func.func @transform_6(%arg0: i32) -> (i32, i32) {
    %c0_i32 = arith.constant 0 : i32
    %c0_i32_0 = arith.constant 0 : i32
    %c0_i32_1 = arith.constant 0 : i32
    return %c0_i32, %c0_i32_0 : i32, i32
  }
  func.func @transform_7(%arg0: i32) -> (i32, i32) {
    %c0_i32 = arith.constant 0 : i32
    %c0_i32_0 = arith.constant 0 : i32
    %c0_i32_1 = arith.constant 0 : i32
    return %c0_i32, %c0_i32_0 : i32, i32
  }
  func.func @transform_8(%arg0: i32) -> (i32, i32) {
    %c0_i32 = arith.constant 0 : i32
    %c0_i32_0 = arith.constant 0 : i32
    %c0_i32_1 = arith.constant 0 : i32
    return %c0_i32, %c0_i32_0 : i32, i32
  }
  func.func @transform_9(%arg0: i32) -> (i32, i32) {
    %c0_i32 = arith.constant 0 : i32
    %c0_i32_0 = arith.constant 0 : i32
    %c0_i32_1 = arith.constant 0 : i32
    return %c0_i32, %c0_i32_0 : i32, i32
  }
  func.func @transform_10(%arg0: i32) -> (i32, i32, i32) {
    %c0_i32 = arith.constant 0 : i32
    %c0_i32_0 = arith.constant 0 : i32
    %c0_i32_1 = arith.constant 0 : i32
    return %arg0, %c0_i32, %c0_i32_0 : i32, i32, i32
  }
}

</mosaic_0001>

<llo_original>
// kernel: resnet1d_forward.5
$region0: #{resnet1d_forward.5}
  #allocation0 [shape = 'u32[]', space=smem, size = 0x4, offset = 0x4, fixed_abs, tag = 'smem constant byte address 0x4 - core index']
  #allocation1 [shape = 'u32[144,128]{1,0:T(1,128)}', space=vmem, size = 0x12000, scoped, tag = 'internal scratch']
  #allocation2 [shape = 'f32[16,64]{1,0:T(8,128)}', space=vmem, size = 0x2000, scoped, tag = 'scratch operand']
  %s0 = inlined_call_operand.vmem [shape: bf16[2,9,16,4], index: 0, kind: input, shape index: {}]
  %s1 = inlined_call_operand.hbm [shape: bf16[7,4,64], index: 1, kind: input, shape index: {}]
  %s2 = inlined_call_operand.hbm [shape: f32[1,64], index: 2, kind: input, shape index: {}]
  %s3 = inlined_call_operand.vmem [shape: bf16[2,16,64], index: 3, kind: output, shape index: {}]
  %s4 = sld [smem:[#allocation0]]
  $region53: #{resnet1d_forward.5} parent=0
    _
  %s6 = ssub.s32 1, %s4
  %s7 = scalar_select 0, %s6, %s4
  $region1: #{resnet1d_forward.5} parent=0
    #allocation3 [shape = 'u8[7168]{0}', space=vmem, size = 0x1c00, scoped, tag = 'input window, operand 1, single buffered']
    #allocation4 [shape = 's32[2]{0}', space=sflag, size = 0x8, scoped, tag = 'scoped memory for resnet1d_forward.5']
    #allocation5 [shape = 'u8[512]{0}', space=vmem, size = 0x400, scoped, tag = 'input window, operand 2, single buffered']
    #allocation6 [shape = 's32[1]{0}', space=sflag, size = 0x4, scoped, tag = 'scoped memory for resnet1d_forward.5']
    %8 = vsyncpa [#allocation4], 0
    %9 = vsyncpa [#allocation6], 0
    loop: start=0, step=1, limit=4
    $region2: #{resnet1d_forward.5} parent=1 // loop_pre_header
      _
    $region3: #{resnet1d_forward.5} parent=1 // loop_header
      %s11 = sphi 0, %s15
      %p12 = scmp.ge.s32.totalorder %s11, 4
      %s21 = sphi 0, %s23
      %s24 = sphi 0, %s21
      %s25 = sphi 0, %s24
      %s41 = sphi 0, %s25
      %s45 = sphi 0, %s45
      %s47 = sphi 0, %s45
      %s48 = sphi 0, %s47
      %s62 = sphi 0, %s48
      %s66 = sphi 0, %s66
      %s68 = sphi 0, %s66
      %s69 = sphi 0, %s68
      %s83 = sphi 0, %s69
      %s89 = sphi 0, %s91
      %s92 = sphi 0, %s89
      %s93 = sphi 0, %s92
      %s109 = sphi 0, %s93
    $region4: #{resnet1d_forward.5} parent=1 // loop_header_branch
      %14 = sbr.rel (%p12) target = $region8
    $region5: #{resnet1d_forward.5} parent=1 // loop_body
      %s16 = ssub.s32 %s11, 1
      %s17 = ssub.s32 %s11, 2
      %s18 = sadd.s32 %s11, 1
      %s19 = ssub.s32 %s11, %s18
      %p20 = scmp.eq.s32.totalorder %s19, 0
      %s22 = sadd.s32 %s21, 1
      %s23 = scalar_select %p20, %s21, %s22
      %p26 = pneg %p20
      %p27 = scmp.eq.s32.totalorder %s11, 1
      %p28 = por %p26, %p27
      %p29 = scmp.ne.s32.totalorder %s21, %s24
      %p30 = scmp.eq.s32.totalorder %s11, 0
      %p31 = por %p29, %p30
      %p32 = scmp.ne.s32.totalorder %s21, %s24
      %p33 = scmp.eq.s32.totalorder %s16, 1
      %p34 = por %p32, %p33
      %p35 = scmp.ne.s32.totalorder %s24, %s25
      %p36 = scmp.eq.s32.totalorder %s16, 0
      %p37 = por %p35, %p36
      %p38 = scmp.ne.s32.totalorder %s24, %s25
      %p39 = scmp.eq.s32.totalorder %s17, 1
      %p40 = por %p38, %p39
      %p42 = scmp.ne.s32.totalorder %s25, %s41
      %p43 = scmp.eq.s32.totalorder %s17, 0
      %p44 = por %p42, %p43
      %s46 = sadd.s32 %s45, 1
      %p49 = scmp.eq.s32.totalorder %s11, 1
      %p50 = scmp.ne.s32.totalorder %s45, %s47
      %p51 = scmp.eq.s32.totalorder %s11, 0
      %p52 = por %p50, %p51
      %p53 = scmp.ne.s32.totalorder %s45, %s47
      %p54 = scmp.eq.s32.totalorder %s16, 1
      %p55 = por %p53, %p54
      %p56 = scmp.ne.s32.totalorder %s47, %s48
      %p57 = scmp.eq.s32.totalorder %s16, 0
      %p58 = por %p56, %p57
      %p59 = scmp.ne.s32.totalorder %s47, %s48
      %p60 = scmp.eq.s32.totalorder %s17, 1
      %p61 = por %p59, %p60
      %p63 = scmp.ne.s32.totalorder %s48, %s62
      %p64 = scmp.eq.s32.totalorder %s17, 0
      %p65 = por %p63, %p64
      %s67 = sadd.s32 %s66, 1
      %p70 = scmp.eq.s32.totalorder %s11, 1
      %p71 = scmp.ne.s32.totalorder %s66, %s68
      %p72 = scmp.eq.s32.totalorder %s11, 0
      %p73 = por %p71, %p72
      %p74 = scmp.ne.s32.totalorder %s66, %s68
      %p75 = scmp.eq.s32.totalorder %s16, 1
      %p76 = por %p74, %p75
      %p77 = scmp.ne.s32.totalorder %s68, %s69
      %p78 = scmp.eq.s32.totalorder %s16, 0
      %p79 = por %p77, %p78
      %p80 = scmp.ne.s32.totalorder %s68, %s69
      %p81 = scmp.eq.s32.totalorder %s17, 1
      %p82 = por %p80, %p81
      %p84 = scmp.ne.s32.totalorder %s69, %s83
      %p85 = scmp.eq.s32.totalorder %s17, 0
      %p86 = por %p84, %p85
      %s87 = ssub.s32 %s11, %s18
      %p88 = scmp.eq.s32.totalorder %s87, 0
      %s90 = sadd.s32 %s89, 1
      %s91 = scalar_select %p88, %s89, %s90
      %p94 = pneg %p88
      %p95 = scmp.eq.s32.totalorder %s11, 1
      %p96 = por %p94, %p95
      %p97 = scmp.ne.s32.totalorder %s89, %s92
      %p98 = scmp.eq.s32.totalorder %s11, 0
      %p99 = por %p97, %p98
      %p100 = scmp.ne.s32.totalorder %s89, %s92
      %p101 = scmp.eq.s32.totalorder %s16, 1
      %p102 = por %p100, %p101
      %p103 = scmp.ne.s32.totalorder %s92, %s93
      %p104 = scmp.eq.s32.totalorder %s16, 0
      %p105 = por %p103, %p104
      %p106 = scmp.ne.s32.totalorder %s92, %s93
      %p107 = scmp.eq.s32.totalorder %s17, 1
      %p108 = por %p106, %p107
      %p110 = scmp.ne.s32.totalorder %s93, %s109
      %p111 = scmp.eq.s32.totalorder %s17, 0
      %p112 = por %p110, %p111
      %p113 = scmp.le.s32.totalorder 1, %s11
      %p114 = scmp.lt.s32.totalorder %s11, 3
      %p115 = pnand %p113, %p114
      %p116 = pneg %p115
      // Predicated region
      $region9: #{resnet1d_forward.5} parent=5 // pred_check
        _
      $region10: #{resnet1d_forward.5} parent=5 // pred_check_branch
        %118 = sbr.rel (%p115) target = $region12
      $region11: #{resnet1d_forward.5} parent=5 // pred_region
        %s119 = ssub.s32 %s11, 1
        // Predicated region
        $region13: #{resnet1d_forward.5} parent=11 // pred_check
          %p120 = pneg %p58
        $region14: #{resnet1d_forward.5} parent=11 // pred_check_branch
          %122 = sbr.rel (%p120) target = $region16
        $region15: #{resnet1d_forward.5} parent=11 // pred_region
          %s124 = ssub.s32 224, 224
          %125 = vsyncadd [#allocation4], %s124
          %s126 = sshll.u32 [#allocation3], 4
          %s127 = int_to_ptr.vmem [resolvable:$true] %s126
          %132 = dma.hbm_to_vmem [thread:$0]  %s1, 224, %s127, [#allocation4], 32, 32, 2
        $region16: #{resnet1d_forward.5} parent=11 // pred_fallthru
          _
        // Predicated region
        $region17: #{resnet1d_forward.5} parent=11 // pred_check
          %p133 = pneg %p79
        $region18: #{resnet1d_forward.5} parent=11 // pred_check_branch
          %135 = sbr.rel (%p133) target = $region20
        $region19: #{resnet1d_forward.5} parent=11 // pred_region
          %s137 = ssub.s32 16, 16
          %138 = vsyncadd [#allocation6], %s137
          %s140 = sshll.u32 [#allocation5], 4
          %s141 = int_to_ptr.vmem [resolvable:$true] %s140
          %143 = dma.hbm_to_vmem [thread:$0]  %s2, 16, %s141, [#allocation6]
        $region20: #{resnet1d_forward.5} parent=11 // pred_fallthru
          _
      $region12: #{resnet1d_forward.5} parent=5 // pred_fallthru
        _
      %p144 = scmp.lt.s32.totalorder %s11, 2
      // Predicated region
      $region21: #{resnet1d_forward.5} parent=5 // pred_check
        %p145 = pneg %p144
      $region22: #{resnet1d_forward.5} parent=5 // pred_check_branch
        %147 = sbr.rel (%p145) target = $region24
      $region23: #{resnet1d_forward.5} parent=5 // pred_region
        // Predicated region
        $region25: #{resnet1d_forward.5} parent=23 // pred_check
          %p148 = pneg %p31
        $region26: #{resnet1d_forward.5} parent=23 // pred_check_branch
          %150 = sbr.rel (%p148) target = $region28
        $region27: #{resnet1d_forward.5} parent=23 // pred_region
          %p151 = scmp.lt.s32.totalorder %s11, 1
          %s152 = scalar_select %p151, %s11, 1
          %s153 = smul.addr %s152, 18
          %s154 = smul.addr %s153, 4
          %s155 = scalar_lea.vmem %s0, %s154
        $region28: #{resnet1d_forward.5} parent=23 // pred_fallthru
          _
      $region24: #{resnet1d_forward.5} parent=5 // pred_fallthru
        _
      %p156 = scmp.le.s32.totalorder 1, %s11
      %p157 = scmp.lt.s32.totalorder %s11, 3
      %p158 = pnand %p156, %p157
      %p159 = pneg %p158
      // Predicated region
      $region29: #{resnet1d_forward.5} parent=5 // pred_check
        _
      $region30: #{resnet1d_forward.5} parent=5 // pred_check_branch
        %161 = sbr.rel (%p158) target = $region32
      $region31: #{resnet1d_forward.5} parent=5 // pred_region
        %s162 = ssub.s32 %s11, 1
        // Predicated region
        $region33: #{resnet1d_forward.5} parent=31 // pred_check
          %p163 = pneg %p58
        $region34: #{resnet1d_forward.5} parent=31 // pred_check_branch
          %165 = sbr.rel (%p163) target = $region36
        $region35: #{resnet1d_forward.5} parent=31 // pred_region
          %166 = dma.done [#allocation4], 224
        $region36: #{resnet1d_forward.5} parent=31 // pred_fallthru
          _
        // Predicated region
        $region37: #{resnet1d_forward.5} parent=31 // pred_check
          %p167 = pneg %p79
        $region38: #{resnet1d_forward.5} parent=31 // pred_check_branch
          %169 = sbr.rel (%p167) target = $region40
        $region39: #{resnet1d_forward.5} parent=31 // pred_region
          %170 = dma.done [#allocation6], 16
        $region40: #{resnet1d_forward.5} parent=31 // pred_fallthru
          _
        %p171 = scmp.lt.s32.totalorder %s16, 1
        %s172 = scalar_select %p171, %s16, 1
        %s173 = smul.addr %s172, 18
        %s174 = smul.addr %s173, 4
        %s175 = scalar_lea.vmem %s0, %s174
        %p176 = pneg %p37
        %p177 = pneg %p34
        %p178 = pneg %p58
        %p179 = pneg %p55
        %p180 = pneg %p79
        %p181 = pneg %p76
        %p182 = pneg %p105
        %p183 = pneg %p102
        %p184 = scmp.lt.s32.totalorder %s16, 1
        %s185 = scalar_select %p184, %s16, 1
        %s186 = smul.addr %s185, 2
        %s187 = smul.addr %s186, 4
        %s188 = scalar_lea.vmem %s3, %s187
        %p189 = scmp.lt.s32.totalorder %s16, 1
        %s190 = scalar_select %p189, %s16, 1
        %s191 = smul.addr %s190, 18
        %s192 = smul.addr %s191, 4
        %s193 = scalar_lea.vmem %s0, %s192
        %p194 = scmp.lt.s32.totalorder %s16, 1
        %s195 = scalar_select %p194, %s16, 1
        %s196 = smul.addr %s195, 2
        %s197 = smul.addr %s196, 4
        %s198 = scalar_lea.vmem %s3, %s197
        %v200 = vld [vmem:[%s193] sm:$0xf]
        %v201 = vld [vmem:[%s193 + $0x4] sm:$0xf]
        %v202 = vld [vmem:[#allocation3] sm:$0x3]
        %s203 = scalar_lea.vmem %s193, 16
        %v204 = vld [vmem:[%s203] sm:$0xf]
        %v205 = vld [vmem:[%s203 + $0x4] sm:$0xf]
        %s206 = scalar_lea.vmem %s193, 8
        %v207 = vld [vmem:[%s206] sm:$0xf]
        %v208 = vld [vmem:[%s206 + $0x4] sm:$0xf]
        %s209 = scalar_lea.vmem [#allocation3], 2
        %v210 = vld [vmem:[%s209] sm:$0x3]
        %v213 = vunpack.c.l.b16 %v207
        %v214 = vunpack.c.l.b16 %v208
        %v215 = vpack.c.b16 %v214, %v213
        %vm216 = vcmask 31744
        %v218 = vsel %vm216, %v215, 0
        %vm220 = vcmask 1041408
        %v222 = vsel %vm220, %v210, 0
        %224 = vmatprep.subr.bf16.mxu0 0
        %225 = vmatpush1.bf16.msra.mxu0 %v222
        %226 = vmatprep.subr.bf16.mxu0 0
        %227 = vmatpush1.bf16.msra.mxu0 0
        %228 = vmatprep.subr.bf16.mxu0 0
        %229 = vmatpush1.bf16.msra.mxu0 0
        %230 = vmatprep.subr.bf16.mxu0 0
        %231 = vmatpush1.bf16.msra.mxu0 0
        %232 = vmatprep.subr.bf16.mxu0 0
        %233 = vmatpush1.bf16.msra.mxu0 0
        %234 = vmatprep.subr.bf16.mxu0 0
        %235 = vmatpush1.bf16.msra.mxu0 0
        %236 = vmatprep.subr.bf16.mxu0 0
        %237 = vmatpush1.bf16.msra.mxu0 0
        %238 = vmatprep.subr.bf16.mxu0 0
        %239 = vmatpush1.bf16.msra.mxu0 0
        %240 = vmatprep.subr.bf16.mxu0 0
        %241 = vmatpush1.bf16.msra.mxu0 0
        %242 = vmatprep.subr.bf16.mxu0 0
        %243 = vmatpush1.bf16.msra.mxu0 0
        %244 = vmatprep.subr.bf16.mxu0 0
        %245 = vmatpush1.bf16.msra.mxu0 0
        %246 = vmatprep.subr.bf16.mxu0 0
        %247 = vmatpush1.bf16.msra.mxu0 0
        %248 = vmatprep.subr.bf16.mxu0 0
        %249 = vmatpush1.bf16.msra.mxu0 0
        %250 = vmatprep.subr.bf16.mxu0 0
        %251 = vmatpush1.bf16.msra.mxu0 0
        %252 = vmatprep.subr.bf16.mxu0 0
        %253 = vmatpush1.bf16.msra.mxu0 0
        %254 = vmatprep.subr.bf16.mxu0 0
        %255 = vmatpush1.bf16.msra.mxu0 0
        %256 = vmatprep.mubr.bf16.mxu0 0
        %257 = vmatmul.mubr.bf16.gmra.mrb[0].mxu0 %v218
        %v258 = vpop.f32.mrb[0].mxu0
        %v259 = vadd.f32 0.0, %v258
        %v260 = vpop.f32.mrb[0].mxu0
        %v261 = vpop.f32.mrb[0].mxu0
        %v262 = vadd.f32 0.0, %v261
        %v263 = vpop.f32.mrb[0].mxu0
        %264 = vdwg.mxu0
        %v267 = vunpack.c.l.b16 %v200
        %v268 = vunpack.c.l.b16 %v201
        %v269 = vpack.c.b16 %v268, %v267
        %v271 = vsel %vm216, %v269, 0
        %v274 = vsel %vm220, %v202, 0
        %276 = vmatprep.subr.bf16.mxu0 0
        %277 = vmatpush1.bf16.msra.mxu0 %v274
        %278 = vmatprep.subr.bf16.mxu0 0
        %279 = vmatpush1.bf16.msra.mxu0 0
        %280 = vmatprep.subr.bf16.mxu0 0
        %281 = vmatpush1.bf16.msra.mxu0 0
        %282 = vmatprep.subr.bf16.mxu0 0
        %283 = vmatpush1.bf16.msra.mxu0 0
        %284 = vmatprep.subr.bf16.mxu0 0
        %285 = vmatpush1.bf16.msra.mxu0 0
        %286 = vmatprep.subr.bf16.mxu0 0
        %287 = vmatpush1.bf16.msra.mxu0 0
        %288 = vmatprep.subr.bf16.mxu0 0
        %289 = vmatpush1.bf16.msra.mxu0 0
        %290 = vmatprep.subr.bf16.mxu0 0
        %291 = vmatpush1.bf16.msra.mxu0 0
        %292 = vmatprep.subr.bf16.mxu0 0
        %293 = vmatpush1.bf16.msra.mxu0 0
        %294 = vmatprep.subr.bf16.mxu0 0
        %295 = vmatpush1.bf16.msra.mxu0 0
        %296 = vmatprep.subr.bf16.mxu0 0
        %297 = vmatpush1.bf16.msra.mxu0 0
        %298 = vmatprep.subr.bf16.mxu0 0
        %299 = vmatpush1.bf16.msra.mxu0 0
        %300 = vmatprep.subr.bf16.mxu0 0
        %301 = vmatpush1.bf16.msra.mxu0 0
        %302 = vmatprep.subr.bf16.mxu0 0
        %303 = vmatpush1.bf16.msra.mxu0 0
        %304 = vmatprep.subr.bf16.mxu0 0
        %305 = vmatpush1.bf16.msra.mxu0 0
        %306 = vmatprep.subr.bf16.mxu0 0
        %307 = vmatpush1.bf16.msra.mxu0 0
        %308 = vmatprep.mubr.bf16.mxu0 0
        %309 = vmatmul.mubr.bf16.gmra.mrb[0].mxu0 %v271
        %v310 = vpop.f32.mrb[0].mxu0
        %v311 = vadd.f32 %v259, %v310
        %v312 = vpop.f32.mrb[0].mxu0
        %v313 = vpop.f32.mrb[0].mxu0
        %v314 = vadd.f32 %v262, %v313
        %v315 = vpop.f32.mrb[0].mxu0
        %316 = vdwg.mxu0
        %s317 = scalar_lea.vmem %s193, 24
        %v318 = vld [vmem:[%s317] sm:$0xf]
        %v319 = vld [vmem:[%s317 + $0x4] sm:$0xf]
        %v322 = vunpack.c.l.b16 %v318
        %v323 = vunpack.c.l.b16 %v319
        %v324 = vpack.c.b16 %v323, %v322
        %v326 = vsel %vm216, %v324, 0
        %328 = vmatprep.subr.bf16.mxu0 0
        %329 = vmatpush1.bf16.msra.mxu0 %v222
        %330 = vmatprep.subr.bf16.mxu0 0
        %331 = vmatpush1.bf16.msra.mxu0 0
        %332 = vmatprep.subr.bf16.mxu0 0
        %333 = vmatpush1.bf16.msra.mxu0 0
        %334 = vmatprep.subr.bf16.mxu0 0
        %335 = vmatpush1.bf16.msra.mxu0 0
        %336 = vmatprep.subr.bf16.mxu0 0
        %337 = vmatpush1.bf16.msra.mxu0 0
        %338 = vmatprep.subr.bf16.mxu0 0
        %339 = vmatpush1.bf16.msra.mxu0 0
        %340 = vmatprep.subr.bf16.mxu0 0
        %341 = vmatpush1.bf16.msra.mxu0 0
        %342 = vmatprep.subr.bf16.mxu0 0
        %343 = vmatpush1.bf16.msra.mxu0 0
        %344 = vmatprep.subr.bf16.mxu0 0
        %345 = vmatpush1.bf16.msra.mxu0 0
        %346 = vmatprep.subr.bf16.mxu0 0
        %347 = vmatpush1.bf16.msra.mxu0 0
        %348 = vmatprep.subr.bf16.mxu0 0
        %349 = vmatpush1.bf16.msra.mxu0 0
        %350 = vmatprep.subr.bf16.mxu0 0
        %351 = vmatpush1.bf16.msra.mxu0 0
        %352 = vmatprep.subr.bf16.mxu0 0
        %353 = vmatpush1.bf16.msra.mxu0 0
        %354 = vmatprep.subr.bf16.mxu0 0
        %355 = vmatpush1.bf16.msra.mxu0 0
        %356 = vmatprep.subr.bf16.mxu0 0
        %357 = vmatpush1.bf16.msra.mxu0 0
        %358 = vmatprep.subr.bf16.mxu0 0
        %359 = vmatpush1.bf16.msra.mxu0 0
        %360 = vmatprep.mubr.bf16.mxu0 0
        %361 = vmatmul.mubr.bf16.gmra.mrb[0].mxu0 %v326
        %v362 = vpop.f32.mrb[0].mxu0
        %v363 = vadd.f32 0.0, %v362
        %v364 = vpop.f32.mrb[0].mxu0
        %v365 = vpop.f32.mrb[0].mxu0
        %v366 = vadd.f32 0.0, %v365
        %v367 = vpop.f32.mrb[0].mxu0
        %368 = vdwg.mxu0
        %v371 = vunpack.c.l.b16 %v204
        %v372 = vunpack.c.l.b16 %v205
        %v373 = vpack.c.b16 %v372, %v371
        %v375 = vsel %vm216, %v373, 0
        %377 = vmatprep.subr.bf16.mxu0 0
        %378 = vmatpush1.bf16.msra.mxu0 %v274
        %379 = vmatprep.subr.bf16.mxu0 0
        %380 = vmatpush1.bf16.msra.mxu0 0
        %381 = vmatprep.subr.bf16.mxu0 0
        %382 = vmatpush1.bf16.msra.mxu0 0
        %383 = vmatprep.subr.bf16.mxu0 0
        %384 = vmatpush1.bf16.msra.mxu0 0
        %385 = vmatprep.subr.bf16.mxu0 0
        %386 = vmatpush1.bf16.msra.mxu0 0
        %387 = vmatprep.subr.bf16.mxu0 0
        %388 = vmatpush1.bf16.msra.mxu0 0
        %389 = vmatprep.subr.bf16.mxu0 0
        %390 = vmatpush1.bf16.msra.mxu0 0
        %391 = vmatprep.subr.bf16.mxu0 0
        %392 = vmatpush1.bf16.msra.mxu0 0
        %393 = vmatprep.subr.bf16.mxu0 0
        %394 = vmatpush1.bf16.msra.mxu0 0
        %395 = vmatprep.subr.bf16.mxu0 0
        %396 = vmatpush1.bf16.msra.mxu0 0
        %397 = vmatprep.subr.bf16.mxu0 0
        %398 = vmatpush1.bf16.msra.mxu0 0
        %399 = vmatprep.subr.bf16.mxu0 0
        %400 = vmatpush1.bf16.msra.mxu0 0
        %401 = vmatprep.subr.bf16.mxu0 0
        %402 = vmatpush1.bf16.msra.mxu0 0
        %403 = vmatprep.subr.bf16.mxu0 0
        %404 = vmatpush1.bf16.msra.mxu0 0
        %405 = vmatprep.subr.bf16.mxu0 0
        %406 = vmatpush1.bf16.msra.mxu0 0
        %407 = vmatprep.subr.bf16.mxu0 0
        %408 = vmatpush1.bf16.msra.mxu0 0
        %409 = vmatprep.mubr.bf16.mxu0 0
        %410 = vmatmul.mubr.bf16.gmra.mrb[0].mxu0 %v375
        %v411 = vpop.f32.mrb[0].mxu0
        %v412 = vadd.f32 %v363, %v411
        %v413 = vpop.f32.mrb[0].mxu0
        %v414 = vpop.f32.mrb[0].mxu0
        %v415 = vadd.f32 %v366, %v414
        %v416 = vpop.f32.mrb[0].mxu0
        %417 = vdwg.mxu0
        %s418 = scalar_lea.vmem [#allocation3], 4
        %v419 = vld [vmem:[%s418] sm:$0x3]
        %v421 = vsel %vm220, %v419, 0
        %423 = vmatprep.subr.bf16.mxu0 0
        %424 = vmatpush1.bf16.msra.mxu0 %v421
        %425 = vmatprep.subr.bf16.mxu0 0
        %426 = vmatpush1.bf16.msra.mxu0 0
        %427 = vmatprep.subr.bf16.mxu0 0
        %428 = vmatpush1.bf16.msra.mxu0 0
        %429 = vmatprep.subr.bf16.mxu0 0
        %430 = vmatpush1.bf16.msra.mxu0 0
        %431 = vmatprep.subr.bf16.mxu0 0
        %432 = vmatpush1.bf16.msra.mxu0 0
        %433 = vmatprep.subr.bf16.mxu0 0
        %434 = vmatpush1.bf16.msra.mxu0 0
        %435 = vmatprep.subr.bf16.mxu0 0
        %436 = vmatpush1.bf16.msra.mxu0 0
        %437 = vmatprep.subr.bf16.mxu0 0
        %438 = vmatpush1.bf16.msra.mxu0 0
        %439 = vmatprep.subr.bf16.mxu0 0
        %440 = vmatpush1.bf16.msra.mxu0 0
        %441 = vmatprep.subr.bf16.mxu0 0
        %442 = vmatpush1.bf16.msra.mxu0 0
        %443 = vmatprep.subr.bf16.mxu0 0
        %444 = vmatpush1.bf16.msra.mxu0 0
        %445 = vmatprep.subr.bf16.mxu0 0
        %446 = vmatpush1.bf16.msra.mxu0 0
        %447 = vmatprep.subr.bf16.mxu0 0
        %448 = vmatpush1.bf16.msra.mxu0 0
        %449 = vmatprep.subr.bf16.mxu0 0
        %450 = vmatpush1.bf16.msra.mxu0 0
        %451 = vmatprep.subr.bf16.mxu0 0
        %452 = vmatpush1.bf16.msra.mxu0 0
        %453 = vmatprep.subr.bf16.mxu0 0
        %454 = vmatpush1.bf16.msra.mxu0 0
        %455 = vmatprep.mubr.bf16.mxu0 0
        %456 = vmatmul.mubr.bf16.gmra.mrb[0].mxu0 %v375
        %v457 = vpop.f32.mrb[0].mxu0
        %v458 = vadd.f32 0.0, %v457
        %v459 = vpop.f32.mrb[0].mxu0
        %v460 = vpop.f32.mrb[0].mxu0
        %v461 = vadd.f32 0.0, %v460
        %v462 = vpop.f32.mrb[0].mxu0
        %463 = vdwg.mxu0
        %v464 = vadd.f32 %v311, %v458
        %v465 = vadd.f32 %v314, %v461
        %s466 = scalar_lea.vmem %s193, 32
        %v467 = vld [vmem:[%s466] sm:$0xf]
        %v468 = vld [vmem:[%s466 + $0x4] sm:$0xf]
        %v471 = vunpack.c.l.b16 %v467
        %v472 = vunpack.c.l.b16 %v468
        %v473 = vpack.c.b16 %v472, %v471
        %v475 = vsel %vm216, %v473, 0
        %477 = vmatprep.subr.bf16.mxu0 0
        %478 = vmatpush1.bf16.msra.mxu0 %v421
        %479 = vmatprep.subr.bf16.mxu0 0
        %480 = vmatpush1.bf16.msra.mxu0 0
        %481 = vmatprep.subr.bf16.mxu0 0
        %482 = vmatpush1.bf16.msra.mxu0 0
        %483 = vmatprep.subr.bf16.mxu0 0
        %484 = vmatpush1.bf16.msra.mxu0 0
        %485 = vmatprep.subr.bf16.mxu0 0
        %486 = vmatpush1.bf16.msra.mxu0 0
        %487 = vmatprep.subr.bf16.mxu0 0
        %488 = vmatpush1.bf16.msra.mxu0 0
        %489 = vmatprep.subr.bf16.mxu0 0
        %490 = vmatpush1.bf16.msra.mxu0 0
        %491 = vmatprep.subr.bf16.mxu0 0
        %492 = vmatpush1.bf16.msra.mxu0 0
        %493 = vmatprep.subr.bf16.mxu0 0
        %494 = vmatpush1.bf16.msra.mxu0 0
        %495 = vmatprep.subr.bf16.mxu0 0
        %496 = vmatpush1.bf16.msra.mxu0 0
        %497 = vmatprep.subr.bf16.mxu0 0
        %498 = vmatpush1.bf16.msra.mxu0 0
        %499 = vmatprep.subr.bf16.mxu0 0
        %500 = vmatpush1.bf16.msra.mxu0 0
        %501 = vmatprep.subr.bf16.mxu0 0
        %502 = vmatpush1.bf16.msra.mxu0 0
        %503 = vmatprep.subr.bf16.mxu0 0
        %504 = vmatpush1.bf16.msra.mxu0 0
        %505 = vmatprep.subr.bf16.mxu0 0
        %506 = vmatpush1.bf16.msra.mxu0 0
        %507 = vmatprep.subr.bf16.mxu0 0
        %508 = vmatpush1.bf16.msra.mxu0 0
        %509 = vmatprep.mubr.bf16.mxu0 0
        %510 = vmatmul.mubr.bf16.gmra.mrb[0].mxu0 %v475
        %v511 = vpop.f32.mrb[0].mxu0
        %v512 = vadd.f32 0.0, %v511
        %v513 = vpop.f32.mrb[0].mxu0
        %v514 = vpop.f32.mrb[0].mxu0
        %v515 = vadd.f32 0.0, %v514
        %v516 = vpop.f32.mrb[0].mxu0
        %517 = vdwg.mxu0
        %v518 = vadd.f32 %v412, %v512
        %v519 = vadd.f32 %v415, %v515
        %s520 = scalar_lea.vmem [#allocation3], 6
        %v521 = vld [vmem:[%s520] sm:$0x3]
        %v523 = vsel %vm220, %v521, 0
        %525 = vmatprep.subr.bf16.mxu0 0
        %526 = vmatpush1.bf16.msra.mxu0 %v523
        %527 = vmatprep.subr.bf16.mxu0 0
        %528 = vmatpush1.bf16.msra.mxu0 0
        %529 = vmatprep.subr.bf16.mxu0 0
        %530 = vmatpush1.bf16.msra.mxu0 0
        %531 = vmatprep.subr.bf16.mxu0 0
        %532 = vmatpush1.bf16.msra.mxu0 0
        %533 = vmatprep.subr.bf16.mxu0 0
        %534 = vmatpush1.bf16.msra.mxu0 0
        %535 = vmatprep.subr.bf16.mxu0 0
        %536 = vmatpush1.bf16.msra.mxu0 0
        %537 = vmatprep.subr.bf16.mxu0 0
        %538 = vmatpush1.bf16.msra.mxu0 0
        %539 = vmatprep.subr.bf16.mxu0 0
        %540 = vmatpush1.bf16.msra.mxu0 0
        %541 = vmatprep.subr.bf16.mxu0 0
        %542 = vmatpush1.bf16.msra.mxu0 0
        %543 = vmatprep.subr.bf16.mxu0 0
        %544 = vmatpush1.bf16.msra.mxu0 0
        %545 = vmatprep.subr.bf16.mxu0 0
        %546 = vmatpush1.bf16.msra.mxu0 0
        %547 = vmatprep.subr.bf16.mxu0 0
        %548 = vmatpush1.bf16.msra.mxu0 0
        %549 = vmatprep.subr.bf16.mxu0 0
        %550 = vmatpush1.bf16.msra.mxu0 0
        %551 = vmatprep.subr.bf16.mxu0 0
        %552 = vmatpush1.bf16.msra.mxu0 0
        %553 = vmatprep.subr.bf16.mxu0 0
        %554 = vmatpush1.bf16.msra.mxu0 0
        %555 = vmatprep.subr.bf16.mxu0 0
        %556 = vmatpush1.bf16.msra.mxu0 0
        %557 = vmatprep.mubr.bf16.mxu0 0
        %558 = vmatmul.mubr.bf16.gmra.mrb[0].mxu0 %v326
        %v559 = vpop.f32.mrb[0].mxu0
        %v560 = vadd.f32 0.0, %v559
        %v561 = vpop.f32.mrb[0].mxu0
        %v562 = vpop.f32.mrb[0].mxu0
        %v563 = vadd.f32 0.0, %v562
        %v564 = vpop.f32.mrb[0].mxu0
        %565 = vdwg.mxu0
        %v566 = vadd.f32 %v464, %v560
        %v567 = vadd.f32 %v465, %v563
        %s568 = scalar_lea.vmem %s193, 40
        %v569 = vld [vmem:[%s568] sm:$0xf]
        %v570 = vld [vmem:[%s568 + $0x4] sm:$0xf]
        %v573 = vunpack.c.l.b16 %v569
        %v574 = vunpack.c.l.b16 %v570
        %v575 = vpack.c.b16 %v574, %v573
        %v577 = vsel %vm216, %v575, 0
        %579 = vmatprep.subr.bf16.mxu0 0
        %580 = vmatpush1.bf16.msra.mxu0 %v523
        %581 = vmatprep.subr.bf16.mxu0 0
        %582 = vmatpush1.bf16.msra.mxu0 0
        %583 = vmatprep.subr.bf16.mxu0 0
        %584 = vmatpush1.bf16.msra.mxu0 0
        %585 = vmatprep.subr.bf16.mxu0 0
        %586 = vmatpush1.bf16.msra.mxu0 0
        %587 = vmatprep.subr.bf16.mxu0 0
        %588 = vmatpush1.bf16.msra.mxu0 0
        %589 = vmatprep.subr.bf16.mxu0 0
        %590 = vmatpush1.bf16.msra.mxu0 0
        %591 = vmatprep.subr.bf16.mxu0 0
        %592 = vmatpush1.bf16.msra.mxu0 0
        %593 = vmatprep.subr.bf16.mxu0 0
        %594 = vmatpush1.bf16.msra.mxu0 0
        %595 = vmatprep.subr.bf16.mxu0 0
        %596 = vmatpush1.bf16.msra.mxu0 0
        %597 = vmatprep.subr.bf16.mxu0 0
        %598 = vmatpush1.bf16.msra.mxu0 0
        %599 = vmatprep.subr.bf16.mxu0 0
        %600 = vmatpush1.bf16.msra.mxu0 0
        %601 = vmatprep.subr.bf16.mxu0 0
        %602 = vmatpush1.bf16.msra.mxu0 0
        %603 = vmatprep.subr.bf16.mxu0 0
        %604 = vmatpush1.bf16.msra.mxu0 0
        %605 = vmatprep.subr.bf16.mxu0 0
        %606 = vmatpush1.bf16.msra.mxu0 0
        %607 = vmatprep.subr.bf16.mxu0 0
        %608 = vmatpush1.bf16.msra.mxu0 0
        %609 = vmatprep.subr.bf16.mxu0 0
        %610 = vmatpush1.bf16.msra.mxu0 0
        %611 = vmatprep.mubr.bf16.mxu0 0
        %612 = vmatmul.mubr.bf16.gmra.mrb[0].mxu0 %v577
        %v613 = vpop.f32.mrb[0].mxu0
        %v614 = vadd.f32 0.0, %v613
        %v615 = vpop.f32.mrb[0].mxu0
        %v616 = vpop.f32.mrb[0].mxu0
        %v617 = vadd.f32 0.0, %v616
        %v618 = vpop.f32.mrb[0].mxu0
        %619 = vdwg.mxu0
        %v620 = vadd.f32 %v518, %v614
        %v621 = vadd.f32 %v519, %v617
        %s622 = scalar_lea.vmem [#allocation3], 8
        %v623 = vld [vmem:[%s622] sm:$0x3]
        %v625 = vsel %vm220, %v623, 0
        %627 = vmatprep.subr.bf16.mxu0 0
        %628 = vmatpush1.bf16.msra.mxu0 %v625
        %629 = vmatprep.subr.bf16.mxu0 0
        %630 = vmatpush1.bf16.msra.mxu0 0
        %631 = vmatprep.subr.bf16.mxu0 0
        %632 = vmatpush1.bf16.msra.mxu0 0
        %633 = vmatprep.subr.bf16.mxu0 0
        %634 = vmatpush1.bf16.msra.mxu0 0
        %635 = vmatprep.subr.bf16.mxu0 0
        %636 = vmatpush1.bf16.msra.mxu0 0
        %637 = vmatprep.subr.bf16.mxu0 0
        %638 = vmatpush1.bf16.msra.mxu0 0
        %639 = vmatprep.subr.bf16.mxu0 0
        %640 = vmatpush1.bf16.msra.mxu0 0
        %641 = vmatprep.subr.bf16.mxu0 0
        %642 = vmatpush1.bf16.msra.mxu0 0
        %643 = vmatprep.subr.bf16.mxu0 0
        %644 = vmatpush1.bf16.msra.mxu0 0
        %645 = vmatprep.subr.bf16.mxu0 0
        %646 = vmatpush1.bf16.msra.mxu0 0
        %647 = vmatprep.subr.bf16.mxu0 0
        %648 = vmatpush1.bf16.msra.mxu0 0
        %649 = vmatprep.subr.bf16.mxu0 0
        %650 = vmatpush1.bf16.msra.mxu0 0
        %651 = vmatprep.subr.bf16.mxu0 0
        %652 = vmatpush1.bf16.msra.mxu0 0
        %653 = vmatprep.subr.bf16.mxu0 0
        %654 = vmatpush1.bf16.msra.mxu0 0
        %655 = vmatprep.subr.bf16.mxu0 0
        %656 = vmatpush1.bf16.msra.mxu0 0
        %657 = vmatprep.subr.bf16.mxu0 0
        %658 = vmatpush1.bf16.msra.mxu0 0
        %659 = vmatprep.mubr.bf16.mxu0 0
        %660 = vmatmul.mubr.bf16.gmra.mrb[0].mxu0 %v475
        %v661 = vpop.f32.mrb[0].mxu0
        %v662 = vadd.f32 0.0, %v661
        %v663 = vpop.f32.mrb[0].mxu0
        %v664 = vpop.f32.mrb[0].mxu0
        %v665 = vadd.f32 0.0, %v664
        %v666 = vpop.f32.mrb[0].mxu0
        %667 = vdwg.mxu0
        %v668 = vadd.f32 %v566, %v662
        %v669 = vadd.f32 %v567, %v665
        %s670 = scalar_lea.vmem %s193, 48
        %v671 = vld [vmem:[%s670] sm:$0xf]
        %v672 = vld [vmem:[%s670 + $0x4] sm:$0xf]
        %v675 = vunpack.c.l.b16 %v671
        %v676 = vunpack.c.l.b16 %v672
        %v677 = vpack.c.b16 %v676, %v675
        %v679 = vsel %vm216, %v677, 0
        %681 = vmatprep.subr.bf16.mxu0 0
        %682 = vmatpush1.bf16.msra.mxu0 %v625
        %683 = vmatprep.subr.bf16.mxu0 0
        %684 = vmatpush1.bf16.msra.mxu0 0
        %685 = vmatprep.subr.bf16.mxu0 0
        %686 = vmatpush1.bf16.msra.mxu0 0
        %687 = vmatprep.subr.bf16.mxu0 0
        %688 = vmatpush1.bf16.msra.mxu0 0
        %689 = vmatprep.subr.bf16.mxu0 0
        %690 = vmatpush1.bf16.msra.mxu0 0
        %691 = vmatprep.subr.bf16.mxu0 0
        %692 = vmatpush1.bf16.msra.mxu0 0
        %693 = vmatprep.subr.bf16.mxu0 0
        %694 = vmatpush1.bf16.msra.mxu0 0
        %695 = vmatprep.subr.bf16.mxu0 0
        %696 = vmatpush1.bf16.msra.mxu0 0
        %697 = vmatprep.subr.bf16.mxu0 0
        %698 = vmatpush1.bf16.msra.mxu0 0
        %699 = vmatprep.subr.bf16.mxu0 0
        %700 = vmatpush1.bf16.msra.mxu0 0
        %701 = vmatprep.subr.bf16.mxu0 0
        %702 = vmatpush1.bf16.msra.mxu0 0
        %703 = vmatprep.subr.bf16.mxu0 0
        %704 = vmatpush1.bf16.msra.mxu0 0
        %705 = vmatprep.subr.bf16.mxu0 0
        %706 = vmatpush1.bf16.msra.mxu0 0
        %707 = vmatprep.subr.bf16.mxu0 0
        %708 = vmatpush1.bf16.msra.mxu0 0
        %709 = vmatprep.subr.bf16.mxu0 0
        %710 = vmatpush1.bf16.msra.mxu0 0
        %711 = vmatprep.subr.bf16.mxu0 0
        %712 = vmatpush1.bf16.msra.mxu0 0
        %713 = vmatprep.mubr.bf16.mxu0 0
        %714 = vmatmul.mubr.bf16.gmra.mrb[0].mxu0 %v679
        %v715 = vpop.f32.mrb[0].mxu0
        %v716 = vadd.f32 0.0, %v715
        %v717 = vpop.f32.mrb[0].mxu0
        %v718 = vpop.f32.mrb[0].mxu0
        %v719 = vadd.f32 0.0, %v718
        %v720 = vpop.f32.mrb[0].mxu0
        %721 = vdwg.mxu0
        %v722 = vadd.f32 %v620, %v716
        %v723 = vadd.f32 %v621, %v719
        %s724 = scalar_lea.vmem [#allocation3], 10
        %v725 = vld [vmem:[%s724] sm:$0x3]
        %v727 = vsel %vm220, %v725, 0
        %729 = vmatprep.subr.bf16.mxu0 0
        %730 = vmatpush1.bf16.msra.mxu0 %v727
        %731 = vmatprep.subr.bf16.mxu0 0
        %732 = vmatpush1.bf16.msra.mxu0 0
        %733 = vmatprep.subr.bf16.mxu0 0
        %734 = vmatpush1.bf16.msra.mxu0 0
        %735 = vmatprep.subr.bf16.mxu0 0
        %736 = vmatpush1.bf16.msra.mxu0 0
        %737 = vmatprep.subr.bf16.mxu0 0
        %738 = vmatpush1.bf16.msra.mxu0 0
        %739 = vmatprep.subr.bf16.mxu0 0
        %740 = vmatpush1.bf16.msra.mxu0 0
        %741 = vmatprep.subr.bf16.mxu0 0
        %742 = vmatpush1.bf16.msra.mxu0 0
        %743 = vmatprep.subr.bf16.mxu0 0
        %744 = vmatpush1.bf16.msra.mxu0 0
        %745 = vmatprep.subr.bf16.mxu0 0
        %746 = vmatpush1.bf16.msra.mxu0 0
        %747 = vmatprep.subr.bf16.mxu0 0
        %748 = vmatpush1.bf16.msra.mxu0 0
        %749 = vmatprep.subr.bf16.mxu0 0
        %750 = vmatpush1.bf16.msra.mxu0 0
        %751 = vmatprep.subr.bf16.mxu0 0
        %752 = vmatpush1.bf16.msra.mxu0 0
        %753 = vmatprep.subr.bf16.mxu0 0
        %754 = vmatpush1.bf16.msra.mxu0 0
        %755 = vmatprep.subr.bf16.mxu0 0
        %756 = vmatpush1.bf16.msra.mxu0 0
        %757 = vmatprep.subr.bf16.mxu0 0
        %758 = vmatpush1.bf16.msra.mxu0 0
        %759 = vmatprep.subr.bf16.mxu0 0
        %760 = vmatpush1.bf16.msra.mxu0 0
        %761 = vmatprep.mubr.bf16.mxu0 0
        %762 = vmatmul.mubr.bf16.gmra.mrb[0].mxu0 %v577
        %v763 = vpop.f32.mrb[0].mxu0
        %v764 = vadd.f32 0.0, %v763
        %v765 = vpop.f32.mrb[0].mxu0
        %v766 = vpop.f32.mrb[0].mxu0
        %v767 = vadd.f32 0.0, %v766
        %v768 = vpop.f32.mrb[0].mxu0
        %769 = vdwg.mxu0
        %v770 = vadd.f32 %v668, %v764
        %v771 = vadd.f32 %v669, %v767
        %s772 = scalar_lea.vmem %s193, 56
        %v773 = vld [vmem:[%s772] sm:$0xf]
        %v774 = vld [vmem:[%s772 + $0x4] sm:$0xf]
        %v777 = vunpack.c.l.b16 %v773
        %v778 = vunpack.c.l.b16 %v774
        %v779 = vpack.c.b16 %v778, %v777
        %v781 = vsel %vm216, %v779, 0
        %783 = vmatprep.subr.bf16.mxu0 0
        %784 = vmatpush1.bf16.msra.mxu0 %v727
        %785 = vmatprep.subr.bf16.mxu0 0
        %786 = vmatpush1.bf16.msra.mxu0 0
        %787 = vmatprep.subr.bf16.mxu0 0
        %788 = vmatpush1.bf16.msra.mxu0 0
        %789 = vmatprep.subr.bf16.mxu0 0
        %790 = vmatpush1.bf16.msra.mxu0 0
        %791 = vmatprep.subr.bf16.mxu0 0
        %792 = vmatpush1.bf16.msra.mxu0 0
        %793 = vmatprep.subr.bf16.mxu0 0
        %794 = vmatpush1.bf16.msra.mxu0 0
        %795 = vmatprep.subr.bf16.mxu0 0
        %796 = vmatpush1.bf16.msra.mxu0 0
        %797 = vmatprep.subr.bf16.mxu0 0
        %798 = vmatpush1.bf16.msra.mxu0 0
        %799 = vmatprep.subr.bf16.mxu0 0
        %800 = vmatpush1.bf16.msra.mxu0 0
        %801 = vmatprep.subr.bf16.mxu0 0
        %802 = vmatpush1.bf16.msra.mxu0 0
        %803 = vmatprep.subr.bf16.mxu0 0
        %804 = vmatpush1.bf16.msra.mxu0 0
        %805 = vmatprep.subr.bf16.mxu0 0
        %806 = vmatpush1.bf16.msra.mxu0 0
        %807 = vmatprep.subr.bf16.mxu0 0
        %808 = vmatpush1.bf16.msra.mxu0 0
        %809 = vmatprep.subr.bf16.mxu0 0
        %810 = vmatpush1.bf16.msra.mxu0 0
        %811 = vmatprep.subr.bf16.mxu0 0
        %812 = vmatpush1.bf16.msra.mxu0 0
        %813 = vmatprep.subr.bf16.mxu0 0
        %814 = vmatpush1.bf16.msra.mxu0 0
        %815 = vmatprep.mubr.bf16.mxu0 0
        %816 = vmatmul.mubr.bf16.gmra.mrb[0].mxu0 %v781
        %v817 = vpop.f32.mrb[0].mxu0
        %v818 = vadd.f32 0.0, %v817
        %v819 = vpop.f32.mrb[0].mxu0
        %v820 = vpop.f32.mrb[0].mxu0
        %v821 = vadd.f32 0.0, %v820
        %v822 = vpop.f32.mrb[0].mxu0
        %823 = vdwg.mxu0
        %v824 = vadd.f32 %v722, %v818
        %v825 = vadd.f32 %v723, %v821
        %s826 = scalar_lea.vmem [#allocation3], 12
        %v827 = vld [vmem:[%s826] sm:$0x3]
        %v829 = vsel %vm220, %v827, 0
        %831 = vmatprep.subr.bf16.mxu0 0
        %832 = vmatpush1.bf16.msra.mxu0 %v829
        %833 = vmatprep.subr.bf16.mxu0 0
        %834 = vmatpush1.bf16.msra.mxu0 0
        %835 = vmatprep.subr.bf16.mxu0 0
        %836 = vmatpush1.bf16.msra.mxu0 0
        %837 = vmatprep.subr.bf16.mxu0 0
        %838 = vmatpush1.bf16.msra.mxu0 0
        %839 = vmatprep.subr.bf16.mxu0 0
        %840 = vmatpush1.bf16.msra.mxu0 0
        %841 = vmatprep.subr.bf16.mxu0 0
        %842 = vmatpush1.bf16.msra.mxu0 0
        %843 = vmatprep.subr.bf16.mxu0 0
        %844 = vmatpush1.bf16.msra.mxu0 0
        %845 = vmatprep.subr.bf16.mxu0 0
        %846 = vmatpush1.bf16.msra.mxu0 0
        %847 = vmatprep.subr.bf16.mxu0 0
        %848 = vmatpush1.bf16.msra.mxu0 0
        %849 = vmatprep.subr.bf16.mxu0 0
        %850 = vmatpush1.bf16.msra.mxu0 0
        %851 = vmatprep.subr.bf16.mxu0 0
        %852 = vmatpush1.bf16.msra.mxu0 0
        %853 = vmatprep.subr.bf16.mxu0 0
        %854 = vmatpush1.bf16.msra.mxu0 0
        %855 = vmatprep.subr.bf16.mxu0 0
        %856 = vmatpush1.bf16.msra.mxu0 0
        %857 = vmatprep.subr.bf16.mxu0 0
        %858 = vmatpush1.bf16.msra.mxu0 0
        %859 = vmatprep.subr.bf16.mxu0 0
        %860 = vmatpush1.bf16.msra.mxu0 0
        %861 = vmatprep.subr.bf16.mxu0 0
        %862 = vmatpush1.bf16.msra.mxu0 0
        %863 = vmatprep.mubr.bf16.mxu0 0
        %864 = vmatmul.mubr.bf16.gmra.mrb[0].mxu0 %v679
        %v865 = vpop.f32.mrb[0].mxu0
        %v866 = vadd.f32 0.0, %v865
        %v867 = vpop.f32.mrb[0].mxu0
        %v868 = vpop.f32.mrb[0].mxu0
        %v869 = vadd.f32 0.0, %v868
        %v870 = vpop.f32.mrb[0].mxu0
        %871 = vdwg.mxu0
        %v872 = vadd.f32 %v770, %v866
        %v873 = vadd.f32 %v771, %v869
        %s874 = scalar_lea.vmem %s193, 64
        %v875 = vld [vmem:[%s874] sm:$0xf]
        %v876 = vld [vmem:[%s874 + $0x4] sm:$0xf]
        %v879 = vunpack.c.l.b16 %v875
        %v880 = vunpack.c.l.b16 %v876
        %v881 = vpack.c.b16 %v880, %v879
        %v883 = vsel %vm216, %v881, 0
        %885 = vmatprep.subr.bf16.mxu0 0
        %886 = vmatpush1.bf16.msra.mxu0 %v829
        %887 = vmatprep.subr.bf16.mxu0 0
        %888 = vmatpush1.bf16.msra.mxu0 0
        %889 = vmatprep.subr.bf16.mxu0 0
        %890 = vmatpush1.bf16.msra.mxu0 0
        %891 = vmatprep.subr.bf16.mxu0 0
        %892 = vmatpush1.bf16.msra.mxu0 0
        %893 = vmatprep.subr.bf16.mxu0 0
        %894 = vmatpush1.bf16.msra.mxu0 0
        %895 = vmatprep.subr.bf16.mxu0 0
        %896 = vmatpush1.bf16.msra.mxu0 0
        %897 = vmatprep.subr.bf16.mxu0 0
        %898 = vmatpush1.bf16.msra.mxu0 0
        %899 = vmatprep.subr.bf16.mxu0 0
        %900 = vmatpush1.bf16.msra.mxu0 0
        %901 = vmatprep.subr.bf16.mxu0 0
        %902 = vmatpush1.bf16.msra.mxu0 0
        %903 = vmatprep.subr.bf16.mxu0 0
        %904 = vmatpush1.bf16.msra.mxu0 0
        %905 = vmatprep.subr.bf16.mxu0 0
        %906 = vmatpush1.bf16.msra.mxu0 0
        %907 = vmatprep.subr.bf16.mxu0 0
        %908 = vmatpush1.bf16.msra.mxu0 0
        %909 = vmatprep.subr.bf16.mxu0 0
        %910 = vmatpush1.bf16.msra.mxu0 0
        %911 = vmatprep.subr.bf16.mxu0 0
        %912 = vmatpush1.bf16.msra.mxu0 0
        %913 = vmatprep.subr.bf16.mxu0 0
        %914 = vmatpush1.bf16.msra.mxu0 0
        %915 = vmatprep.subr.bf16.mxu0 0
        %916 = vmatpush1.bf16.msra.mxu0 0
        %917 = vmatprep.mubr.bf16.mxu0 0
        %918 = vmatmul.mubr.bf16.gmra.mrb[0].mxu0 %v883
        %v919 = vpop.f32.mrb[0].mxu0
        %v920 = vadd.f32 0.0, %v919
        %v921 = vpop.f32.mrb[0].mxu0
        %v922 = vpop.f32.mrb[0].mxu0
        %v923 = vadd.f32 0.0, %v922
        %v924 = vpop.f32.mrb[0].mxu0
        %925 = vdwg.mxu0
        %v926 = vadd.f32 %v824, %v920
        %v927 = vadd.f32 %v825, %v923
        %v928 = vld [vmem:[#allocation5] sm:$0x1]
        %v930 = vlaneseq
        %v931 = vshrl.u32 %v930, 7
        %v932 = vsub.s32 0, %v931
        %v933 = vrot.slane %v928, %v932
        %v935 = vadd.f32 %v872, %v933
        %v936 = vadd.f32 %v873, %v933
        %v937 = vmax.f32 %v935, 0.0
        %v938 = vmax.f32 %v936, 0.0
        %v939 = vadd.f32 %v926, %v933
        %v940 = vadd.f32 %v927, %v933
        %v941 = vmax.f32 %v939, 0.0
        %v942 = vmax.f32 %v940, 0.0
        %vm943 = vcmask 516096
        %944 = vst.msk [vmem:[#allocation2] sm:$0x1] %vm943, 0.0
        %vm945 = vcmask 523264
        %946 = vst.msk [vmem:[#allocation2 + $0x1] sm:$0xff] %vm945, %v941
        %vm947 = vcmask 522240
        %948 = vst.msk [vmem:[#allocation2 + $0x9] sm:$0x7f] %vm947, %v942
        %v949 = vld [vmem:[#allocation2] sm:$0xff]
        %v950 = vld [vmem:[#allocation2 + $0x8] sm:$0xff]
        %v951 = vmax.f32 %v949, %v937
        %v952 = vmax.f32 %v950, %v938
        %v953 = vmax.f32 %v951, %v941
        %v954 = vmax.f32 %v952, %v942
        %v955 = vpack.c.bf16 %v954, %v953
        %v957 = vunpack.c.l.b16 %v955
        %v958 = vunpack.c.h.b16 %v955
        %v959 = vpack.c.b16 %v957, %v957
        %v960 = vpack.c.b16 %v958, %v958
        %vm963 = vcmask 519168
        %964 = vst.msk [vmem:[%s198] sm:$0xf] %vm963, %v959
        %965 = vst.msk [vmem:[%s198 + $0x4] sm:$0xf] %vm963, %v960
        %p966 = scmp.lt.s32.totalorder %s16, 1
        %s967 = scalar_select %p966, %s16, 1
        %s968 = smul.addr %s967, 2
        %s969 = smul.addr %s968, 4
        %s970 = scalar_lea.vmem %s3, %s969
        // Predicated region
        $region41: #{resnet1d_forward.5} parent=31 // pred_check
          %p971 = pneg %p102
        $region42: #{resnet1d_forward.5} parent=31 // pred_check_branch
          %973 = sbr.rel (%p971) target = $region44
        $region43: #{resnet1d_forward.5} parent=31 // pred_region
          _
        $region44: #{resnet1d_forward.5} parent=31 // pred_fallthru
          _
      $region32: #{resnet1d_forward.5} parent=5 // pred_fallthru
        _
      %p974 = scmp.le.s32.totalorder 2, %s11
      // Predicated region
      $region45: #{resnet1d_forward.5} parent=5 // pred_check
        %p975 = pneg %p974
      $region46: #{resnet1d_forward.5} parent=5 // pred_check_branch
        %977 = sbr.rel (%p975) target = $region48
      $region47: #{resnet1d_forward.5} parent=5 // pred_region
        %s978 = ssub.s32 %s11, 2
        // Predicated region
        $region49: #{resnet1d_forward.5} parent=47 // pred_check
          %p979 = pneg %p108
        $region50: #{resnet1d_forward.5} parent=47 // pred_check_branch
          %981 = sbr.rel (%p979) target = $region52
        $region51: #{resnet1d_forward.5} parent=47 // pred_region
          %p982 = scmp.lt.s32.totalorder %s17, 1
          %s983 = scalar_select %p982, %s17, 1
          %s984 = smul.addr %s983, 2
          %s985 = smul.addr %s984, 4
          %s986 = scalar_lea.vmem %s3, %s985
        $region52: #{resnet1d_forward.5} parent=47 // pred_fallthru
          _
      $region48: #{resnet1d_forward.5} parent=5 // pred_fallthru
        _
    $region6: #{resnet1d_forward.5} parent=1 // loop_footer
      %s15 = sadd.s32 1, %s11
    $region7: #{resnet1d_forward.5} parent=1 // loop_footer_branch
      %10 = sbr.rel target = $region3
    $region8: #{resnet1d_forward.5} parent=1 // loop_exit
      _
    %987 = vsyncpa [#allocation4], 1
    %s988 = scalar_lea.sflag [#allocation4], 1
    %989 = vsyncpa %s988, 1
    %990 = vsyncpa [#allocation6], 1

// kernel: resnet1d_forward.6
$region0: #{resnet1d_forward.6}
  #allocation0 [shape = 'u32[]', space=smem, size = 0x4, offset = 0x4, fixed_abs, tag = 'smem constant byte address 0x4 - core index']
  #allocation1 [shape = 'u32[144,128]{1,0:T(1,128)}', space=vmem, size = 0x12000, scoped, tag = 'internal scratch']
  #allocation2 [shape = 'bf16[18,64]{1,0:T(8,128)(2,1)}', space=vmem, size = 0x1800, scoped, tag = 'scratch operand']
  %s0 = inlined_call_operand.vmem [shape: bf16[2,18,64], index: 0, kind: input, shape index: {}]
  %s1 = inlined_call_operand.hbm [shape: bf16[3,64,64], index: 1, kind: input, shape index: {}]
  %s2 = inlined_call_operand.hbm [shape: f32[1,64], index: 2, kind: input, shape index: {}]
  %s3 = inlined_call_operand.hbm [shape: bf16[3,64,64], index: 3, kind: input, shape index: {}]
  %s4 = inlined_call_operand.hbm [shape: f32[1,64], index: 4, kind: input, shape index: {}]
  %s5 = inlined_call_operand.vmem [shape: bf16[2,16,64], index: 5, kind: output, shape index: {}]
  %s6 = sld [smem:[#allocation0]]
  $region69: #{resnet1d_forward.6} parent=0
    _
  %s8 = ssub.s32 1, %s6
  %s9 = scalar_select 0, %s8, %s6
  $region1: #{resnet1d_forward.6} parent=0
    #allocation3 [shape = 'u8[49152]{0}', space=vmem, size = 0xc000, scoped, tag = 'input window, operand 1, single buffered']
    #allocation4 [shape = 's32[2]{0}', space=sflag, size = 0x8, scoped, tag = 'scoped memory for resnet1d_forward.6']
    #allocation5 [shape = 'u8[512]{0}', space=vmem, size = 0x400, scoped, tag = 'input window, operand 2, single buffered']
    #allocation6 [shape = 's32[1]{0}', space=sflag, size = 0x4, scoped, tag = 'scoped memory for resnet1d_forward.6']
    #allocation7 [shape = 'u8[49152]{0}', space=vmem, size = 0xc000, scoped, tag = 'input window, operand 3, single buffered']
    #allocation8 [shape = 'u8[512]{0}', space=vmem, size = 0x400, scoped, tag = 'input window, operand 4, single buffered']
    #allocation9 [shape = 's32[1]{0}', space=sflag, size = 0x4, scoped, tag = 'scoped memory for resnet1d_forward.6']
    %10 = vsyncpa [#allocation4], 0
    %11 = vsyncpa [#allocation6], 0
    %12 = vsyncpa [#allocation9], 0
    loop: start=0, step=1, limit=4
    $region2: #{resnet1d_forward.6} parent=1 // loop_pre_header
      _
    $region3: #{resnet1d_forward.6} parent=1 // loop_header
      %s14 = sphi 0, %s18
      %p15 = scmp.ge.s32.totalorder %s14, 4
      %s24 = sphi 0, %s26
      %s27 = sphi 0, %s24
      %s28 = sphi 0, %s27
      %s44 = sphi 0, %s28
      %s48 = sphi 0, %s48
      %s50 = sphi 0, %s48
      %s51 = sphi 0, %s50
      %s65 = sphi 0, %s51
      %s69 = sphi 0, %s69
      %s71 = sphi 0, %s69
      %s72 = sphi 0, %s71
      %s86 = sphi 0, %s72
      %s90 = sphi 0, %s90
      %s92 = sphi 0, %s90
      %s93 = sphi 0, %s92
      %s107 = sphi 0, %s93
      %s111 = sphi 0, %s111
      %s113 = sphi 0, %s111
      %s114 = sphi 0, %s113
      %s128 = sphi 0, %s114
      %s134 = sphi 0, %s136
      %s137 = sphi 0, %s134
      %s138 = sphi 0, %s137
      %s154 = sphi 0, %s138
    $region4: #{resnet1d_forward.6} parent=1 // loop_header_branch
      %17 = sbr.rel (%p15) target = $region8
    $region5: #{resnet1d_forward.6} parent=1 // loop_body
      %s19 = ssub.s32 %s14, 1
      %s20 = ssub.s32 %s14, 2
      %s21 = sadd.s32 %s14, 1
      %s22 = ssub.s32 %s14, %s21
      %p23 = scmp.eq.s32.totalorder %s22, 0
      %s25 = sadd.s32 %s24, 1
      %s26 = scalar_select %p23, %s24, %s25
      %p29 = pneg %p23
      %p30 = scmp.eq.s32.totalorder %s14, 1
      %p31 = por %p29, %p30
      %p32 = scmp.ne.s32.totalorder %s24, %s27
      %p33 = scmp.eq.s32.totalorder %s14, 0
      %p34 = por %p32, %p33
      %p35 = scmp.ne.s32.totalorder %s24, %s27
      %p36 = scmp.eq.s32.totalorder %s19, 1
      %p37 = por %p35, %p36
      %p38 = scmp.ne.s32.totalorder %s27, %s28
      %p39 = scmp.eq.s32.totalorder %s19, 0
      %p40 = por %p38, %p39
      %p41 = scmp.ne.s32.totalorder %s27, %s28
      %p42 = scmp.eq.s32.totalorder %s20, 1
      %p43 = por %p41, %p42
      %p45 = scmp.ne.s32.totalorder %s28, %s44
      %p46 = scmp.eq.s32.totalorder %s20, 0
      %p47 = por %p45, %p46
      %s49 = sadd.s32 %s48, 1
      %p52 = scmp.eq.s32.totalorder %s14, 1
      %p53 = scmp.ne.s32.totalorder %s48, %s50
      %p54 = scmp.eq.s32.totalorder %s14, 0
      %p55 = por %p53, %p54
      %p56 = scmp.ne.s32.totalorder %s48, %s50
      %p57 = scmp.eq.s32.totalorder %s19, 1
      %p58 = por %p56, %p57
      %p59 = scmp.ne.s32.totalorder %s50, %s51
      %p60 = scmp.eq.s32.totalorder %s19, 0
      %p61 = por %p59, %p60
      %p62 = scmp.ne.s32.totalorder %s50, %s51
      %p63 = scmp.eq.s32.totalorder %s20, 1
      %p64 = por %p62, %p63
      %p66 = scmp.ne.s32.totalorder %s51, %s65
      %p67 = scmp.eq.s32.totalorder %s20, 0
      %p68 = por %p66, %p67
      %s70 = sadd.s32 %s69, 1
      %p73 = scmp.eq.s32.totalorder %s14, 1
      %p74 = scmp.ne.s32.totalorder %s69, %s71
      %p75 = scmp.eq.s32.totalorder %s14, 0
      %p76 = por %p74, %p75
      %p77 = scmp.ne.s32.totalorder %s69, %s71
      %p78 = scmp.eq.s32.totalorder %s19, 1
      %p79 = por %p77, %p78
      %p80 = scmp.ne.s32.totalorder %s71, %s72
      %p81 = scmp.eq.s32.totalorder %s19, 0
      %p82 = por %p80, %p81
      %p83 = scmp.ne.s32.totalorder %s71, %s72
      %p84 = scmp.eq.s32.totalorder %s20, 1
      %p85 = por %p83, %p84
      %p87 = scmp.ne.s32.totalorder %s72, %s86
      %p88 = scmp.eq.s32.totalorder %s20, 0
      %p89 = por %p87, %p88
      %s91 = sadd.s32 %s90, 1
      %p94 = scmp.eq.s32.totalorder %s14, 1
      %p95 = scmp.ne.s32.totalorder %s90, %s92
      %p96 = scmp.eq.s32.totalorder %s14, 0
      %p97 = por %p95, %p96
      %p98 = scmp.ne.s32.totalorder %s90, %s92
      %p99 = scmp.eq.s32.totalorder %s19, 1
      %p100 = por %p98, %p99
      %p101 = scmp.ne.s32.totalorder %s92, %s93
      %p102 = scmp.eq.s32.totalorder %s19, 0
      %p103 = por %p101, %p102
      %p104 = scmp.ne.s32.totalorder %s92, %s93
      %p105 = scmp.eq.s32.totalorder %s20, 1
      %p106 = por %p104, %p105
      %p108 = scmp.ne.s32.totalorder %s93, %s107
      %p109 = scmp.eq.s32.totalorder %s20, 0
      %p110 = por %p108, %p109
      %s112 = sadd.s32 %s111, 1
      %p115 = scmp.eq.s32.totalorder %s14, 1
      %p116 = scmp.ne.s32.totalorder %s111, %s113
      %p117 = scmp.eq.s32.totalorder %s14, 0
      %p118 = por %p116, %p117
      %p119 = scmp.ne.s32.totalorder %s111, %s113
      %p120 = scmp.eq.s32.totalorder %s19, 1
      %p121 = por %p119, %p120
      %p122 = scmp.ne.s32.totalorder %s113, %s114
      %p123 = scmp.eq.s32.totalorder %s19, 0
      %p124 = por %p122, %p123
      %p125 = scmp.ne.s32.totalorder %s113, %s114
      %p126 = scmp.eq.s32.totalorder %s20, 1
      %p127 = por %p125, %p126
      %p129 = scmp.ne.s32.totalorder %s114, %s128
      %p130 = scmp.eq.s32.totalorder %s20, 0
      %p131 = por %p129, %p130
      %s132 = ssub.s32 %s14, %s21
      %p133 = scmp.eq.s32.totalorder %s132, 0
      %s135 = sadd.s32 %s134, 1
      %s136 = scalar_select %p133, %s134, %s135
      %p139 = pneg %p133
      %p140 = scmp.eq.s32.totalorder %s14, 1
      %p141 = por %p139, %p140
      %p142 = scmp.ne.s32.totalorder %s134, %s137
      %p143 = scmp.eq.s32.totalorder %s14, 0
      %p144 = por %p142, %p143
      %p145 = scmp.ne.s32.totalorder %s134, %s137
      %p146 = scmp.eq.s32.totalorder %s19, 1
      %p147 = por %p145, %p146
      %p148 = scmp.ne.s32.totalorder %s137, %s138
      %p149 = scmp.eq.s32.totalorder %s19, 0
      %p150 = por %p148, %p149
      %p151 = scmp.ne.s32.totalorder %s137, %s138
      %p152 = scmp.eq.s32.totalorder %s20, 1
      %p153 = por %p151, %p152
      %p155 = scmp.ne.s32.totalorder %s138, %s154
      %p156 = scmp.eq.s32.totalorder %s20, 0
      %p157 = por %p155, %p156
      %p158 = scmp.le.s32.totalorder 1, %s14
      %p159 = scmp.lt.s32.totalorder %s14, 3
      %p160 = pnand %p158, %p159
      %p161 = pneg %p160
      // Predicated region
      $region9: #{resnet1d_forward.6} parent=5 // pred_check
        _
      $region10: #{resnet1d_forward.6} parent=5 // pred_check_branch
        %163 = sbr.rel (%p160) target = $region12
      $region11: #{resnet1d_forward.6} parent=5 // pred_region
        %s164 = ssub.s32 %s14, 1
        // Predicated region
        $region13: #{resnet1d_forward.6} parent=11 // pred_check
          %p165 = pneg %p61
        $region14: #{resnet1d_forward.6} parent=11 // pred_check_branch
          %167 = sbr.rel (%p165) target = $region16
        $region15: #{resnet1d_forward.6} parent=11 // pred_region
          %s169 = ssub.s32 1536, 1536
          %170 = vsyncadd [#allocation4], %s169
          %s171 = sshll.u32 [#allocation3], 4
          %s172 = int_to_ptr.vmem [resolvable:$true] %s171
          %177 = dma.hbm_to_vmem [thread:$0]  %s1, 1536, %s172, [#allocation4], 64, 64, 4
        $region16: #{resnet1d_forward.6} parent=11 // pred_fallthru
          _
        // Predicated region
        $region17: #{resnet1d_forward.6} parent=11 // pred_check
          %p178 = pneg %p82
        $region18: #{resnet1d_forward.6} parent=11 // pred_check_branch
          %180 = sbr.rel (%p178) target = $region20
        $region19: #{resnet1d_forward.6} parent=11 // pred_region
          %s182 = ssub.s32 16, 16
          %183 = vsyncadd [#allocation6], %s182
          %s185 = sshll.u32 [#allocation5], 4
          %s186 = int_to_ptr.vmem [resolvable:$true] %s185
          %188 = dma.hbm_to_vmem [thread:$0]  %s2, 16, %s186, [#allocation6]
        $region20: #{resnet1d_forward.6} parent=11 // pred_fallthru
          _
        // Predicated region
        $region21: #{resnet1d_forward.6} parent=11 // pred_check
          %p189 = pneg %p103
        $region22: #{resnet1d_forward.6} parent=11 // pred_check_branch
          %191 = sbr.rel (%p189) target = $region24
        $region23: #{resnet1d_forward.6} parent=11 // pred_region
          %s193 = ssub.s32 1536, 1536
          %194 = vsyncadd [#allocation6], %s193
          %s195 = sshll.u32 [#allocation7], 4
          %s196 = int_to_ptr.vmem [resolvable:$true] %s195
          %201 = dma.hbm_to_vmem [thread:$0]  %s3, 1536, %s196, [#allocation6], 64, 64, 4
        $region24: #{resnet1d_forward.6} parent=11 // pred_fallthru
          _
        // Predicated region
        $region25: #{resnet1d_forward.6} parent=11 // pred_check
          %p202 = pneg %p124
        $region26: #{resnet1d_forward.6} parent=11 // pred_check_branch
          %204 = sbr.rel (%p202) target = $region28
        $region27: #{resnet1d_forward.6} parent=11 // pred_region
          %s206 = ssub.s32 16, 16
          %207 = vsyncadd [#allocation9], %s206
          %s209 = sshll.u32 [#allocation8], 4
          %s210 = int_to_ptr.vmem [resolvable:$true] %s209
          %212 = dma.hbm_to_vmem [thread:$0]  %s4, 16, %s210, [#allocation9]
        $region28: #{resnet1d_forward.6} parent=11 // pred_fallthru
          _
      $region12: #{resnet1d_forward.6} parent=5 // pred_fallthru
        _
      %p213 = scmp.lt.s32.totalorder %s14, 2
      // Predicated region
      $region29: #{resnet1d_forward.6} parent=5 // pred_check
        %p214 = pneg %p213
      $region30: #{resnet1d_forward.6} parent=5 // pred_check_branch
        %216 = sbr.rel (%p214) target = $region32
      $region31: #{resnet1d_forward.6} parent=5 // pred_region
        // Predicated region
        $region33: #{resnet1d_forward.6} parent=31 // pred_check
          %p217 = pneg %p34
        $region34: #{resnet1d_forward.6} parent=31 // pred_check_branch
          %219 = sbr.rel (%p217) target = $region36
        $region35: #{resnet1d_forward.6} parent=31 // pred_region
          %p220 = scmp.lt.s32.totalorder %s14, 1
          %s221 = scalar_select %p220, %s14, 1
          %s222 = smul.addr %s221, 3
          %s223 = smul.addr %s222, 4
          %s224 = scalar_lea.vmem %s0, %s223
        $region36: #{resnet1d_forward.6} parent=31 // pred_fallthru
          _
      $region32: #{resnet1d_forward.6} parent=5 // pred_fallthru
        _
      %p225 = scmp.le.s32.totalorder 1, %s14
      %p226 = scmp.lt.s32.totalorder %s14, 3
      %p227 = pnand %p225, %p226
      %p228 = pneg %p227
      // Predicated region
      $region37: #{resnet1d_forward.6} parent=5 // pred_check
        _
      $region38: #{resnet1d_forward.6} parent=5 // pred_check_branch
        %230 = sbr.rel (%p227) target = $region40
      $region39: #{resnet1d_forward.6} parent=5 // pred_region
        %s231 = ssub.s32 %s14, 1
        // Predicated region
        $region41: #{resnet1d_forward.6} parent=39 // pred_check
          %p232 = pneg %p61
        $region42: #{resnet1d_forward.6} parent=39 // pred_check_branch
          %234 = sbr.rel (%p232) target = $region44
        $region43: #{resnet1d_forward.6} parent=39 // pred_region
          %235 = dma.done [#allocation4], 1536
        $region44: #{resnet1d_forward.6} parent=39 // pred_fallthru
          _
        // Predicated region
        $region45: #{resnet1d_forward.6} parent=39 // pred_check
          %p236 = pneg %p82
        $region46: #{resnet1d_forward.6} parent=39 // pred_check_branch
          %238 = sbr.rel (%p236) target = $region48
        $region47: #{resnet1d_forward.6} parent=39 // pred_region
          %239 = dma.done [#allocation6], 16
        $region48: #{resnet1d_forward.6} parent=39 // pred_fallthru
          _
        // Predicated region
        $region49: #{resnet1d_forward.6} parent=39 // pred_check
          %p240 = pneg %p103
        $region50: #{resnet1d_forward.6} parent=39 // pred_check_branch
          %242 = sbr.rel (%p240) target = $region52
        $region51: #{resnet1d_forward.6} parent=39 // pred_region
          %243 = dma.done [#allocation6], 1536
        $region52: #{resnet1d_forward.6} parent=39 // pred_fallthru
          _
        // Predicated region
        $region53: #{resnet1d_forward.6} parent=39 // pred_check
          %p244 = pneg %p124
        $region54: #{resnet1d_forward.6} parent=39 // pred_check_branch
          %246 = sbr.rel (%p244) target = $region56
        $region55: #{resnet1d_forward.6} parent=39 // pred_region
          %247 = dma.done [#allocation9], 16
        $region56: #{resnet1d_forward.6} parent=39 // pred_fallthru
          _
        %p248 = scmp.lt.s32.totalorder %s19, 1
        %s249 = scalar_select %p248, %s19, 1
        %s250 = smul.addr %s249, 3
        %s251 = smul.addr %s250, 4
        %s252 = scalar_lea.vmem %s0, %s251
        %p253 = pneg %p40
        %p254 = pneg %p37
        %p255 = pneg %p61
        %p256 = pneg %p58
        %p257 = pneg %p82
        %p258 = pneg %p79
        %p259 = pneg %p103
        %p260 = pneg %p100
        %p261 = pneg %p124
        %p262 = pneg %p121
        %p263 = pneg %p150
        %p264 = pneg %p147
        %p265 = scmp.lt.s32.totalorder %s19, 1
        %s266 = scalar_select %p265, %s19, 1
        %s267 = smul.addr %s266, 2
        %s268 = smul.addr %s267, 4
        %s269 = scalar_lea.vmem %s5, %s268
        %p270 = scmp.lt.s32.totalorder %s19, 1
        %s271 = scalar_select %p270, %s19, 1
        %s272 = smul.addr %s271, 3
        %s273 = smul.addr %s272, 4
        %s274 = scalar_lea.vmem %s0, %s273
        %p275 = scmp.lt.s32.totalorder %s19, 1
        %s276 = scalar_select %p275, %s19, 1
        %s277 = smul.addr %s276, 2
        %s278 = smul.addr %s277, 4
        %s279 = scalar_lea.vmem %s5, %s278
        %v281 = vld [vmem:[%s274] sm:$0xf]
        %v282 = vld [vmem:[%s274 + $0x4] sm:$0xf]
        %v283 = vld [vmem:[%s274 + $0x8] sm:$0x1]
        %v284 = vld [vmem:[%s274] sm:$0xe]
        %v285 = vld [vmem:[#allocation3] sm:$0xf]
        %v286 = vld [vmem:[#allocation3 + $0x4] sm:$0xf]
        %v287 = vld [vmem:[#allocation3 + $0x8] sm:$0xf]
        %v288 = vld [vmem:[#allocation3 + $0xc] sm:$0xf]
        %v289 = vld [vmem:[#allocation3 + $0x10] sm:$0xf]
        %v290 = vld [vmem:[#allocation3 + $0x14] sm:$0xf]
        %v291 = vld [vmem:[#allocation3 + $0x18] sm:$0xf]
        %v292 = vld [vmem:[#allocation3 + $0x1c] sm:$0xf]
        %s293 = scalar_lea.vmem [#allocation3], 32
        %v294 = vld [vmem:[%s293] sm:$0xf]
        %v295 = vld [vmem:[%s293 + $0x4] sm:$0xf]
        %v296 = vld [vmem:[%s293 + $0x8] sm:$0xf]
        %v297 = vld [vmem:[%s293 + $0xc] sm:$0xf]
        %v298 = vld [vmem:[%s293 + $0x10] sm:$0xf]
        %v299 = vld [vmem:[%s293 + $0x14] sm:$0xf]
        %v300 = vld [vmem:[%s293 + $0x18] sm:$0xf]
        %v301 = vld [vmem:[%s293 + $0x1c] sm:$0xf]
        %v305 = vunpack.c.l.b16 %v281
        %v306 = vunpack.c.l.b16 %v282
        %v307 = vunpack.c.l.b16 %v283
        %v308 = vpack.c.b16 %v306, %v305
        %v309 = vpack.c.b16 %v307, %v307
        %vm310 = vsmask.f32 7424
        %v312 = vshrl.u32 %v308, 16
        %v314 = vshll.u32 %v308, 16
        %v316 = vrot.slane %v314, 1
        %v317 = vor.u32 %v312, %v316
        %v319 = vshll.u32 %v309, 16
        %v321 = vrot.slane %v319, 1
        %v322 = vsel %vm310, %v317, %v321
        %v331 = vunpack.c.l.b16 %v294
        %v332 = vunpack.c.l.b16 %v295
        %v333 = vunpack.c.l.b16 %v296
        %v334 = vunpack.c.l.b16 %v297
        %v335 = vunpack.c.l.b16 %v298
        %v336 = vunpack.c.l.b16 %v299
        %v337 = vunpack.c.l.b16 %v300
        %v338 = vunpack.c.l.b16 %v301
        %v339 = vpack.c.b16 %v332, %v331
        %v340 = vpack.c.b16 %v334, %v333
        %v341 = vpack.c.b16 %v336, %v335
        %v342 = vpack.c.b16 %v338, %v337
        %vm347 = vcmask 523264
        %v349 = vsel %vm347, %v322, 0
        %351 = vmatprep.subr.bf16.mxu0 0
        %352 = vmatpush1.bf16.msra.mxu0 %v339
        %353 = vmatprep.subr.bf16.mxu0 0
        %354 = vmatpush1.bf16.msra.mxu0 %v340
        %355 = vmatprep.subr.bf16.mxu0 0
        %356 = vmatpush1.bf16.msra.mxu0 %v341
        %357 = vmatprep.subr.bf16.mxu0 0
        %358 = vmatpush1.bf16.msra.mxu0 %v342
        %359 = vmatprep.subr.bf16.mxu0 0
        %360 = vmatpush1.bf16.msra.mxu0 0
        %361 = vmatprep.subr.bf16.mxu0 0
        %362 = vmatpush1.bf16.msra.mxu0 0
        %363 = vmatprep.subr.bf16.mxu0 0
        %364 = vmatpush1.bf16.msra.mxu0 0
        %365 = vmatprep.subr.bf16.mxu0 0
        %366 = vmatpush1.bf16.msra.mxu0 0
        %367 = vmatprep.subr.bf16.mxu0 0
        %368 = vmatpush1.bf16.msra.mxu0 0
        %369 = vmatprep.subr.bf16.mxu0 0
        %370 = vmatpush1.bf16.msra.mxu0 0
        %371 = vmatprep.subr.bf16.mxu0 0
        %372 = vmatpush1.bf16.msra.mxu0 0
        %373 = vmatprep.subr.bf16.mxu0 0
        %374 = vmatpush1.bf16.msra.mxu0 0
        %375 = vmatprep.subr.bf16.mxu0 0
        %376 = vmatpush1.bf16.msra.mxu0 0
        %377 = vmatprep.subr.bf16.mxu0 0
        %378 = vmatpush1.bf16.msra.mxu0 0
        %379 = vmatprep.subr.bf16.mxu0 0
        %380 = vmatpush1.bf16.msra.mxu0 0
        %381 = vmatprep.subr.bf16.mxu0 0
        %382 = vmatpush1.bf16.msra.mxu0 0
        %383 = vmatprep.mubr.bf16.mxu0 0
        %384 = vmatmul.mubr.bf16.gmra.mrb[0].mxu0 %v349
        %v385 = vpop.f32.mrb[0].mxu0
        %v386 = vadd.f32 0.0, %v385
        %v387 = vpop.f32.mrb[0].mxu0
        %v388 = vpop.f32.mrb[0].mxu0
        %v389 = vadd.f32 0.0, %v388
        %v390 = vpop.f32.mrb[0].mxu0
        %391 = vdwg.mxu0
        %v400 = vunpack.c.l.b16 %v285
        %v401 = vunpack.c.l.b16 %v286
        %v402 = vunpack.c.l.b16 %v287
        %v403 = vunpack.c.l.b16 %v288
        %v404 = vunpack.c.l.b16 %v289
        %v405 = vunpack.c.l.b16 %v290
        %v406 = vunpack.c.l.b16 %v291
        %v407 = vunpack.c.l.b16 %v292
        %v408 = vpack.c.b16 %v401, %v400
        %v409 = vpack.c.b16 %v403, %v402
        %v410 = vpack.c.b16 %v405, %v404
        %v411 = vpack.c.b16 %v407, %v406
        %v416 = vsel %vm347, %v308, 0
        %418 = vmatprep.subr.bf16.mxu0 0
        %419 = vmatpush1.bf16.msra.mxu0 %v408
        %420 = vmatprep.subr.bf16.mxu0 0
        %421 = vmatpush1.bf16.msra.mxu0 %v409
        %422 = vmatprep.subr.bf16.mxu0 0
        %423 = vmatpush1.bf16.msra.mxu0 %v410
        %424 = vmatprep.subr.bf16.mxu0 0
        %425 = vmatpush1.bf16.msra.mxu0 %v411
        %426 = vmatprep.subr.bf16.mxu0 0
        %427 = vmatpush1.bf16.msra.mxu0 0
        %428 = vmatprep.subr.bf16.mxu0 0
        %429 = vmatpush1.bf16.msra.mxu0 0
        %430 = vmatprep.subr.bf16.mxu0 0
        %431 = vmatpush1.bf16.msra.mxu0 0
        %432 = vmatprep.subr.bf16.mxu0 0
        %433 = vmatpush1.bf16.msra.mxu0 0
        %434 = vmatprep.subr.bf16.mxu0 0
        %435 = vmatpush1.bf16.msra.mxu0 0
        %436 = vmatprep.subr.bf16.mxu0 0
        %437 = vmatpush1.bf16.msra.mxu0 0
        %438 = vmatprep.subr.bf16.mxu0 0
        %439 = vmatpush1.bf16.msra.mxu0 0
        %440 = vmatprep.subr.bf16.mxu0 0
        %441 = vmatpush1.bf16.msra.mxu0 0
        %442 = vmatprep.subr.bf16.mxu0 0
        %443 = vmatpush1.bf16.msra.mxu0 0
        %444 = vmatprep.subr.bf16.mxu0 0
        %445 = vmatpush1.bf16.msra.mxu0 0
        %446 = vmatprep.subr.bf16.mxu0 0
        %447 = vmatpush1.bf16.msra.mxu0 0
        %448 = vmatprep.subr.bf16.mxu0 0
        %449 = vmatpush1.bf16.msra.mxu0 0
        %450 = vmatprep.mubr.bf16.mxu0 0
        %451 = vmatmul.mubr.bf16.gmra.mrb[0].mxu0 %v416
        %v452 = vpop.f32.mrb[0].mxu0
        %v453 = vadd.f32 %v386, %v452
        %v454 = vpop.f32.mrb[0].mxu0
        %v455 = vpop.f32.mrb[0].mxu0
        %v456 = vadd.f32 %v389, %v455
        %v457 = vpop.f32.mrb[0].mxu0
        %458 = vdwg.mxu0
        %s459 = scalar_lea.vmem [#allocation3], 64
        %v460 = vld [vmem:[%s459] sm:$0xf]
        %v461 = vld [vmem:[%s459 + $0x4] sm:$0xf]
        %v462 = vld [vmem:[%s459 + $0x8] sm:$0xf]
        %v463 = vld [vmem:[%s459 + $0xc] sm:$0xf]
        %v464 = vld [vmem:[%s459 + $0x10] sm:$0xf]
        %v465 = vld [vmem:[%s459 + $0x14] sm:$0xf]
        %v466 = vld [vmem:[%s459 + $0x18] sm:$0xf]
        %v467 = vld [vmem:[%s459 + $0x1c] sm:$0xf]
        %v469 = vunpack.c.l.b16 %v284
        %v470 = vpack.c.b16 %v306, %v469
        %vm471 = vcmask 1046528
        %v472 = vrot.slane %v470, 1
        %v473 = vrot.slane %v309, 1
        %v474 = vsel %vm471, %v472, %v473
        %v483 = vunpack.c.l.b16 %v460
        %v484 = vunpack.c.l.b16 %v461
        %v485 = vunpack.c.l.b16 %v462
        %v486 = vunpack.c.l.b16 %v463
        %v487 = vunpack.c.l.b16 %v464
        %v488 = vunpack.c.l.b16 %v465
        %v489 = vunpack.c.l.b16 %v466
        %v490 = vunpack.c.l.b16 %v467
        %v491 = vpack.c.b16 %v484, %v483
        %v492 = vpack.c.b16 %v486, %v485
        %v493 = vpack.c.b16 %v488, %v487
        %v494 = vpack.c.b16 %v490, %v489
        %v500 = vsel %vm347, %v474, 0
        %502 = vmatprep.subr.bf16.mxu0 0
        %503 = vmatpush1.bf16.msra.mxu0 %v491
        %504 = vmatprep.subr.bf16.mxu0 0
        %505 = vmatpush1.bf16.msra.mxu0 %v492
        %506 = vmatprep.subr.bf16.mxu0 0
        %507 = vmatpush1.bf16.msra.mxu0 %v493
        %508 = vmatprep.subr.bf16.mxu0 0
        %509 = vmatpush1.bf16.msra.mxu0 %v494
        %510 = vmatprep.subr.bf16.mxu0 0
        %511 = vmatpush1.bf16.msra.mxu0 0
        %512 = vmatprep.subr.bf16.mxu0 0
        %513 = vmatpush1.bf16.msra.mxu0 0
        %514 = vmatprep.subr.bf16.mxu0 0
        %515 = vmatpush1.bf16.msra.mxu0 0
        %516 = vmatprep.subr.bf16.mxu0 0
        %517 = vmatpush1.bf16.msra.mxu0 0
        %518 = vmatprep.subr.bf16.mxu0 0
        %519 = vmatpush1.bf16.msra.mxu0 0
        %520 = vmatprep.subr.bf16.mxu0 0
        %521 = vmatpush1.bf16.msra.mxu0 0
        %522 = vmatprep.subr.bf16.mxu0 0
        %523 = vmatpush1.bf16.msra.mxu0 0
        %524 = vmatprep.subr.bf16.mxu0 0
        %525 = vmatpush1.bf16.msra.mxu0 0
        %526 = vmatprep.subr.bf16.mxu0 0
        %527 = vmatpush1.bf16.msra.mxu0 0
        %528 = vmatprep.subr.bf16.mxu0 0
        %529 = vmatpush1.bf16.msra.mxu0 0
        %530 = vmatprep.subr.bf16.mxu0 0
        %531 = vmatpush1.bf16.msra.mxu0 0
        %532 = vmatprep.subr.bf16.mxu0 0
        %533 = vmatpush1.bf16.msra.mxu0 0
        %534 = vmatprep.mubr.bf16.mxu0 0
        %535 = vmatmul.mubr.bf16.gmra.mrb[0].mxu0 %v500
        %v536 = vpop.f32.mrb[0].mxu0
        %v537 = vadd.f32 0.0, %v536
        %v538 = vpop.f32.mrb[0].mxu0
        %v539 = vpop.f32.mrb[0].mxu0
        %v540 = vadd.f32 0.0, %v539
        %v541 = vpop.f32.mrb[0].mxu0
        %542 = vdwg.mxu0
        %v543 = vadd.f32 %v453, %v537
        %v544 = vadd.f32 %v456, %v540
        %v545 = vld [vmem:[#allocation5] sm:$0x1]
        %v547 = vlaneseq
        %v548 = vshrl.u32 %v547, 7
        %v549 = vsub.s32 0, %v548
        %v550 = vrot.slane %v545, %v549
        %v552 = vadd.f32 %v543, %v550
        %v553 = vadd.f32 %v544, %v550
        %v554 = vmax.f32 %v552, 0.0
        %v555 = vmax.f32 %v553, 0.0
        %vm556 = vcmask 516096
        %vm557 = vsmask.f32 256
        %vm558 = vmand %vm556, %vm557
        %v559 = vld [vmem:[#allocation2] sm:$0x1]
        %v560 = vsel %vm558, 0, %v559
        %561 = vst [vmem:[#allocation2] sm:$0x1] %v560
        %vm562 = vsmask.f32 7938
        %vm563 = vmand %vm556, %vm562
        %v564 = vld [vmem:[#allocation2 + $0x8] sm:$0x1]
        %v565 = vsel %vm563, 0, %v564
        %566 = vst [vmem:[#allocation2 + $0x8] sm:$0x1] %v565
        %v567 = vpack.c.bf16 %v555, %v554
        %v569 = vunpack.c.l.b16 %v567
        %v570 = vunpack.c.h.b16 %v567
        %v571 = vpack.c.b16 %v569, %v569
        %v572 = vpack.c.b16 %v570, %v570
        %vm573 = vsmask.f32 4368
        %vm574 = vmor %vm557, %vm573
        %v576 = vshrl.u32 %v571, 16
        %v578 = vrot.slane %v576, 7
        %v579 = vshll.u32 %v571, 16
        %v581 = vor.u32 %v578, %v579
        %v582 = vrot.slane %v578, 4
        %v584 = vshrl.u32 %v572, 16
        %v586 = vrot.slane %v584, 7
        %v587 = vshll.u32 %v572, 16
        %v589 = vor.u32 %v586, %v587
        %v590 = vsel %vm574, %v582, %v589
        %v591 = vrot.slane %v586, 4
        %vm595 = vcmask 519168
        %vm596 = vmand %vm595, %vm562
        %v597 = vld [vmem:[#allocation2] sm:$0xf]
        %v598 = vsel %vm596, %v581, %v597
        %599 = vst [vmem:[#allocation2] sm:$0xf] %v598
        %vm600 = vcmask 519168
        %601 = vst.msk [vmem:[#allocation2 + $0x4] sm:$0xf] %vm600, %v590
        %v602 = vld [vmem:[#allocation2 + $0x8] sm:$0x1]
        %v603 = vsel %vm558, %v591, %v602
        %604 = vst [vmem:[#allocation2 + $0x8] sm:$0x1] %v603
        %v605 = vld [vmem:[#allocation2] sm:$0xf]
        %v606 = vld [vmem:[#allocation2 + $0x4] sm:$0xf]
        %v607 = vld [vmem:[#allocation7] sm:$0xf]
        %v608 = vld [vmem:[#allocation7 + $0x4] sm:$0xf]
        %v609 = vld [vmem:[#allocation7 + $0x8] sm:$0xf]
        %v610 = vld [vmem:[#allocation7 + $0xc] sm:$0xf]
        %v611 = vld [vmem:[#allocation7 + $0x10] sm:$0xf]
        %v612 = vld [vmem:[#allocation7 + $0x14] sm:$0xf]
        %v613 = vld [vmem:[#allocation7 + $0x18] sm:$0xf]
        %v614 = vld [vmem:[#allocation7 + $0x1c] sm:$0xf]
        %v615 = vld [vmem:[#allocation2 + $0x8] sm:$0x1]
        %s616 = scalar_lea.vmem [#allocation7], 32
        %v617 = vld [vmem:[%s616] sm:$0xf]
        %v618 = vld [vmem:[%s616 + $0x4] sm:$0xf]
        %v619 = vld [vmem:[%s616 + $0x8] sm:$0xf]
        %v620 = vld [vmem:[%s616 + $0xc] sm:$0xf]
        %v621 = vld [vmem:[%s616 + $0x10] sm:$0xf]
        %v622 = vld [vmem:[%s616 + $0x14] sm:$0xf]
        %v623 = vld [vmem:[%s616 + $0x18] sm:$0xf]
        %v624 = vld [vmem:[%s616 + $0x1c] sm:$0xf]
        %v628 = vunpack.c.l.b16 %v605
        %v629 = vunpack.c.l.b16 %v606
        %v630 = vunpack.c.l.b16 %v615
        %v631 = vpack.c.b16 %v629, %v628
        %v632 = vpack.c.b16 %v630, %v630
        %v634 = vshrl.u32 %v631, 16
        %v636 = vshll.u32 %v631, 16
        %v638 = vrot.slane %v636, 1
        %v639 = vor.u32 %v634, %v638
        %v641 = vshll.u32 %v632, 16
        %v643 = vrot.slane %v641, 1
        %v644 = vsel %vm310, %v639, %v643
        %v653 = vunpack.c.l.b16 %v617
        %v654 = vunpack.c.l.b16 %v618
        %v655 = vunpack.c.l.b16 %v619
        %v656 = vunpack.c.l.b16 %v620
        %v657 = vunpack.c.l.b16 %v621
        %v658 = vunpack.c.l.b16 %v622
        %v659 = vunpack.c.l.b16 %v623
        %v660 = vunpack.c.l.b16 %v624
        %v661 = vpack.c.b16 %v654, %v653
        %v662 = vpack.c.b16 %v656, %v655
        %v663 = vpack.c.b16 %v658, %v657
        %v664 = vpack.c.b16 %v660, %v659
        %v670 = vsel %vm347, %v644, 0
        %672 = vmatprep.subr.bf16.mxu0 0
        %673 = vmatpush1.bf16.msra.mxu0 %v661
        %674 = vmatprep.subr.bf16.mxu0 0
        %675 = vmatpush1.bf16.msra.mxu0 %v662
        %676 = vmatprep.subr.bf16.mxu0 0
        %677 = vmatpush1.bf16.msra.mxu0 %v663
        %678 = vmatprep.subr.bf16.mxu0 0
        %679 = vmatpush1.bf16.msra.mxu0 %v664
        %680 = vmatprep.subr.bf16.mxu0 0
        %681 = vmatpush1.bf16.msra.mxu0 0
        %682 = vmatprep.subr.bf16.mxu0 0
        %683 = vmatpush1.bf16.msra.mxu0 0
        %684 = vmatprep.subr.bf16.mxu0 0
        %685 = vmatpush1.bf16.msra.mxu0 0
        %686 = vmatprep.subr.bf16.mxu0 0
        %687 = vmatpush1.bf16.msra.mxu0 0
        %688 = vmatprep.subr.bf16.mxu0 0
        %689 = vmatpush1.bf16.msra.mxu0 0
        %690 = vmatprep.subr.bf16.mxu0 0
        %691 = vmatpush1.bf16.msra.mxu0 0
        %692 = vmatprep.subr.bf16.mxu0 0
        %693 = vmatpush1.bf16.msra.mxu0 0
        %694 = vmatprep.subr.bf16.mxu0 0
        %695 = vmatpush1.bf16.msra.mxu0 0
        %696 = vmatprep.subr.bf16.mxu0 0
        %697 = vmatpush1.bf16.msra.mxu0 0
        %698 = vmatprep.subr.bf16.mxu0 0
        %699 = vmatpush1.bf16.msra.mxu0 0
        %700 = vmatprep.subr.bf16.mxu0 0
        %701 = vmatpush1.bf16.msra.mxu0 0
        %702 = vmatprep.subr.bf16.mxu0 0
        %703 = vmatpush1.bf16.msra.mxu0 0
        %704 = vmatprep.mubr.bf16.mxu0 0
        %705 = vmatmul.mubr.bf16.gmra.mrb[0].mxu0 %v670
        %v706 = vpop.f32.mrb[0].mxu0
        %v707 = vadd.f32 0.0, %v706
        %v708 = vpop.f32.mrb[0].mxu0
        %v709 = vpop.f32.mrb[0].mxu0
        %v710 = vadd.f32 0.0, %v709
        %v711 = vpop.f32.mrb[0].mxu0
        %712 = vdwg.mxu0
        %v721 = vunpack.c.l.b16 %v607
        %v722 = vunpack.c.l.b16 %v608
        %v723 = vunpack.c.l.b16 %v609
        %v724 = vunpack.c.l.b16 %v610
        %v725 = vunpack.c.l.b16 %v611
        %v726 = vunpack.c.l.b16 %v612
        %v727 = vunpack.c.l.b16 %v613
        %v728 = vunpack.c.l.b16 %v614
        %v729 = vpack.c.b16 %v722, %v721
        %v730 = vpack.c.b16 %v724, %v723
        %v731 = vpack.c.b16 %v726, %v725
        %v732 = vpack.c.b16 %v728, %v727
        %v737 = vsel %vm347, %v631, 0
        %739 = vmatprep.subr.bf16.mxu0 0
        %740 = vmatpush1.bf16.msra.mxu0 %v729
        %741 = vmatprep.subr.bf16.mxu0 0
        %742 = vmatpush1.bf16.msra.mxu0 %v730
        %743 = vmatprep.subr.bf16.mxu0 0
        %744 = vmatpush1.bf16.msra.mxu0 %v731
        %745 = vmatprep.subr.bf16.mxu0 0
        %746 = vmatpush1.bf16.msra.mxu0 %v732
        %747 = vmatprep.subr.bf16.mxu0 0
        %748 = vmatpush1.bf16.msra.mxu0 0
        %749 = vmatprep.subr.bf16.mxu0 0
        %750 = vmatpush1.bf16.msra.mxu0 0
        %751 = vmatprep.subr.bf16.mxu0 0
        %752 = vmatpush1.bf16.msra.mxu0 0
        %753 = vmatprep.subr.bf16.mxu0 0
        %754 = vmatpush1.bf16.msra.mxu0 0
        %755 = vmatprep.subr.bf16.mxu0 0
        %756 = vmatpush1.bf16.msra.mxu0 0
        %757 = vmatprep.subr.bf16.mxu0 0
        %758 = vmatpush1.bf16.msra.mxu0 0
        %759 = vmatprep.subr.bf16.mxu0 0
        %760 = vmatpush1.bf16.msra.mxu0 0
        %761 = vmatprep.subr.bf16.mxu0 0
        %762 = vmatpush1.bf16.msra.mxu0 0
        %763 = vmatprep.subr.bf16.mxu0 0
        %764 = vmatpush1.bf16.msra.mxu0 0
        %765 = vmatprep.subr.bf16.mxu0 0
        %766 = vmatpush1.bf16.msra.mxu0 0
        %767 = vmatprep.subr.bf16.mxu0 0
        %768 = vmatpush1.bf16.msra.mxu0 0
        %769 = vmatprep.subr.bf16.mxu0 0
        %770 = vmatpush1.bf16.msra.mxu0 0
        %771 = vmatprep.mubr.bf16.mxu0 0
        %772 = vmatmul.mubr.bf16.gmra.mrb[0].mxu0 %v737
        %v773 = vpop.f32.mrb[0].mxu0
        %v774 = vadd.f32 %v707, %v773
        %v775 = vpop.f32.mrb[0].mxu0
        %v776 = vpop.f32.mrb[0].mxu0
        %v777 = vadd.f32 %v710, %v776
        %v778 = vpop.f32.mrb[0].mxu0
        %779 = vdwg.mxu0
        %v780 = vld [vmem:[#allocation2] sm:$0xe]
        %s781 = scalar_lea.vmem [#allocation7], 64
        %v782 = vld [vmem:[%s781] sm:$0xf]
        %v783 = vld [vmem:[%s781 + $0x4] sm:$0xf]
        %v784 = vld [vmem:[%s781 + $0x8] sm:$0xf]
        %v785 = vld [vmem:[%s781 + $0xc] sm:$0xf]
        %v786 = vld [vmem:[%s781 + $0x10] sm:$0xf]
        %v787 = vld [vmem:[%s781 + $0x14] sm:$0xf]
        %v788 = vld [vmem:[%s781 + $0x18] sm:$0xf]
        %v789 = vld [vmem:[%s781 + $0x1c] sm:$0xf]
        %v791 = vunpack.c.l.b16 %v780
        %v792 = vpack.c.b16 %v629, %v791
        %v793 = vrot.slane %v792, 1
        %v794 = vrot.slane %v632, 1
        %v795 = vsel %vm471, %v793, %v794
        %v804 = vunpack.c.l.b16 %v782
        %v805 = vunpack.c.l.b16 %v783
        %v806 = vunpack.c.l.b16 %v784
        %v807 = vunpack.c.l.b16 %v785
        %v808 = vunpack.c.l.b16 %v786
        %v809 = vunpack.c.l.b16 %v787
        %v810 = vunpack.c.l.b16 %v788
        %v811 = vunpack.c.l.b16 %v789
        %v812 = vpack.c.b16 %v805, %v804
        %v813 = vpack.c.b16 %v807, %v806
        %v814 = vpack.c.b16 %v809, %v808
        %v815 = vpack.c.b16 %v811, %v810
        %v821 = vsel %vm347, %v795, 0
        %823 = vmatprep.subr.bf16.mxu0 0
        %824 = vmatpush1.bf16.msra.mxu0 %v812
        %825 = vmatprep.subr.bf16.mxu0 0
        %826 = vmatpush1.bf16.msra.mxu0 %v813
        %827 = vmatprep.subr.bf16.mxu0 0
        %828 = vmatpush1.bf16.msra.mxu0 %v814
        %829 = vmatprep.subr.bf16.mxu0 0
        %830 = vmatpush1.bf16.msra.mxu0 %v815
        %831 = vmatprep.subr.bf16.mxu0 0
        %832 = vmatpush1.bf16.msra.mxu0 0
        %833 = vmatprep.subr.bf16.mxu0 0
        %834 = vmatpush1.bf16.msra.mxu0 0
        %835 = vmatprep.subr.bf16.mxu0 0
        %836 = vmatpush1.bf16.msra.mxu0 0
        %837 = vmatprep.subr.bf16.mxu0 0
        %838 = vmatpush1.bf16.msra.mxu0 0
        %839 = vmatprep.subr.bf16.mxu0 0
        %840 = vmatpush1.bf16.msra.mxu0 0
        %841 = vmatprep.subr.bf16.mxu0 0
        %842 = vmatpush1.bf16.msra.mxu0 0
        %843 = vmatprep.subr.bf16.mxu0 0
        %844 = vmatpush1.bf16.msra.mxu0 0
        %845 = vmatprep.subr.bf16.mxu0 0
        %846 = vmatpush1.bf16.msra.mxu0 0
        %847 = vmatprep.subr.bf16.mxu0 0
        %848 = vmatpush1.bf16.msra.mxu0 0
        %849 = vmatprep.subr.bf16.mxu0 0
        %850 = vmatpush1.bf16.msra.mxu0 0
        %851 = vmatprep.subr.bf16.mxu0 0
        %852 = vmatpush1.bf16.msra.mxu0 0
        %853 = vmatprep.subr.bf16.mxu0 0
        %854 = vmatpush1.bf16.msra.mxu0 0
        %855 = vmatprep.mubr.bf16.mxu0 0
        %856 = vmatmul.mubr.bf16.gmra.mrb[0].mxu0 %v821
        %v857 = vpop.f32.mrb[0].mxu0
        %v858 = vadd.f32 0.0, %v857
        %v859 = vpop.f32.mrb[0].mxu0
        %v860 = vpop.f32.mrb[0].mxu0
        %v861 = vadd.f32 0.0, %v860
        %v862 = vpop.f32.mrb[0].mxu0
        %863 = vdwg.mxu0
        %v864 = vadd.f32 %v774, %v858
        %v865 = vadd.f32 %v777, %v861
        %v866 = vunpack.c.l.bf16 %v281
        %v867 = vunpack.c.l.bf16 %v282
        %v868 = vunpack.c.l.bf16 %v283
        %v869 = vld [vmem:[#allocation8] sm:$0x1]
        %v871 = vlaneseq
        %v872 = vshrl.u32 %v871, 7
        %v873 = vsub.s32 0, %v872
        %v874 = vrot.slane %v869, %v873
        %v876 = vadd.f32 %v864, %v874
        %v877 = vadd.f32 %v865, %v874
        %vm881 = vcmask 1046528
        %v882 = vrot.slane %v866, 1
        %v883 = vrot.slane %v867, 1
        %v884 = vsel %vm881, %v882, %v883
        %v885 = vrot.slane %v868, 1
        %v886 = vsel %vm881, %v883, %v885
        %v889 = vadd.f32 %v876, %v884
        %v890 = vadd.f32 %v877, %v886
        %v891 = vmax.f32 %v889, 0.0
        %v892 = vmax.f32 %v890, 0.0
        %v893 = vpack.c.bf16 %v892, %v891
        %v895 = vunpack.c.l.b16 %v893
        %v896 = vunpack.c.h.b16 %v893
        %v897 = vpack.c.b16 %v895, %v895
        %v898 = vpack.c.b16 %v896, %v896
        %901 = vst.msk [vmem:[%s279] sm:$0xf] %vm600, %v897
        %902 = vst.msk [vmem:[%s279 + $0x4] sm:$0xf] %vm600, %v898
        %p903 = scmp.lt.s32.totalorder %s19, 1
        %s904 = scalar_select %p903, %s19, 1
        %s905 = smul.addr %s904, 2
        %s906 = smul.addr %s905, 4
        %s907 = scalar_lea.vmem %s5, %s906
        // Predicated region
        $region57: #{resnet1d_forward.6} parent=39 // pred_check
          %p908 = pneg %p147
        $region58: #{resnet1d_forward.6} parent=39 // pred_check_branch
          %910 = sbr.rel (%p908) target = $region60
        $region59: #{resnet1d_forward.6} parent=39 // pred_region
          _
        $region60: #{resnet1d_forward.6} parent=39 // pred_fallthru
          _
      $region40: #{resnet1d_forward.6} parent=5 // pred_fallthru
        _
      %p911 = scmp.le.s32.totalorder 2, %s14
      // Predicated region
      $region61: #{resnet1d_forward.6} parent=5 // pred_check
        %p912 = pneg %p911
      $region62: #{resnet1d_forward.6} parent=5 // pred_check_branch
        %914 = sbr.rel (%p912) target = $region64
      $region63: #{resnet1d_forward.6} parent=5 // pred_region
        %s915 = ssub.s32 %s14, 2
        // Predicated region
        $region65: #{resnet1d_forward.6} parent=63 // pred_check
          %p916 = pneg %p153
        $region66: #{resnet1d_forward.6} parent=63 // pred_check_branch
          %918 = sbr.rel (%p916) target = $region68
        $region67: #{resnet1d_forward.6} parent=63 // pred_region
          %p919 = scmp.lt.s32.totalorder %s20, 1
          %s920 = scalar_select %p919, %s20, 1
          %s921 = smul.addr %s920, 2
          %s922 = smul.addr %s921, 4
          %s923 = scalar_lea.vmem %s5, %s922
        $region68: #{resnet1d_forward.6} parent=63 // pred_fallthru
          _
      $region64: #{resnet1d_forward.6} parent=5 // pred_fallthru
        _
    $region6: #{resnet1d_forward.6} parent=1 // loop_footer
      %s18 = sadd.s32 1, %s14
    $region7: #{resnet1d_forward.6} parent=1 // loop_footer_branch
      %13 = sbr.rel target = $region3
    $region8: #{resnet1d_forward.6} parent=1 // loop_exit
      _
    %924 = vsyncpa [#allocation4], 1
    %s925 = scalar_lea.sflag [#allocation4], 1
    %926 = vsyncpa %s925, 1
    %927 = vsyncpa [#allocation6], 1
    %928 = vsyncpa [#allocation9], 1

// kernel: resnet1d_forward.7
$region0: #{resnet1d_forward.7}
  #allocation0 [shape = 'u32[]', space=smem, size = 0x4, offset = 0x4, fixed_abs, tag = 'smem constant byte address 0x4 - core index']
  #allocation1 [shape = 'u32[144,128]{1,0:T(1,128)}', space=vmem, size = 0x12000, scoped, tag = 'internal scratch']
  #allocation2 [shape = 'bf16[10,128]{1,0:T(8,128)(2,1)}', space=vmem, size = 0x1000, scoped, tag = 'scratch operand']
  %s0 = inlined_call_operand.vmem [shape: bf16[2,9,64], index: 0, kind: input, shape index: {}]
  %s1 = inlined_call_operand.vmem [shape: bf16[2,9,64], index: 1, kind: input, shape index: {}]
  %s2 = inlined_call_operand.hbm [shape: bf16[3,64,128], index: 2, kind: input, shape index: {}]
  %s3 = inlined_call_operand.hbm [shape: f32[1,128], index: 3, kind: input, shape index: {}]
  %s4 = inlined_call_operand.hbm [shape: bf16[3,128,128], index: 4, kind: input, shape index: {}]
  %s5 = inlined_call_operand.hbm [shape: f32[1,128], index: 5, kind: input, shape index: {}]
  %s6 = inlined_call_operand.hbm [shape: bf16[64,128], index: 6, kind: input, shape index: {}]
  %s7 = inlined_call_operand.hbm [shape: f32[1,128], index: 7, kind: input, shape index: {}]
  %s8 = inlined_call_operand.vmem [shape: bf16[2,8,128], index: 8, kind: output, shape index: {}]
  %s9 = sld [smem:[#allocation0]]
  $region89: #{resnet1d_forward.7} parent=0
    _
  %s11 = ssub.s32 1, %s9
  %s12 = scalar_select 0, %s11, %s9
  $region1: #{resnet1d_forward.7} parent=0
    #allocation3 [shape = 'u8[49152]{0}', space=vmem, size = 0xc000, scoped, tag = 'input window, operand 2, single buffered']
    #allocation4 [shape = 's32[2]{0}', space=sflag, size = 0x8, scoped, tag = 'scoped memory for resnet1d_forward.7']
    #allocation5 [shape = 'u8[512]{0}', space=vmem, size = 0x400, scoped, tag = 'input window, operand 3, single buffered']
    #allocation6 [shape = 's32[1]{0}', space=sflag, size = 0x4, scoped, tag = 'scoped memory for resnet1d_forward.7']
    #allocation7 [shape = 'u8[98304]{0}', space=vmem, size = 0x18000, scoped, tag = 'input window, operand 4, single buffered']
    #allocation8 [shape = 'u8[512]{0}', space=vmem, size = 0x400, scoped, tag = 'input window, operand 5, single buffered']
    #allocation9 [shape = 's32[1]{0}', space=sflag, size = 0x4, scoped, tag = 'scoped memory for resnet1d_forward.7']
    #allocation10 [shape = 'u8[16384]{0}', space=vmem, size = 0x4000, scoped, tag = 'input window, operand 6, single buffered']
    #allocation11 [shape = 'u8[512]{0}', space=vmem, size = 0x400, scoped, tag = 'input window, operand 7, single buffered']
    #allocation12 [shape = 's32[1]{0}', space=sflag, size = 0x4, scoped, tag = 'scoped memory for resnet1d_forward.7']
    %13 = vsyncpa [#allocation4], 0
    %14 = vsyncpa [#allocation6], 0
    %15 = vsyncpa [#allocation9], 0
    %16 = vsyncpa [#allocation12], 0
    loop: start=0, step=1, limit=4
    $region2: #{resnet1d_forward.7} parent=1 // loop_pre_header
      _
    $region3: #{resnet1d_forward.7} parent=1 // loop_header
      %s18 = sphi 0, %s22
      %p19 = scmp.ge.s32.totalorder %s18, 4
      %s28 = sphi 0, %s30
      %s31 = sphi 0, %s28
      %s32 = sphi 0, %s31
      %s48 = sphi 0, %s32
      %s54 = sphi 0, %s56
      %s57 = sphi 0, %s54
      %s58 = sphi 0, %s57
      %s74 = sphi 0, %s58
      %s78 = sphi 0, %s78
      %s80 = sphi 0, %s78
      %s81 = sphi 0, %s80
      %s95 = sphi 0, %s81
      %s99 = sphi 0, %s99
      %s101 = sphi 0, %s99
      %s102 = sphi 0, %s101
      %s116 = sphi 0, %s102
      %s120 = sphi 0, %s120
      %s122 = sphi 0, %s120
      %s123 = sphi 0, %s122
      %s137 = sphi 0, %s123
      %s141 = sphi 0, %s141
      %s143 = sphi 0, %s141
      %s144 = sphi 0, %s143
      %s158 = sphi 0, %s144
      %s162 = sphi 0, %s162
      %s164 = sphi 0, %s162
      %s165 = sphi 0, %s164
      %s179 = sphi 0, %s165
      %s183 = sphi 0, %s183
      %s185 = sphi 0, %s183
      %s186 = sphi 0, %s185
      %s200 = sphi 0, %s186
      %s206 = sphi 0, %s208
      %s209 = sphi 0, %s206
      %s210 = sphi 0, %s209
      %s226 = sphi 0, %s210
    $region4: #{resnet1d_forward.7} parent=1 // loop_header_branch
      %21 = sbr.rel (%p19) target = $region8
    $region5: #{resnet1d_forward.7} parent=1 // loop_body
      %s23 = ssub.s32 %s18, 1
      %s24 = ssub.s32 %s18, 2
      %s25 = sadd.s32 %s18, 1
      %s26 = ssub.s32 %s18, %s25
      %p27 = scmp.eq.s32.totalorder %s26, 0
      %s29 = sadd.s32 %s28, 1
      %s30 = scalar_select %p27, %s28, %s29
      %p33 = pneg %p27
      %p34 = scmp.eq.s32.totalorder %s18, 1
      %p35 = por %p33, %p34
      %p36 = scmp.ne.s32.totalorder %s28, %s31
      %p37 = scmp.eq.s32.totalorder %s18, 0
      %p38 = por %p36, %p37
      %p39 = scmp.ne.s32.totalorder %s28, %s31
      %p40 = scmp.eq.s32.totalorder %s23, 1
      %p41 = por %p39, %p40
      %p42 = scmp.ne.s32.totalorder %s31, %s32
      %p43 = scmp.eq.s32.totalorder %s23, 0
      %p44 = por %p42, %p43
      %p45 = scmp.ne.s32.totalorder %s31, %s32
      %p46 = scmp.eq.s32.totalorder %s24, 1
      %p47 = por %p45, %p46
      %p49 = scmp.ne.s32.totalorder %s32, %s48
      %p50 = scmp.eq.s32.totalorder %s24, 0
      %p51 = por %p49, %p50
      %s52 = ssub.s32 %s18, %s25
      %p53 = scmp.eq.s32.totalorder %s52, 0
      %s55 = sadd.s32 %s54, 1
      %s56 = scalar_select %p53, %s54, %s55
      %p59 = pneg %p53
      %p60 = scmp.eq.s32.totalorder %s18, 1
      %p61 = por %p59, %p60
      %p62 = scmp.ne.s32.totalorder %s54, %s57
      %p63 = scmp.eq.s32.totalorder %s18, 0
      %p64 = por %p62, %p63
      %p65 = scmp.ne.s32.totalorder %s54, %s57
      %p66 = scmp.eq.s32.totalorder %s23, 1
      %p67 = por %p65, %p66
      %p68 = scmp.ne.s32.totalorder %s57, %s58
      %p69 = scmp.eq.s32.totalorder %s23, 0
      %p70 = por %p68, %p69
      %p71 = scmp.ne.s32.totalorder %s57, %s58
      %p72 = scmp.eq.s32.totalorder %s24, 1
      %p73 = por %p71, %p72
      %p75 = scmp.ne.s32.totalorder %s58, %s74
      %p76 = scmp.eq.s32.totalorder %s24, 0
      %p77 = por %p75, %p76
      %s79 = sadd.s32 %s78, 1
      %p82 = scmp.eq.s32.totalorder %s18, 1
      %p83 = scmp.ne.s32.totalorder %s78, %s80
      %p84 = scmp.eq.s32.totalorder %s18, 0
      %p85 = por %p83, %p84
      %p86 = scmp.ne.s32.totalorder %s78, %s80
      %p87 = scmp.eq.s32.totalorder %s23, 1
      %p88 = por %p86, %p87
      %p89 = scmp.ne.s32.totalorder %s80, %s81
      %p90 = scmp.eq.s32.totalorder %s23, 0
      %p91 = por %p89, %p90
      %p92 = scmp.ne.s32.totalorder %s80, %s81
      %p93 = scmp.eq.s32.totalorder %s24, 1
      %p94 = por %p92, %p93
      %p96 = scmp.ne.s32.totalorder %s81, %s95
      %p97 = scmp.eq.s32.totalorder %s24, 0
      %p98 = por %p96, %p97
      %s100 = sadd.s32 %s99, 1
      %p103 = scmp.eq.s32.totalorder %s18, 1
      %p104 = scmp.ne.s32.totalorder %s99, %s101
      %p105 = scmp.eq.s32.totalorder %s18, 0
      %p106 = por %p104, %p105
      %p107 = scmp.ne.s32.totalorder %s99, %s101
      %p108 = scmp.eq.s32.totalorder %s23, 1
      %p109 = por %p107, %p108
      %p110 = scmp.ne.s32.totalorder %s101, %s102
      %p111 = scmp.eq.s32.totalorder %s23, 0
      %p112 = por %p110, %p111
      %p113 = scmp.ne.s32.totalorder %s101, %s102
      %p114 = scmp.eq.s32.totalorder %s24, 1
      %p115 = por %p113, %p114
      %p117 = scmp.ne.s32.totalorder %s102, %s116
      %p118 = scmp.eq.s32.totalorder %s24, 0
      %p119 = por %p117, %p118
      %s121 = sadd.s32 %s120, 1
      %p124 = scmp.eq.s32.totalorder %s18, 1
      %p125 = scmp.ne.s32.totalorder %s120, %s122
      %p126 = scmp.eq.s32.totalorder %s18, 0
      %p127 = por %p125, %p126
      %p128 = scmp.ne.s32.totalorder %s120, %s122
      %p129 = scmp.eq.s32.totalorder %s23, 1
      %p130 = por %p128, %p129
      %p131 = scmp.ne.s32.totalorder %s122, %s123
      %p132 = scmp.eq.s32.totalorder %s23, 0
      %p133 = por %p131, %p132
      %p134 = scmp.ne.s32.totalorder %s122, %s123
      %p135 = scmp.eq.s32.totalorder %s24, 1
      %p136 = por %p134, %p135
      %p138 = scmp.ne.s32.totalorder %s123, %s137
      %p139 = scmp.eq.s32.totalorder %s24, 0
      %p140 = por %p138, %p139
      %s142 = sadd.s32 %s141, 1
      %p145 = scmp.eq.s32.totalorder %s18, 1
      %p146 = scmp.ne.s32.totalorder %s141, %s143
      %p147 = scmp.eq.s32.totalorder %s18, 0
      %p148 = por %p146, %p147
      %p149 = scmp.ne.s32.totalorder %s141, %s143
      %p150 = scmp.eq.s32.totalorder %s23, 1
      %p151 = por %p149, %p150
      %p152 = scmp.ne.s32.totalorder %s143, %s144
      %p153 = scmp.eq.s32.totalorder %s23, 0
      %p154 = por %p152, %p153
      %p155 = scmp.ne.s32.totalorder %s143, %s144
      %p156 = scmp.eq.s32.totalorder %s24, 1
      %p157 = por %p155, %p156
      %p159 = scmp.ne.s32.totalorder %s144, %s158
      %p160 = scmp.eq.s32.totalorder %s24, 0
      %p161 = por %p159, %p160
      %s163 = sadd.s32 %s162, 1
      %p166 = scmp.eq.s32.totalorder %s18, 1
      %p167 = scmp.ne.s32.totalorder %s162, %s164
      %p168 = scmp.eq.s32.totalorder %s18, 0
      %p169 = por %p167, %p168
      %p170 = scmp.ne.s32.totalorder %s162, %s164
      %p171 = scmp.eq.s32.totalorder %s23, 1
      %p172 = por %p170, %p171
      %p173 = scmp.ne.s32.totalorder %s164, %s165
      %p174 = scmp.eq.s32.totalorder %s23, 0
      %p175 = por %p173, %p174
      %p176 = scmp.ne.s32.totalorder %s164, %s165
      %p177 = scmp.eq.s32.totalorder %s24, 1
      %p178 = por %p176, %p177
      %p180 = scmp.ne.s32.totalorder %s165, %s179
      %p181 = scmp.eq.s32.totalorder %s24, 0
      %p182 = por %p180, %p181
      %s184 = sadd.s32 %s183, 1
      %p187 = scmp.eq.s32.totalorder %s18, 1
      %p188 = scmp.ne.s32.totalorder %s183, %s185
      %p189 = scmp.eq.s32.totalorder %s18, 0
      %p190 = por %p188, %p189
      %p191 = scmp.ne.s32.totalorder %s183, %s185
      %p192 = scmp.eq.s32.totalorder %s23, 1
      %p193 = por %p191, %p192
      %p194 = scmp.ne.s32.totalorder %s185, %s186
      %p195 = scmp.eq.s32.totalorder %s23, 0
      %p196 = por %p194, %p195
      %p197 = scmp.ne.s32.totalorder %s185, %s186
      %p198 = scmp.eq.s32.totalorder %s24, 1
      %p199 = por %p197, %p198
      %p201 = scmp.ne.s32.totalorder %s186, %s200
      %p202 = scmp.eq.s32.totalorder %s24, 0
      %p203 = por %p201, %p202
      %s204 = ssub.s32 %s18, %s25
      %p205 = scmp.eq.s32.totalorder %s204, 0
      %s207 = sadd.s32 %s206, 1
      %s208 = scalar_select %p205, %s206, %s207
      %p211 = pneg %p205
      %p212 = scmp.eq.s32.totalorder %s18, 1
      %p213 = por %p211, %p212
      %p214 = scmp.ne.s32.totalorder %s206, %s209
      %p215 = scmp.eq.s32.totalorder %s18, 0
      %p216 = por %p214, %p215
      %p217 = scmp.ne.s32.totalorder %s206, %s209
      %p218 = scmp.eq.s32.totalorder %s23, 1
      %p219 = por %p217, %p218
      %p220 = scmp.ne.s32.totalorder %s209, %s210
      %p221 = scmp.eq.s32.totalorder %s23, 0
      %p222 = por %p220, %p221
      %p223 = scmp.ne.s32.totalorder %s209, %s210
      %p224 = scmp.eq.s32.totalorder %s24, 1
      %p225 = por %p223, %p224
      %p227 = scmp.ne.s32.totalorder %s210, %s226
      %p228 = scmp.eq.s32.totalorder %s24, 0
      %p229 = por %p227, %p228
      %p230 = scmp.le.s32.totalorder 1, %s18
      %p231 = scmp.lt.s32.totalorder %s18, 3
      %p232 = pnand %p230, %p231
      %p233 = pneg %p232
      // Predicated region
      $region9: #{resnet1d_forward.7} parent=5 // pred_check
        _
      $region10: #{resnet1d_forward.7} parent=5 // pred_check_branch
        %235 = sbr.rel (%p232) target = $region12
      $region11: #{resnet1d_forward.7} parent=5 // pred_region
        %s236 = ssub.s32 %s18, 1
        // Predicated region
        $region13: #{resnet1d_forward.7} parent=11 // pred_check
          %p237 = pneg %p91
        $region14: #{resnet1d_forward.7} parent=11 // pred_check_branch
          %239 = sbr.rel (%p237) target = $region16
        $region15: #{resnet1d_forward.7} parent=11 // pred_region
          %s241 = ssub.s32 1536, 1536
          %242 = vsyncadd [#allocation4], %s241
          %s243 = sshll.u32 [#allocation3], 4
          %s244 = int_to_ptr.vmem [resolvable:$true] %s243
          %249 = dma.hbm_to_vmem [thread:$0]  %s2, 1536, %s244, [#allocation4], 64, 64, 4
        $region16: #{resnet1d_forward.7} parent=11 // pred_fallthru
          _
        // Predicated region
        $region17: #{resnet1d_forward.7} parent=11 // pred_check
          %p250 = pneg %p112
        $region18: #{resnet1d_forward.7} parent=11 // pred_check_branch
          %252 = sbr.rel (%p250) target = $region20
        $region19: #{resnet1d_forward.7} parent=11 // pred_region
          %s254 = ssub.s32 16, 16
          %255 = vsyncadd [#allocation6], %s254
          %s257 = sshll.u32 [#allocation5], 4
          %s258 = int_to_ptr.vmem [resolvable:$true] %s257
          %260 = dma.hbm_to_vmem [thread:$0]  %s3, 16, %s258, [#allocation6]
        $region20: #{resnet1d_forward.7} parent=11 // pred_fallthru
          _
        // Predicated region
        $region21: #{resnet1d_forward.7} parent=11 // pred_check
          %p261 = pneg %p133
        $region22: #{resnet1d_forward.7} parent=11 // pred_check_branch
          %263 = sbr.rel (%p261) target = $region24
        $region23: #{resnet1d_forward.7} parent=11 // pred_region
          %s265 = ssub.s32 3072, 3072
          %266 = vsyncadd [#allocation6], %s265
          %s267 = sshll.u32 [#allocation7], 4
          %s268 = int_to_ptr.vmem [resolvable:$true] %s267
          %273 = dma.hbm_to_vmem [thread:$0]  %s4, 3072, %s268, [#allocation6], 64, 64, 4
        $region24: #{resnet1d_forward.7} parent=11 // pred_fallthru
          _
        // Predicated region
        $region25: #{resnet1d_forward.7} parent=11 // pred_check
          %p274 = pneg %p154
        $region26: #{resnet1d_forward.7} parent=11 // pred_check_branch
          %276 = sbr.rel (%p274) target = $region28
        $region27: #{resnet1d_forward.7} parent=11 // pred_region
          %s278 = ssub.s32 16, 16
          %279 = vsyncadd [#allocation9], %s278
          %s281 = sshll.u32 [#allocation8], 4
          %s282 = int_to_ptr.vmem [resolvable:$true] %s281
          %284 = dma.hbm_to_vmem [thread:$0]  %s5, 16, %s282, [#allocation9]
        $region28: #{resnet1d_forward.7} parent=11 // pred_fallthru
          _
        // Predicated region
        $region29: #{resnet1d_forward.7} parent=11 // pred_check
          %p285 = pneg %p175
        $region30: #{resnet1d_forward.7} parent=11 // pred_check_branch
          %287 = sbr.rel (%p285) target = $region32
        $region31: #{resnet1d_forward.7} parent=11 // pred_region
          %s289 = ssub.s32 512, 512
          %290 = vsyncadd [#allocation9], %s289
          %s291 = sshll.u32 [#allocation10], 4
          %s292 = int_to_ptr.vmem [resolvable:$true] %s291
          %297 = dma.hbm_to_vmem [thread:$0]  %s6, 512, %s292, [#allocation9], 64, 64, 4
        $region32: #{resnet1d_forward.7} parent=11 // pred_fallthru
          _
        // Predicated region
        $region33: #{resnet1d_forward.7} parent=11 // pred_check
          %p298 = pneg %p196
        $region34: #{resnet1d_forward.7} parent=11 // pred_check_branch
          %300 = sbr.rel (%p298) target = $region36
        $region35: #{resnet1d_forward.7} parent=11 // pred_region
          %s302 = ssub.s32 16, 16
          %303 = vsyncadd [#allocation12], %s302
          %s305 = sshll.u32 [#allocation11], 4
          %s306 = int_to_ptr.vmem [resolvable:$true] %s305
          %308 = dma.hbm_to_vmem [thread:$0]  %s7, 16, %s306, [#allocation12]
        $region36: #{resnet1d_forward.7} parent=11 // pred_fallthru
          _
      $region12: #{resnet1d_forward.7} parent=5 // pred_fallthru
        _
      %p309 = scmp.lt.s32.totalorder %s18, 2
      // Predicated region
      $region37: #{resnet1d_forward.7} parent=5 // pred_check
        %p310 = pneg %p309
      $region38: #{resnet1d_forward.7} parent=5 // pred_check_branch
        %312 = sbr.rel (%p310) target = $region40
      $region39: #{resnet1d_forward.7} parent=5 // pred_region
        // Predicated region
        $region41: #{resnet1d_forward.7} parent=39 // pred_check
          %p313 = pneg %p38
        $region42: #{resnet1d_forward.7} parent=39 // pred_check_branch
          %315 = sbr.rel (%p313) target = $region44
        $region43: #{resnet1d_forward.7} parent=39 // pred_region
          %p316 = scmp.lt.s32.totalorder %s18, 1
          %s317 = scalar_select %p316, %s18, 1
          %s318 = smul.addr %s317, 2
          %s319 = smul.addr %s318, 4
          %s320 = scalar_lea.vmem %s0, %s319
        $region44: #{resnet1d_forward.7} parent=39 // pred_fallthru
          _
        // Predicated region
        $region45: #{resnet1d_forward.7} parent=39 // pred_check
          %p321 = pneg %p64
        $region46: #{resnet1d_forward.7} parent=39 // pred_check_branch
          %323 = sbr.rel (%p321) target = $region48
        $region47: #{resnet1d_forward.7} parent=39 // pred_region
          %p324 = scmp.lt.s32.totalorder %s18, 1
          %s325 = scalar_select %p324, %s18, 1
          %s326 = smul.addr %s325, 2
          %s327 = smul.addr %s326, 4
          %s328 = scalar_lea.vmem %s1, %s327
        $region48: #{resnet1d_forward.7} parent=39 // pred_fallthru
          _
      $region40: #{resnet1d_forward.7} parent=5 // pred_fallthru
        _
      %p329 = scmp.le.s32.totalorder 1, %s18
      %p330 = scmp.lt.s32.totalorder %s18, 3
      %p331 = pnand %p329, %p330
      %p332 = pneg %p331
      // Predicated region
      $region49: #{resnet1d_forward.7} parent=5 // pred_check
        _
      $region50: #{resnet1d_forward.7} parent=5 // pred_check_branch
        %334 = sbr.rel (%p331) target = $region52
      $region51: #{resnet1d_forward.7} parent=5 // pred_region
        %s335 = ssub.s32 %s18, 1
        // Predicated region
        $region53: #{resnet1d_forward.7} parent=51 // pred_check
          %p336 = pneg %p91
        $region54: #{resnet1d_forward.7} parent=51 // pred_check_branch
          %338 = sbr.rel (%p336) target = $region56
        $region55: #{resnet1d_forward.7} parent=51 // pred_region
          %339 = dma.done [#allocation4], 1536
        $region56: #{resnet1d_forward.7} parent=51 // pred_fallthru
          _
        // Predicated region
        $region57: #{resnet1d_forward.7} parent=51 // pred_check
          %p340 = pneg %p112
        $region58: #{resnet1d_forward.7} parent=51 // pred_check_branch
          %342 = sbr.rel (%p340) target = $region60
        $region59: #{resnet1d_forward.7} parent=51 // pred_region
          %343 = dma.done [#allocation6], 16
        $region60: #{resnet1d_forward.7} parent=51 // pred_fallthru
          _
        // Predicated region
        $region61: #{resnet1d_forward.7} parent=51 // pred_check
          %p344 = pneg %p133
        $region62: #{resnet1d_forward.7} parent=51 // pred_check_branch
          %346 = sbr.rel (%p344) target = $region64
        $region63: #{resnet1d_forward.7} parent=51 // pred_region
          %347 = dma.done [#allocation6], 3072
        $region64: #{resnet1d_forward.7} parent=51 // pred_fallthru
          _
        // Predicated region
        $region65: #{resnet1d_forward.7} parent=51 // pred_check
          %p348 = pneg %p154
        $region66: #{resnet1d_forward.7} parent=51 // pred_check_branch
          %350 = sbr.rel (%p348) target = $region68
        $region67: #{resnet1d_forward.7} parent=51 // pred_region
          %351 = dma.done [#allocation9], 16
        $region68: #{resnet1d_forward.7} parent=51 // pred_fallthru
          _
        // Predicated region
        $region69: #{resnet1d_forward.7} parent=51 // pred_check
          %p352 = pneg %p175
        $region70: #{resnet1d_forward.7} parent=51 // pred_check_branch
          %354 = sbr.rel (%p352) target = $region72
        $region71: #{resnet1d_forward.7} parent=51 // pred_region
          %355 = dma.done [#allocation9], 512
        $region72: #{resnet1d_forward.7} parent=51 // pred_fallthru
          _
        // Predicated region
        $region73: #{resnet1d_forward.7} parent=51 // pred_check
          %p356 = pneg %p196
        $region74: #{resnet1d_forward.7} parent=51 // pred_check_branch
          %358 = sbr.rel (%p356) target = $region76
        $region75: #{resnet1d_forward.7} parent=51 // pred_region
          %359 = dma.done [#allocation12], 16
        $region76: #{resnet1d_forward.7} parent=51 // pred_fallthru
          _
        %p360 = scmp.lt.s32.totalorder %s23, 1
        %s361 = scalar_select %p360, %s23, 1
        %s362 = smul.addr %s361, 2
        %s363 = smul.addr %s362, 4
        %s364 = scalar_lea.vmem %s0, %s363
        %p365 = pneg %p44
        %p366 = pneg %p41
        %p367 = scmp.lt.s32.totalorder %s23, 1
        %s368 = scalar_select %p367, %s23, 1
        %s369 = smul.addr %s368, 2
        %s370 = smul.addr %s369, 4
        %s371 = scalar_lea.vmem %s1, %s370
        %p372 = pneg %p70
        %p373 = pneg %p67
        %p374 = pneg %p91
        %p375 = pneg %p88
        %p376 = pneg %p112
        %p377 = pneg %p109
        %p378 = pneg %p133
        %p379 = pneg %p130
        %p380 = pneg %p154
        %p381 = pneg %p151
        %p382 = pneg %p175
        %p383 = pneg %p172
        %p384 = pneg %p196
        %p385 = pneg %p193
        %p386 = pneg %p222
        %p387 = pneg %p219
        %p388 = scmp.lt.s32.totalorder %s23, 1
        %s389 = scalar_select %p388, %s23, 1
        %s390 = smul.addr %s389, 4
        %s391 = scalar_lea.vmem %s8, %s390
        %p392 = scmp.lt.s32.totalorder %s23, 1
        %s393 = scalar_select %p392, %s23, 1
        %s394 = smul.addr %s393, 2
        %s395 = smul.addr %s394, 4
        %s396 = scalar_lea.vmem %s0, %s395
        %p397 = scmp.lt.s32.totalorder %s23, 1
        %s398 = scalar_select %p397, %s23, 1
        %s399 = smul.addr %s398, 2
        %s400 = smul.addr %s399, 4
        %s401 = scalar_lea.vmem %s1, %s400
        %p402 = scmp.lt.s32.totalorder %s23, 1
        %s403 = scalar_select %p402, %s23, 1
        %s404 = smul.addr %s403, 4
        %s405 = scalar_lea.vmem %s8, %s404
        %v407 = vld [vmem:[%s396] sm:$0xf]
        %v408 = vld [vmem:[%s401] sm:$0xf]
        %v409 = vld [vmem:[%s396 + $0x4] sm:$0x1]
        %v410 = vld [vmem:[#allocation3] sm:$0xf]
        %v411 = vld [vmem:[#allocation3 + $0x4] sm:$0xf]
        %v412 = vld [vmem:[#allocation3 + $0x8] sm:$0xf]
        %v413 = vld [vmem:[#allocation3 + $0xc] sm:$0xf]
        %v414 = vld [vmem:[#allocation3 + $0x10] sm:$0xf]
        %v415 = vld [vmem:[#allocation3 + $0x14] sm:$0xf]
        %v416 = vld [vmem:[#allocation3 + $0x18] sm:$0xf]
        %v417 = vld [vmem:[#allocation3 + $0x1c] sm:$0xf]
        %s418 = scalar_lea.vmem [#allocation3], 32
        %v419 = vld [vmem:[%s418] sm:$0xf]
        %v420 = vld [vmem:[%s418 + $0x4] sm:$0xf]
        %v421 = vld [vmem:[%s418 + $0x8] sm:$0xf]
        %v422 = vld [vmem:[%s418 + $0xc] sm:$0xf]
        %v423 = vld [vmem:[%s418 + $0x10] sm:$0xf]
        %v424 = vld [vmem:[%s418 + $0x14] sm:$0xf]
        %v425 = vld [vmem:[%s418 + $0x18] sm:$0xf]
        %v426 = vld [vmem:[%s418 + $0x1c] sm:$0xf]
        %v435 = vunpack.c.l.b16 %v419
        %v436 = vunpack.c.l.b16 %v420
        %v437 = vunpack.c.l.b16 %v421
        %v438 = vunpack.c.l.b16 %v422
        %v439 = vunpack.c.l.b16 %v423
        %v440 = vunpack.c.l.b16 %v424
        %v441 = vunpack.c.l.b16 %v425
        %v442 = vunpack.c.l.b16 %v426
        %v443 = vpack.c.b16 %v436, %v435
        %v444 = vpack.c.b16 %v438, %v437
        %v445 = vpack.c.b16 %v440, %v439
        %v446 = vpack.c.b16 %v442, %v441
        %vm451 = vcmask 523264
        %v453 = vsel %vm451, %v408, 0
        %455 = vmatprep.subr.bf16.mxu0 0
        %456 = vmatpush1.bf16.msra.mxu0 %v443
        %457 = vmatprep.subr.bf16.mxu0 0
        %458 = vmatpush1.bf16.msra.mxu0 %v444
        %459 = vmatprep.subr.bf16.mxu0 0
        %460 = vmatpush1.bf16.msra.mxu0 %v445
        %461 = vmatprep.subr.bf16.mxu0 0
        %462 = vmatpush1.bf16.msra.mxu0 %v446
        %463 = vmatprep.subr.bf16.mxu0 0
        %464 = vmatpush1.bf16.msra.mxu0 0
        %465 = vmatprep.subr.bf16.mxu0 0
        %466 = vmatpush1.bf16.msra.mxu0 0
        %467 = vmatprep.subr.bf16.mxu0 0
        %468 = vmatpush1.bf16.msra.mxu0 0
        %469 = vmatprep.subr.bf16.mxu0 0
        %470 = vmatpush1.bf16.msra.mxu0 0
        %471 = vmatprep.subr.bf16.mxu0 0
        %472 = vmatpush1.bf16.msra.mxu0 0
        %473 = vmatprep.subr.bf16.mxu0 0
        %474 = vmatpush1.bf16.msra.mxu0 0
        %475 = vmatprep.subr.bf16.mxu0 0
        %476 = vmatpush1.bf16.msra.mxu0 0
        %477 = vmatprep.subr.bf16.mxu0 0
        %478 = vmatpush1.bf16.msra.mxu0 0
        %479 = vmatprep.subr.bf16.mxu0 0
        %480 = vmatpush1.bf16.msra.mxu0 0
        %481 = vmatprep.subr.bf16.mxu0 0
        %482 = vmatpush1.bf16.msra.mxu0 0
        %483 = vmatprep.subr.bf16.mxu0 0
        %484 = vmatpush1.bf16.msra.mxu0 0
        %485 = vmatprep.subr.bf16.mxu0 0
        %486 = vmatpush1.bf16.msra.mxu0 0
        %487 = vmatprep.mubr.bf16.mxu0 0
        %488 = vmatmul.mubr.bf16.gmra.mrb[0].mxu0 %v453
        %v489 = vpop.f32.mrb[0].mxu0
        %v490 = vadd.f32 0.0, %v489
        %v491 = vpop.f32.mrb[0].mxu0
        %v492 = vpop.f32.mrb[0].mxu0
        %v493 = vpop.f32.mrb[0].mxu0
        %494 = vdwg.mxu0
        %v503 = vunpack.c.l.b16 %v410
        %v504 = vunpack.c.l.b16 %v411
        %v505 = vunpack.c.l.b16 %v412
        %v506 = vunpack.c.l.b16 %v413
        %v507 = vunpack.c.l.b16 %v414
        %v508 = vunpack.c.l.b16 %v415
        %v509 = vunpack.c.l.b16 %v416
        %v510 = vunpack.c.l.b16 %v417
        %v511 = vpack.c.b16 %v504, %v503
        %v512 = vpack.c.b16 %v506, %v505
        %v513 = vpack.c.b16 %v508, %v507
        %v514 = vpack.c.b16 %v510, %v509
        %v520 = vsel %vm451, %v407, 0
        %522 = vmatprep.subr.bf16.mxu0 0
        %523 = vmatpush1.bf16.msra.mxu0 %v511
        %524 = vmatprep.subr.bf16.mxu0 0
        %525 = vmatpush1.bf16.msra.mxu0 %v512
        %526 = vmatprep.subr.bf16.mxu0 0
        %527 = vmatpush1.bf16.msra.mxu0 %v513
        %528 = vmatprep.subr.bf16.mxu0 0
        %529 = vmatpush1.bf16.msra.mxu0 %v514
        %530 = vmatprep.subr.bf16.mxu0 0
        %531 = vmatpush1.bf16.msra.mxu0 0
        %532 = vmatprep.subr.bf16.mxu0 0
        %533 = vmatpush1.bf16.msra.mxu0 0
        %534 = vmatprep.subr.bf16.mxu0 0
        %535 = vmatpush1.bf16.msra.mxu0 0
        %536 = vmatprep.subr.bf16.mxu0 0
        %537 = vmatpush1.bf16.msra.mxu0 0
        %538 = vmatprep.subr.bf16.mxu0 0
        %539 = vmatpush1.bf16.msra.mxu0 0
        %540 = vmatprep.subr.bf16.mxu0 0
        %541 = vmatpush1.bf16.msra.mxu0 0
        %542 = vmatprep.subr.bf16.mxu0 0
        %543 = vmatpush1.bf16.msra.mxu0 0
        %544 = vmatprep.subr.bf16.mxu0 0
        %545 = vmatpush1.bf16.msra.mxu0 0
        %546 = vmatprep.subr.bf16.mxu0 0
        %547 = vmatpush1.bf16.msra.mxu0 0
        %548 = vmatprep.subr.bf16.mxu0 0
        %549 = vmatpush1.bf16.msra.mxu0 0
        %550 = vmatprep.subr.bf16.mxu0 0
        %551 = vmatpush1.bf16.msra.mxu0 0
        %552 = vmatprep.subr.bf16.mxu0 0
        %553 = vmatpush1.bf16.msra.mxu0 0
        %554 = vmatprep.mubr.bf16.mxu0 0
        %555 = vmatmul.mubr.bf16.gmra.mrb[0].mxu0 %v520
        %v556 = vpop.f32.mrb[0].mxu0
        %v557 = vadd.f32 %v490, %v556
        %v558 = vpop.f32.mrb[0].mxu0
        %v559 = vpop.f32.mrb[0].mxu0
        %v560 = vpop.f32.mrb[0].mxu0
        %561 = vdwg.mxu0
        %s562 = scalar_lea.vmem [#allocation3], 64
        %v563 = vld [vmem:[%s562] sm:$0xf]
        %v564 = vld [vmem:[%s562 + $0x4] sm:$0xf]
        %v565 = vld [vmem:[%s562 + $0x8] sm:$0xf]
        %v566 = vld [vmem:[%s562 + $0xc] sm:$0xf]
        %v567 = vld [vmem:[%s562 + $0x10] sm:$0xf]
        %v568 = vld [vmem:[%s562 + $0x14] sm:$0xf]
        %v569 = vld [vmem:[%s562 + $0x18] sm:$0xf]
        %v570 = vld [vmem:[%s562 + $0x1c] sm:$0xf]
        %v573 = vunpack.c.l.b16 %v407
        %v574 = vunpack.c.l.b16 %v409
        %v575 = vpack.c.b16 %v574, %v573
        %v577 = vshrl.u32 %v575, 16
        %v579 = vshll.u32 %v575, 16
        %v581 = vrot.slane %v579, 1
        %v582 = vor.u32 %v577, %v581
        %v591 = vunpack.c.l.b16 %v563
        %v592 = vunpack.c.l.b16 %v564
        %v593 = vunpack.c.l.b16 %v565
        %v594 = vunpack.c.l.b16 %v566
        %v595 = vunpack.c.l.b16 %v567
        %v596 = vunpack.c.l.b16 %v568
        %v597 = vunpack.c.l.b16 %v569
        %v598 = vunpack.c.l.b16 %v570
        %v599 = vpack.c.b16 %v592, %v591
        %v600 = vpack.c.b16 %v594, %v593
        %v601 = vpack.c.b16 %v596, %v595
        %v602 = vpack.c.b16 %v598, %v597
        %v608 = vsel %vm451, %v582, 0
        %610 = vmatprep.subr.bf16.mxu0 0
        %611 = vmatpush1.bf16.msra.mxu0 %v599
        %612 = vmatprep.subr.bf16.mxu0 0
        %613 = vmatpush1.bf16.msra.mxu0 %v600
        %614 = vmatprep.subr.bf16.mxu0 0
        %615 = vmatpush1.bf16.msra.mxu0 %v601
        %616 = vmatprep.subr.bf16.mxu0 0
        %617 = vmatpush1.bf16.msra.mxu0 %v602
        %618 = vmatprep.subr.bf16.mxu0 0
        %619 = vmatpush1.bf16.msra.mxu0 0
        %620 = vmatprep.subr.bf16.mxu0 0
        %621 = vmatpush1.bf16.msra.mxu0 0
        %622 = vmatprep.subr.bf16.mxu0 0
        %623 = vmatpush1.bf16.msra.mxu0 0
        %624 = vmatprep.subr.bf16.mxu0 0
        %625 = vmatpush1.bf16.msra.mxu0 0
        %626 = vmatprep.subr.bf16.mxu0 0
        %627 = vmatpush1.bf16.msra.mxu0 0
        %628 = vmatprep.subr.bf16.mxu0 0
        %629 = vmatpush1.bf16.msra.mxu0 0
        %630 = vmatprep.subr.bf16.mxu0 0
        %631 = vmatpush1.bf16.msra.mxu0 0
        %632 = vmatprep.subr.bf16.mxu0 0
        %633 = vmatpush1.bf16.msra.mxu0 0
        %634 = vmatprep.subr.bf16.mxu0 0
        %635 = vmatpush1.bf16.msra.mxu0 0
        %636 = vmatprep.subr.bf16.mxu0 0
        %637 = vmatpush1.bf16.msra.mxu0 0
        %638 = vmatprep.subr.bf16.mxu0 0
        %639 = vmatpush1.bf16.msra.mxu0 0
        %640 = vmatprep.subr.bf16.mxu0 0
        %641 = vmatpush1.bf16.msra.mxu0 0
        %642 = vmatprep.mubr.bf16.mxu0 0
        %643 = vmatmul.mubr.bf16.gmra.mrb[0].mxu0 %v608
        %v644 = vpop.f32.mrb[0].mxu0
        %v645 = vadd.f32 0.0, %v644
        %v646 = vpop.f32.mrb[0].mxu0
        %v647 = vpop.f32.mrb[0].mxu0
        %v648 = vpop.f32.mrb[0].mxu0
        %649 = vdwg.mxu0
        %v650 = vadd.f32 %v557, %v645
        %v651 = vld [vmem:[#allocation5] sm:$0x1]
        %v653 = vlaneseq
        %v654 = vshrl.u32 %v653, 7
        %v655 = vsub.s32 0, %v654
        %v656 = vrot.slane %v651, %v655
        %v658 = vadd.f32 %v650, %v656
        %v659 = vmax.f32 %v658, 0.0
        %vm660 = vcmask 1040384
        %vm661 = vsmask.f32 256
        %vm662 = vmand %vm660, %vm661
        %v663 = vld [vmem:[#allocation2] sm:$0x1]
        %v664 = vsel %vm662, 0, %v663
        %665 = vst [vmem:[#allocation2] sm:$0x1] %v664
        %vm666 = vsmask.f32 7938
        %vm667 = vmand %vm660, %vm666
        %v668 = vld [vmem:[#allocation2 + $0x4] sm:$0x1]
        %v669 = vsel %vm667, 0, %v668
        %670 = vst [vmem:[#allocation2 + $0x4] sm:$0x1] %v669
        %v671 = vpack.c.bf16 %v659, %v659
        %v673 = vunpack.c.l.b16 %v671
        %v674 = vpack.c.b16 %v673, %v673
        %v676 = vshrl.u32 %v674, 16
        %v678 = vrot.slane %v676, 7
        %v679 = vshll.u32 %v674, 16
        %v681 = vor.u32 %v678, %v679
        %v682 = vrot.slane %v678, 4
        %vm685 = vcmask 1043456
        %vm686 = vmand %vm685, %vm666
        %v687 = vld [vmem:[#allocation2] sm:$0xf]
        %v688 = vsel %vm686, %v681, %v687
        %689 = vst [vmem:[#allocation2] sm:$0xf] %v688
        %v690 = vld [vmem:[#allocation2 + $0x4] sm:$0x1]
        %v691 = vsel %vm662, %v682, %v690
        %692 = vst [vmem:[#allocation2 + $0x4] sm:$0x1] %v691
        %v693 = vld [vmem:[#allocation2] sm:$0xf]
        %v694 = vld [vmem:[#allocation7] sm:$0xf]
        %v695 = vld [vmem:[#allocation7 + $0x4] sm:$0xf]
        %v696 = vld [vmem:[#allocation7 + $0x8] sm:$0xf]
        %v697 = vld [vmem:[#allocation7 + $0xc] sm:$0xf]
        %v698 = vld [vmem:[#allocation7 + $0x10] sm:$0xf]
        %v699 = vld [vmem:[#allocation7 + $0x14] sm:$0xf]
        %v700 = vld [vmem:[#allocation7 + $0x18] sm:$0xf]
        %v701 = vld [vmem:[#allocation7 + $0x1c] sm:$0xf]
        %v702 = vld [vmem:[#allocation7 + $0x20] sm:$0xf]
        %v703 = vld [vmem:[#allocation7 + $0x24] sm:$0xf]
        %v704 = vld [vmem:[#allocation7 + $0x28] sm:$0xf]
        %v705 = vld [vmem:[#allocation7 + $0x2c] sm:$0xf]
        %v706 = vld [vmem:[#allocation7 + $0x30] sm:$0xf]
        %v707 = vld [vmem:[#allocation7 + $0x34] sm:$0xf]
        %v708 = vld [vmem:[#allocation7 + $0x38] sm:$0xf]
        %v709 = vld [vmem:[#allocation7 + $0x3c] sm:$0xf]
        %v710 = vld [vmem:[#allocation2 + $0x4] sm:$0x1]
        %s711 = scalar_lea.vmem [#allocation7], 64
        %v712 = vld [vmem:[%s711] sm:$0xf]
        %v713 = vld [vmem:[%s711 + $0x4] sm:$0xf]
        %v714 = vld [vmem:[%s711 + $0x8] sm:$0xf]
        %v715 = vld [vmem:[%s711 + $0xc] sm:$0xf]
        %v716 = vld [vmem:[%s711 + $0x10] sm:$0xf]
        %v717 = vld [vmem:[%s711 + $0x14] sm:$0xf]
        %v718 = vld [vmem:[%s711 + $0x18] sm:$0xf]
        %v719 = vld [vmem:[%s711 + $0x1c] sm:$0xf]
        %v720 = vld [vmem:[%s711 + $0x20] sm:$0xf]
        %v721 = vld [vmem:[%s711 + $0x24] sm:$0xf]
        %v722 = vld [vmem:[%s711 + $0x28] sm:$0xf]
        %v723 = vld [vmem:[%s711 + $0x2c] sm:$0xf]
        %v724 = vld [vmem:[%s711 + $0x30] sm:$0xf]
        %v725 = vld [vmem:[%s711 + $0x34] sm:$0xf]
        %v726 = vld [vmem:[%s711 + $0x38] sm:$0xf]
        %v727 = vld [vmem:[%s711 + $0x3c] sm:$0xf]
        %v730 = vunpack.c.l.b16 %v693
        %v731 = vunpack.c.l.b16 %v710
        %v732 = vpack.c.b16 %v731, %v730
        %v734 = vshrl.u32 %v732, 16
        %v736 = vshll.u32 %v732, 16
        %v738 = vrot.slane %v736, 1
        %v739 = vor.u32 %v734, %v738
        %v757 = vunpack.c.l.b16 %v712
        %v758 = vunpack.c.l.b16 %v713
        %v759 = vunpack.c.l.b16 %v714
        %v760 = vunpack.c.l.b16 %v715
        %v761 = vunpack.c.l.b16 %v716
        %v762 = vunpack.c.l.b16 %v717
        %v763 = vunpack.c.l.b16 %v718
        %v764 = vunpack.c.l.b16 %v719
        %v765 = vunpack.c.l.b16 %v720
        %v766 = vunpack.c.l.b16 %v721
        %v767 = vunpack.c.l.b16 %v722
        %v768 = vunpack.c.l.b16 %v723
        %v769 = vunpack.c.l.b16 %v724
        %v770 = vunpack.c.l.b16 %v725
        %v771 = vunpack.c.l.b16 %v726
        %v772 = vunpack.c.l.b16 %v727
        %v773 = vpack.c.b16 %v758, %v757
        %v774 = vpack.c.b16 %v760, %v759
        %v775 = vpack.c.b16 %v762, %v761
        %v776 = vpack.c.b16 %v764, %v763
        %v777 = vpack.c.b16 %v766, %v765
        %v778 = vpack.c.b16 %v768, %v767
        %v779 = vpack.c.b16 %v770, %v769
        %v780 = vpack.c.b16 %v772, %v771
        %789 = vmatprep.subr.bf16.mxu0 0
        %790 = vmatpush1.bf16.msra.mxu0 %v773
        %791 = vmatprep.subr.bf16.mxu0 0
        %792 = vmatpush1.bf16.msra.mxu0 %v774
        %793 = vmatprep.subr.bf16.mxu0 0
        %794 = vmatpush1.bf16.msra.mxu0 %v775
        %795 = vmatprep.subr.bf16.mxu0 0
        %796 = vmatpush1.bf16.msra.mxu0 %v776
        %797 = vmatprep.subr.bf16.mxu0 0
        %798 = vmatpush1.bf16.msra.mxu0 %v777
        %799 = vmatprep.subr.bf16.mxu0 0
        %800 = vmatpush1.bf16.msra.mxu0 %v778
        %801 = vmatprep.subr.bf16.mxu0 0
        %802 = vmatpush1.bf16.msra.mxu0 %v779
        %803 = vmatprep.subr.bf16.mxu0 0
        %804 = vmatpush1.bf16.msra.mxu0 %v780
        %805 = vmatprep.subr.bf16.mxu0 0
        %806 = vmatpush1.bf16.msra.mxu0 0
        %807 = vmatprep.subr.bf16.mxu0 0
        %808 = vmatpush1.bf16.msra.mxu0 0
        %809 = vmatprep.subr.bf16.mxu0 0
        %810 = vmatpush1.bf16.msra.mxu0 0
        %811 = vmatprep.subr.bf16.mxu0 0
        %812 = vmatpush1.bf16.msra.mxu0 0
        %813 = vmatprep.subr.bf16.mxu0 0
        %814 = vmatpush1.bf16.msra.mxu0 0
        %815 = vmatprep.subr.bf16.mxu0 0
        %816 = vmatpush1.bf16.msra.mxu0 0
        %817 = vmatprep.subr.bf16.mxu0 0
        %818 = vmatpush1.bf16.msra.mxu0 0
        %819 = vmatprep.subr.bf16.mxu0 0
        %820 = vmatpush1.bf16.msra.mxu0 0
        %821 = vmatprep.mubr.bf16.mxu0 0
        %822 = vmatmul.mubr.bf16.gmra.mrb[0].mxu0 %v739
        %v823 = vpop.f32.mrb[0].mxu0
        %v824 = vadd.f32 0.0, %v823
        %v825 = vpop.f32.mrb[0].mxu0
        %v826 = vpop.f32.mrb[0].mxu0
        %v827 = vpop.f32.mrb[0].mxu0
        %828 = vdwg.mxu0
        %v845 = vunpack.c.l.b16 %v694
        %v846 = vunpack.c.l.b16 %v695
        %v847 = vunpack.c.l.b16 %v696
        %v848 = vunpack.c.l.b16 %v697
        %v849 = vunpack.c.l.b16 %v698
        %v850 = vunpack.c.l.b16 %v699
        %v851 = vunpack.c.l.b16 %v700
        %v852 = vunpack.c.l.b16 %v701
        %v853 = vunpack.c.l.b16 %v702
        %v854 = vunpack.c.l.b16 %v703
        %v855 = vunpack.c.l.b16 %v704
        %v856 = vunpack.c.l.b16 %v705
        %v857 = vunpack.c.l.b16 %v706
        %v858 = vunpack.c.l.b16 %v707
        %v859 = vunpack.c.l.b16 %v708
        %v860 = vunpack.c.l.b16 %v709
        %v861 = vpack.c.b16 %v846, %v845
        %v862 = vpack.c.b16 %v848, %v847
        %v863 = vpack.c.b16 %v850, %v849
        %v864 = vpack.c.b16 %v852, %v851
        %v865 = vpack.c.b16 %v854, %v853
        %v866 = vpack.c.b16 %v856, %v855
        %v867 = vpack.c.b16 %v858, %v857
        %v868 = vpack.c.b16 %v860, %v859
        %877 = vmatprep.subr.bf16.mxu0 0
        %878 = vmatpush1.bf16.msra.mxu0 %v861
        %879 = vmatprep.subr.bf16.mxu0 0
        %880 = vmatpush1.bf16.msra.mxu0 %v862
        %881 = vmatprep.subr.bf16.mxu0 0
        %882 = vmatpush1.bf16.msra.mxu0 %v863
        %883 = vmatprep.subr.bf16.mxu0 0
        %884 = vmatpush1.bf16.msra.mxu0 %v864
        %885 = vmatprep.subr.bf16.mxu0 0
        %886 = vmatpush1.bf16.msra.mxu0 %v865
        %887 = vmatprep.subr.bf16.mxu0 0
        %888 = vmatpush1.bf16.msra.mxu0 %v866
        %889 = vmatprep.subr.bf16.mxu0 0
        %890 = vmatpush1.bf16.msra.mxu0 %v867
        %891 = vmatprep.subr.bf16.mxu0 0
        %892 = vmatpush1.bf16.msra.mxu0 %v868
        %893 = vmatprep.subr.bf16.mxu0 0
        %894 = vmatpush1.bf16.msra.mxu0 0
        %895 = vmatprep.subr.bf16.mxu0 0
        %896 = vmatpush1.bf16.msra.mxu0 0
        %897 = vmatprep.subr.bf16.mxu0 0
        %898 = vmatpush1.bf16.msra.mxu0 0
        %899 = vmatprep.subr.bf16.mxu0 0
        %900 = vmatpush1.bf16.msra.mxu0 0
        %901 = vmatprep.subr.bf16.mxu0 0
        %902 = vmatpush1.bf16.msra.mxu0 0
        %903 = vmatprep.subr.bf16.mxu0 0
        %904 = vmatpush1.bf16.msra.mxu0 0
        %905 = vmatprep.subr.bf16.mxu0 0
        %906 = vmatpush1.bf16.msra.mxu0 0
        %907 = vmatprep.subr.bf16.mxu0 0
        %908 = vmatpush1.bf16.msra.mxu0 0
        %909 = vmatprep.mubr.bf16.mxu0 0
        %910 = vmatmul.mubr.bf16.gmra.mrb[0].mxu0 %v693
        %v911 = vpop.f32.mrb[0].mxu0
        %v912 = vadd.f32 %v824, %v911
        %v913 = vpop.f32.mrb[0].mxu0
        %v914 = vpop.f32.mrb[0].mxu0
        %v915 = vpop.f32.mrb[0].mxu0
        %916 = vdwg.mxu0
        %v917 = vld [vmem:[#allocation2] sm:$0xe]
        %s918 = scalar_lea.vmem [#allocation7], 128
        %v919 = vld [vmem:[%s918] sm:$0xf]
        %v920 = vld [vmem:[%s918 + $0x4] sm:$0xf]
        %v921 = vld [vmem:[%s918 + $0x8] sm:$0xf]
        %v922 = vld [vmem:[%s918 + $0xc] sm:$0xf]
        %v923 = vld [vmem:[%s918 + $0x10] sm:$0xf]
        %v924 = vld [vmem:[%s918 + $0x14] sm:$0xf]
        %v925 = vld [vmem:[%s918 + $0x18] sm:$0xf]
        %v926 = vld [vmem:[%s918 + $0x1c] sm:$0xf]
        %v927 = vld [vmem:[%s918 + $0x20] sm:$0xf]
        %v928 = vld [vmem:[%s918 + $0x24] sm:$0xf]
        %v929 = vld [vmem:[%s918 + $0x28] sm:$0xf]
        %v930 = vld [vmem:[%s918 + $0x2c] sm:$0xf]
        %v931 = vld [vmem:[%s918 + $0x30] sm:$0xf]
        %v932 = vld [vmem:[%s918 + $0x34] sm:$0xf]
        %v933 = vld [vmem:[%s918 + $0x38] sm:$0xf]
        %v934 = vld [vmem:[%s918 + $0x3c] sm:$0xf]
        %v936 = vunpack.c.l.b16 %v917
        %v937 = vpack.c.b16 %v731, %v936
        %v938 = vrot.slane %v937, 1
        %v956 = vunpack.c.l.b16 %v919
        %v957 = vunpack.c.l.b16 %v920
        %v958 = vunpack.c.l.b16 %v921
        %v959 = vunpack.c.l.b16 %v922
        %v960 = vunpack.c.l.b16 %v923
        %v961 = vunpack.c.l.b16 %v924
        %v962 = vunpack.c.l.b16 %v925
        %v963 = vunpack.c.l.b16 %v926
        %v964 = vunpack.c.l.b16 %v927
        %v965 = vunpack.c.l.b16 %v928
        %v966 = vunpack.c.l.b16 %v929
        %v967 = vunpack.c.l.b16 %v930
        %v968 = vunpack.c.l.b16 %v931
        %v969 = vunpack.c.l.b16 %v932
        %v970 = vunpack.c.l.b16 %v933
        %v971 = vunpack.c.l.b16 %v934
        %v972 = vpack.c.b16 %v957, %v956
        %v973 = vpack.c.b16 %v959, %v958
        %v974 = vpack.c.b16 %v961, %v960
        %v975 = vpack.c.b16 %v963, %v962
        %v976 = vpack.c.b16 %v965, %v964
        %v977 = vpack.c.b16 %v967, %v966
        %v978 = vpack.c.b16 %v969, %v968
        %v979 = vpack.c.b16 %v971, %v970
        %988 = vmatprep.subr.bf16.mxu0 0
        %989 = vmatpush1.bf16.msra.mxu0 %v972
        %990 = vmatprep.subr.bf16.mxu0 0
        %991 = vmatpush1.bf16.msra.mxu0 %v973
        %992 = vmatprep.subr.bf16.mxu0 0
        %993 = vmatpush1.bf16.msra.mxu0 %v974
        %994 = vmatprep.subr.bf16.mxu0 0
        %995 = vmatpush1.bf16.msra.mxu0 %v975
        %996 = vmatprep.subr.bf16.mxu0 0
        %997 = vmatpush1.bf16.msra.mxu0 %v976
        %998 = vmatprep.subr.bf16.mxu0 0
        %999 = vmatpush1.bf16.msra.mxu0 %v977
        %1000 = vmatprep.subr.bf16.mxu0 0
        %1001 = vmatpush1.bf16.msra.mxu0 %v978
        %1002 = vmatprep.subr.bf16.mxu0 0
        %1003 = vmatpush1.bf16.msra.mxu0 %v979
        %1004 = vmatprep.subr.bf16.mxu0 0
        %1005 = vmatpush1.bf16.msra.mxu0 0
        %1006 = vmatprep.subr.bf16.mxu0 0
        %1007 = vmatpush1.bf16.msra.mxu0 0
        %1008 = vmatprep.subr.bf16.mxu0 0
        %1009 = vmatpush1.bf16.msra.mxu0 0
        %1010 = vmatprep.subr.bf16.mxu0 0
        %1011 = vmatpush1.bf16.msra.mxu0 0
        %1012 = vmatprep.subr.bf16.mxu0 0
        %1013 = vmatpush1.bf16.msra.mxu0 0
        %1014 = vmatprep.subr.bf16.mxu0 0
        %1015 = vmatpush1.bf16.msra.mxu0 0
        %1016 = vmatprep.subr.bf16.mxu0 0
        %1017 = vmatpush1.bf16.msra.mxu0 0
        %1018 = vmatprep.subr.bf16.mxu0 0
        %1019 = vmatpush1.bf16.msra.mxu0 0
        %1020 = vmatprep.mubr.bf16.mxu0 0
        %1021 = vmatmul.mubr.bf16.gmra.mrb[0].mxu0 %v938
        %v1022 = vpop.f32.mrb[0].mxu0
        %v1023 = vadd.f32 0.0, %v1022
        %v1024 = vpop.f32.mrb[0].mxu0
        %v1025 = vpop.f32.mrb[0].mxu0
        %v1026 = vpop.f32.mrb[0].mxu0
        %1027 = vdwg.mxu0
        %v1028 = vadd.f32 %v912, %v1023
        %v1029 = vld [vmem:[#allocation10] sm:$0xf]
        %v1030 = vld [vmem:[#allocation10 + $0x4] sm:$0xf]
        %v1031 = vld [vmem:[#allocation10 + $0x8] sm:$0xf]
        %v1032 = vld [vmem:[#allocation10 + $0xc] sm:$0xf]
        %v1033 = vld [vmem:[#allocation10 + $0x10] sm:$0xf]
        %v1034 = vld [vmem:[#allocation10 + $0x14] sm:$0xf]
        %v1035 = vld [vmem:[#allocation10 + $0x18] sm:$0xf]
        %v1036 = vld [vmem:[#allocation10 + $0x1c] sm:$0xf]
        %v1037 = vld [vmem:[#allocation11] sm:$0x1]
        %v1039 = vlaneseq
        %v1040 = vshrl.u32 %v1039, 7
        %v1041 = vsub.s32 0, %v1040
        %v1042 = vrot.slane %v1037, %v1041
        %v1052 = vunpack.c.l.b16 %v1029
        %v1053 = vunpack.c.l.b16 %v1030
        %v1054 = vunpack.c.l.b16 %v1031
        %v1055 = vunpack.c.l.b16 %v1032
        %v1056 = vunpack.c.l.b16 %v1033
        %v1057 = vunpack.c.l.b16 %v1034
        %v1058 = vunpack.c.l.b16 %v1035
        %v1059 = vunpack.c.l.b16 %v1036
        %v1060 = vpack.c.b16 %v1053, %v1052
        %v1061 = vpack.c.b16 %v1055, %v1054
        %v1062 = vpack.c.b16 %v1057, %v1056
        %v1063 = vpack.c.b16 %v1059, %v1058
        %1068 = vmatprep.subr.bf16.mxu0 0
        %1069 = vmatpush1.bf16.msra.mxu0 %v1060
        %1070 = vmatprep.subr.bf16.mxu0 0
        %1071 = vmatpush1.bf16.msra.mxu0 %v1061
        %1072 = vmatprep.subr.bf16.mxu0 0
        %1073 = vmatpush1.bf16.msra.mxu0 %v1062
        %1074 = vmatprep.subr.bf16.mxu0 0
        %1075 = vmatpush1.bf16.msra.mxu0 %v1063
        %1076 = vmatprep.subr.bf16.mxu0 0
        %1077 = vmatpush1.bf16.msra.mxu0 0
        %1078 = vmatprep.subr.bf16.mxu0 0
        %1079 = vmatpush1.bf16.msra.mxu0 0
        %1080 = vmatprep.subr.bf16.mxu0 0
        %1081 = vmatpush1.bf16.msra.mxu0 0
        %1082 = vmatprep.subr.bf16.mxu0 0
        %1083 = vmatpush1.bf16.msra.mxu0 0
        %1084 = vmatprep.subr.bf16.mxu0 0
        %1085 = vmatpush1.bf16.msra.mxu0 0
        %1086 = vmatprep.subr.bf16.mxu0 0
        %1087 = vmatpush1.bf16.msra.mxu0 0
        %1088 = vmatprep.subr.bf16.mxu0 0
        %1089 = vmatpush1.bf16.msra.mxu0 0
        %1090 = vmatprep.subr.bf16.mxu0 0
        %1091 = vmatpush1.bf16.msra.mxu0 0
        %1092 = vmatprep.subr.bf16.mxu0 0
        %1093 = vmatpush1.bf16.msra.mxu0 0
        %1094 = vmatprep.subr.bf16.mxu0 0
        %1095 = vmatpush1.bf16.msra.mxu0 0
        %1096 = vmatprep.subr.bf16.mxu0 0
        %1097 = vmatpush1.bf16.msra.mxu0 0
        %1098 = vmatprep.subr.bf16.mxu0 0
        %1099 = vmatpush1.bf16.msra.mxu0 0
        %1100 = vmatprep.mubr.bf16.mxu0 0
        %1101 = vmatmul.mubr.bf16.gmra.mrb[0].mxu0 %v453
        %v1102 = vpop.f32.mrb[0].mxu0
        %v1103 = vadd.f32 %v1042, %v1102
        %v1104 = vpop.f32.mrb[0].mxu0
        %v1105 = vpop.f32.mrb[0].mxu0
        %v1106 = vpop.f32.mrb[0].mxu0
        %1107 = vdwg.mxu0
        %v1108 = vld [vmem:[#allocation8] sm:$0x1]
        %v1110 = vlaneseq
        %v1111 = vshrl.u32 %v1110, 7
        %v1112 = vsub.s32 0, %v1111
        %v1113 = vrot.slane %v1108, %v1112
        %v1115 = vadd.f32 %v1028, %v1113
        %v1116 = vadd.f32 %v1115, %v1103
        %v1117 = vmax.f32 %v1116, 0.0
        %v1118 = vpack.c.bf16 %v1117, %v1117
        %1119 = vst [vmem:[%s405] sm:$0xf] %v1118
        %p1120 = scmp.lt.s32.totalorder %s23, 1
        %s1121 = scalar_select %p1120, %s23, 1
        %s1122 = smul.addr %s1121, 4
        %s1123 = scalar_lea.vmem %s8, %s1122
        // Predicated region
        $region77: #{resnet1d_forward.7} parent=51 // pred_check
          %p1124 = pneg %p219
        $region78: #{resnet1d_forward.7} parent=51 // pred_check_branch
          %1126 = sbr.rel (%p1124) target = $region80
        $region79: #{resnet1d_forward.7} parent=51 // pred_region
          _
        $region80: #{resnet1d_forward.7} parent=51 // pred_fallthru
          _
      $region52: #{resnet1d_forward.7} parent=5 // pred_fallthru
        _
      %p1127 = scmp.le.s32.totalorder 2, %s18
      // Predicated region
      $region81: #{resnet1d_forward.7} parent=5 // pred_check
        %p1128 = pneg %p1127
      $region82: #{resnet1d_forward.7} parent=5 // pred_check_branch
        %1130 = sbr.rel (%p1128) target = $region84
      $region83: #{resnet1d_forward.7} parent=5 // pred_region
        %s1131 = ssub.s32 %s18, 2
        // Predicated region
        $region85: #{resnet1d_forward.7} parent=83 // pred_check
          %p1132 = pneg %p225
        $region86: #{resnet1d_forward.7} parent=83 // pred_check_branch
          %1134 = sbr.rel (%p1132) target = $region88
        $region87: #{resnet1d_forward.7} parent=83 // pred_region
          %p1135 = scmp.lt.s32.totalorder %s24, 1
          %s1136 = scalar_select %p1135, %s24, 1
          %s1137 = smul.addr %s1136, 4
          %s1138 = scalar_lea.vmem %s8, %s1137
        $region88: #{resnet1d_forward.7} parent=83 // pred_fallthru
          _
      $region84: #{resnet1d_forward.7} parent=5 // pred_fallthru
        _
    $region6: #{resnet1d_forward.7} parent=1 // loop_footer
      %s22 = sadd.s32 1, %s18
    $region7: #{resnet1d_forward.7} parent=1 // loop_footer_branch
      %17 = sbr.rel target = $region3
    $region8: #{resnet1d_forward.7} parent=1 // loop_exit
      _
    %1139 = vsyncpa [#allocation4], 1
    %s1140 = scalar_lea.sflag [#allocation4], 1
    %1141 = vsyncpa %s1140, 1
    %1142 = vsyncpa [#allocation6], 1
    %1143 = vsyncpa [#allocation9], 1
    %1144 = vsyncpa [#allocation12], 1

// kernel: resnet1d_forward.8
$region0: #{resnet1d_forward.8}
  #allocation0 [shape = 'u32[]', space=smem, size = 0x4, offset = 0x4, fixed_abs, tag = 'smem constant byte address 0x4 - core index']
  #allocation1 [shape = 'u32[144,128]{1,0:T(1,128)}', space=vmem, size = 0x12000, scoped, tag = 'internal scratch']
  #allocation2 [shape = 'bf16[6,256]{1,0:T(8,128)(2,1)}', space=vmem, size = 0x1000, scoped, tag = 'scratch operand']
  %s0 = inlined_call_operand.vmem [shape: bf16[2,5,128], index: 0, kind: input, shape index: {}]
  %s1 = inlined_call_operand.vmem [shape: bf16[2,5,128], index: 1, kind: input, shape index: {}]
  %s2 = inlined_call_operand.vmem [shape: bf16[3,128,256], index: 2, kind: input, shape index: {}]
  %s3 = inlined_call_operand.vmem [shape: f32[1,256], index: 3, kind: input, shape index: {}]
  %s4 = inlined_call_operand.vmem [shape: bf16[3,256,256], index: 4, kind: input, shape index: {}]
  %s5 = inlined_call_operand.vmem [shape: f32[1,256], index: 5, kind: input, shape index: {}]
  %s6 = inlined_call_operand.vmem [shape: bf16[128,256], index: 6, kind: input, shape index: {}]
  %s7 = inlined_call_operand.vmem [shape: f32[1,256], index: 7, kind: input, shape index: {}]
  %s8 = inlined_call_operand.vmem [shape: bf16[2,4,256], index: 8, kind: output, shape index: {}]
  %s9 = sld [smem:[#allocation0]]
  $region65: #{resnet1d_forward.8} parent=0
    _
  %s11 = ssub.s32 1, %s9
  %s12 = scalar_select 0, %s11, %s9
  loop: start=0, step=1, limit=4
  $region2: #{resnet1d_forward.8} parent=0 // loop_pre_header
    _
  $region3: #{resnet1d_forward.8} parent=0 // loop_header
    %s14 = sphi 0, %s18
    %p15 = scmp.ge.s32.totalorder %s14, 4
    %s24 = sphi 0, %s26
    %s27 = sphi 0, %s24
    %s28 = sphi 0, %s27
    %s44 = sphi 0, %s28
    %s50 = sphi 0, %s52
    %s53 = sphi 0, %s50
    %s54 = sphi 0, %s53
    %s70 = sphi 0, %s54
    %s74 = sphi 0, %s74
    %s76 = sphi 0, %s74
    %s77 = sphi 0, %s76
    %s91 = sphi 0, %s77
    %s95 = sphi 0, %s95
    %s97 = sphi 0, %s95
    %s98 = sphi 0, %s97
    %s112 = sphi 0, %s98
    %s116 = sphi 0, %s116
    %s118 = sphi 0, %s116
    %s119 = sphi 0, %s118
    %s133 = sphi 0, %s119
    %s137 = sphi 0, %s137
    %s139 = sphi 0, %s137
    %s140 = sphi 0, %s139
    %s154 = sphi 0, %s140
    %s158 = sphi 0, %s158
    %s160 = sphi 0, %s158
    %s161 = sphi 0, %s160
    %s175 = sphi 0, %s161
    %s179 = sphi 0, %s179
    %s181 = sphi 0, %s179
    %s182 = sphi 0, %s181
    %s196 = sphi 0, %s182
    %s202 = sphi 0, %s204
    %s205 = sphi 0, %s202
    %s206 = sphi 0, %s205
    %s222 = sphi 0, %s206
  $region4: #{resnet1d_forward.8} parent=0 // loop_header_branch
    %17 = sbr.rel (%p15) target = $region8
  $region5: #{resnet1d_forward.8} parent=0 // loop_body
    %s19 = ssub.s32 %s14, 1
    %s20 = ssub.s32 %s14, 2
    %s21 = sadd.s32 %s14, 1
    %s22 = ssub.s32 %s14, %s21
    %p23 = scmp.eq.s32.totalorder %s22, 0
    %s25 = sadd.s32 %s24, 1
    %s26 = scalar_select %p23, %s24, %s25
    %p29 = pneg %p23
    %p30 = scmp.eq.s32.totalorder %s14, 1
    %p31 = por %p29, %p30
    %p32 = scmp.ne.s32.totalorder %s24, %s27
    %p33 = scmp.eq.s32.totalorder %s14, 0
    %p34 = por %p32, %p33
    %p35 = scmp.ne.s32.totalorder %s24, %s27
    %p36 = scmp.eq.s32.totalorder %s19, 1
    %p37 = por %p35, %p36
    %p38 = scmp.ne.s32.totalorder %s27, %s28
    %p39 = scmp.eq.s32.totalorder %s19, 0
    %p40 = por %p38, %p39
    %p41 = scmp.ne.s32.totalorder %s27, %s28
    %p42 = scmp.eq.s32.totalorder %s20, 1
    %p43 = por %p41, %p42
    %p45 = scmp.ne.s32.totalorder %s28, %s44
    %p46 = scmp.eq.s32.totalorder %s20, 0
    %p47 = por %p45, %p46
    %s48 = ssub.s32 %s14, %s21
    %p49 = scmp.eq.s32.totalorder %s48, 0
    %s51 = sadd.s32 %s50, 1
    %s52 = scalar_select %p49, %s50, %s51
    %p55 = pneg %p49
    %p56 = scmp.eq.s32.totalorder %s14, 1
    %p57 = por %p55, %p56
    %p58 = scmp.ne.s32.totalorder %s50, %s53
    %p59 = scmp.eq.s32.totalorder %s14, 0
    %p60 = por %p58, %p59
    %p61 = scmp.ne.s32.totalorder %s50, %s53
    %p62 = scmp.eq.s32.totalorder %s19, 1
    %p63 = por %p61, %p62
    %p64 = scmp.ne.s32.totalorder %s53, %s54
    %p65 = scmp.eq.s32.totalorder %s19, 0
    %p66 = por %p64, %p65
    %p67 = scmp.ne.s32.totalorder %s53, %s54
    %p68 = scmp.eq.s32.totalorder %s20, 1
    %p69 = por %p67, %p68
    %p71 = scmp.ne.s32.totalorder %s54, %s70
    %p72 = scmp.eq.s32.totalorder %s20, 0
    %p73 = por %p71, %p72
    %s75 = sadd.s32 %s74, 1
    %p78 = scmp.eq.s32.totalorder %s14, 1
    %p79 = scmp.ne.s32.totalorder %s74, %s76
    %p80 = scmp.eq.s32.totalorder %s14, 0
    %p81 = por %p79, %p80
    %p82 = scmp.ne.s32.totalorder %s74, %s76
    %p83 = scmp.eq.s32.totalorder %s19, 1
    %p84 = por %p82, %p83
    %p85 = scmp.ne.s32.totalorder %s76, %s77
    %p86 = scmp.eq.s32.totalorder %s19, 0
    %p87 = por %p85, %p86
    %p88 = scmp.ne.s32.totalorder %s76, %s77
    %p89 = scmp.eq.s32.totalorder %s20, 1
    %p90 = por %p88, %p89
    %p92 = scmp.ne.s32.totalorder %s77, %s91
    %p93 = scmp.eq.s32.totalorder %s20, 0
    %p94 = por %p92, %p93
    %s96 = sadd.s32 %s95, 1
    %p99 = scmp.eq.s32.totalorder %s14, 1
    %p100 = scmp.ne.s32.totalorder %s95, %s97
    %p101 = scmp.eq.s32.totalorder %s14, 0
    %p102 = por %p100, %p101
    %p103 = scmp.ne.s32.totalorder %s95, %s97
    %p104 = scmp.eq.s32.totalorder %s19, 1
    %p105 = por %p103, %p104
    %p106 = scmp.ne.s32.totalorder %s97, %s98
    %p107 = scmp.eq.s32.totalorder %s19, 0
    %p108 = por %p106, %p107
    %p109 = scmp.ne.s32.totalorder %s97, %s98
    %p110 = scmp.eq.s32.totalorder %s20, 1
    %p111 = por %p109, %p110
    %p113 = scmp.ne.s32.totalorder %s98, %s112
    %p114 = scmp.eq.s32.totalorder %s20, 0
    %p115 = por %p113, %p114
    %s117 = sadd.s32 %s116, 1
    %p120 = scmp.eq.s32.totalorder %s14, 1
    %p121 = scmp.ne.s32.totalorder %s116, %s118
    %p122 = scmp.eq.s32.totalorder %s14, 0
    %p123 = por %p121, %p122
    %p124 = scmp.ne.s32.totalorder %s116, %s118
    %p125 = scmp.eq.s32.totalorder %s19, 1
    %p126 = por %p124, %p125
    %p127 = scmp.ne.s32.totalorder %s118, %s119
    %p128 = scmp.eq.s32.totalorder %s19, 0
    %p129 = por %p127, %p128
    %p130 = scmp.ne.s32.totalorder %s118, %s119
    %p131 = scmp.eq.s32.totalorder %s20, 1
    %p132 = por %p130, %p131
    %p134 = scmp.ne.s32.totalorder %s119, %s133
    %p135 = scmp.eq.s32.totalorder %s20, 0
    %p136 = por %p134, %p135
    %s138 = sadd.s32 %s137, 1
    %p141 = scmp.eq.s32.totalorder %s14, 1
    %p142 = scmp.ne.s32.totalorder %s137, %s139
    %p143 = scmp.eq.s32.totalorder %s14, 0
    %p144 = por %p142, %p143
    %p145 = scmp.ne.s32.totalorder %s137, %s139
    %p146 = scmp.eq.s32.totalorder %s19, 1
    %p147 = por %p145, %p146
    %p148 = scmp.ne.s32.totalorder %s139, %s140
    %p149 = scmp.eq.s32.totalorder %s19, 0
    %p150 = por %p148, %p149
    %p151 = scmp.ne.s32.totalorder %s139, %s140
    %p152 = scmp.eq.s32.totalorder %s20, 1
    %p153 = por %p151, %p152
    %p155 = scmp.ne.s32.totalorder %s140, %s154
    %p156 = scmp.eq.s32.totalorder %s20, 0
    %p157 = por %p155, %p156
    %s159 = sadd.s32 %s158, 1
    %p162 = scmp.eq.s32.totalorder %s14, 1
    %p163 = scmp.ne.s32.totalorder %s158, %s160
    %p164 = scmp.eq.s32.totalorder %s14, 0
    %p165 = por %p163, %p164
    %p166 = scmp.ne.s32.totalorder %s158, %s160
    %p167 = scmp.eq.s32.totalorder %s19, 1
    %p168 = por %p166, %p167
    %p169 = scmp.ne.s32.totalorder %s160, %s161
    %p170 = scmp.eq.s32.totalorder %s19, 0
    %p171 = por %p169, %p170
    %p172 = scmp.ne.s32.totalorder %s160, %s161
    %p173 = scmp.eq.s32.totalorder %s20, 1
    %p174 = por %p172, %p173
    %p176 = scmp.ne.s32.totalorder %s161, %s175
    %p177 = scmp.eq.s32.totalorder %s20, 0
    %p178 = por %p176, %p177
    %s180 = sadd.s32 %s179, 1
    %p183 = scmp.eq.s32.totalorder %s14, 1
    %p184 = scmp.ne.s32.totalorder %s179, %s181
    %p185 = scmp.eq.s32.totalorder %s14, 0
    %p186 = por %p184, %p185
    %p187 = scmp.ne.s32.totalorder %s179, %s181
    %p188 = scmp.eq.s32.totalorder %s19, 1
    %p189 = por %p187, %p188
    %p190 = scmp.ne.s32.totalorder %s181, %s182
    %p191 = scmp.eq.s32.totalorder %s19, 0
    %p192 = por %p190, %p191
    %p193 = scmp.ne.s32.totalorder %s181, %s182
    %p194 = scmp.eq.s32.totalorder %s20, 1
    %p195 = por %p193, %p194
    %p197 = scmp.ne.s32.totalorder %s182, %s196
    %p198 = scmp.eq.s32.totalorder %s20, 0
    %p199 = por %p197, %p198
    %s200 = ssub.s32 %s14, %s21
    %p201 = scmp.eq.s32.totalorder %s200, 0
    %s203 = sadd.s32 %s202, 1
    %s204 = scalar_select %p201, %s202, %s203
    %p207 = pneg %p201
    %p208 = scmp.eq.s32.totalorder %s14, 1
    %p209 = por %p207, %p208
    %p210 = scmp.ne.s32.totalorder %s202, %s205
    %p211 = scmp.eq.s32.totalorder %s14, 0
    %p212 = por %p210, %p211
    %p213 = scmp.ne.s32.totalorder %s202, %s205
    %p214 = scmp.eq.s32.totalorder %s19, 1
    %p215 = por %p213, %p214
    %p216 = scmp.ne.s32.totalorder %s205, %s206
    %p217 = scmp.eq.s32.totalorder %s19, 0
    %p218 = por %p216, %p217
    %p219 = scmp.ne.s32.totalorder %s205, %s206
    %p220 = scmp.eq.s32.totalorder %s20, 1
    %p221 = por %p219, %p220
    %p223 = scmp.ne.s32.totalorder %s206, %s222
    %p224 = scmp.eq.s32.totalorder %s20, 0
    %p225 = por %p223, %p224
    %p226 = scmp.le.s32.totalorder 1, %s14
    %p227 = scmp.lt.s32.totalorder %s14, 3
    %p228 = pnand %p226, %p227
    %p229 = pneg %p228
    // Predicated region
    $region9: #{resnet1d_forward.8} parent=5 // pred_check
      _
    $region10: #{resnet1d_forward.8} parent=5 // pred_check_branch
      %231 = sbr.rel (%p228) target = $region12
    $region11: #{resnet1d_forward.8} parent=5 // pred_region
      %s232 = ssub.s32 %s14, 1
      // Predicated region
      $region13: #{resnet1d_forward.8} parent=11 // pred_check
        %p233 = pneg %p87
      $region14: #{resnet1d_forward.8} parent=11 // pred_check_branch
        %235 = sbr.rel (%p233) target = $region16
      $region15: #{resnet1d_forward.8} parent=11 // pred_region
        _
      $region16: #{resnet1d_forward.8} parent=11 // pred_fallthru
        _
      // Predicated region
      $region17: #{resnet1d_forward.8} parent=11 // pred_check
        %p236 = pneg %p108
      $region18: #{resnet1d_forward.8} parent=11 // pred_check_branch
        %238 = sbr.rel (%p236) target = $region20
      $region19: #{resnet1d_forward.8} parent=11 // pred_region
        _
      $region20: #{resnet1d_forward.8} parent=11 // pred_fallthru
        _
      // Predicated region
      $region21: #{resnet1d_forward.8} parent=11 // pred_check
        %p239 = pneg %p129
      $region22: #{resnet1d_forward.8} parent=11 // pred_check_branch
        %241 = sbr.rel (%p239) target = $region24
      $region23: #{resnet1d_forward.8} parent=11 // pred_region
        _
      $region24: #{resnet1d_forward.8} parent=11 // pred_fallthru
        _
      // Predicated region
      $region25: #{resnet1d_forward.8} parent=11 // pred_check
        %p242 = pneg %p150
      $region26: #{resnet1d_forward.8} parent=11 // pred_check_branch
        %244 = sbr.rel (%p242) target = $region28
      $region27: #{resnet1d_forward.8} parent=11 // pred_region
        _
      $region28: #{resnet1d_forward.8} parent=11 // pred_fallthru
        _
      // Predicated region
      $region29: #{resnet1d_forward.8} parent=11 // pred_check
        %p245 = pneg %p171
      $region30: #{resnet1d_forward.8} parent=11 // pred_check_branch
        %247 = sbr.rel (%p245) target = $region32
      $region31: #{resnet1d_forward.8} parent=11 // pred_region
        _
      $region32: #{resnet1d_forward.8} parent=11 // pred_fallthru
        _
      // Predicated region
      $region33: #{resnet1d_forward.8} parent=11 // pred_check
        %p248 = pneg %p192
      $region34: #{resnet1d_forward.8} parent=11 // pred_check_branch
        %250 = sbr.rel (%p248) target = $region36
      $region35: #{resnet1d_forward.8} parent=11 // pred_region
        _
      $region36: #{resnet1d_forward.8} parent=11 // pred_fallthru
        _
    $region12: #{resnet1d_forward.8} parent=5 // pred_fallthru
      _
    %p251 = scmp.lt.s32.totalorder %s14, 2
    // Predicated region
    $region37: #{resnet1d_forward.8} parent=5 // pred_check
      %p252 = pneg %p251
    $region38: #{resnet1d_forward.8} parent=5 // pred_check_branch
      %254 = sbr.rel (%p252) target = $region40
    $region39: #{resnet1d_forward.8} parent=5 // pred_region
      // Predicated region
      $region41: #{resnet1d_forward.8} parent=39 // pred_check
        %p255 = pneg %p34
      $region42: #{resnet1d_forward.8} parent=39 // pred_check_branch
        %257 = sbr.rel (%p255) target = $region44
      $region43: #{resnet1d_forward.8} parent=39 // pred_region
        %p258 = scmp.lt.s32.totalorder %s14, 1
        %s259 = scalar_select %p258, %s14, 1
        %s260 = smul.addr %s259, 4
        %s261 = scalar_lea.vmem %s0, %s260
      $region44: #{resnet1d_forward.8} parent=39 // pred_fallthru
        _
      // Predicated region
      $region45: #{resnet1d_forward.8} parent=39 // pred_check
        %p262 = pneg %p60
      $region46: #{resnet1d_forward.8} parent=39 // pred_check_branch
        %264 = sbr.rel (%p262) target = $region48
      $region47: #{resnet1d_forward.8} parent=39 // pred_region
        %p265 = scmp.lt.s32.totalorder %s14, 1
        %s266 = scalar_select %p265, %s14, 1
        %s267 = smul.addr %s266, 4
        %s268 = scalar_lea.vmem %s1, %s267
      $region48: #{resnet1d_forward.8} parent=39 // pred_fallthru
        _
    $region40: #{resnet1d_forward.8} parent=5 // pred_fallthru
      _
    %p269 = scmp.le.s32.totalorder 1, %s14
    %p270 = scmp.lt.s32.totalorder %s14, 3
    %p271 = pnand %p269, %p270
    %p272 = pneg %p271
    // Predicated region
    $region49: #{resnet1d_forward.8} parent=5 // pred_check
      _
    $region50: #{resnet1d_forward.8} parent=5 // pred_check_branch
      %274 = sbr.rel (%p271) target = $region52
    $region51: #{resnet1d_forward.8} parent=5 // pred_region
      %s275 = ssub.s32 %s14, 1
      %p276 = scmp.lt.s32.totalorder %s19, 1
      %s277 = scalar_select %p276, %s19, 1
      %s278 = smul.addr %s277, 4
      %s279 = scalar_lea.vmem %s0, %s278
      %p280 = pneg %p40
      %p281 = pneg %p37
      %p282 = scmp.lt.s32.totalorder %s19, 1
      %s283 = scalar_select %p282, %s19, 1
      %s284 = smul.addr %s283, 4
      %s285 = scalar_lea.vmem %s1, %s284
      %p286 = pneg %p66
      %p287 = pneg %p63
      %p288 = pneg %p87
      %p289 = pneg %p84
      %p290 = pneg %p108
      %p291 = pneg %p105
      %p292 = pneg %p129
      %p293 = pneg %p126
      %p294 = pneg %p150
      %p295 = pneg %p147
      %p296 = pneg %p171
      %p297 = pneg %p168
      %p298 = pneg %p192
      %p299 = pneg %p189
      %p300 = pneg %p218
      %p301 = pneg %p215
      %p302 = scmp.lt.s32.totalorder %s19, 1
      %s303 = scalar_select %p302, %s19, 1
      %s304 = smul.addr %s303, 2
      %s305 = smul.addr %s304, 2
      %s306 = scalar_lea.vmem %s8, %s305
      %p307 = scmp.lt.s32.totalorder %s19, 1
      %s308 = scalar_select %p307, %s19, 1
      %s309 = smul.addr %s308, 4
      %s310 = scalar_lea.vmem %s0, %s309
      %p311 = scmp.lt.s32.totalorder %s19, 1
      %s312 = scalar_select %p311, %s19, 1
      %s313 = smul.addr %s312, 4
      %s314 = scalar_lea.vmem %s1, %s313
      %p315 = scmp.lt.s32.totalorder %s19, 1
      %s316 = scalar_select %p315, %s19, 1
      %s317 = smul.addr %s316, 2
      %s318 = smul.addr %s317, 2
      %s319 = scalar_lea.vmem %s8, %s318
      %v321 = vld [vmem:[%s310] sm:$0x3]
      %v322 = vld [vmem:[%s314] sm:$0x3]
      %v323 = vld [vmem:[%s310] sm:$0x7]
      %v324 = vld [vmem:[%s2] sm:$0xff]
      %v325 = vld [vmem:[%s2 + $0x8] sm:$0xff]
      %v326 = vld [vmem:[%s2 + $0x10] sm:$0xff]
      %v327 = vld [vmem:[%s2 + $0x18] sm:$0xff]
      %v328 = vld [vmem:[%s2 + $0x20] sm:$0xff]
      %v329 = vld [vmem:[%s2 + $0x28] sm:$0xff]
      %v330 = vld [vmem:[%s2 + $0x30] sm:$0xff]
      %v331 = vld [vmem:[%s2 + $0x38] sm:$0xff]
      %v332 = vld [vmem:[%s2 + $0x40] sm:$0xff]
      %v333 = vld [vmem:[%s2 + $0x48] sm:$0xff]
      %v334 = vld [vmem:[%s2 + $0x50] sm:$0xff]
      %v335 = vld [vmem:[%s2 + $0x58] sm:$0xff]
      %v336 = vld [vmem:[%s2 + $0x60] sm:$0xff]
      %v337 = vld [vmem:[%s2 + $0x68] sm:$0xff]
      %v338 = vld [vmem:[%s2 + $0x70] sm:$0xff]
      %v339 = vld [vmem:[%s2 + $0x78] sm:$0xff]
      %s340 = scalar_lea.vmem %s2, 128
      %v341 = vld [vmem:[%s340] sm:$0xff]
      %v342 = vld [vmem:[%s340 + $0x8] sm:$0xff]
      %v343 = vld [vmem:[%s340 + $0x10] sm:$0xff]
      %v344 = vld [vmem:[%s340 + $0x18] sm:$0xff]
      %v345 = vld [vmem:[%s340 + $0x20] sm:$0xff]
      %v346 = vld [vmem:[%s340 + $0x28] sm:$0xff]
      %v347 = vld [vmem:[%s340 + $0x30] sm:$0xff]
      %v348 = vld [vmem:[%s340 + $0x38] sm:$0xff]
      %v349 = vld [vmem:[%s340 + $0x40] sm:$0xff]
      %v350 = vld [vmem:[%s340 + $0x48] sm:$0xff]
      %v351 = vld [vmem:[%s340 + $0x50] sm:$0xff]
      %v352 = vld [vmem:[%s340 + $0x58] sm:$0xff]
      %v353 = vld [vmem:[%s340 + $0x60] sm:$0xff]
      %v354 = vld [vmem:[%s340 + $0x68] sm:$0xff]
      %v355 = vld [vmem:[%s340 + $0x70] sm:$0xff]
      %v356 = vld [vmem:[%s340 + $0x78] sm:$0xff]
      %v373 = vunpack.c.l.b16 %v341
      %v374 = vunpack.c.h.b16 %v341
      %v375 = vunpack.c.l.b16 %v342
      %v376 = vunpack.c.h.b16 %v342
      %v377 = vunpack.c.l.b16 %v343
      %v378 = vunpack.c.h.b16 %v343
      %v379 = vunpack.c.l.b16 %v344
      %v380 = vunpack.c.h.b16 %v344
      %v381 = vunpack.c.l.b16 %v345
      %v382 = vunpack.c.h.b16 %v345
      %v383 = vunpack.c.l.b16 %v346
      %v384 = vunpack.c.h.b16 %v346
      %v385 = vunpack.c.l.b16 %v347
      %v386 = vunpack.c.h.b16 %v347
      %v387 = vunpack.c.l.b16 %v348
      %v388 = vunpack.c.h.b16 %v348
      %v389 = vunpack.c.l.b16 %v349
      %v390 = vunpack.c.h.b16 %v349
      %v391 = vunpack.c.l.b16 %v350
      %v392 = vunpack.c.h.b16 %v350
      %v393 = vunpack.c.l.b16 %v351
      %v394 = vunpack.c.h.b16 %v351
      %v395 = vunpack.c.l.b16 %v352
      %v396 = vunpack.c.h.b16 %v352
      %v397 = vunpack.c.l.b16 %v353
      %v398 = vunpack.c.h.b16 %v353
      %v399 = vunpack.c.l.b16 %v354
      %v400 = vunpack.c.h.b16 %v354
      %v401 = vunpack.c.l.b16 %v355
      %v402 = vunpack.c.h.b16 %v355
      %v403 = vunpack.c.l.b16 %v356
      %v404 = vunpack.c.h.b16 %v356
      %v405 = vpack.c.b16 %v375, %v373
      %v406 = vpack.c.b16 %v376, %v374
      %v407 = vpack.c.b16 %v379, %v377
      %v408 = vpack.c.b16 %v380, %v378
      %v409 = vpack.c.b16 %v383, %v381
      %v410 = vpack.c.b16 %v384, %v382
      %v411 = vpack.c.b16 %v387, %v385
      %v412 = vpack.c.b16 %v388, %v386
      %v413 = vpack.c.b16 %v391, %v389
      %v414 = vpack.c.b16 %v392, %v390
      %v415 = vpack.c.b16 %v395, %v393
      %v416 = vpack.c.b16 %v396, %v394
      %v417 = vpack.c.b16 %v399, %v397
      %v418 = vpack.c.b16 %v400, %v398
      %v419 = vpack.c.b16 %v403, %v401
      %v420 = vpack.c.b16 %v404, %v402
      %437 = vmatprep.subr.bf16.mxu0 %v406
      %438 = vmatpush1.bf16.msra.mxu0 %v405
      %439 = vmatprep.subr.bf16.mxu0 %v408
      %440 = vmatpush1.bf16.msra.mxu0 %v407
      %441 = vmatprep.subr.bf16.mxu0 %v410
      %442 = vmatpush1.bf16.msra.mxu0 %v409
      %443 = vmatprep.subr.bf16.mxu0 %v412
      %444 = vmatpush1.bf16.msra.mxu0 %v411
      %445 = vmatprep.subr.bf16.mxu0 %v414
      %446 = vmatpush1.bf16.msra.mxu0 %v413
      %447 = vmatprep.subr.bf16.mxu0 %v416
      %448 = vmatpush1.bf16.msra.mxu0 %v415
      %449 = vmatprep.subr.bf16.mxu0 %v418
      %450 = vmatpush1.bf16.msra.mxu0 %v417
      %451 = vmatprep.subr.bf16.mxu0 %v420
      %452 = vmatpush1.bf16.msra.mxu0 %v419
      %453 = vmatprep.subr.bf16.mxu0 0
      %454 = vmatpush1.bf16.msra.mxu0 0
      %455 = vmatprep.subr.bf16.mxu0 0
      %456 = vmatpush1.bf16.msra.mxu0 0
      %457 = vmatprep.subr.bf16.mxu0 0
      %458 = vmatpush1.bf16.msra.mxu0 0
      %459 = vmatprep.subr.bf16.mxu0 0
      %460 = vmatpush1.bf16.msra.mxu0 0
      %461 = vmatprep.subr.bf16.mxu0 0
      %462 = vmatpush1.bf16.msra.mxu0 0
      %463 = vmatprep.subr.bf16.mxu0 0
      %464 = vmatpush1.bf16.msra.mxu0 0
      %465 = vmatprep.subr.bf16.mxu0 0
      %466 = vmatpush1.bf16.msra.mxu0 0
      %467 = vmatprep.subr.bf16.mxu0 0
      %468 = vmatpush1.bf16.msra.mxu0 0
      %469 = vmatprep.mubr.bf16.mxu0 0
      %470 = vmatmul.mubr.bf16.gmra.mrb[0].mxu0 %v322
      %v471 = vpop.f32.mrb[0].mxu0
      %v472 = vadd.f32 0.0, %v471
      %v473 = vpop.f32.mrb[0].mxu0
      %v474 = vadd.f32 0.0, %v473
      %v475 = vpop.f32.mrb[0].mxu0
      %v476 = vpop.f32.mrb[0].mxu0
      %477 = vdwg.mxu0
      %v494 = vunpack.c.l.b16 %v324
      %v495 = vunpack.c.h.b16 %v324
      %v496 = vunpack.c.l.b16 %v325
      %v497 = vunpack.c.h.b16 %v325
      %v498 = vunpack.c.l.b16 %v326
      %v499 = vunpack.c.h.b16 %v326
      %v500 = vunpack.c.l.b16 %v327
      %v501 = vunpack.c.h.b16 %v327
      %v502 = vunpack.c.l.b16 %v328
      %v503 = vunpack.c.h.b16 %v328
      %v504 = vunpack.c.l.b16 %v329
      %v505 = vunpack.c.h.b16 %v329
      %v506 = vunpack.c.l.b16 %v330
      %v507 = vunpack.c.h.b16 %v330
      %v508 = vunpack.c.l.b16 %v331
      %v509 = vunpack.c.h.b16 %v331
      %v510 = vunpack.c.l.b16 %v332
      %v511 = vunpack.c.h.b16 %v332
      %v512 = vunpack.c.l.b16 %v333
      %v513 = vunpack.c.h.b16 %v333
      %v514 = vunpack.c.l.b16 %v334
      %v515 = vunpack.c.h.b16 %v334
      %v516 = vunpack.c.l.b16 %v335
      %v517 = vunpack.c.h.b16 %v335
      %v518 = vunpack.c.l.b16 %v336
      %v519 = vunpack.c.h.b16 %v336
      %v520 = vunpack.c.l.b16 %v337
      %v521 = vunpack.c.h.b16 %v337
      %v522 = vunpack.c.l.b16 %v338
      %v523 = vunpack.c.h.b16 %v338
      %v524 = vunpack.c.l.b16 %v339
      %v525 = vunpack.c.h.b16 %v339
      %v526 = vpack.c.b16 %v496, %v494
      %v527 = vpack.c.b16 %v497, %v495
      %v528 = vpack.c.b16 %v500, %v498
      %v529 = vpack.c.b16 %v501, %v499
      %v530 = vpack.c.b16 %v504, %v502
      %v531 = vpack.c.b16 %v505, %v503
      %v532 = vpack.c.b16 %v508, %v506
      %v533 = vpack.c.b16 %v509, %v507
      %v534 = vpack.c.b16 %v512, %v510
      %v535 = vpack.c.b16 %v513, %v511
      %v536 = vpack.c.b16 %v516, %v514
      %v537 = vpack.c.b16 %v517, %v515
      %v538 = vpack.c.b16 %v520, %v518
      %v539 = vpack.c.b16 %v521, %v519
      %v540 = vpack.c.b16 %v524, %v522
      %v541 = vpack.c.b16 %v525, %v523
      %558 = vmatprep.subr.bf16.mxu0 %v527
      %559 = vmatpush1.bf16.msra.mxu0 %v526
      %560 = vmatprep.subr.bf16.mxu0 %v529
      %561 = vmatpush1.bf16.msra.mxu0 %v528
      %562 = vmatprep.subr.bf16.mxu0 %v531
      %563 = vmatpush1.bf16.msra.mxu0 %v530
      %564 = vmatprep.subr.bf16.mxu0 %v533
      %565 = vmatpush1.bf16.msra.mxu0 %v532
      %566 = vmatprep.subr.bf16.mxu0 %v535
      %567 = vmatpush1.bf16.msra.mxu0 %v534
      %568 = vmatprep.subr.bf16.mxu0 %v537
      %569 = vmatpush1.bf16.msra.mxu0 %v536
      %570 = vmatprep.subr.bf16.mxu0 %v539
      %571 = vmatpush1.bf16.msra.mxu0 %v538
      %572 = vmatprep.subr.bf16.mxu0 %v541
      %573 = vmatpush1.bf16.msra.mxu0 %v540
      %574 = vmatprep.subr.bf16.mxu0 0
      %575 = vmatpush1.bf16.msra.mxu0 0
      %576 = vmatprep.subr.bf16.mxu0 0
      %577 = vmatpush1.bf16.msra.mxu0 0
      %578 = vmatprep.subr.bf16.mxu0 0
      %579 = vmatpush1.bf16.msra.mxu0 0
      %580 = vmatprep.subr.bf16.mxu0 0
      %581 = vmatpush1.bf16.msra.mxu0 0
      %582 = vmatprep.subr.bf16.mxu0 0
      %583 = vmatpush1.bf16.msra.mxu0 0
      %584 = vmatprep.subr.bf16.mxu0 0
      %585 = vmatpush1.bf16.msra.mxu0 0
      %586 = vmatprep.subr.bf16.mxu0 0
      %587 = vmatpush1.bf16.msra.mxu0 0
      %588 = vmatprep.subr.bf16.mxu0 0
      %589 = vmatpush1.bf16.msra.mxu0 0
      %590 = vmatprep.mubr.bf16.mxu0 0
      %591 = vmatmul.mubr.bf16.gmra.mrb[0].mxu0 %v321
      %v592 = vpop.f32.mrb[0].mxu0
      %v593 = vadd.f32 %v472, %v592
      %v594 = vpop.f32.mrb[0].mxu0
      %v595 = vadd.f32 %v474, %v594
      %v596 = vpop.f32.mrb[0].mxu0
      %v597 = vpop.f32.mrb[0].mxu0
      %598 = vdwg.mxu0
      %s599 = scalar_lea.vmem %s2, 256
      %v600 = vld [vmem:[%s599] sm:$0xff]
      %v601 = vld [vmem:[%s599 + $0x8] sm:$0xff]
      %v602 = vld [vmem:[%s599 + $0x10] sm:$0xff]
      %v603 = vld [vmem:[%s599 + $0x18] sm:$0xff]
      %v604 = vld [vmem:[%s599 + $0x20] sm:$0xff]
      %v605 = vld [vmem:[%s599 + $0x28] sm:$0xff]
      %v606 = vld [vmem:[%s599 + $0x30] sm:$0xff]
      %v607 = vld [vmem:[%s599 + $0x38] sm:$0xff]
      %v608 = vld [vmem:[%s599 + $0x40] sm:$0xff]
      %v609 = vld [vmem:[%s599 + $0x48] sm:$0xff]
      %v610 = vld [vmem:[%s599 + $0x50] sm:$0xff]
      %v611 = vld [vmem:[%s599 + $0x58] sm:$0xff]
      %v612 = vld [vmem:[%s599 + $0x60] sm:$0xff]
      %v613 = vld [vmem:[%s599 + $0x68] sm:$0xff]
      %v614 = vld [vmem:[%s599 + $0x70] sm:$0xff]
      %v615 = vld [vmem:[%s599 + $0x78] sm:$0xff]
      %v617 = vunpack.c.l.b16 %v323
      %v618 = vpack.c.b16 %v617, %v617
      %v620 = vshrl.u32 %v618, 16
      %v622 = vshll.u32 %v618, 16
      %v624 = vrot.slane %v622, 1
      %v625 = vor.u32 %v620, %v624
      %v643 = vunpack.c.l.b16 %v600
      %v644 = vunpack.c.h.b16 %v600
      %v645 = vunpack.c.l.b16 %v601
      %v646 = vunpack.c.h.b16 %v601
      %v647 = vunpack.c.l.b16 %v602
      %v648 = vunpack.c.h.b16 %v602
      %v649 = vunpack.c.l.b16 %v603
      %v650 = vunpack.c.h.b16 %v603
      %v651 = vunpack.c.l.b16 %v604
      %v652 = vunpack.c.h.b16 %v604
      %v653 = vunpack.c.l.b16 %v605
      %v654 = vunpack.c.h.b16 %v605
      %v655 = vunpack.c.l.b16 %v606
      %v656 = vunpack.c.h.b16 %v606
      %v657 = vunpack.c.l.b16 %v607
      %v658 = vunpack.c.h.b16 %v607
      %v659 = vunpack.c.l.b16 %v608
      %v660 = vunpack.c.h.b16 %v608
      %v661 = vunpack.c.l.b16 %v609
      %v662 = vunpack.c.h.b16 %v609
      %v663 = vunpack.c.l.b16 %v610
      %v664 = vunpack.c.h.b16 %v610
      %v665 = vunpack.c.l.b16 %v611
      %v666 = vunpack.c.h.b16 %v611
      %v667 = vunpack.c.l.b16 %v612
      %v668 = vunpack.c.h.b16 %v612
      %v669 = vunpack.c.l.b16 %v613
      %v670 = vunpack.c.h.b16 %v613
      %v671 = vunpack.c.l.b16 %v614
      %v672 = vunpack.c.h.b16 %v614
      %v673 = vunpack.c.l.b16 %v615
      %v674 = vunpack.c.h.b16 %v615
      %v675 = vpack.c.b16 %v645, %v643
      %v676 = vpack.c.b16 %v646, %v644
      %v677 = vpack.c.b16 %v649, %v647
      %v678 = vpack.c.b16 %v650, %v648
      %v679 = vpack.c.b16 %v653, %v651
      %v680 = vpack.c.b16 %v654, %v652
      %v681 = vpack.c.b16 %v657, %v655
      %v682 = vpack.c.b16 %v658, %v656
      %v683 = vpack.c.b16 %v661, %v659
      %v684 = vpack.c.b16 %v662, %v660
      %v685 = vpack.c.b16 %v665, %v663
      %v686 = vpack.c.b16 %v666, %v664
      %v687 = vpack.c.b16 %v669, %v667
      %v688 = vpack.c.b16 %v670, %v668
      %v689 = vpack.c.b16 %v673, %v671
      %v690 = vpack.c.b16 %v674, %v672
      %707 = vmatprep.subr.bf16.mxu0 %v676
      %708 = vmatpush1.bf16.msra.mxu0 %v675
      %709 = vmatprep.subr.bf16.mxu0 %v678
      %710 = vmatpush1.bf16.msra.mxu0 %v677
      %711 = vmatprep.subr.bf16.mxu0 %v680
      %712 = vmatpush1.bf16.msra.mxu0 %v679
      %713 = vmatprep.subr.bf16.mxu0 %v682
      %714 = vmatpush1.bf16.msra.mxu0 %v681
      %715 = vmatprep.subr.bf16.mxu0 %v684
      %716 = vmatpush1.bf16.msra.mxu0 %v683
      %717 = vmatprep.subr.bf16.mxu0 %v686
      %718 = vmatpush1.bf16.msra.mxu0 %v685
      %719 = vmatprep.subr.bf16.mxu0 %v688
      %720 = vmatpush1.bf16.msra.mxu0 %v687
      %721 = vmatprep.subr.bf16.mxu0 %v690
      %722 = vmatpush1.bf16.msra.mxu0 %v689
      %723 = vmatprep.subr.bf16.mxu0 0
      %724 = vmatpush1.bf16.msra.mxu0 0
      %725 = vmatprep.subr.bf16.mxu0 0
      %726 = vmatpush1.bf16.msra.mxu0 0
      %727 = vmatprep.subr.bf16.mxu0 0
      %728 = vmatpush1.bf16.msra.mxu0 0
      %729 = vmatprep.subr.bf16.mxu0 0
      %730 = vmatpush1.bf16.msra.mxu0 0
      %731 = vmatprep.subr.bf16.mxu0 0
      %732 = vmatpush1.bf16.msra.mxu0 0
      %733 = vmatprep.subr.bf16.mxu0 0
      %734 = vmatpush1.bf16.msra.mxu0 0
      %735 = vmatprep.subr.bf16.mxu0 0
      %736 = vmatpush1.bf16.msra.mxu0 0
      %737 = vmatprep.subr.bf16.mxu0 0
      %738 = vmatpush1.bf16.msra.mxu0 0
      %739 = vmatprep.mubr.bf16.mxu0 0
      %740 = vmatmul.mubr.bf16.gmra.mrb[0].mxu0 %v625
      %v741 = vpop.f32.mrb[0].mxu0
      %v742 = vadd.f32 0.0, %v741
      %v743 = vpop.f32.mrb[0].mxu0
      %v744 = vadd.f32 0.0, %v743
      %v745 = vpop.f32.mrb[0].mxu0
      %v746 = vpop.f32.mrb[0].mxu0
      %747 = vdwg.mxu0
      %v748 = vadd.f32 %v593, %v742
      %v749 = vadd.f32 %v595, %v744
      %v750 = vld [vmem:[%s3] sm:$0x3]
      %v752 = vlaneseq
      %v753 = vshrl.u32 %v752, 7
      %v754 = vsub.s32 0, %v753
      %v755 = vrot.slane %v750, %v754
      %v756 = vlaneseq
      %v757 = vshrl.u32 %v756, 7
      %v758 = vsub.s32 1, %v757
      %v759 = vrot.slane %v750, %v758
      %v762 = vadd.f32 %v748, %v755
      %v763 = vadd.f32 %v749, %v759
      %v764 = vmax.f32 %v762, 0.0
      %v765 = vmax.f32 %v763, 0.0
      %vm766 = vcmask 1040384
      %vm767 = vsmask.f32 256
      %vm768 = vmand %vm766, %vm767
      %vm769 = vcmask 1044484
      %vm770 = vsmask.f32 4352
      %vm771 = vmand %vm769, %vm770
      %vm772 = vmor %vm771, %vm768
      %v773 = vld [vmem:[#allocation2] sm:$0x11]
      %v774 = vsel %vm772, 0, %v773
      %775 = vst [vmem:[#allocation2] sm:$0x11] %v774
      %vm776 = vcmask 1042434
      %vm777 = vsmask.f32 7946
      %vm778 = vmand %vm776, %vm777
      %vm779 = vcmask 1046534
      %vm780 = vsmask.f32 7962
      %vm781 = vmand %vm779, %vm780
      %vm782 = vmor %vm781, %vm778
      %v783 = vld [vmem:[#allocation2] sm:$0x44]
      %v784 = vsel %vm782, 0, %v783
      %785 = vst [vmem:[#allocation2] sm:$0x44] %v784
      %v786 = vpack.c.bf16 %v764, %v764
      %v787 = vpack.c.bf16 %v765, %v765
      %v790 = vunpack.c.l.b16 %v786
      %v791 = vunpack.c.l.b16 %v787
      %v792 = vpack.c.b16 %v791, %v790
      %v794 = vshrl.u32 %v792, 16
      %v796 = vrot.slane %v794, 7
      %v797 = vshll.u32 %v792, 16
      %v799 = vor.u32 %v796, %v797
      %vm801 = vcmask 1042432
      %vm802 = vsmask.f32 2306
      %vm803 = vmand %vm801, %vm802
      %vm804 = vcmask 1046532
      %vm805 = vsmask.f32 6418
      %vm806 = vmand %vm804, %vm805
      %vm807 = vmor %vm806, %vm803
      %v808 = vld [vmem:[#allocation2] sm:$0x77]
      %v809 = vsel %vm807, %v799, %v808
      %810 = vst [vmem:[#allocation2] sm:$0x77] %v809
      %v811 = vld [vmem:[#allocation2] sm:$0x33]
      %v812 = vld [vmem:[%s4] sm:$0xff]
      %v813 = vld [vmem:[%s4 + $0x8] sm:$0xff]
      %v814 = vld [vmem:[%s4 + $0x10] sm:$0xff]
      %v815 = vld [vmem:[%s4 + $0x18] sm:$0xff]
      %v816 = vld [vmem:[%s4 + $0x20] sm:$0xff]
      %v817 = vld [vmem:[%s4 + $0x28] sm:$0xff]
      %v818 = vld [vmem:[%s4 + $0x30] sm:$0xff]
      %v819 = vld [vmem:[%s4 + $0x38] sm:$0xff]
      %v820 = vld [vmem:[%s4 + $0x40] sm:$0xff]
      %v821 = vld [vmem:[%s4 + $0x48] sm:$0xff]
      %v822 = vld [vmem:[%s4 + $0x50] sm:$0xff]
      %v823 = vld [vmem:[%s4 + $0x58] sm:$0xff]
      %v824 = vld [vmem:[%s4 + $0x60] sm:$0xff]
      %v825 = vld [vmem:[%s4 + $0x68] sm:$0xff]
      %v826 = vld [vmem:[%s4 + $0x70] sm:$0xff]
      %v827 = vld [vmem:[%s4 + $0x78] sm:$0xff]
      %v828 = vld [vmem:[%s4 + $0x80] sm:$0xff]
      %v829 = vld [vmem:[%s4 + $0x88] sm:$0xff]
      %v830 = vld [vmem:[%s4 + $0x90] sm:$0xff]
      %v831 = vld [vmem:[%s4 + $0x98] sm:$0xff]
      %v832 = vld [vmem:[%s4 + $0xa0] sm:$0xff]
      %v833 = vld [vmem:[%s4 + $0xa8] sm:$0xff]
      %v834 = vld [vmem:[%s4 + $0xb0] sm:$0xff]
      %v835 = vld [vmem:[%s4 + $0xb8] sm:$0xff]
      %v836 = vld [vmem:[%s4 + $0xc0] sm:$0xff]
      %v837 = vld [vmem:[%s4 + $0xc8] sm:$0xff]
      %v838 = vld [vmem:[%s4 + $0xd0] sm:$0xff]
      %v839 = vld [vmem:[%s4 + $0xd8] sm:$0xff]
      %v840 = vld [vmem:[%s4 + $0xe0] sm:$0xff]
      %v841 = vld [vmem:[%s4 + $0xe8] sm:$0xff]
      %v842 = vld [vmem:[%s4 + $0xf0] sm:$0xff]
      %v843 = vld [vmem:[%s4 + $0xf8] sm:$0xff]
      %v844 = vld [vmem:[#allocation2] sm:$0x77]
      %s845 = scalar_lea.vmem %s4, 256
      %v846 = vld [vmem:[%s845] sm:$0xff]
      %v847 = vld [vmem:[%s845 + $0x8] sm:$0xff]
      %v848 = vld [vmem:[%s845 + $0x10] sm:$0xff]
      %v849 = vld [vmem:[%s845 + $0x18] sm:$0xff]
      %v850 = vld [vmem:[%s845 + $0x20] sm:$0xff]
      %v851 = vld [vmem:[%s845 + $0x28] sm:$0xff]
      %v852 = vld [vmem:[%s845 + $0x30] sm:$0xff]
      %v853 = vld [vmem:[%s845 + $0x38] sm:$0xff]
      %v854 = vld [vmem:[%s845 + $0x40] sm:$0xff]
      %v855 = vld [vmem:[%s845 + $0x48] sm:$0xff]
      %v856 = vld [vmem:[%s845 + $0x50] sm:$0xff]
      %v857 = vld [vmem:[%s845 + $0x58] sm:$0xff]
      %v858 = vld [vmem:[%s845 + $0x60] sm:$0xff]
      %v859 = vld [vmem:[%s845 + $0x68] sm:$0xff]
      %v860 = vld [vmem:[%s845 + $0x70] sm:$0xff]
      %v861 = vld [vmem:[%s845 + $0x78] sm:$0xff]
      %v862 = vld [vmem:[%s845 + $0x80] sm:$0xff]
      %v863 = vld [vmem:[%s845 + $0x88] sm:$0xff]
      %v864 = vld [vmem:[%s845 + $0x90] sm:$0xff]
      %v865 = vld [vmem:[%s845 + $0x98] sm:$0xff]
      %v866 = vld [vmem:[%s845 + $0xa0] sm:$0xff]
      %v867 = vld [vmem:[%s845 + $0xa8] sm:$0xff]
      %v868 = vld [vmem:[%s845 + $0xb0] sm:$0xff]
      %v869 = vld [vmem:[%s845 + $0xb8] sm:$0xff]
      %v870 = vld [vmem:[%s845 + $0xc0] sm:$0xff]
      %v871 = vld [vmem:[%s845 + $0xc8] sm:$0xff]
      %v872 = vld [vmem:[%s845 + $0xd0] sm:$0xff]
      %v873 = vld [vmem:[%s845 + $0xd8] sm:$0xff]
      %v874 = vld [vmem:[%s845 + $0xe0] sm:$0xff]
      %v875 = vld [vmem:[%s845 + $0xe8] sm:$0xff]
      %v876 = vld [vmem:[%s845 + $0xf0] sm:$0xff]
      %v877 = vld [vmem:[%s845 + $0xf8] sm:$0xff]
      %v879 = vunpack.c.l.b16 %v844
      %v880 = vunpack.c.h.b16 %v844
      %v881 = vpack.c.b16 %v879, %v879
      %v882 = vpack.c.b16 %v880, %v880
      %v884 = vshrl.u32 %v881, 16
      %v886 = vshll.u32 %v881, 16
      %v888 = vrot.slane %v886, 1
      %v889 = vor.u32 %v884, %v888
      %v891 = vshrl.u32 %v882, 16
      %v893 = vshll.u32 %v882, 16
      %v895 = vrot.slane %v893, 1
      %v896 = vor.u32 %v891, %v895
      %v931 = vunpack.c.l.b16 %v846
      %v932 = vunpack.c.h.b16 %v846
      %v933 = vunpack.c.l.b16 %v847
      %v934 = vunpack.c.h.b16 %v847
      %v935 = vunpack.c.l.b16 %v848
      %v936 = vunpack.c.h.b16 %v848
      %v937 = vunpack.c.l.b16 %v849
      %v938 = vunpack.c.h.b16 %v849
      %v939 = vunpack.c.l.b16 %v850
      %v940 = vunpack.c.h.b16 %v850
      %v941 = vunpack.c.l.b16 %v851
      %v942 = vunpack.c.h.b16 %v851
      %v943 = vunpack.c.l.b16 %v852
      %v944 = vunpack.c.h.b16 %v852
      %v945 = vunpack.c.l.b16 %v853
      %v946 = vunpack.c.h.b16 %v853
      %v947 = vunpack.c.l.b16 %v854
      %v948 = vunpack.c.h.b16 %v854
      %v949 = vunpack.c.l.b16 %v855
      %v950 = vunpack.c.h.b16 %v855
      %v951 = vunpack.c.l.b16 %v856
      %v952 = vunpack.c.h.b16 %v856
      %v953 = vunpack.c.l.b16 %v857
      %v954 = vunpack.c.h.b16 %v857
      %v955 = vunpack.c.l.b16 %v858
      %v956 = vunpack.c.h.b16 %v858
      %v957 = vunpack.c.l.b16 %v859
      %v958 = vunpack.c.h.b16 %v859
      %v959 = vunpack.c.l.b16 %v860
      %v960 = vunpack.c.h.b16 %v860
      %v961 = vunpack.c.l.b16 %v861
      %v962 = vunpack.c.h.b16 %v861
      %v963 = vunpack.c.l.b16 %v862
      %v964 = vunpack.c.h.b16 %v862
      %v965 = vunpack.c.l.b16 %v863
      %v966 = vunpack.c.h.b16 %v863
      %v967 = vunpack.c.l.b16 %v864
      %v968 = vunpack.c.h.b16 %v864
      %v969 = vunpack.c.l.b16 %v865
      %v970 = vunpack.c.h.b16 %v865
      %v971 = vunpack.c.l.b16 %v866
      %v972 = vunpack.c.h.b16 %v866
      %v973 = vunpack.c.l.b16 %v867
      %v974 = vunpack.c.h.b16 %v867
      %v975 = vunpack.c.l.b16 %v868
      %v976 = vunpack.c.h.b16 %v868
      %v977 = vunpack.c.l.b16 %v869
      %v978 = vunpack.c.h.b16 %v869
      %v979 = vunpack.c.l.b16 %v870
      %v980 = vunpack.c.h.b16 %v870
      %v981 = vunpack.c.l.b16 %v871
      %v982 = vunpack.c.h.b16 %v871
      %v983 = vunpack.c.l.b16 %v872
      %v984 = vunpack.c.h.b16 %v872
      %v985 = vunpack.c.l.b16 %v873
      %v986 = vunpack.c.h.b16 %v873
      %v987 = vunpack.c.l.b16 %v874
      %v988 = vunpack.c.h.b16 %v874
      %v989 = vunpack.c.l.b16 %v875
      %v990 = vunpack.c.h.b16 %v875
      %v991 = vunpack.c.l.b16 %v876
      %v992 = vunpack.c.h.b16 %v876
      %v993 = vunpack.c.l.b16 %v877
      %v994 = vunpack.c.h.b16 %v877
      %v995 = vpack.c.b16 %v933, %v931
      %v996 = vpack.c.b16 %v934, %v932
      %v997 = vpack.c.b16 %v937, %v935
      %v998 = vpack.c.b16 %v938, %v936
      %v999 = vpack.c.b16 %v941, %v939
      %v1000 = vpack.c.b16 %v942, %v940
      %v1001 = vpack.c.b16 %v945, %v943
      %v1002 = vpack.c.b16 %v946, %v944
      %v1003 = vpack.c.b16 %v949, %v947
      %v1004 = vpack.c.b16 %v950, %v948
      %v1005 = vpack.c.b16 %v953, %v951
      %v1006 = vpack.c.b16 %v954, %v952
      %v1007 = vpack.c.b16 %v957, %v955
      %v1008 = vpack.c.b16 %v958, %v956
      %v1009 = vpack.c.b16 %v961, %v959
      %v1010 = vpack.c.b16 %v962, %v960
      %v1011 = vpack.c.b16 %v965, %v963
      %v1012 = vpack.c.b16 %v966, %v964
      %v1013 = vpack.c.b16 %v969, %v967
      %v1014 = vpack.c.b16 %v970, %v968
      %v1015 = vpack.c.b16 %v973, %v971
      %v1016 = vpack.c.b16 %v974, %v972
      %v1017 = vpack.c.b16 %v977, %v975
      %v1018 = vpack.c.b16 %v978, %v976
      %v1019 = vpack.c.b16 %v981, %v979
      %v1020 = vpack.c.b16 %v982, %v980
      %v1021 = vpack.c.b16 %v985, %v983
      %v1022 = vpack.c.b16 %v986, %v984
      %v1023 = vpack.c.b16 %v989, %v987
      %v1024 = vpack.c.b16 %v990, %v988
      %v1025 = vpack.c.b16 %v993, %v991
      %v1026 = vpack.c.b16 %v994, %v992
      %1059 = vmatprep.subr.bf16.mxu0 %v996
      %1060 = vmatpush1.bf16.msra.mxu0 %v995
      %1061 = vmatprep.subr.bf16.mxu0 %v998
      %1062 = vmatpush1.bf16.msra.mxu0 %v997
      %1063 = vmatprep.subr.bf16.mxu0 %v1000
      %1064 = vmatpush1.bf16.msra.mxu0 %v999
      %1065 = vmatprep.subr.bf16.mxu0 %v1002
      %1066 = vmatpush1.bf16.msra.mxu0 %v1001
      %1067 = vmatprep.subr.bf16.mxu0 %v1004
      %1068 = vmatpush1.bf16.msra.mxu0 %v1003
      %1069 = vmatprep.subr.bf16.mxu0 %v1006
      %1070 = vmatpush1.bf16.msra.mxu0 %v1005
      %1071 = vmatprep.subr.bf16.mxu0 %v1008
      %1072 = vmatpush1.bf16.msra.mxu0 %v1007
      %1073 = vmatprep.subr.bf16.mxu0 %v1010
      %1074 = vmatpush1.bf16.msra.mxu0 %v1009
      %1075 = vmatprep.subr.bf16.mxu0 %v1012
      %1076 = vmatpush1.bf16.msra.mxu0 %v1011
      %1077 = vmatprep.subr.bf16.mxu0 %v1014
      %1078 = vmatpush1.bf16.msra.mxu0 %v1013
      %1079 = vmatprep.subr.bf16.mxu0 %v1016
      %1080 = vmatpush1.bf16.msra.mxu0 %v1015
      %1081 = vmatprep.subr.bf16.mxu0 %v1018
      %1082 = vmatpush1.bf16.msra.mxu0 %v1017
      %1083 = vmatprep.subr.bf16.mxu0 %v1020
      %1084 = vmatpush1.bf16.msra.mxu0 %v1019
      %1085 = vmatprep.subr.bf16.mxu0 %v1022
      %1086 = vmatpush1.bf16.msra.mxu0 %v1021
      %1087 = vmatprep.subr.bf16.mxu0 %v1024
      %1088 = vmatpush1.bf16.msra.mxu0 %v1023
      %1089 = vmatprep.subr.bf16.mxu0 %v1026
      %1090 = vmatpush1.bf16.msra.mxu0 %v1025
      %1091 = vmatprep.mubr.bf16.mxu0 %v896
      %1092 = vmatmul.mubr.bf16.gmra.mrb[0].mxu0 %v889
      %v1093 = vpop.f32.mrb[0].mxu0
      %v1094 = vadd.f32 0.0, %v1093
      %v1095 = vpop.f32.mrb[0].mxu0
      %v1096 = vadd.f32 0.0, %v1095
      %v1097 = vpop.f32.mrb[0].mxu0
      %v1098 = vpop.f32.mrb[0].mxu0
      %1099 = vdwg.mxu0
      %v1101 = vunpack.c.l.b16 %v811
      %v1102 = vunpack.c.h.b16 %v811
      %v1103 = vpack.c.b16 %v1101, %v1101
      %v1104 = vpack.c.b16 %v1102, %v1102
      %v1139 = vunpack.c.l.b16 %v812
      %v1140 = vunpack.c.h.b16 %v812
      %v1141 = vunpack.c.l.b16 %v813
      %v1142 = vunpack.c.h.b16 %v813
      %v1143 = vunpack.c.l.b16 %v814
      %v1144 = vunpack.c.h.b16 %v814
      %v1145 = vunpack.c.l.b16 %v815
      %v1146 = vunpack.c.h.b16 %v815
      %v1147 = vunpack.c.l.b16 %v816
      %v1148 = vunpack.c.h.b16 %v816
      %v1149 = vunpack.c.l.b16 %v817
      %v1150 = vunpack.c.h.b16 %v817
      %v1151 = vunpack.c.l.b16 %v818
      %v1152 = vunpack.c.h.b16 %v818
      %v1153 = vunpack.c.l.b16 %v819
      %v1154 = vunpack.c.h.b16 %v819
      %v1155 = vunpack.c.l.b16 %v820
      %v1156 = vunpack.c.h.b16 %v820
      %v1157 = vunpack.c.l.b16 %v821
      %v1158 = vunpack.c.h.b16 %v821
      %v1159 = vunpack.c.l.b16 %v822
      %v1160 = vunpack.c.h.b16 %v822
      %v1161 = vunpack.c.l.b16 %v823
      %v1162 = vunpack.c.h.b16 %v823
      %v1163 = vunpack.c.l.b16 %v824
      %v1164 = vunpack.c.h.b16 %v824
      %v1165 = vunpack.c.l.b16 %v825
      %v1166 = vunpack.c.h.b16 %v825
      %v1167 = vunpack.c.l.b16 %v826
      %v1168 = vunpack.c.h.b16 %v826
      %v1169 = vunpack.c.l.b16 %v827
      %v1170 = vunpack.c.h.b16 %v827
      %v1171 = vunpack.c.l.b16 %v828
      %v1172 = vunpack.c.h.b16 %v828
      %v1173 = vunpack.c.l.b16 %v829
      %v1174 = vunpack.c.h.b16 %v829
      %v1175 = vunpack.c.l.b16 %v830
      %v1176 = vunpack.c.h.b16 %v830
      %v1177 = vunpack.c.l.b16 %v831
      %v1178 = vunpack.c.h.b16 %v831
      %v1179 = vunpack.c.l.b16 %v832
      %v1180 = vunpack.c.h.b16 %v832
      %v1181 = vunpack.c.l.b16 %v833
      %v1182 = vunpack.c.h.b16 %v833
      %v1183 = vunpack.c.l.b16 %v834
      %v1184 = vunpack.c.h.b16 %v834
      %v1185 = vunpack.c.l.b16 %v835
      %v1186 = vunpack.c.h.b16 %v835
      %v1187 = vunpack.c.l.b16 %v836
      %v1188 = vunpack.c.h.b16 %v836
      %v1189 = vunpack.c.l.b16 %v837
      %v1190 = vunpack.c.h.b16 %v837
      %v1191 = vunpack.c.l.b16 %v838
      %v1192 = vunpack.c.h.b16 %v838
      %v1193 = vunpack.c.l.b16 %v839
      %v1194 = vunpack.c.h.b16 %v839
      %v1195 = vunpack.c.l.b16 %v840
      %v1196 = vunpack.c.h.b16 %v840
      %v1197 = vunpack.c.l.b16 %v841
      %v1198 = vunpack.c.h.b16 %v841
      %v1199 = vunpack.c.l.b16 %v842
      %v1200 = vunpack.c.h.b16 %v842
      %v1201 = vunpack.c.l.b16 %v843
      %v1202 = vunpack.c.h.b16 %v843
      %v1203 = vpack.c.b16 %v1141, %v1139
      %v1204 = vpack.c.b16 %v1142, %v1140
      %v1205 = vpack.c.b16 %v1145, %v1143
      %v1206 = vpack.c.b16 %v1146, %v1144
      %v1207 = vpack.c.b16 %v1149, %v1147
      %v1208 = vpack.c.b16 %v1150, %v1148
      %v1209 = vpack.c.b16 %v1153, %v1151
      %v1210 = vpack.c.b16 %v1154, %v1152
      %v1211 = vpack.c.b16 %v1157, %v1155
      %v1212 = vpack.c.b16 %v1158, %v1156
      %v1213 = vpack.c.b16 %v1161, %v1159
      %v1214 = vpack.c.b16 %v1162, %v1160
      %v1215 = vpack.c.b16 %v1165, %v1163
      %v1216 = vpack.c.b16 %v1166, %v1164
      %v1217 = vpack.c.b16 %v1169, %v1167
      %v1218 = vpack.c.b16 %v1170, %v1168
      %v1219 = vpack.c.b16 %v1173, %v1171
      %v1220 = vpack.c.b16 %v1174, %v1172
      %v1221 = vpack.c.b16 %v1177, %v1175
      %v1222 = vpack.c.b16 %v1178, %v1176
      %v1223 = vpack.c.b16 %v1181, %v1179
      %v1224 = vpack.c.b16 %v1182, %v1180
      %v1225 = vpack.c.b16 %v1185, %v1183
      %v1226 = vpack.c.b16 %v1186, %v1184
      %v1227 = vpack.c.b16 %v1189, %v1187
      %v1228 = vpack.c.b16 %v1190, %v1188
      %v1229 = vpack.c.b16 %v1193, %v1191
      %v1230 = vpack.c.b16 %v1194, %v1192
      %v1231 = vpack.c.b16 %v1197, %v1195
      %v1232 = vpack.c.b16 %v1198, %v1196
      %v1233 = vpack.c.b16 %v1201, %v1199
      %v1234 = vpack.c.b16 %v1202, %v1200
      %1267 = vmatprep.subr.bf16.mxu0 %v1204
      %1268 = vmatpush1.bf16.msra.mxu0 %v1203
      %1269 = vmatprep.subr.bf16.mxu0 %v1206
      %1270 = vmatpush1.bf16.msra.mxu0 %v1205
      %1271 = vmatprep.subr.bf16.mxu0 %v1208
      %1272 = vmatpush1.bf16.msra.mxu0 %v1207
      %1273 = vmatprep.subr.bf16.mxu0 %v1210
      %1274 = vmatpush1.bf16.msra.mxu0 %v1209
      %1275 = vmatprep.subr.bf16.mxu0 %v1212
      %1276 = vmatpush1.bf16.msra.mxu0 %v1211
      %1277 = vmatprep.subr.bf16.mxu0 %v1214
      %1278 = vmatpush1.bf16.msra.mxu0 %v1213
      %1279 = vmatprep.subr.bf16.mxu0 %v1216
      %1280 = vmatpush1.bf16.msra.mxu0 %v1215
      %1281 = vmatprep.subr.bf16.mxu0 %v1218
      %1282 = vmatpush1.bf16.msra.mxu0 %v1217
      %1283 = vmatprep.subr.bf16.mxu0 %v1220
      %1284 = vmatpush1.bf16.msra.mxu0 %v1219
      %1285 = vmatprep.subr.bf16.mxu0 %v1222
      %1286 = vmatpush1.bf16.msra.mxu0 %v1221
      %1287 = vmatprep.subr.bf16.mxu0 %v1224
      %1288 = vmatpush1.bf16.msra.mxu0 %v1223
      %1289 = vmatprep.subr.bf16.mxu0 %v1226
      %1290 = vmatpush1.bf16.msra.mxu0 %v1225
      %1291 = vmatprep.subr.bf16.mxu0 %v1228
      %1292 = vmatpush1.bf16.msra.mxu0 %v1227
      %1293 = vmatprep.subr.bf16.mxu0 %v1230
      %1294 = vmatpush1.bf16.msra.mxu0 %v1229
      %1295 = vmatprep.subr.bf16.mxu0 %v1232
      %1296 = vmatpush1.bf16.msra.mxu0 %v1231
      %1297 = vmatprep.subr.bf16.mxu0 %v1234
      %1298 = vmatpush1.bf16.msra.mxu0 %v1233
      %1299 = vmatprep.mubr.bf16.mxu0 %v1104
      %1300 = vmatmul.mubr.bf16.gmra.mrb[0].mxu0 %v1103
      %v1301 = vpop.f32.mrb[0].mxu0
      %v1302 = vadd.f32 %v1094, %v1301
      %v1303 = vpop.f32.mrb[0].mxu0
      %v1304 = vadd.f32 %v1096, %v1303
      %v1305 = vpop.f32.mrb[0].mxu0
      %v1306 = vpop.f32.mrb[0].mxu0
      %1307 = vdwg.mxu0
      %v1308 = vld [vmem:[#allocation2] sm:$0x66]
      %s1309 = scalar_lea.vmem %s4, 512
      %v1310 = vld [vmem:[%s1309] sm:$0xff]
      %v1311 = vld [vmem:[%s1309 + $0x8] sm:$0xff]
      %v1312 = vld [vmem:[%s1309 + $0x10] sm:$0xff]
      %v1313 = vld [vmem:[%s1309 + $0x18] sm:$0xff]
      %v1314 = vld [vmem:[%s1309 + $0x20] sm:$0xff]
      %v1315 = vld [vmem:[%s1309 + $0x28] sm:$0xff]
      %v1316 = vld [vmem:[%s1309 + $0x30] sm:$0xff]
      %v1317 = vld [vmem:[%s1309 + $0x38] sm:$0xff]
      %v1318 = vld [vmem:[%s1309 + $0x40] sm:$0xff]
      %v1319 = vld [vmem:[%s1309 + $0x48] sm:$0xff]
      %v1320 = vld [vmem:[%s1309 + $0x50] sm:$0xff]
      %v1321 = vld [vmem:[%s1309 + $0x58] sm:$0xff]
      %v1322 = vld [vmem:[%s1309 + $0x60] sm:$0xff]
      %v1323 = vld [vmem:[%s1309 + $0x68] sm:$0xff]
      %v1324 = vld [vmem:[%s1309 + $0x70] sm:$0xff]
      %v1325 = vld [vmem:[%s1309 + $0x78] sm:$0xff]
      %v1326 = vld [vmem:[%s1309 + $0x80] sm:$0xff]
      %v1327 = vld [vmem:[%s1309 + $0x88] sm:$0xff]
      %v1328 = vld [vmem:[%s1309 + $0x90] sm:$0xff]
      %v1329 = vld [vmem:[%s1309 + $0x98] sm:$0xff]
      %v1330 = vld [vmem:[%s1309 + $0xa0] sm:$0xff]
      %v1331 = vld [vmem:[%s1309 + $0xa8] sm:$0xff]
      %v1332 = vld [vmem:[%s1309 + $0xb0] sm:$0xff]
      %v1333 = vld [vmem:[%s1309 + $0xb8] sm:$0xff]
      %v1334 = vld [vmem:[%s1309 + $0xc0] sm:$0xff]
      %v1335 = vld [vmem:[%s1309 + $0xc8] sm:$0xff]
      %v1336 = vld [vmem:[%s1309 + $0xd0] sm:$0xff]
      %v1337 = vld [vmem:[%s1309 + $0xd8] sm:$0xff]
      %v1338 = vld [vmem:[%s1309 + $0xe0] sm:$0xff]
      %v1339 = vld [vmem:[%s1309 + $0xe8] sm:$0xff]
      %v1340 = vld [vmem:[%s1309 + $0xf0] sm:$0xff]
      %v1341 = vld [vmem:[%s1309 + $0xf8] sm:$0xff]
      %v1343 = vunpack.c.l.b16 %v1308
      %v1344 = vunpack.c.h.b16 %v1308
      %v1345 = vpack.c.b16 %v1343, %v1343
      %v1346 = vpack.c.b16 %v1344, %v1344
      %v1347 = vrot.slane %v1345, 1
      %v1348 = vrot.slane %v1346, 1
      %v1383 = vunpack.c.l.b16 %v1310
      %v1384 = vunpack.c.h.b16 %v1310
      %v1385 = vunpack.c.l.b16 %v1311
      %v1386 = vunpack.c.h.b16 %v1311
      %v1387 = vunpack.c.l.b16 %v1312
      %v1388 = vunpack.c.h.b16 %v1312
      %v1389 = vunpack.c.l.b16 %v1313
      %v1390 = vunpack.c.h.b16 %v1313
      %v1391 = vunpack.c.l.b16 %v1314
      %v1392 = vunpack.c.h.b16 %v1314
      %v1393 = vunpack.c.l.b16 %v1315
      %v1394 = vunpack.c.h.b16 %v1315
      %v1395 = vunpack.c.l.b16 %v1316
      %v1396 = vunpack.c.h.b16 %v1316
      %v1397 = vunpack.c.l.b16 %v1317
      %v1398 = vunpack.c.h.b16 %v1317
      %v1399 = vunpack.c.l.b16 %v1318
      %v1400 = vunpack.c.h.b16 %v1318
      %v1401 = vunpack.c.l.b16 %v1319
      %v1402 = vunpack.c.h.b16 %v1319
      %v1403 = vunpack.c.l.b16 %v1320
      %v1404 = vunpack.c.h.b16 %v1320
      %v1405 = vunpack.c.l.b16 %v1321
      %v1406 = vunpack.c.h.b16 %v1321
      %v1407 = vunpack.c.l.b16 %v1322
      %v1408 = vunpack.c.h.b16 %v1322
      %v1409 = vunpack.c.l.b16 %v1323
      %v1410 = vunpack.c.h.b16 %v1323
      %v1411 = vunpack.c.l.b16 %v1324
      %v1412 = vunpack.c.h.b16 %v1324
      %v1413 = vunpack.c.l.b16 %v1325
      %v1414 = vunpack.c.h.b16 %v1325
      %v1415 = vunpack.c.l.b16 %v1326
      %v1416 = vunpack.c.h.b16 %v1326
      %v1417 = vunpack.c.l.b16 %v1327
      %v1418 = vunpack.c.h.b16 %v1327
      %v1419 = vunpack.c.l.b16 %v1328
      %v1420 = vunpack.c.h.b16 %v1328
      %v1421 = vunpack.c.l.b16 %v1329
      %v1422 = vunpack.c.h.b16 %v1329
      %v1423 = vunpack.c.l.b16 %v1330
      %v1424 = vunpack.c.h.b16 %v1330
      %v1425 = vunpack.c.l.b16 %v1331
      %v1426 = vunpack.c.h.b16 %v1331
      %v1427 = vunpack.c.l.b16 %v1332
      %v1428 = vunpack.c.h.b16 %v1332
      %v1429 = vunpack.c.l.b16 %v1333
      %v1430 = vunpack.c.h.b16 %v1333
      %v1431 = vunpack.c.l.b16 %v1334
      %v1432 = vunpack.c.h.b16 %v1334
      %v1433 = vunpack.c.l.b16 %v1335
      %v1434 = vunpack.c.h.b16 %v1335
      %v1435 = vunpack.c.l.b16 %v1336
      %v1436 = vunpack.c.h.b16 %v1336
      %v1437 = vunpack.c.l.b16 %v1337
      %v1438 = vunpack.c.h.b16 %v1337
      %v1439 = vunpack.c.l.b16 %v1338
      %v1440 = vunpack.c.h.b16 %v1338
      %v1441 = vunpack.c.l.b16 %v1339
      %v1442 = vunpack.c.h.b16 %v1339
      %v1443 = vunpack.c.l.b16 %v1340
      %v1444 = vunpack.c.h.b16 %v1340
      %v1445 = vunpack.c.l.b16 %v1341
      %v1446 = vunpack.c.h.b16 %v1341
      %v1447 = vpack.c.b16 %v1385, %v1383
      %v1448 = vpack.c.b16 %v1386, %v1384
      %v1449 = vpack.c.b16 %v1389, %v1387
      %v1450 = vpack.c.b16 %v1390, %v1388
      %v1451 = vpack.c.b16 %v1393, %v1391
      %v1452 = vpack.c.b16 %v1394, %v1392
      %v1453 = vpack.c.b16 %v1397, %v1395
      %v1454 = vpack.c.b16 %v1398, %v1396
      %v1455 = vpack.c.b16 %v1401, %v1399
      %v1456 = vpack.c.b16 %v1402, %v1400
      %v1457 = vpack.c.b16 %v1405, %v1403
      %v1458 = vpack.c.b16 %v1406, %v1404
      %v1459 = vpack.c.b16 %v1409, %v1407
      %v1460 = vpack.c.b16 %v1410, %v1408
      %v1461 = vpack.c.b16 %v1413, %v1411
      %v1462 = vpack.c.b16 %v1414, %v1412
      %v1463 = vpack.c.b16 %v1417, %v1415
      %v1464 = vpack.c.b16 %v1418, %v1416
      %v1465 = vpack.c.b16 %v1421, %v1419
      %v1466 = vpack.c.b16 %v1422, %v1420
      %v1467 = vpack.c.b16 %v1425, %v1423
      %v1468 = vpack.c.b16 %v1426, %v1424
      %v1469 = vpack.c.b16 %v1429, %v1427
      %v1470 = vpack.c.b16 %v1430, %v1428
      %v1471 = vpack.c.b16 %v1433, %v1431
      %v1472 = vpack.c.b16 %v1434, %v1432
      %v1473 = vpack.c.b16 %v1437, %v1435
      %v1474 = vpack.c.b16 %v1438, %v1436
      %v1475 = vpack.c.b16 %v1441, %v1439
      %v1476 = vpack.c.b16 %v1442, %v1440
      %v1477 = vpack.c.b16 %v1445, %v1443
      %v1478 = vpack.c.b16 %v1446, %v1444
      %1511 = vmatprep.subr.bf16.mxu0 %v1448
      %1512 = vmatpush1.bf16.msra.mxu0 %v1447
      %1513 = vmatprep.subr.bf16.mxu0 %v1450
      %1514 = vmatpush1.bf16.msra.mxu0 %v1449
      %1515 = vmatprep.subr.bf16.mxu0 %v1452
      %1516 = vmatpush1.bf16.msra.mxu0 %v1451
      %1517 = vmatprep.subr.bf16.mxu0 %v1454
      %1518 = vmatpush1.bf16.msra.mxu0 %v1453
      %1519 = vmatprep.subr.bf16.mxu0 %v1456
      %1520 = vmatpush1.bf16.msra.mxu0 %v1455
      %1521 = vmatprep.subr.bf16.mxu0 %v1458
      %1522 = vmatpush1.bf16.msra.mxu0 %v1457
      %1523 = vmatprep.subr.bf16.mxu0 %v1460
      %1524 = vmatpush1.bf16.msra.mxu0 %v1459
      %1525 = vmatprep.subr.bf16.mxu0 %v1462
      %1526 = vmatpush1.bf16.msra.mxu0 %v1461
      %1527 = vmatprep.subr.bf16.mxu0 %v1464
      %1528 = vmatpush1.bf16.msra.mxu0 %v1463
      %1529 = vmatprep.subr.bf16.mxu0 %v1466
      %1530 = vmatpush1.bf16.msra.mxu0 %v1465
      %1531 = vmatprep.subr.bf16.mxu0 %v1468
      %1532 = vmatpush1.bf16.msra.mxu0 %v1467
      %1533 = vmatprep.subr.bf16.mxu0 %v1470
      %1534 = vmatpush1.bf16.msra.mxu0 %v1469
      %1535 = vmatprep.subr.bf16.mxu0 %v1472
      %1536 = vmatpush1.bf16.msra.mxu0 %v1471
      %1537 = vmatprep.subr.bf16.mxu0 %v1474
      %1538 = vmatpush1.bf16.msra.mxu0 %v1473
      %1539 = vmatprep.subr.bf16.mxu0 %v1476
      %1540 = vmatpush1.bf16.msra.mxu0 %v1475
      %1541 = vmatprep.subr.bf16.mxu0 %v1478
      %1542 = vmatpush1.bf16.msra.mxu0 %v1477
      %1543 = vmatprep.mubr.bf16.mxu0 %v1348
      %1544 = vmatmul.mubr.bf16.gmra.mrb[0].mxu0 %v1347
      %v1545 = vpop.f32.mrb[0].mxu0
      %v1546 = vadd.f32 0.0, %v1545
      %v1547 = vpop.f32.mrb[0].mxu0
      %v1548 = vadd.f32 0.0, %v1547
      %v1549 = vpop.f32.mrb[0].mxu0
      %v1550 = vpop.f32.mrb[0].mxu0
      %1551 = vdwg.mxu0
      %v1552 = vadd.f32 %v1302, %v1546
      %v1553 = vadd.f32 %v1304, %v1548
      %v1554 = vld [vmem:[%s6] sm:$0xff]
      %v1555 = vld [vmem:[%s6 + $0x8] sm:$0xff]
      %v1556 = vld [vmem:[%s6 + $0x10] sm:$0xff]
      %v1557 = vld [vmem:[%s6 + $0x18] sm:$0xff]
      %v1558 = vld [vmem:[%s6 + $0x20] sm:$0xff]
      %v1559 = vld [vmem:[%s6 + $0x28] sm:$0xff]
      %v1560 = vld [vmem:[%s6 + $0x30] sm:$0xff]
      %v1561 = vld [vmem:[%s6 + $0x38] sm:$0xff]
      %v1562 = vld [vmem:[%s6 + $0x40] sm:$0xff]
      %v1563 = vld [vmem:[%s6 + $0x48] sm:$0xff]
      %v1564 = vld [vmem:[%s6 + $0x50] sm:$0xff]
      %v1565 = vld [vmem:[%s6 + $0x58] sm:$0xff]
      %v1566 = vld [vmem:[%s6 + $0x60] sm:$0xff]
      %v1567 = vld [vmem:[%s6 + $0x68] sm:$0xff]
      %v1568 = vld [vmem:[%s6 + $0x70] sm:$0xff]
      %v1569 = vld [vmem:[%s6 + $0x78] sm:$0xff]
      %v1570 = vld [vmem:[%s7] sm:$0x3]
      %v1572 = vlaneseq
      %v1573 = vshrl.u32 %v1572, 7
      %v1574 = vsub.s32 0, %v1573
      %v1575 = vrot.slane %v1570, %v1574
      %v1576 = vlaneseq
      %v1577 = vshrl.u32 %v1576, 7
      %v1578 = vsub.s32 1, %v1577
      %v1579 = vrot.slane %v1570, %v1578
      %v1598 = vunpack.c.l.b16 %v1554
      %v1599 = vunpack.c.h.b16 %v1554
      %v1600 = vunpack.c.l.b16 %v1555
      %v1601 = vunpack.c.h.b16 %v1555
      %v1602 = vunpack.c.l.b16 %v1556
      %v1603 = vunpack.c.h.b16 %v1556
      %v1604 = vunpack.c.l.b16 %v1557
      %v1605 = vunpack.c.h.b16 %v1557
      %v1606 = vunpack.c.l.b16 %v1558
      %v1607 = vunpack.c.h.b16 %v1558
      %v1608 = vunpack.c.l.b16 %v1559
      %v1609 = vunpack.c.h.b16 %v1559
      %v1610 = vunpack.c.l.b16 %v1560
      %v1611 = vunpack.c.h.b16 %v1560
      %v1612 = vunpack.c.l.b16 %v1561
      %v1613 = vunpack.c.h.b16 %v1561
      %v1614 = vunpack.c.l.b16 %v1562
      %v1615 = vunpack.c.h.b16 %v1562
      %v1616 = vunpack.c.l.b16 %v1563
      %v1617 = vunpack.c.h.b16 %v1563
      %v1618 = vunpack.c.l.b16 %v1564
      %v1619 = vunpack.c.h.b16 %v1564
      %v1620 = vunpack.c.l.b16 %v1565
      %v1621 = vunpack.c.h.b16 %v1565
      %v1622 = vunpack.c.l.b16 %v1566
      %v1623 = vunpack.c.h.b16 %v1566
      %v1624 = vunpack.c.l.b16 %v1567
      %v1625 = vunpack.c.h.b16 %v1567
      %v1626 = vunpack.c.l.b16 %v1568
      %v1627 = vunpack.c.h.b16 %v1568
      %v1628 = vunpack.c.l.b16 %v1569
      %v1629 = vunpack.c.h.b16 %v1569
      %v1630 = vpack.c.b16 %v1600, %v1598
      %v1631 = vpack.c.b16 %v1601, %v1599
      %v1632 = vpack.c.b16 %v1604, %v1602
      %v1633 = vpack.c.b16 %v1605, %v1603
      %v1634 = vpack.c.b16 %v1608, %v1606
      %v1635 = vpack.c.b16 %v1609, %v1607
      %v1636 = vpack.c.b16 %v1612, %v1610
      %v1637 = vpack.c.b16 %v1613, %v1611
      %v1638 = vpack.c.b16 %v1616, %v1614
      %v1639 = vpack.c.b16 %v1617, %v1615
      %v1640 = vpack.c.b16 %v1620, %v1618
      %v1641 = vpack.c.b16 %v1621, %v1619
      %v1642 = vpack.c.b16 %v1624, %v1622
      %v1643 = vpack.c.b16 %v1625, %v1623
      %v1644 = vpack.c.b16 %v1628, %v1626
      %v1645 = vpack.c.b16 %v1629, %v1627
      %1662 = vmatprep.subr.bf16.mxu0 %v1631
      %1663 = vmatpush1.bf16.msra.mxu0 %v1630
      %1664 = vmatprep.subr.bf16.mxu0 %v1633
      %1665 = vmatpush1.bf16.msra.mxu0 %v1632
      %1666 = vmatprep.subr.bf16.mxu0 %v1635
      %1667 = vmatpush1.bf16.msra.mxu0 %v1634
      %1668 = vmatprep.subr.bf16.mxu0 %v1637
      %1669 = vmatpush1.bf16.msra.mxu0 %v1636
      %1670 = vmatprep.subr.bf16.mxu0 %v1639
      %1671 = vmatpush1.bf16.msra.mxu0 %v1638
      %1672 = vmatprep.subr.bf16.mxu0 %v1641
      %1673 = vmatpush1.bf16.msra.mxu0 %v1640
      %1674 = vmatprep.subr.bf16.mxu0 %v1643
      %1675 = vmatpush1.bf16.msra.mxu0 %v1642
      %1676 = vmatprep.subr.bf16.mxu0 %v1645
      %1677 = vmatpush1.bf16.msra.mxu0 %v1644
      %1678 = vmatprep.subr.bf16.mxu0 0
      %1679 = vmatpush1.bf16.msra.mxu0 0
      %1680 = vmatprep.subr.bf16.mxu0 0
      %1681 = vmatpush1.bf16.msra.mxu0 0
      %1682 = vmatprep.subr.bf16.mxu0 0
      %1683 = vmatpush1.bf16.msra.mxu0 0
      %1684 = vmatprep.subr.bf16.mxu0 0
      %1685 = vmatpush1.bf16.msra.mxu0 0
      %1686 = vmatprep.subr.bf16.mxu0 0
      %1687 = vmatpush1.bf16.msra.mxu0 0
      %1688 = vmatprep.subr.bf16.mxu0 0
      %1689 = vmatpush1.bf16.msra.mxu0 0
      %1690 = vmatprep.subr.bf16.mxu0 0
      %1691 = vmatpush1.bf16.msra.mxu0 0
      %1692 = vmatprep.subr.bf16.mxu0 0
      %1693 = vmatpush1.bf16.msra.mxu0 0
      %1694 = vmatprep.mubr.bf16.mxu0 0
      %1695 = vmatmul.mubr.bf16.gmra.mrb[0].mxu0 %v322
      %v1696 = vpop.f32.mrb[0].mxu0
      %v1697 = vadd.f32 %v1575, %v1696
      %v1698 = vpop.f32.mrb[0].mxu0
      %v1699 = vadd.f32 %v1579, %v1698
      %v1700 = vpop.f32.mrb[0].mxu0
      %v1701 = vpop.f32.mrb[0].mxu0
      %1702 = vdwg.mxu0
      %v1703 = vld [vmem:[%s5] sm:$0x3]
      %v1705 = vlaneseq
      %v1706 = vshrl.u32 %v1705, 7
      %v1707 = vsub.s32 0, %v1706
      %v1708 = vrot.slane %v1703, %v1707
      %v1709 = vlaneseq
      %v1710 = vshrl.u32 %v1709, 7
      %v1711 = vsub.s32 1, %v1710
      %v1712 = vrot.slane %v1703, %v1711
      %v1715 = vadd.f32 %v1552, %v1708
      %v1716 = vadd.f32 %v1553, %v1712
      %v1717 = vadd.f32 %v1715, %v1697
      %v1718 = vadd.f32 %v1716, %v1699
      %v1719 = vmax.f32 %v1717, 0.0
      %v1720 = vmax.f32 %v1718, 0.0
      %v1721 = vpack.c.bf16 %v1719, %v1719
      %v1722 = vpack.c.bf16 %v1720, %v1720
      %v1725 = vcombine.low %v1721, %v1722
      %v1727 = vunpack.c.l.s4 1983009808
      %v1728 = vunpack.c.0.s8 %v1727
      %v1729 = vlaneseq
      %v1730 = vshrl.u32 %v1729, 7
      %v1731 = vsub.s32 %v1728, %v1730
      %v1732 = vrot.slane %v1725, %v1731
      %1734 = vst [vmem:[%s319] sm:$0xf] %v1732
      %p1735 = scmp.lt.s32.totalorder %s19, 1
      %s1736 = scalar_select %p1735, %s19, 1
      %s1737 = smul.addr %s1736, 2
      %s1738 = smul.addr %s1737, 2
      %s1739 = scalar_lea.vmem %s8, %s1738
      // Predicated region
      $region53: #{resnet1d_forward.8} parent=51 // pred_check
        %p1740 = pneg %p215
      $region54: #{resnet1d_forward.8} parent=51 // pred_check_branch
        %1742 = sbr.rel (%p1740) target = $region56
      $region55: #{resnet1d_forward.8} parent=51 // pred_region
        _
      $region56: #{resnet1d_forward.8} parent=51 // pred_fallthru
        _
    $region52: #{resnet1d_forward.8} parent=5 // pred_fallthru
      _
    %p1743 = scmp.le.s32.totalorder 2, %s14
    // Predicated region
    $region57: #{resnet1d_forward.8} parent=5 // pred_check
      %p1744 = pneg %p1743
    $region58: #{resnet1d_forward.8} parent=5 // pred_check_branch
      %1746 = sbr.rel (%p1744) target = $region60
    $region59: #{resnet1d_forward.8} parent=5 // pred_region
      %s1747 = ssub.s32 %s14, 2
      // Predicated region
      $region61: #{resnet1d_forward.8} parent=59 // pred_check
        %p1748 = pneg %p221
      $region62: #{resnet1d_forward.8} parent=59 // pred_check_branch
        %1750 = sbr.rel (%p1748) target = $region64
      $region63: #{resnet1d_forward.8} parent=59 // pred_region
        %p1751 = scmp.lt.s32.totalorder %s20, 1
        %s1752 = scalar_select %p1751, %s20, 1
        %s1753 = smul.addr %s1752, 2
        %s1754 = smul.addr %s1753, 2
        %s1755 = scalar_lea.vmem %s8, %s1754
      $region64: #{resnet1d_forward.8} parent=59 // pred_fallthru
        _
    $region60: #{resnet1d_forward.8} parent=5 // pred_fallthru
      _
  $region6: #{resnet1d_forward.8} parent=0 // loop_footer
    %s18 = sadd.s32 1, %s14
  $region7: #{resnet1d_forward.8} parent=0 // loop_footer_branch
    %13 = sbr.rel target = $region3
  $region8: #{resnet1d_forward.8} parent=0 // loop_exit
    _

// kernel: resnet1d_forward.9
$region0: #{resnet1d_forward.9}
  #allocation0 [shape = 'u32[]', space=smem, size = 0x4, offset = 0x4, fixed_abs, tag = 'smem constant byte address 0x4 - core index']
  #allocation1 [shape = 'u32[144,128]{1,0:T(1,128)}', space=vmem, size = 0x12000, scoped, tag = 'internal scratch']
  #allocation2 [shape = 'bf16[4,512]{1,0:T(4,128)(2,1)}', space=vmem, size = 0x1000, scoped, tag = 'scratch operand']
  %s0 = inlined_call_operand.vmem [shape: bf16[2,3,256], index: 0, kind: input, shape index: {}]
  %s1 = inlined_call_operand.vmem [shape: bf16[2,3,256], index: 1, kind: input, shape index: {}]
  %s2 = inlined_call_operand.vmem [shape: bf16[3,256,512], index: 2, kind: input, shape index: {}]
  %s3 = inlined_call_operand.vmem [shape: f32[1,512], index: 3, kind: input, shape index: {}]
  %s4 = inlined_call_operand.vmem [shape: bf16[3,512,512], index: 4, kind: input, shape index: {}]
  %s5 = inlined_call_operand.vmem [shape: f32[1,512], index: 5, kind: input, shape index: {}]
  %s6 = inlined_call_operand.vmem [shape: bf16[256,512], index: 6, kind: input, shape index: {}]
  %s7 = inlined_call_operand.vmem [shape: f32[1,512], index: 7, kind: input, shape index: {}]
  %s8 = inlined_call_operand.vmem [shape: f32[512,10], index: 8, kind: input, shape index: {}]
  %s9 = inlined_call_operand.vmem [shape: f32[1,10], index: 9, kind: input, shape index: {}]
  %s10 = inlined_call_operand.hbm [shape: f32[2,1,10], index: 10, kind: output, shape index: {}]
  %s11 = sld [smem:[#allocation0]]
  $region73: #{resnet1d_forward.9} parent=0
    _
  %s13 = ssub.s32 1, %s11
  %s14 = scalar_select 0, %s13, %s11
  $region1: #{resnet1d_forward.9} parent=0
    #allocation3 [shape = 'u8[1024]{0}', space=vmem, size = 0x400, scoped, tag = 'output window, operand 0']
    #allocation4 [shape = 's32[2]{0}', space=sflag, size = 0x8, scoped, tag = 'scoped memory for resnet1d_forward.9']
    %15 = vsyncpa [#allocation4], 0
    %s16 = scalar_lea.sflag [#allocation4], 1
    %17 = vsyncpa %s16, 0
    loop: start=0, step=1, limit=4
    $region2: #{resnet1d_forward.9} parent=1 // loop_pre_header
      _
    $region3: #{resnet1d_forward.9} parent=1 // loop_header
      %s19 = sphi 0, %s23
      %p20 = scmp.ge.s32.totalorder %s19, 4
      %s29 = sphi 0, %s31
      %s32 = sphi 0, %s29
      %s33 = sphi 0, %s32
      %s49 = sphi 0, %s33
      %s55 = sphi 0, %s57
      %s58 = sphi 0, %s55
      %s59 = sphi 0, %s58
      %s75 = sphi 0, %s59
      %s79 = sphi 0, %s79
      %s81 = sphi 0, %s79
      %s82 = sphi 0, %s81
      %s96 = sphi 0, %s82
      %s100 = sphi 0, %s100
      %s102 = sphi 0, %s100
      %s103 = sphi 0, %s102
      %s117 = sphi 0, %s103
      %s121 = sphi 0, %s121
      %s123 = sphi 0, %s121
      %s124 = sphi 0, %s123
      %s138 = sphi 0, %s124
      %s142 = sphi 0, %s142
      %s144 = sphi 0, %s142
      %s145 = sphi 0, %s144
      %s159 = sphi 0, %s145
      %s163 = sphi 0, %s163
      %s165 = sphi 0, %s163
      %s166 = sphi 0, %s165
      %s180 = sphi 0, %s166
      %s184 = sphi 0, %s184
      %s186 = sphi 0, %s184
      %s187 = sphi 0, %s186
      %s201 = sphi 0, %s187
      %s205 = sphi 0, %s205
      %s207 = sphi 0, %s205
      %s208 = sphi 0, %s207
      %s222 = sphi 0, %s208
      %s226 = sphi 0, %s226
      %s228 = sphi 0, %s226
      %s229 = sphi 0, %s228
      %s243 = sphi 0, %s229
      %s249 = sphi 0, %s251
      %s252 = sphi 0, %s249
      %s253 = sphi 0, %s252
      %s269 = sphi 0, %s253
    $region4: #{resnet1d_forward.9} parent=1 // loop_header_branch
      %22 = sbr.rel (%p20) target = $region8
    $region5: #{resnet1d_forward.9} parent=1 // loop_body
      %s24 = ssub.s32 %s19, 1
      %s25 = ssub.s32 %s19, 2
      %s26 = sadd.s32 %s19, 1
      %s27 = ssub.s32 %s19, %s26
      %p28 = scmp.eq.s32.totalorder %s27, 0
      %s30 = sadd.s32 %s29, 1
      %s31 = scalar_select %p28, %s29, %s30
      %p34 = pneg %p28
      %p35 = scmp.eq.s32.totalorder %s19, 1
      %p36 = por %p34, %p35
      %p37 = scmp.ne.s32.totalorder %s29, %s32
      %p38 = scmp.eq.s32.totalorder %s19, 0
      %p39 = por %p37, %p38
      %p40 = scmp.ne.s32.totalorder %s29, %s32
      %p41 = scmp.eq.s32.totalorder %s24, 1
      %p42 = por %p40, %p41
      %p43 = scmp.ne.s32.totalorder %s32, %s33
      %p44 = scmp.eq.s32.totalorder %s24, 0
      %p45 = por %p43, %p44
      %p46 = scmp.ne.s32.totalorder %s32, %s33
      %p47 = scmp.eq.s32.totalorder %s25, 1
      %p48 = por %p46, %p47
      %p50 = scmp.ne.s32.totalorder %s33, %s49
      %p51 = scmp.eq.s32.totalorder %s25, 0
      %p52 = por %p50, %p51
      %s53 = ssub.s32 %s19, %s26
      %p54 = scmp.eq.s32.totalorder %s53, 0
      %s56 = sadd.s32 %s55, 1
      %s57 = scalar_select %p54, %s55, %s56
      %p60 = pneg %p54
      %p61 = scmp.eq.s32.totalorder %s19, 1
      %p62 = por %p60, %p61
      %p63 = scmp.ne.s32.totalorder %s55, %s58
      %p64 = scmp.eq.s32.totalorder %s19, 0
      %p65 = por %p63, %p64
      %p66 = scmp.ne.s32.totalorder %s55, %s58
      %p67 = scmp.eq.s32.totalorder %s24, 1
      %p68 = por %p66, %p67
      %p69 = scmp.ne.s32.totalorder %s58, %s59
      %p70 = scmp.eq.s32.totalorder %s24, 0
      %p71 = por %p69, %p70
      %p72 = scmp.ne.s32.totalorder %s58, %s59
      %p73 = scmp.eq.s32.totalorder %s25, 1
      %p74 = por %p72, %p73
      %p76 = scmp.ne.s32.totalorder %s59, %s75
      %p77 = scmp.eq.s32.totalorder %s25, 0
      %p78 = por %p76, %p77
      %s80 = sadd.s32 %s79, 1
      %p83 = scmp.eq.s32.totalorder %s19, 1
      %p84 = scmp.ne.s32.totalorder %s79, %s81
      %p85 = scmp.eq.s32.totalorder %s19, 0
      %p86 = por %p84, %p85
      %p87 = scmp.ne.s32.totalorder %s79, %s81
      %p88 = scmp.eq.s32.totalorder %s24, 1
      %p89 = por %p87, %p88
      %p90 = scmp.ne.s32.totalorder %s81, %s82
      %p91 = scmp.eq.s32.totalorder %s24, 0
      %p92 = por %p90, %p91
      %p93 = scmp.ne.s32.totalorder %s81, %s82
      %p94 = scmp.eq.s32.totalorder %s25, 1
      %p95 = por %p93, %p94
      %p97 = scmp.ne.s32.totalorder %s82, %s96
      %p98 = scmp.eq.s32.totalorder %s25, 0
      %p99 = por %p97, %p98
      %s101 = sadd.s32 %s100, 1
      %p104 = scmp.eq.s32.totalorder %s19, 1
      %p105 = scmp.ne.s32.totalorder %s100, %s102
      %p106 = scmp.eq.s32.totalorder %s19, 0
      %p107 = por %p105, %p106
      %p108 = scmp.ne.s32.totalorder %s100, %s102
      %p109 = scmp.eq.s32.totalorder %s24, 1
      %p110 = por %p108, %p109
      %p111 = scmp.ne.s32.totalorder %s102, %s103
      %p112 = scmp.eq.s32.totalorder %s24, 0
      %p113 = por %p111, %p112
      %p114 = scmp.ne.s32.totalorder %s102, %s103
      %p115 = scmp.eq.s32.totalorder %s25, 1
      %p116 = por %p114, %p115
      %p118 = scmp.ne.s32.totalorder %s103, %s117
      %p119 = scmp.eq.s32.totalorder %s25, 0
      %p120 = por %p118, %p119
      %s122 = sadd.s32 %s121, 1
      %p125 = scmp.eq.s32.totalorder %s19, 1
      %p126 = scmp.ne.s32.totalorder %s121, %s123
      %p127 = scmp.eq.s32.totalorder %s19, 0
      %p128 = por %p126, %p127
      %p129 = scmp.ne.s32.totalorder %s121, %s123
      %p130 = scmp.eq.s32.totalorder %s24, 1
      %p131 = por %p129, %p130
      %p132 = scmp.ne.s32.totalorder %s123, %s124
      %p133 = scmp.eq.s32.totalorder %s24, 0
      %p134 = por %p132, %p133
      %p135 = scmp.ne.s32.totalorder %s123, %s124
      %p136 = scmp.eq.s32.totalorder %s25, 1
      %p137 = por %p135, %p136
      %p139 = scmp.ne.s32.totalorder %s124, %s138
      %p140 = scmp.eq.s32.totalorder %s25, 0
      %p141 = por %p139, %p140
      %s143 = sadd.s32 %s142, 1
      %p146 = scmp.eq.s32.totalorder %s19, 1
      %p147 = scmp.ne.s32.totalorder %s142, %s144
      %p148 = scmp.eq.s32.totalorder %s19, 0
      %p149 = por %p147, %p148
      %p150 = scmp.ne.s32.totalorder %s142, %s144
      %p151 = scmp.eq.s32.totalorder %s24, 1
      %p152 = por %p150, %p151
      %p153 = scmp.ne.s32.totalorder %s144, %s145
      %p154 = scmp.eq.s32.totalorder %s24, 0
      %p155 = por %p153, %p154
      %p156 = scmp.ne.s32.totalorder %s144, %s145
      %p157 = scmp.eq.s32.totalorder %s25, 1
      %p158 = por %p156, %p157
      %p160 = scmp.ne.s32.totalorder %s145, %s159
      %p161 = scmp.eq.s32.totalorder %s25, 0
      %p162 = por %p160, %p161
      %s164 = sadd.s32 %s163, 1
      %p167 = scmp.eq.s32.totalorder %s19, 1
      %p168 = scmp.ne.s32.totalorder %s163, %s165
      %p169 = scmp.eq.s32.totalorder %s19, 0
      %p170 = por %p168, %p169
      %p171 = scmp.ne.s32.totalorder %s163, %s165
      %p172 = scmp.eq.s32.totalorder %s24, 1
      %p173 = por %p171, %p172
      %p174 = scmp.ne.s32.totalorder %s165, %s166
      %p175 = scmp.eq.s32.totalorder %s24, 0
      %p176 = por %p174, %p175
      %p177 = scmp.ne.s32.totalorder %s165, %s166
      %p178 = scmp.eq.s32.totalorder %s25, 1
      %p179 = por %p177, %p178
      %p181 = scmp.ne.s32.totalorder %s166, %s180
      %p182 = scmp.eq.s32.totalorder %s25, 0
      %p183 = por %p181, %p182
      %s185 = sadd.s32 %s184, 1
      %p188 = scmp.eq.s32.totalorder %s19, 1
      %p189 = scmp.ne.s32.totalorder %s184, %s186
      %p190 = scmp.eq.s32.totalorder %s19, 0
      %p191 = por %p189, %p190
      %p192 = scmp.ne.s32.totalorder %s184, %s186
      %p193 = scmp.eq.s32.totalorder %s24, 1
      %p194 = por %p192, %p193
      %p195 = scmp.ne.s32.totalorder %s186, %s187
      %p196 = scmp.eq.s32.totalorder %s24, 0
      %p197 = por %p195, %p196
      %p198 = scmp.ne.s32.totalorder %s186, %s187
      %p199 = scmp.eq.s32.totalorder %s25, 1
      %p200 = por %p198, %p199
      %p202 = scmp.ne.s32.totalorder %s187, %s201
      %p203 = scmp.eq.s32.totalorder %s25, 0
      %p204 = por %p202, %p203
      %s206 = sadd.s32 %s205, 1
      %p209 = scmp.eq.s32.totalorder %s19, 1
      %p210 = scmp.ne.s32.totalorder %s205, %s207
      %p211 = scmp.eq.s32.totalorder %s19, 0
      %p212 = por %p210, %p211
      %p213 = scmp.ne.s32.totalorder %s205, %s207
      %p214 = scmp.eq.s32.totalorder %s24, 1
      %p215 = por %p213, %p214
      %p216 = scmp.ne.s32.totalorder %s207, %s208
      %p217 = scmp.eq.s32.totalorder %s24, 0
      %p218 = por %p216, %p217
      %p219 = scmp.ne.s32.totalorder %s207, %s208
      %p220 = scmp.eq.s32.totalorder %s25, 1
      %p221 = por %p219, %p220
      %p223 = scmp.ne.s32.totalorder %s208, %s222
      %p224 = scmp.eq.s32.totalorder %s25, 0
      %p225 = por %p223, %p224
      %s227 = sadd.s32 %s226, 1
      %p230 = scmp.eq.s32.totalorder %s19, 1
      %p231 = scmp.ne.s32.totalorder %s226, %s228
      %p232 = scmp.eq.s32.totalorder %s19, 0
      %p233 = por %p231, %p232
      %p234 = scmp.ne.s32.totalorder %s226, %s228
      %p235 = scmp.eq.s32.totalorder %s24, 1
      %p236 = por %p234, %p235
      %p237 = scmp.ne.s32.totalorder %s228, %s229
      %p238 = scmp.eq.s32.totalorder %s24, 0
      %p239 = por %p237, %p238
      %p240 = scmp.ne.s32.totalorder %s228, %s229
      %p241 = scmp.eq.s32.totalorder %s25, 1
      %p242 = por %p240, %p241
      %p244 = scmp.ne.s32.totalorder %s229, %s243
      %p245 = scmp.eq.s32.totalorder %s25, 0
      %p246 = por %p244, %p245
      %s247 = ssub.s32 %s19, %s26
      %p248 = scmp.eq.s32.totalorder %s247, 0
      %s250 = sadd.s32 %s249, 1
      %s251 = scalar_select %p248, %s249, %s250
      %p254 = pneg %p248
      %p255 = scmp.eq.s32.totalorder %s19, 1
      %p256 = por %p254, %p255
      %p257 = scmp.ne.s32.totalorder %s249, %s252
      %p258 = scmp.eq.s32.totalorder %s19, 0
      %p259 = por %p257, %p258
      %p260 = scmp.ne.s32.totalorder %s249, %s252
      %p261 = scmp.eq.s32.totalorder %s24, 1
      %p262 = por %p260, %p261
      %p263 = scmp.ne.s32.totalorder %s252, %s253
      %p264 = scmp.eq.s32.totalorder %s24, 0
      %p265 = por %p263, %p264
      %p266 = scmp.ne.s32.totalorder %s252, %s253
      %p267 = scmp.eq.s32.totalorder %s25, 1
      %p268 = por %p266, %p267
      %p270 = scmp.ne.s32.totalorder %s253, %s269
      %p271 = scmp.eq.s32.totalorder %s25, 0
      %p272 = por %p270, %p271
      %p273 = scmp.le.s32.totalorder 1, %s19
      %p274 = scmp.lt.s32.totalorder %s19, 3
      %p275 = pnand %p273, %p274
      %p276 = pneg %p275
      // Predicated region
      $region9: #{resnet1d_forward.9} parent=5 // pred_check
        _
      $region10: #{resnet1d_forward.9} parent=5 // pred_check_branch
        %278 = sbr.rel (%p275) target = $region12
      $region11: #{resnet1d_forward.9} parent=5 // pred_region
        %s279 = ssub.s32 %s19, 1
        // Predicated region
        $region13: #{resnet1d_forward.9} parent=11 // pred_check
          %p280 = pneg %p92
        $region14: #{resnet1d_forward.9} parent=11 // pred_check_branch
          %282 = sbr.rel (%p280) target = $region16
        $region15: #{resnet1d_forward.9} parent=11 // pred_region
          _
        $region16: #{resnet1d_forward.9} parent=11 // pred_fallthru
          _
        // Predicated region
        $region17: #{resnet1d_forward.9} parent=11 // pred_check
          %p283 = pneg %p113
        $region18: #{resnet1d_forward.9} parent=11 // pred_check_branch
          %285 = sbr.rel (%p283) target = $region20
        $region19: #{resnet1d_forward.9} parent=11 // pred_region
          _
        $region20: #{resnet1d_forward.9} parent=11 // pred_fallthru
          _
        // Predicated region
        $region21: #{resnet1d_forward.9} parent=11 // pred_check
          %p286 = pneg %p134
        $region22: #{resnet1d_forward.9} parent=11 // pred_check_branch
          %288 = sbr.rel (%p286) target = $region24
        $region23: #{resnet1d_forward.9} parent=11 // pred_region
          _
        $region24: #{resnet1d_forward.9} parent=11 // pred_fallthru
          _
        // Predicated region
        $region25: #{resnet1d_forward.9} parent=11 // pred_check
          %p289 = pneg %p155
        $region26: #{resnet1d_forward.9} parent=11 // pred_check_branch
          %291 = sbr.rel (%p289) target = $region28
        $region27: #{resnet1d_forward.9} parent=11 // pred_region
          _
        $region28: #{resnet1d_forward.9} parent=11 // pred_fallthru
          _
        // Predicated region
        $region29: #{resnet1d_forward.9} parent=11 // pred_check
          %p292 = pneg %p176
        $region30: #{resnet1d_forward.9} parent=11 // pred_check_branch
          %294 = sbr.rel (%p292) target = $region32
        $region31: #{resnet1d_forward.9} parent=11 // pred_region
          _
        $region32: #{resnet1d_forward.9} parent=11 // pred_fallthru
          _
        // Predicated region
        $region33: #{resnet1d_forward.9} parent=11 // pred_check
          %p295 = pneg %p197
        $region34: #{resnet1d_forward.9} parent=11 // pred_check_branch
          %297 = sbr.rel (%p295) target = $region36
        $region35: #{resnet1d_forward.9} parent=11 // pred_region
          _
        $region36: #{resnet1d_forward.9} parent=11 // pred_fallthru
          _
        // Predicated region
        $region37: #{resnet1d_forward.9} parent=11 // pred_check
          %p298 = pneg %p218
        $region38: #{resnet1d_forward.9} parent=11 // pred_check_branch
          %300 = sbr.rel (%p298) target = $region40
        $region39: #{resnet1d_forward.9} parent=11 // pred_region
          _
        $region40: #{resnet1d_forward.9} parent=11 // pred_fallthru
          _
        // Predicated region
        $region41: #{resnet1d_forward.9} parent=11 // pred_check
          %p301 = pneg %p239
        $region42: #{resnet1d_forward.9} parent=11 // pred_check_branch
          %303 = sbr.rel (%p301) target = $region44
        $region43: #{resnet1d_forward.9} parent=11 // pred_region
          _
        $region44: #{resnet1d_forward.9} parent=11 // pred_fallthru
          _
      $region12: #{resnet1d_forward.9} parent=5 // pred_fallthru
        _
      %p304 = scmp.lt.s32.totalorder %s19, 2
      // Predicated region
      $region45: #{resnet1d_forward.9} parent=5 // pred_check
        %p305 = pneg %p304
      $region46: #{resnet1d_forward.9} parent=5 // pred_check_branch
        %307 = sbr.rel (%p305) target = $region48
      $region47: #{resnet1d_forward.9} parent=5 // pred_region
        // Predicated region
        $region49: #{resnet1d_forward.9} parent=47 // pred_check
          %p308 = pneg %p39
        $region50: #{resnet1d_forward.9} parent=47 // pred_check_branch
          %310 = sbr.rel (%p308) target = $region52
        $region51: #{resnet1d_forward.9} parent=47 // pred_region
          %p311 = scmp.lt.s32.totalorder %s19, 1
          %s312 = scalar_select %p311, %s19, 1
          %s313 = smul.addr %s312, 2
          %s314 = smul.addr %s313, 2
          %s315 = scalar_lea.vmem %s0, %s314
        $region52: #{resnet1d_forward.9} parent=47 // pred_fallthru
          _
        // Predicated region
        $region53: #{resnet1d_forward.9} parent=47 // pred_check
          %p316 = pneg %p65
        $region54: #{resnet1d_forward.9} parent=47 // pred_check_branch
          %318 = sbr.rel (%p316) target = $region56
        $region55: #{resnet1d_forward.9} parent=47 // pred_region
          %p319 = scmp.lt.s32.totalorder %s19, 1
          %s320 = scalar_select %p319, %s19, 1
          %s321 = smul.addr %s320, 2
          %s322 = smul.addr %s321, 2
          %s323 = scalar_lea.vmem %s1, %s322
        $region56: #{resnet1d_forward.9} parent=47 // pred_fallthru
          _
      $region48: #{resnet1d_forward.9} parent=5 // pred_fallthru
        _
      %p324 = scmp.le.s32.totalorder 1, %s19
      %p325 = scmp.lt.s32.totalorder %s19, 3
      %p326 = pnand %p324, %p325
      %p327 = pneg %p326
      // Predicated region
      $region57: #{resnet1d_forward.9} parent=5 // pred_check
        _
      $region58: #{resnet1d_forward.9} parent=5 // pred_check_branch
        %329 = sbr.rel (%p326) target = $region60
      $region59: #{resnet1d_forward.9} parent=5 // pred_region
        %s330 = ssub.s32 %s19, 1
        %p331 = scmp.lt.s32.totalorder %s24, 1
        %s332 = scalar_select %p331, %s24, 1
        %s333 = smul.addr %s332, 2
        %s334 = smul.addr %s333, 2
        %s335 = scalar_lea.vmem %s0, %s334
        %p336 = pneg %p45
        %p337 = pneg %p42
        %p338 = scmp.lt.s32.totalorder %s24, 1
        %s339 = scalar_select %p338, %s24, 1
        %s340 = smul.addr %s339, 2
        %s341 = smul.addr %s340, 2
        %s342 = scalar_lea.vmem %s1, %s341
        %p343 = pneg %p71
        %p344 = pneg %p68
        %p345 = pneg %p92
        %p346 = pneg %p89
        %p347 = pneg %p113
        %p348 = pneg %p110
        %p349 = pneg %p134
        %p350 = pneg %p131
        %p351 = pneg %p155
        %p352 = pneg %p152
        %p353 = pneg %p176
        %p354 = pneg %p173
        %p355 = pneg %p197
        %p356 = pneg %p194
        %p357 = pneg %p218
        %p358 = pneg %p215
        %p359 = pneg %p239
        %p360 = pneg %p236
        %p361 = pneg %p265
        %p362 = pneg %p262
        %s363 = sand.u32 %s252, 1
        %s364 = scalar_lea.sflag [#allocation4], %s363
        %s365 = sand.u32 %s252, 1
        %s366 = scalar_lea.vmem [#allocation3], %s365
        %p367 = scmp.lt.s32.totalorder %s24, 1
        %s368 = scalar_select %p367, %s24, 1
        %s369 = smul.addr %s368, 2
        %s370 = smul.addr %s369, 2
        %s371 = scalar_lea.vmem %s0, %s370
        %p372 = scmp.lt.s32.totalorder %s24, 1
        %s373 = scalar_select %p372, %s24, 1
        %s374 = smul.addr %s373, 2
        %s375 = smul.addr %s374, 2
        %s376 = scalar_lea.vmem %s1, %s375
        %v378 = vld [vmem:[%s371] sm:$0x5]
        %v379 = vld [vmem:[%s376] sm:$0x5]
        %v380 = vld [vmem:[%s371] sm:$0xf]
        %v381 = vld [vmem:[%s2] sm:$0xff]
        %v382 = vld [vmem:[%s2 + $0x8] sm:$0xff]
        %v383 = vld [vmem:[%s2 + $0x10] sm:$0xff]
        %v384 = vld [vmem:[%s2 + $0x18] sm:$0xff]
        %v385 = vld [vmem:[%s2 + $0x20] sm:$0xff]
        %v386 = vld [vmem:[%s2 + $0x28] sm:$0xff]
        %v387 = vld [vmem:[%s2 + $0x30] sm:$0xff]
        %v388 = vld [vmem:[%s2 + $0x38] sm:$0xff]
        %v389 = vld [vmem:[%s2 + $0x40] sm:$0xff]
        %v390 = vld [vmem:[%s2 + $0x48] sm:$0xff]
        %v391 = vld [vmem:[%s2 + $0x50] sm:$0xff]
        %v392 = vld [vmem:[%s2 + $0x58] sm:$0xff]
        %v393 = vld [vmem:[%s2 + $0x60] sm:$0xff]
        %v394 = vld [vmem:[%s2 + $0x68] sm:$0xff]
        %v395 = vld [vmem:[%s2 + $0x70] sm:$0xff]
        %v396 = vld [vmem:[%s2 + $0x78] sm:$0xff]
        %v397 = vld [vmem:[%s2 + $0x80] sm:$0xff]
        %v398 = vld [vmem:[%s2 + $0x88] sm:$0xff]
        %v399 = vld [vmem:[%s2 + $0x90] sm:$0xff]
        %v400 = vld [vmem:[%s2 + $0x98] sm:$0xff]
        %v401 = vld [vmem:[%s2 + $0xa0] sm:$0xff]
        %v402 = vld [vmem:[%s2 + $0xa8] sm:$0xff]
        %v403 = vld [vmem:[%s2 + $0xb0] sm:$0xff]
        %v404 = vld [vmem:[%s2 + $0xb8] sm:$0xff]
        %v405 = vld [vmem:[%s2 + $0xc0] sm:$0xff]
        %v406 = vld [vmem:[%s2 + $0xc8] sm:$0xff]
        %v407 = vld [vmem:[%s2 + $0xd0] sm:$0xff]
        %v408 = vld [vmem:[%s2 + $0xd8] sm:$0xff]
        %v409 = vld [vmem:[%s2 + $0xe0] sm:$0xff]
        %v410 = vld [vmem:[%s2 + $0xe8] sm:$0xff]
        %v411 = vld [vmem:[%s2 + $0xf0] sm:$0xff]
        %v412 = vld [vmem:[%s2 + $0xf8] sm:$0xff]
        %v413 = vld [vmem:[%s2 + $0x100] sm:$0xff]
        %v414 = vld [vmem:[%s2 + $0x108] sm:$0xff]
        %v415 = vld [vmem:[%s2 + $0x110] sm:$0xff]
        %v416 = vld [vmem:[%s2 + $0x118] sm:$0xff]
        %v417 = vld [vmem:[%s2 + $0x120] sm:$0xff]
        %v418 = vld [vmem:[%s2 + $0x128] sm:$0xff]
        %v419 = vld [vmem:[%s2 + $0x130] sm:$0xff]
        %v420 = vld [vmem:[%s2 + $0x138] sm:$0xff]
        %v421 = vld [vmem:[%s2 + $0x140] sm:$0xff]
        %v422 = vld [vmem:[%s2 + $0x148] sm:$0xff]
        %v423 = vld [vmem:[%s2 + $0x150] sm:$0xff]
        %v424 = vld [vmem:[%s2 + $0x158] sm:$0xff]
        %v425 = vld [vmem:[%s2 + $0x160] sm:$0xff]
        %v426 = vld [vmem:[%s2 + $0x168] sm:$0xff]
        %v427 = vld [vmem:[%s2 + $0x170] sm:$0xff]
        %v428 = vld [vmem:[%s2 + $0x178] sm:$0xff]
        %v429 = vld [vmem:[%s2 + $0x180] sm:$0xff]
        %v430 = vld [vmem:[%s2 + $0x188] sm:$0xff]
        %v431 = vld [vmem:[%s2 + $0x190] sm:$0xff]
        %v432 = vld [vmem:[%s2 + $0x198] sm:$0xff]
        %v433 = vld [vmem:[%s2 + $0x1a0] sm:$0xff]
        %v434 = vld [vmem:[%s2 + $0x1a8] sm:$0xff]
        %v435 = vld [vmem:[%s2 + $0x1b0] sm:$0xff]
        %v436 = vld [vmem:[%s2 + $0x1b8] sm:$0xff]
        %v437 = vld [vmem:[%s2 + $0x1c0] sm:$0xff]
        %v438 = vld [vmem:[%s2 + $0x1c8] sm:$0xff]
        %v439 = vld [vmem:[%s2 + $0x1d0] sm:$0xff]
        %v440 = vld [vmem:[%s2 + $0x1d8] sm:$0xff]
        %v441 = vld [vmem:[%s2 + $0x1e0] sm:$0xff]
        %v442 = vld [vmem:[%s2 + $0x1e8] sm:$0xff]
        %v443 = vld [vmem:[%s2 + $0x1f0] sm:$0xff]
        %v444 = vld [vmem:[%s2 + $0x1f8] sm:$0xff]
        %s445 = scalar_lea.vmem %s2, 512
        %v446 = vld [vmem:[%s445] sm:$0xff]
        %v447 = vld [vmem:[%s445 + $0x8] sm:$0xff]
        %v448 = vld [vmem:[%s445 + $0x10] sm:$0xff]
        %v449 = vld [vmem:[%s445 + $0x18] sm:$0xff]
        %v450 = vld [vmem:[%s445 + $0x20] sm:$0xff]
        %v451 = vld [vmem:[%s445 + $0x28] sm:$0xff]
        %v452 = vld [vmem:[%s445 + $0x30] sm:$0xff]
        %v453 = vld [vmem:[%s445 + $0x38] sm:$0xff]
        %v454 = vld [vmem:[%s445 + $0x40] sm:$0xff]
        %v455 = vld [vmem:[%s445 + $0x48] sm:$0xff]
        %v456 = vld [vmem:[%s445 + $0x50] sm:$0xff]
        %v457 = vld [vmem:[%s445 + $0x58] sm:$0xff]
        %v458 = vld [vmem:[%s445 + $0x60] sm:$0xff]
        %v459 = vld [vmem:[%s445 + $0x68] sm:$0xff]
        %v460 = vld [vmem:[%s445 + $0x70] sm:$0xff]
        %v461 = vld [vmem:[%s445 + $0x78] sm:$0xff]
        %v462 = vld [vmem:[%s445 + $0x80] sm:$0xff]
        %v463 = vld [vmem:[%s445 + $0x88] sm:$0xff]
        %v464 = vld [vmem:[%s445 + $0x90] sm:$0xff]
        %v465 = vld [vmem:[%s445 + $0x98] sm:$0xff]
        %v466 = vld [vmem:[%s445 + $0xa0] sm:$0xff]
        %v467 = vld [vmem:[%s445 + $0xa8] sm:$0xff]
        %v468 = vld [vmem:[%s445 + $0xb0] sm:$0xff]
        %v469 = vld [vmem:[%s445 + $0xb8] sm:$0xff]
        %v470 = vld [vmem:[%s445 + $0xc0] sm:$0xff]
        %v471 = vld [vmem:[%s445 + $0xc8] sm:$0xff]
        %v472 = vld [vmem:[%s445 + $0xd0] sm:$0xff]
        %v473 = vld [vmem:[%s445 + $0xd8] sm:$0xff]
        %v474 = vld [vmem:[%s445 + $0xe0] sm:$0xff]
        %v475 = vld [vmem:[%s445 + $0xe8] sm:$0xff]
        %v476 = vld [vmem:[%s445 + $0xf0] sm:$0xff]
        %v477 = vld [vmem:[%s445 + $0xf8] sm:$0xff]
        %v478 = vld [vmem:[%s445 + $0x100] sm:$0xff]
        %v479 = vld [vmem:[%s445 + $0x108] sm:$0xff]
        %v480 = vld [vmem:[%s445 + $0x110] sm:$0xff]
        %v481 = vld [vmem:[%s445 + $0x118] sm:$0xff]
        %v482 = vld [vmem:[%s445 + $0x120] sm:$0xff]
        %v483 = vld [vmem:[%s445 + $0x128] sm:$0xff]
        %v484 = vld [vmem:[%s445 + $0x130] sm:$0xff]
        %v485 = vld [vmem:[%s445 + $0x138] sm:$0xff]
        %v486 = vld [vmem:[%s445 + $0x140] sm:$0xff]
        %v487 = vld [vmem:[%s445 + $0x148] sm:$0xff]
        %v488 = vld [vmem:[%s445 + $0x150] sm:$0xff]
        %v489 = vld [vmem:[%s445 + $0x158] sm:$0xff]
        %v490 = vld [vmem:[%s445 + $0x160] sm:$0xff]
        %v491 = vld [vmem:[%s445 + $0x168] sm:$0xff]
        %v492 = vld [vmem:[%s445 + $0x170] sm:$0xff]
        %v493 = vld [vmem:[%s445 + $0x178] sm:$0xff]
        %v494 = vld [vmem:[%s445 + $0x180] sm:$0xff]
        %v495 = vld [vmem:[%s445 + $0x188] sm:$0xff]
        %v496 = vld [vmem:[%s445 + $0x190] sm:$0xff]
        %v497 = vld [vmem:[%s445 + $0x198] sm:$0xff]
        %v498 = vld [vmem:[%s445 + $0x1a0] sm:$0xff]
        %v499 = vld [vmem:[%s445 + $0x1a8] sm:$0xff]
        %v500 = vld [vmem:[%s445 + $0x1b0] sm:$0xff]
        %v501 = vld [vmem:[%s445 + $0x1b8] sm:$0xff]
        %v502 = vld [vmem:[%s445 + $0x1c0] sm:$0xff]
        %v503 = vld [vmem:[%s445 + $0x1c8] sm:$0xff]
        %v504 = vld [vmem:[%s445 + $0x1d0] sm:$0xff]
        %v505 = vld [vmem:[%s445 + $0x1d8] sm:$0xff]
        %v506 = vld [vmem:[%s445 + $0x1e0] sm:$0xff]
        %v507 = vld [vmem:[%s445 + $0x1e8] sm:$0xff]
        %v508 = vld [vmem:[%s445 + $0x1f0] sm:$0xff]
        %v509 = vld [vmem:[%s445 + $0x1f8] sm:$0xff]
        %v512 = vunpack.c.l.s4 1983009808
        %v513 = vunpack.c.0.s8 %v512
        %v514 = vlaneseq
        %v515 = vshrl.u32 %v514, 7
        %v516 = vsub.s32 %v513, %v515
        %v517 = vrot.slane %v379, %v516
        %v518 = vcombine.high %v517, %v517
        %v585 = vunpack.c.l.b16 %v446
        %v586 = vunpack.c.h.b16 %v446
        %v587 = vunpack.c.l.b16 %v447
        %v588 = vunpack.c.h.b16 %v447
        %v589 = vunpack.c.l.b16 %v448
        %v590 = vunpack.c.h.b16 %v448
        %v591 = vunpack.c.l.b16 %v449
        %v592 = vunpack.c.h.b16 %v449
        %v593 = vunpack.c.l.b16 %v450
        %v594 = vunpack.c.h.b16 %v450
        %v595 = vunpack.c.l.b16 %v451
        %v596 = vunpack.c.h.b16 %v451
        %v597 = vunpack.c.l.b16 %v452
        %v598 = vunpack.c.h.b16 %v452
        %v599 = vunpack.c.l.b16 %v453
        %v600 = vunpack.c.h.b16 %v453
        %v601 = vunpack.c.l.b16 %v454
        %v602 = vunpack.c.h.b16 %v454
        %v603 = vunpack.c.l.b16 %v455
        %v604 = vunpack.c.h.b16 %v455
        %v605 = vunpack.c.l.b16 %v456
        %v606 = vunpack.c.h.b16 %v456
        %v607 = vunpack.c.l.b16 %v457
        %v608 = vunpack.c.h.b16 %v457
        %v609 = vunpack.c.l.b16 %v458
        %v610 = vunpack.c.h.b16 %v458
        %v611 = vunpack.c.l.b16 %v459
        %v612 = vunpack.c.h.b16 %v459
        %v613 = vunpack.c.l.b16 %v460
        %v614 = vunpack.c.h.b16 %v460
        %v615 = vunpack.c.l.b16 %v461
        %v616 = vunpack.c.h.b16 %v461
        %v617 = vunpack.c.l.b16 %v462
        %v618 = vunpack.c.h.b16 %v462
        %v619 = vunpack.c.l.b16 %v463
        %v620 = vunpack.c.h.b16 %v463
        %v621 = vunpack.c.l.b16 %v464
        %v622 = vunpack.c.h.b16 %v464
        %v623 = vunpack.c.l.b16 %v465
        %v624 = vunpack.c.h.b16 %v465
        %v625 = vunpack.c.l.b16 %v466
        %v626 = vunpack.c.h.b16 %v466
        %v627 = vunpack.c.l.b16 %v467
        %v628 = vunpack.c.h.b16 %v467
        %v629 = vunpack.c.l.b16 %v468
        %v630 = vunpack.c.h.b16 %v468
        %v631 = vunpack.c.l.b16 %v469
        %v632 = vunpack.c.h.b16 %v469
        %v633 = vunpack.c.l.b16 %v470
        %v634 = vunpack.c.h.b16 %v470
        %v635 = vunpack.c.l.b16 %v471
        %v636 = vunpack.c.h.b16 %v471
        %v637 = vunpack.c.l.b16 %v472
        %v638 = vunpack.c.h.b16 %v472
        %v639 = vunpack.c.l.b16 %v473
        %v640 = vunpack.c.h.b16 %v473
        %v641 = vunpack.c.l.b16 %v474
        %v642 = vunpack.c.h.b16 %v474
        %v643 = vunpack.c.l.b16 %v475
        %v644 = vunpack.c.h.b16 %v475
        %v645 = vunpack.c.l.b16 %v476
        %v646 = vunpack.c.h.b16 %v476
        %v647 = vunpack.c.l.b16 %v477
        %v648 = vunpack.c.h.b16 %v477
        %v649 = vunpack.c.l.b16 %v478
        %v650 = vunpack.c.h.b16 %v478
        %v651 = vunpack.c.l.b16 %v479
        %v652 = vunpack.c.h.b16 %v479
        %v653 = vunpack.c.l.b16 %v480
        %v654 = vunpack.c.h.b16 %v480
        %v655 = vunpack.c.l.b16 %v481
        %v656 = vunpack.c.h.b16 %v481
        %v657 = vunpack.c.l.b16 %v482
        %v658 = vunpack.c.h.b16 %v482
        %v659 = vunpack.c.l.b16 %v483
        %v660 = vunpack.c.h.b16 %v483
        %v661 = vunpack.c.l.b16 %v484
        %v662 = vunpack.c.h.b16 %v484
        %v663 = vunpack.c.l.b16 %v485
        %v664 = vunpack.c.h.b16 %v485
        %v665 = vunpack.c.l.b16 %v486
        %v666 = vunpack.c.h.b16 %v486
        %v667 = vunpack.c.l.b16 %v487
        %v668 = vunpack.c.h.b16 %v487
        %v669 = vunpack.c.l.b16 %v488
        %v670 = vunpack.c.h.b16 %v488
        %v671 = vunpack.c.l.b16 %v489
        %v672 = vunpack.c.h.b16 %v489
        %v673 = vunpack.c.l.b16 %v490
        %v674 = vunpack.c.h.b16 %v490
        %v675 = vunpack.c.l.b16 %v491
        %v676 = vunpack.c.h.b16 %v491
        %v677 = vunpack.c.l.b16 %v492
        %v678 = vunpack.c.h.b16 %v492
        %v679 = vunpack.c.l.b16 %v493
        %v680 = vunpack.c.h.b16 %v493
        %v681 = vunpack.c.l.b16 %v494
        %v682 = vunpack.c.h.b16 %v494
        %v683 = vunpack.c.l.b16 %v495
        %v684 = vunpack.c.h.b16 %v495
        %v685 = vunpack.c.l.b16 %v496
        %v686 = vunpack.c.h.b16 %v496
        %v687 = vunpack.c.l.b16 %v497
        %v688 = vunpack.c.h.b16 %v497
        %v689 = vunpack.c.l.b16 %v498
        %v690 = vunpack.c.h.b16 %v498
        %v691 = vunpack.c.l.b16 %v499
        %v692 = vunpack.c.h.b16 %v499
        %v693 = vunpack.c.l.b16 %v500
        %v694 = vunpack.c.h.b16 %v500
        %v695 = vunpack.c.l.b16 %v501
        %v696 = vunpack.c.h.b16 %v501
        %v697 = vunpack.c.l.b16 %v502
        %v698 = vunpack.c.h.b16 %v502
        %v699 = vunpack.c.l.b16 %v503
        %v700 = vunpack.c.h.b16 %v503
        %v701 = vunpack.c.l.b16 %v504
        %v702 = vunpack.c.h.b16 %v504
        %v703 = vunpack.c.l.b16 %v505
        %v704 = vunpack.c.h.b16 %v505
        %v705 = vunpack.c.l.b16 %v506
        %v706 = vunpack.c.h.b16 %v506
        %v707 = vunpack.c.l.b16 %v507
        %v708 = vunpack.c.h.b16 %v507
        %v709 = vunpack.c.l.b16 %v508
        %v710 = vunpack.c.h.b16 %v508
        %v711 = vunpack.c.l.b16 %v509
        %v712 = vunpack.c.h.b16 %v509
        %v713 = vpack.c.b16 %v589, %v585
        %v714 = vpack.c.b16 %v590, %v586
        %v715 = vpack.c.b16 %v591, %v587
        %v716 = vpack.c.b16 %v592, %v588
        %v717 = vpack.c.b16 %v597, %v593
        %v718 = vpack.c.b16 %v598, %v594
        %v719 = vpack.c.b16 %v599, %v595
        %v720 = vpack.c.b16 %v600, %v596
        %v721 = vpack.c.b16 %v605, %v601
        %v722 = vpack.c.b16 %v606, %v602
        %v723 = vpack.c.b16 %v607, %v603
        %v724 = vpack.c.b16 %v608, %v604
        %v725 = vpack.c.b16 %v613, %v609
        %v726 = vpack.c.b16 %v614, %v610
        %v727 = vpack.c.b16 %v615, %v611
        %v728 = vpack.c.b16 %v616, %v612
        %v729 = vpack.c.b16 %v621, %v617
        %v730 = vpack.c.b16 %v622, %v618
        %v731 = vpack.c.b16 %v623, %v619
        %v732 = vpack.c.b16 %v624, %v620
        %v733 = vpack.c.b16 %v629, %v625
        %v734 = vpack.c.b16 %v630, %v626
        %v735 = vpack.c.b16 %v631, %v627
        %v736 = vpack.c.b16 %v632, %v628
        %v737 = vpack.c.b16 %v637, %v633
        %v738 = vpack.c.b16 %v638, %v634
        %v739 = vpack.c.b16 %v639, %v635
        %v740 = vpack.c.b16 %v640, %v636
        %v741 = vpack.c.b16 %v645, %v641
        %v742 = vpack.c.b16 %v646, %v642
        %v743 = vpack.c.b16 %v647, %v643
        %v744 = vpack.c.b16 %v648, %v644
        %v745 = vpack.c.b16 %v653, %v649
        %v746 = vpack.c.b16 %v654, %v650
        %v747 = vpack.c.b16 %v655, %v651
        %v748 = vpack.c.b16 %v656, %v652
        %v749 = vpack.c.b16 %v661, %v657
        %v750 = vpack.c.b16 %v662, %v658
        %v751 = vpack.c.b16 %v663, %v659
        %v752 = vpack.c.b16 %v664, %v660
        %v753 = vpack.c.b16 %v669, %v665
        %v754 = vpack.c.b16 %v670, %v666
        %v755 = vpack.c.b16 %v671, %v667
        %v756 = vpack.c.b16 %v672, %v668
        %v757 = vpack.c.b16 %v677, %v673
        %v758 = vpack.c.b16 %v678, %v674
        %v759 = vpack.c.b16 %v679, %v675
        %v760 = vpack.c.b16 %v680, %v676
        %v761 = vpack.c.b16 %v685, %v681
        %v762 = vpack.c.b16 %v686, %v682
        %v763 = vpack.c.b16 %v687, %v683
        %v764 = vpack.c.b16 %v688, %v684
        %v765 = vpack.c.b16 %v693, %v689
        %v766 = vpack.c.b16 %v694, %v690
        %v767 = vpack.c.b16 %v695, %v691
        %v768 = vpack.c.b16 %v696, %v692
        %v769 = vpack.c.b16 %v701, %v697
        %v770 = vpack.c.b16 %v702, %v698
        %v771 = vpack.c.b16 %v703, %v699
        %v772 = vpack.c.b16 %v704, %v700
        %v773 = vpack.c.b16 %v709, %v705
        %v774 = vpack.c.b16 %v710, %v706
        %v775 = vpack.c.b16 %v711, %v707
        %v776 = vpack.c.b16 %v712, %v708
        %841 = vmatprep.subr.bf16.mxu0 %v714
        %842 = vmatpush1.bf16.msra.mxu0 %v713
        %843 = vmatprep.subr.bf16.mxu0 %v718
        %844 = vmatpush1.bf16.msra.mxu0 %v717
        %845 = vmatprep.subr.bf16.mxu0 %v722
        %846 = vmatpush1.bf16.msra.mxu0 %v721
        %847 = vmatprep.subr.bf16.mxu0 %v726
        %848 = vmatpush1.bf16.msra.mxu0 %v725
        %849 = vmatprep.subr.bf16.mxu0 %v730
        %850 = vmatpush1.bf16.msra.mxu0 %v729
        %851 = vmatprep.subr.bf16.mxu0 %v734
        %852 = vmatpush1.bf16.msra.mxu0 %v733
        %853 = vmatprep.subr.bf16.mxu0 %v738
        %854 = vmatpush1.bf16.msra.mxu0 %v737
        %855 = vmatprep.subr.bf16.mxu0 %v742
        %856 = vmatpush1.bf16.msra.mxu0 %v741
        %857 = vmatprep.subr.bf16.mxu0 %v746
        %858 = vmatpush1.bf16.msra.mxu0 %v745
        %859 = vmatprep.subr.bf16.mxu0 %v750
        %860 = vmatpush1.bf16.msra.mxu0 %v749
        %861 = vmatprep.subr.bf16.mxu0 %v754
        %862 = vmatpush1.bf16.msra.mxu0 %v753
        %863 = vmatprep.subr.bf16.mxu0 %v758
        %864 = vmatpush1.bf16.msra.mxu0 %v757
        %865 = vmatprep.subr.bf16.mxu0 %v762
        %866 = vmatpush1.bf16.msra.mxu0 %v761
        %867 = vmatprep.subr.bf16.mxu0 %v766
        %868 = vmatpush1.bf16.msra.mxu0 %v765
        %869 = vmatprep.subr.bf16.mxu0 %v770
        %870 = vmatpush1.bf16.msra.mxu0 %v769
        %871 = vmatprep.subr.bf16.mxu0 %v774
        %872 = vmatpush1.bf16.msra.mxu0 %v773
        %873 = vmatprep.mubr.bf16.mxu0 %v518
        %874 = vmatmul.mubr.bf16.gmra.mrb[0].mxu0 %v517
        %v875 = vpop.f32.mrb[0].mxu0
        %v876 = vadd.f32 0.0, %v875
        %v877 = vpop.f32.mrb[0].mxu0
        %v878 = vadd.f32 0.0, %v877
        %v879 = vpop.f32.mrb[0].mxu0
        %v880 = vpop.f32.mrb[0].mxu0
        %881 = vdwg.mxu0
        %882 = vmatprep.subr.bf16.mxu0 %v716
        %883 = vmatpush1.bf16.msra.mxu0 %v715
        %884 = vmatprep.subr.bf16.mxu0 %v720
        %885 = vmatpush1.bf16.msra.mxu0 %v719
        %886 = vmatprep.subr.bf16.mxu0 %v724
        %887 = vmatpush1.bf16.msra.mxu0 %v723
        %888 = vmatprep.subr.bf16.mxu0 %v728
        %889 = vmatpush1.bf16.msra.mxu0 %v727
        %890 = vmatprep.subr.bf16.mxu0 %v732
        %891 = vmatpush1.bf16.msra.mxu0 %v731
        %892 = vmatprep.subr.bf16.mxu0 %v736
        %893 = vmatpush1.bf16.msra.mxu0 %v735
        %894 = vmatprep.subr.bf16.mxu0 %v740
        %895 = vmatpush1.bf16.msra.mxu0 %v739
        %896 = vmatprep.subr.bf16.mxu0 %v744
        %897 = vmatpush1.bf16.msra.mxu0 %v743
        %898 = vmatprep.subr.bf16.mxu0 %v748
        %899 = vmatpush1.bf16.msra.mxu0 %v747
        %900 = vmatprep.subr.bf16.mxu0 %v752
        %901 = vmatpush1.bf16.msra.mxu0 %v751
        %902 = vmatprep.subr.bf16.mxu0 %v756
        %903 = vmatpush1.bf16.msra.mxu0 %v755
        %904 = vmatprep.subr.bf16.mxu0 %v760
        %905 = vmatpush1.bf16.msra.mxu0 %v759
        %906 = vmatprep.subr.bf16.mxu0 %v764
        %907 = vmatpush1.bf16.msra.mxu0 %v763
        %908 = vmatprep.subr.bf16.mxu0 %v768
        %909 = vmatpush1.bf16.msra.mxu0 %v767
        %910 = vmatprep.subr.bf16.mxu0 %v772
        %911 = vmatpush1.bf16.msra.mxu0 %v771
        %912 = vmatprep.subr.bf16.mxu0 %v776
        %913 = vmatpush1.bf16.msra.mxu0 %v775
        %914 = vmatprep.mubr.bf16.mxu0 %v518
        %915 = vmatmul.mubr.bf16.gmra.mrb[0].mxu0 %v517
        %v916 = vpop.f32.mrb[0].mxu0
        %v917 = vadd.f32 0.0, %v916
        %v918 = vpop.f32.mrb[0].mxu0
        %v919 = vadd.f32 0.0, %v918
        %v920 = vpop.f32.mrb[0].mxu0
        %v921 = vpop.f32.mrb[0].mxu0
        %922 = vdwg.mxu0
        %v925 = vunpack.c.l.s4 1983009808
        %v926 = vunpack.c.0.s8 %v925
        %v927 = vlaneseq
        %v928 = vshrl.u32 %v927, 7
        %v929 = vsub.s32 %v926, %v928
        %v930 = vrot.slane %v378, %v929
        %v931 = vcombine.high %v930, %v930
        %v998 = vunpack.c.l.b16 %v381
        %v999 = vunpack.c.h.b16 %v381
        %v1000 = vunpack.c.l.b16 %v382
        %v1001 = vunpack.c.h.b16 %v382
        %v1002 = vunpack.c.l.b16 %v383
        %v1003 = vunpack.c.h.b16 %v383
        %v1004 = vunpack.c.l.b16 %v384
        %v1005 = vunpack.c.h.b16 %v384
        %v1006 = vunpack.c.l.b16 %v385
        %v1007 = vunpack.c.h.b16 %v385
        %v1008 = vunpack.c.l.b16 %v386
        %v1009 = vunpack.c.h.b16 %v386
        %v1010 = vunpack.c.l.b16 %v387
        %v1011 = vunpack.c.h.b16 %v387
        %v1012 = vunpack.c.l.b16 %v388
        %v1013 = vunpack.c.h.b16 %v388
        %v1014 = vunpack.c.l.b16 %v389
        %v1015 = vunpack.c.h.b16 %v389
        %v1016 = vunpack.c.l.b16 %v390
        %v1017 = vunpack.c.h.b16 %v390
        %v1018 = vunpack.c.l.b16 %v391
        %v1019 = vunpack.c.h.b16 %v391
        %v1020 = vunpack.c.l.b16 %v392
        %v1021 = vunpack.c.h.b16 %v392
        %v1022 = vunpack.c.l.b16 %v393
        %v1023 = vunpack.c.h.b16 %v393
        %v1024 = vunpack.c.l.b16 %v394
        %v1025 = vunpack.c.h.b16 %v394
        %v1026 = vunpack.c.l.b16 %v395
        %v1027 = vunpack.c.h.b16 %v395
        %v1028 = vunpack.c.l.b16 %v396
        %v1029 = vunpack.c.h.b16 %v396
        %v1030 = vunpack.c.l.b16 %v397
        %v1031 = vunpack.c.h.b16 %v397
        %v1032 = vunpack.c.l.b16 %v398
        %v1033 = vunpack.c.h.b16 %v398
        %v1034 = vunpack.c.l.b16 %v399
        %v1035 = vunpack.c.h.b16 %v399
        %v1036 = vunpack.c.l.b16 %v400
        %v1037 = vunpack.c.h.b16 %v400
        %v1038 = vunpack.c.l.b16 %v401
        %v1039 = vunpack.c.h.b16 %v401
        %v1040 = vunpack.c.l.b16 %v402
        %v1041 = vunpack.c.h.b16 %v402
        %v1042 = vunpack.c.l.b16 %v403
        %v1043 = vunpack.c.h.b16 %v403
        %v1044 = vunpack.c.l.b16 %v404
        %v1045 = vunpack.c.h.b16 %v404
        %v1046 = vunpack.c.l.b16 %v405
        %v1047 = vunpack.c.h.b16 %v405
        %v1048 = vunpack.c.l.b16 %v406
        %v1049 = vunpack.c.h.b16 %v406
        %v1050 = vunpack.c.l.b16 %v407
        %v1051 = vunpack.c.h.b16 %v407
        %v1052 = vunpack.c.l.b16 %v408
        %v1053 = vunpack.c.h.b16 %v408
        %v1054 = vunpack.c.l.b16 %v409
        %v1055 = vunpack.c.h.b16 %v409
        %v1056 = vunpack.c.l.b16 %v410
        %v1057 = vunpack.c.h.b16 %v410
        %v1058 = vunpack.c.l.b16 %v411
        %v1059 = vunpack.c.h.b16 %v411
        %v1060 = vunpack.c.l.b16 %v412
        %v1061 = vunpack.c.h.b16 %v412
        %v1062 = vunpack.c.l.b16 %v413
        %v1063 = vunpack.c.h.b16 %v413
        %v1064 = vunpack.c.l.b16 %v414
        %v1065 = vunpack.c.h.b16 %v414
        %v1066 = vunpack.c.l.b16 %v415
        %v1067 = vunpack.c.h.b16 %v415
        %v1068 = vunpack.c.l.b16 %v416
        %v1069 = vunpack.c.h.b16 %v416
        %v1070 = vunpack.c.l.b16 %v417
        %v1071 = vunpack.c.h.b16 %v417
        %v1072 = vunpack.c.l.b16 %v418
        %v1073 = vunpack.c.h.b16 %v418
        %v1074 = vunpack.c.l.b16 %v419
        %v1075 = vunpack.c.h.b16 %v419
        %v1076 = vunpack.c.l.b16 %v420
        %v1077 = vunpack.c.h.b16 %v420
        %v1078 = vunpack.c.l.b16 %v421
        %v1079 = vunpack.c.h.b16 %v421
        %v1080 = vunpack.c.l.b16 %v422
        %v1081 = vunpack.c.h.b16 %v422
        %v1082 = vunpack.c.l.b16 %v423
        %v1083 = vunpack.c.h.b16 %v423
        %v1084 = vunpack.c.l.b16 %v424
        %v1085 = vunpack.c.h.b16 %v424
        %v1086 = vunpack.c.l.b16 %v425
        %v1087 = vunpack.c.h.b16 %v425
        %v1088 = vunpack.c.l.b16 %v426
        %v1089 = vunpack.c.h.b16 %v426
        %v1090 = vunpack.c.l.b16 %v427
        %v1091 = vunpack.c.h.b16 %v427
        %v1092 = vunpack.c.l.b16 %v428
        %v1093 = vunpack.c.h.b16 %v428
        %v1094 = vunpack.c.l.b16 %v429
        %v1095 = vunpack.c.h.b16 %v429
        %v1096 = vunpack.c.l.b16 %v430
        %v1097 = vunpack.c.h.b16 %v430
        %v1098 = vunpack.c.l.b16 %v431
        %v1099 = vunpack.c.h.b16 %v431
        %v1100 = vunpack.c.l.b16 %v432
        %v1101 = vunpack.c.h.b16 %v432
        %v1102 = vunpack.c.l.b16 %v433
        %v1103 = vunpack.c.h.b16 %v433
        %v1104 = vunpack.c.l.b16 %v434
        %v1105 = vunpack.c.h.b16 %v434
        %v1106 = vunpack.c.l.b16 %v435
        %v1107 = vunpack.c.h.b16 %v435
        %v1108 = vunpack.c.l.b16 %v436
        %v1109 = vunpack.c.h.b16 %v436
        %v1110 = vunpack.c.l.b16 %v437
        %v1111 = vunpack.c.h.b16 %v437
        %v1112 = vunpack.c.l.b16 %v438
        %v1113 = vunpack.c.h.b16 %v438
        %v1114 = vunpack.c.l.b16 %v439
        %v1115 = vunpack.c.h.b16 %v439
        %v1116 = vunpack.c.l.b16 %v440
        %v1117 = vunpack.c.h.b16 %v440
        %v1118 = vunpack.c.l.b16 %v441
        %v1119 = vunpack.c.h.b16 %v441
        %v1120 = vunpack.c.l.b16 %v442
        %v1121 = vunpack.c.h.b16 %v442
        %v1122 = vunpack.c.l.b16 %v443
        %v1123 = vunpack.c.h.b16 %v443
        %v1124 = vunpack.c.l.b16 %v444
        %v1125 = vunpack.c.h.b16 %v444
        %v1126 = vpack.c.b16 %v1002, %v998
        %v1127 = vpack.c.b16 %v1003, %v999
        %v1128 = vpack.c.b16 %v1004, %v1000
        %v1129 = vpack.c.b16 %v1005, %v1001
        %v1130 = vpack.c.b16 %v1010, %v1006
        %v1131 = vpack.c.b16 %v1011, %v1007
        %v1132 = vpack.c.b16 %v1012, %v1008
        %v1133 = vpack.c.b16 %v1013, %v1009
        %v1134 = vpack.c.b16 %v1018, %v1014
        %v1135 = vpack.c.b16 %v1019, %v1015
        %v1136 = vpack.c.b16 %v1020, %v1016
        %v1137 = vpack.c.b16 %v1021, %v1017
        %v1138 = vpack.c.b16 %v1026, %v1022
        %v1139 = vpack.c.b16 %v1027, %v1023
        %v1140 = vpack.c.b16 %v1028, %v1024
        %v1141 = vpack.c.b16 %v1029, %v1025
        %v1142 = vpack.c.b16 %v1034, %v1030
        %v1143 = vpack.c.b16 %v1035, %v1031
        %v1144 = vpack.c.b16 %v1036, %v1032
        %v1145 = vpack.c.b16 %v1037, %v1033
        %v1146 = vpack.c.b16 %v1042, %v1038
        %v1147 = vpack.c.b16 %v1043, %v1039
        %v1148 = vpack.c.b16 %v1044, %v1040
        %v1149 = vpack.c.b16 %v1045, %v1041
        %v1150 = vpack.c.b16 %v1050, %v1046
        %v1151 = vpack.c.b16 %v1051, %v1047
        %v1152 = vpack.c.b16 %v1052, %v1048
        %v1153 = vpack.c.b16 %v1053, %v1049
        %v1154 = vpack.c.b16 %v1058, %v1054
        %v1155 = vpack.c.b16 %v1059, %v1055
        %v1156 = vpack.c.b16 %v1060, %v1056
        %v1157 = vpack.c.b16 %v1061, %v1057
        %v1158 = vpack.c.b16 %v1066, %v1062
        %v1159 = vpack.c.b16 %v1067, %v1063
        %v1160 = vpack.c.b16 %v1068, %v1064
        %v1161 = vpack.c.b16 %v1069, %v1065
        %v1162 = vpack.c.b16 %v1074, %v1070
        %v1163 = vpack.c.b16 %v1075, %v1071
        %v1164 = vpack.c.b16 %v1076, %v1072
        %v1165 = vpack.c.b16 %v1077, %v1073
        %v1166 = vpack.c.b16 %v1082, %v1078
        %v1167 = vpack.c.b16 %v1083, %v1079
        %v1168 = vpack.c.b16 %v1084, %v1080
        %v1169 = vpack.c.b16 %v1085, %v1081
        %v1170 = vpack.c.b16 %v1090, %v1086
        %v1171 = vpack.c.b16 %v1091, %v1087
        %v1172 = vpack.c.b16 %v1092, %v1088
        %v1173 = vpack.c.b16 %v1093, %v1089
        %v1174 = vpack.c.b16 %v1098, %v1094
        %v1175 = vpack.c.b16 %v1099, %v1095
        %v1176 = vpack.c.b16 %v1100, %v1096
        %v1177 = vpack.c.b16 %v1101, %v1097
        %v1178 = vpack.c.b16 %v1106, %v1102
        %v1179 = vpack.c.b16 %v1107, %v1103
        %v1180 = vpack.c.b16 %v1108, %v1104
        %v1181 = vpack.c.b16 %v1109, %v1105
        %v1182 = vpack.c.b16 %v1114, %v1110
        %v1183 = vpack.c.b16 %v1115, %v1111
        %v1184 = vpack.c.b16 %v1116, %v1112
        %v1185 = vpack.c.b16 %v1117, %v1113
        %v1186 = vpack.c.b16 %v1122, %v1118
        %v1187 = vpack.c.b16 %v1123, %v1119
        %v1188 = vpack.c.b16 %v1124, %v1120
        %v1189 = vpack.c.b16 %v1125, %v1121
        %1254 = vmatprep.subr.bf16.mxu0 %v1127
        %1255 = vmatpush1.bf16.msra.mxu0 %v1126
        %1256 = vmatprep.subr.bf16.mxu0 %v1131
        %1257 = vmatpush1.bf16.msra.mxu0 %v1130
        %1258 = vmatprep.subr.bf16.mxu0 %v1135
        %1259 = vmatpush1.bf16.msra.mxu0 %v1134
        %1260 = vmatprep.subr.bf16.mxu0 %v1139
        %1261 = vmatpush1.bf16.msra.mxu0 %v1138
        %1262 = vmatprep.subr.bf16.mxu0 %v1143
        %1263 = vmatpush1.bf16.msra.mxu0 %v1142
        %1264 = vmatprep.subr.bf16.mxu0 %v1147
        %1265 = vmatpush1.bf16.msra.mxu0 %v1146
        %1266 = vmatprep.subr.bf16.mxu0 %v1151
        %1267 = vmatpush1.bf16.msra.mxu0 %v1150
        %1268 = vmatprep.subr.bf16.mxu0 %v1155
        %1269 = vmatpush1.bf16.msra.mxu0 %v1154
        %1270 = vmatprep.subr.bf16.mxu0 %v1159
        %1271 = vmatpush1.bf16.msra.mxu0 %v1158
        %1272 = vmatprep.subr.bf16.mxu0 %v1163
        %1273 = vmatpush1.bf16.msra.mxu0 %v1162
        %1274 = vmatprep.subr.bf16.mxu0 %v1167
        %1275 = vmatpush1.bf16.msra.mxu0 %v1166
        %1276 = vmatprep.subr.bf16.mxu0 %v1171
        %1277 = vmatpush1.bf16.msra.mxu0 %v1170
        %1278 = vmatprep.subr.bf16.mxu0 %v1175
        %1279 = vmatpush1.bf16.msra.mxu0 %v1174
        %1280 = vmatprep.subr.bf16.mxu0 %v1179
        %1281 = vmatpush1.bf16.msra.mxu0 %v1178
        %1282 = vmatprep.subr.bf16.mxu0 %v1183
        %1283 = vmatpush1.bf16.msra.mxu0 %v1182
        %1284 = vmatprep.subr.bf16.mxu0 %v1187
        %1285 = vmatpush1.bf16.msra.mxu0 %v1186
        %1286 = vmatprep.mubr.bf16.mxu0 %v931
        %1287 = vmatmul.mubr.bf16.gmra.mrb[0].mxu0 %v930
        %v1288 = vpop.f32.mrb[0].mxu0
        %v1289 = vadd.f32 %v876, %v1288
        %v1290 = vpop.f32.mrb[0].mxu0
        %v1291 = vadd.f32 %v878, %v1290
        %v1292 = vpop.f32.mrb[0].mxu0
        %v1293 = vpop.f32.mrb[0].mxu0
        %1294 = vdwg.mxu0
        %1295 = vmatprep.subr.bf16.mxu0 %v1129
        %1296 = vmatpush1.bf16.msra.mxu0 %v1128
        %1297 = vmatprep.subr.bf16.mxu0 %v1133
        %1298 = vmatpush1.bf16.msra.mxu0 %v1132
        %1299 = vmatprep.subr.bf16.mxu0 %v1137
        %1300 = vmatpush1.bf16.msra.mxu0 %v1136
        %1301 = vmatprep.subr.bf16.mxu0 %v1141
        %1302 = vmatpush1.bf16.msra.mxu0 %v1140
        %1303 = vmatprep.subr.bf16.mxu0 %v1145
        %1304 = vmatpush1.bf16.msra.mxu0 %v1144
        %1305 = vmatprep.subr.bf16.mxu0 %v1149
        %1306 = vmatpush1.bf16.msra.mxu0 %v1148
        %1307 = vmatprep.subr.bf16.mxu0 %v1153
        %1308 = vmatpush1.bf16.msra.mxu0 %v1152
        %1309 = vmatprep.subr.bf16.mxu0 %v1157
        %1310 = vmatpush1.bf16.msra.mxu0 %v1156
        %1311 = vmatprep.subr.bf16.mxu0 %v1161
        %1312 = vmatpush1.bf16.msra.mxu0 %v1160
        %1313 = vmatprep.subr.bf16.mxu0 %v1165
        %1314 = vmatpush1.bf16.msra.mxu0 %v1164
        %1315 = vmatprep.subr.bf16.mxu0 %v1169
        %1316 = vmatpush1.bf16.msra.mxu0 %v1168
        %1317 = vmatprep.subr.bf16.mxu0 %v1173
        %1318 = vmatpush1.bf16.msra.mxu0 %v1172
        %1319 = vmatprep.subr.bf16.mxu0 %v1177
        %1320 = vmatpush1.bf16.msra.mxu0 %v1176
        %1321 = vmatprep.subr.bf16.mxu0 %v1181
        %1322 = vmatpush1.bf16.msra.mxu0 %v1180
        %1323 = vmatprep.subr.bf16.mxu0 %v1185
        %1324 = vmatpush1.bf16.msra.mxu0 %v1184
        %1325 = vmatprep.subr.bf16.mxu0 %v1189
        %1326 = vmatpush1.bf16.msra.mxu0 %v1188
        %1327 = vmatprep.mubr.bf16.mxu0 %v931
        %1328 = vmatmul.mubr.bf16.gmra.mrb[0].mxu0 %v930
        %v1329 = vpop.f32.mrb[0].mxu0
        %v1330 = vadd.f32 %v917, %v1329
        %v1331 = vpop.f32.mrb[0].mxu0
        %v1332 = vadd.f32 %v919, %v1331
        %v1333 = vpop.f32.mrb[0].mxu0
        %v1334 = vpop.f32.mrb[0].mxu0
        %1335 = vdwg.mxu0
        %s1336 = scalar_lea.vmem %s2, 1024
        %v1337 = vld [vmem:[%s1336] sm:$0xff]
        %v1338 = vld [vmem:[%s1336 + $0x8] sm:$0xff]
        %v1339 = vld [vmem:[%s1336 + $0x10] sm:$0xff]
        %v1340 = vld [vmem:[%s1336 + $0x18] sm:$0xff]
        %v1341 = vld [vmem:[%s1336 + $0x20] sm:$0xff]
        %v1342 = vld [vmem:[%s1336 + $0x28] sm:$0xff]
        %v1343 = vld [vmem:[%s1336 + $0x30] sm:$0xff]
        %v1344 = vld [vmem:[%s1336 + $0x38] sm:$0xff]
        %v1345 = vld [vmem:[%s1336 + $0x40] sm:$0xff]
        %v1346 = vld [vmem:[%s1336 + $0x48] sm:$0xff]
        %v1347 = vld [vmem:[%s1336 + $0x50] sm:$0xff]
        %v1348 = vld [vmem:[%s1336 + $0x58] sm:$0xff]
        %v1349 = vld [vmem:[%s1336 + $0x60] sm:$0xff]
        %v1350 = vld [vmem:[%s1336 + $0x68] sm:$0xff]
        %v1351 = vld [vmem:[%s1336 + $0x70] sm:$0xff]
        %v1352 = vld [vmem:[%s1336 + $0x78] sm:$0xff]
        %v1353 = vld [vmem:[%s1336 + $0x80] sm:$0xff]
        %v1354 = vld [vmem:[%s1336 + $0x88] sm:$0xff]
        %v1355 = vld [vmem:[%s1336 + $0x90] sm:$0xff]
        %v1356 = vld [vmem:[%s1336 + $0x98] sm:$0xff]
        %v1357 = vld [vmem:[%s1336 + $0xa0] sm:$0xff]
        %v1358 = vld [vmem:[%s1336 + $0xa8] sm:$0xff]
        %v1359 = vld [vmem:[%s1336 + $0xb0] sm:$0xff]
        %v1360 = vld [vmem:[%s1336 + $0xb8] sm:$0xff]
        %v1361 = vld [vmem:[%s1336 + $0xc0] sm:$0xff]
        %v1362 = vld [vmem:[%s1336 + $0xc8] sm:$0xff]
        %v1363 = vld [vmem:[%s1336 + $0xd0] sm:$0xff]
        %v1364 = vld [vmem:[%s1336 + $0xd8] sm:$0xff]
        %v1365 = vld [vmem:[%s1336 + $0xe0] sm:$0xff]
        %v1366 = vld [vmem:[%s1336 + $0xe8] sm:$0xff]
        %v1367 = vld [vmem:[%s1336 + $0xf0] sm:$0xff]
        %v1368 = vld [vmem:[%s1336 + $0xf8] sm:$0xff]
        %v1369 = vld [vmem:[%s1336 + $0x100] sm:$0xff]
        %v1370 = vld [vmem:[%s1336 + $0x108] sm:$0xff]
        %v1371 = vld [vmem:[%s1336 + $0x110] sm:$0xff]
        %v1372 = vld [vmem:[%s1336 + $0x118] sm:$0xff]
        %v1373 = vld [vmem:[%s1336 + $0x120] sm:$0xff]
        %v1374 = vld [vmem:[%s1336 + $0x128] sm:$0xff]
        %v1375 = vld [vmem:[%s1336 + $0x130] sm:$0xff]
        %v1376 = vld [vmem:[%s1336 + $0x138] sm:$0xff]
        %v1377 = vld [vmem:[%s1336 + $0x140] sm:$0xff]
        %v1378 = vld [vmem:[%s1336 + $0x148] sm:$0xff]
        %v1379 = vld [vmem:[%s1336 + $0x150] sm:$0xff]
        %v1380 = vld [vmem:[%s1336 + $0x158] sm:$0xff]
        %v1381 = vld [vmem:[%s1336 + $0x160] sm:$0xff]
        %v1382 = vld [vmem:[%s1336 + $0x168] sm:$0xff]
        %v1383 = vld [vmem:[%s1336 + $0x170] sm:$0xff]
        %v1384 = vld [vmem:[%s1336 + $0x178] sm:$0xff]
        %v1385 = vld [vmem:[%s1336 + $0x180] sm:$0xff]
        %v1386 = vld [vmem:[%s1336 + $0x188] sm:$0xff]
        %v1387 = vld [vmem:[%s1336 + $0x190] sm:$0xff]
        %v1388 = vld [vmem:[%s1336 + $0x198] sm:$0xff]
        %v1389 = vld [vmem:[%s1336 + $0x1a0] sm:$0xff]
        %v1390 = vld [vmem:[%s1336 + $0x1a8] sm:$0xff]
        %v1391 = vld [vmem:[%s1336 + $0x1b0] sm:$0xff]
        %v1392 = vld [vmem:[%s1336 + $0x1b8] sm:$0xff]
        %v1393 = vld [vmem:[%s1336 + $0x1c0] sm:$0xff]
        %v1394 = vld [vmem:[%s1336 + $0x1c8] sm:$0xff]
        %v1395 = vld [vmem:[%s1336 + $0x1d0] sm:$0xff]
        %v1396 = vld [vmem:[%s1336 + $0x1d8] sm:$0xff]
        %v1397 = vld [vmem:[%s1336 + $0x1e0] sm:$0xff]
        %v1398 = vld [vmem:[%s1336 + $0x1e8] sm:$0xff]
        %v1399 = vld [vmem:[%s1336 + $0x1f0] sm:$0xff]
        %v1400 = vld [vmem:[%s1336 + $0x1f8] sm:$0xff]
        %v1403 = vunpack.c.l.s4 1983009808
        %v1404 = vunpack.c.0.s8 %v1403
        %v1405 = vlaneseq
        %v1406 = vshrl.u32 %v1405, 7
        %v1407 = vsub.s32 %v1404, %v1406
        %v1408 = vrot.slane %v380, %v1407
        %v1409 = vcombine.high %v1408, %v1408
        %v1411 = vshrl.u32 %v1408, 16
        %v1413 = vshll.u32 %v1408, 16
        %v1415 = vrot.slane %v1413, 1
        %v1416 = vor.u32 %v1411, %v1415
        %v1418 = vshrl.u32 %v1409, 16
        %v1420 = vshll.u32 %v1409, 16
        %v1422 = vrot.slane %v1420, 1
        %v1423 = vor.u32 %v1418, %v1422
        %v1490 = vunpack.c.l.b16 %v1337
        %v1491 = vunpack.c.h.b16 %v1337
        %v1492 = vunpack.c.l.b16 %v1338
        %v1493 = vunpack.c.h.b16 %v1338
        %v1494 = vunpack.c.l.b16 %v1339
        %v1495 = vunpack.c.h.b16 %v1339
        %v1496 = vunpack.c.l.b16 %v1340
        %v1497 = vunpack.c.h.b16 %v1340
        %v1498 = vunpack.c.l.b16 %v1341
        %v1499 = vunpack.c.h.b16 %v1341
        %v1500 = vunpack.c.l.b16 %v1342
        %v1501 = vunpack.c.h.b16 %v1342
        %v1502 = vunpack.c.l.b16 %v1343
        %v1503 = vunpack.c.h.b16 %v1343
        %v1504 = vunpack.c.l.b16 %v1344
        %v1505 = vunpack.c.h.b16 %v1344
        %v1506 = vunpack.c.l.b16 %v1345
        %v1507 = vunpack.c.h.b16 %v1345
        %v1508 = vunpack.c.l.b16 %v1346
        %v1509 = vunpack.c.h.b16 %v1346
        %v1510 = vunpack.c.l.b16 %v1347
        %v1511 = vunpack.c.h.b16 %v1347
        %v1512 = vunpack.c.l.b16 %v1348
        %v1513 = vunpack.c.h.b16 %v1348
        %v1514 = vunpack.c.l.b16 %v1349
        %v1515 = vunpack.c.h.b16 %v1349
        %v1516 = vunpack.c.l.b16 %v1350
        %v1517 = vunpack.c.h.b16 %v1350
        %v1518 = vunpack.c.l.b16 %v1351
        %v1519 = vunpack.c.h.b16 %v1351
        %v1520 = vunpack.c.l.b16 %v1352
        %v1521 = vunpack.c.h.b16 %v1352
        %v1522 = vunpack.c.l.b16 %v1353
        %v1523 = vunpack.c.h.b16 %v1353
        %v1524 = vunpack.c.l.b16 %v1354
        %v1525 = vunpack.c.h.b16 %v1354
        %v1526 = vunpack.c.l.b16 %v1355
        %v1527 = vunpack.c.h.b16 %v1355
        %v1528 = vunpack.c.l.b16 %v1356
        %v1529 = vunpack.c.h.b16 %v1356
        %v1530 = vunpack.c.l.b16 %v1357
        %v1531 = vunpack.c.h.b16 %v1357
        %v1532 = vunpack.c.l.b16 %v1358
        %v1533 = vunpack.c.h.b16 %v1358
        %v1534 = vunpack.c.l.b16 %v1359
        %v1535 = vunpack.c.h.b16 %v1359
        %v1536 = vunpack.c.l.b16 %v1360
        %v1537 = vunpack.c.h.b16 %v1360
        %v1538 = vunpack.c.l.b16 %v1361
        %v1539 = vunpack.c.h.b16 %v1361
        %v1540 = vunpack.c.l.b16 %v1362
        %v1541 = vunpack.c.h.b16 %v1362
        %v1542 = vunpack.c.l.b16 %v1363
        %v1543 = vunpack.c.h.b16 %v1363
        %v1544 = vunpack.c.l.b16 %v1364
        %v1545 = vunpack.c.h.b16 %v1364
        %v1546 = vunpack.c.l.b16 %v1365
        %v1547 = vunpack.c.h.b16 %v1365
        %v1548 = vunpack.c.l.b16 %v1366
        %v1549 = vunpack.c.h.b16 %v1366
        %v1550 = vunpack.c.l.b16 %v1367
        %v1551 = vunpack.c.h.b16 %v1367
        %v1552 = vunpack.c.l.b16 %v1368
        %v1553 = vunpack.c.h.b16 %v1368
        %v1554 = vunpack.c.l.b16 %v1369
        %v1555 = vunpack.c.h.b16 %v1369
        %v1556 = vunpack.c.l.b16 %v1370
        %v1557 = vunpack.c.h.b16 %v1370
        %v1558 = vunpack.c.l.b16 %v1371
        %v1559 = vunpack.c.h.b16 %v1371
        %v1560 = vunpack.c.l.b16 %v1372
        %v1561 = vunpack.c.h.b16 %v1372
        %v1562 = vunpack.c.l.b16 %v1373
        %v1563 = vunpack.c.h.b16 %v1373
        %v1564 = vunpack.c.l.b16 %v1374
        %v1565 = vunpack.c.h.b16 %v1374
        %v1566 = vunpack.c.l.b16 %v1375
        %v1567 = vunpack.c.h.b16 %v1375
        %v1568 = vunpack.c.l.b16 %v1376
        %v1569 = vunpack.c.h.b16 %v1376
        %v1570 = vunpack.c.l.b16 %v1377
        %v1571 = vunpack.c.h.b16 %v1377
        %v1572 = vunpack.c.l.b16 %v1378
        %v1573 = vunpack.c.h.b16 %v1378
        %v1574 = vunpack.c.l.b16 %v1379
        %v1575 = vunpack.c.h.b16 %v1379
        %v1576 = vunpack.c.l.b16 %v1380
        %v1577 = vunpack.c.h.b16 %v1380
        %v1578 = vunpack.c.l.b16 %v1381
        %v1579 = vunpack.c.h.b16 %v1381
        %v1580 = vunpack.c.l.b16 %v1382
        %v1581 = vunpack.c.h.b16 %v1382
        %v1582 = vunpack.c.l.b16 %v1383
        %v1583 = vunpack.c.h.b16 %v1383
        %v1584 = vunpack.c.l.b16 %v1384
        %v1585 = vunpack.c.h.b16 %v1384
        %v1586 = vunpack.c.l.b16 %v1385
        %v1587 = vunpack.c.h.b16 %v1385
        %v1588 = vunpack.c.l.b16 %v1386
        %v1589 = vunpack.c.h.b16 %v1386
        %v1590 = vunpack.c.l.b16 %v1387
        %v1591 = vunpack.c.h.b16 %v1387
        %v1592 = vunpack.c.l.b16 %v1388
        %v1593 = vunpack.c.h.b16 %v1388
        %v1594 = vunpack.c.l.b16 %v1389
        %v1595 = vunpack.c.h.b16 %v1389
        %v1596 = vunpack.c.l.b16 %v1390
        %v1597 = vunpack.c.h.b16 %v1390
        %v1598 = vunpack.c.l.b16 %v1391
        %v1599 = vunpack.c.h.b16 %v1391
        %v1600 = vunpack.c.l.b16 %v1392
        %v1601 = vunpack.c.h.b16 %v1392
        %v1602 = vunpack.c.l.b16 %v1393
        %v1603 = vunpack.c.h.b16 %v1393
        %v1604 = vunpack.c.l.b16 %v1394
        %v1605 = vunpack.c.h.b16 %v1394
        %v1606 = vunpack.c.l.b16 %v1395
        %v1607 = vunpack.c.h.b16 %v1395
        %v1608 = vunpack.c.l.b16 %v1396
        %v1609 = vunpack.c.h.b16 %v1396
        %v1610 = vunpack.c.l.b16 %v1397
        %v1611 = vunpack.c.h.b16 %v1397
        %v1612 = vunpack.c.l.b16 %v1398
        %v1613 = vunpack.c.h.b16 %v1398
        %v1614 = vunpack.c.l.b16 %v1399
        %v1615 = vunpack.c.h.b16 %v1399
        %v1616 = vunpack.c.l.b16 %v1400
        %v1617 = vunpack.c.h.b16 %v1400
        %v1618 = vpack.c.b16 %v1494, %v1490
        %v1619 = vpack.c.b16 %v1495, %v1491
        %v1620 = vpack.c.b16 %v1496, %v1492
        %v1621 = vpack.c.b16 %v1497, %v1493
        %v1622 = vpack.c.b16 %v1502, %v1498
        %v1623 = vpack.c.b16 %v1503, %v1499
        %v1624 = vpack.c.b16 %v1504, %v1500
        %v1625 = vpack.c.b16 %v1505, %v1501
        %v1626 = vpack.c.b16 %v1510, %v1506
        %v1627 = vpack.c.b16 %v1511, %v1507
        %v1628 = vpack.c.b16 %v1512, %v1508
        %v1629 = vpack.c.b16 %v1513, %v1509
        %v1630 = vpack.c.b16 %v1518, %v1514
        %v1631 = vpack.c.b16 %v1519, %v1515
        %v1632 = vpack.c.b16 %v1520, %v1516
        %v1633 = vpack.c.b16 %v1521, %v1517
        %v1634 = vpack.c.b16 %v1526, %v1522
        %v1635 = vpack.c.b16 %v1527, %v1523
        %v1636 = vpack.c.b16 %v1528, %v1524
        %v1637 = vpack.c.b16 %v1529, %v1525
        %v1638 = vpack.c.b16 %v1534, %v1530
        %v1639 = vpack.c.b16 %v1535, %v1531
        %v1640 = vpack.c.b16 %v1536, %v1532
        %v1641 = vpack.c.b16 %v1537, %v1533
        %v1642 = vpack.c.b16 %v1542, %v1538
        %v1643 = vpack.c.b16 %v1543, %v1539
        %v1644 = vpack.c.b16 %v1544, %v1540
        %v1645 = vpack.c.b16 %v1545, %v1541
        %v1646 = vpack.c.b16 %v1550, %v1546
        %v1647 = vpack.c.b16 %v1551, %v1547
        %v1648 = vpack.c.b16 %v1552, %v1548
        %v1649 = vpack.c.b16 %v1553, %v1549
        %v1650 = vpack.c.b16 %v1558, %v1554
        %v1651 = vpack.c.b16 %v1559, %v1555
        %v1652 = vpack.c.b16 %v1560, %v1556
        %v1653 = vpack.c.b16 %v1561, %v1557
        %v1654 = vpack.c.b16 %v1566, %v1562
        %v1655 = vpack.c.b16 %v1567, %v1563
        %v1656 = vpack.c.b16 %v1568, %v1564
        %v1657 = vpack.c.b16 %v1569, %v1565
        %v1658 = vpack.c.b16 %v1574, %v1570
        %v1659 = vpack.c.b16 %v1575, %v1571
        %v1660 = vpack.c.b16 %v1576, %v1572
        %v1661 = vpack.c.b16 %v1577, %v1573
        %v1662 = vpack.c.b16 %v1582, %v1578
        %v1663 = vpack.c.b16 %v1583, %v1579
        %v1664 = vpack.c.b16 %v1584, %v1580
        %v1665 = vpack.c.b16 %v1585, %v1581
        %v1666 = vpack.c.b16 %v1590, %v1586
        %v1667 = vpack.c.b16 %v1591, %v1587
        %v1668 = vpack.c.b16 %v1592, %v1588
        %v1669 = vpack.c.b16 %v1593, %v1589
        %v1670 = vpack.c.b16 %v1598, %v1594
        %v1671 = vpack.c.b16 %v1599, %v1595
        %v1672 = vpack.c.b16 %v1600, %v1596
        %v1673 = vpack.c.b16 %v1601, %v1597
        %v1674 = vpack.c.b16 %v1606, %v1602
        %v1675 = vpack.c.b16 %v1607, %v1603
        %v1676 = vpack.c.b16 %v1608, %v1604
        %v1677 = vpack.c.b16 %v1609, %v1605
        %v1678 = vpack.c.b16 %v1614, %v1610
        %v1679 = vpack.c.b16 %v1615, %v1611
        %v1680 = vpack.c.b16 %v1616, %v1612
        %v1681 = vpack.c.b16 %v1617, %v1613
        %1746 = vmatprep.subr.bf16.mxu0 %v1619
        %1747 = vmatpush1.bf16.msra.mxu0 %v1618
        %1748 = vmatprep.subr.bf16.mxu0 %v1623
        %1749 = vmatpush1.bf16.msra.mxu0 %v1622
        %1750 = vmatprep.subr.bf16.mxu0 %v1627
        %1751 = vmatpush1.bf16.msra.mxu0 %v1626
        %1752 = vmatprep.subr.bf16.mxu0 %v1631
        %1753 = vmatpush1.bf16.msra.mxu0 %v1630
        %1754 = vmatprep.subr.bf16.mxu0 %v1635
        %1755 = vmatpush1.bf16.msra.mxu0 %v1634
        %1756 = vmatprep.subr.bf16.mxu0 %v1639
        %1757 = vmatpush1.bf16.msra.mxu0 %v1638
        %1758 = vmatprep.subr.bf16.mxu0 %v1643
        %1759 = vmatpush1.bf16.msra.mxu0 %v1642
        %1760 = vmatprep.subr.bf16.mxu0 %v1647
        %1761 = vmatpush1.bf16.msra.mxu0 %v1646
        %1762 = vmatprep.subr.bf16.mxu0 %v1651
        %1763 = vmatpush1.bf16.msra.mxu0 %v1650
        %1764 = vmatprep.subr.bf16.mxu0 %v1655
        %1765 = vmatpush1.bf16.msra.mxu0 %v1654
        %1766 = vmatprep.subr.bf16.mxu0 %v1659
        %1767 = vmatpush1.bf16.msra.mxu0 %v1658
        %1768 = vmatprep.subr.bf16.mxu0 %v1663
        %1769 = vmatpush1.bf16.msra.mxu0 %v1662
        %1770 = vmatprep.subr.bf16.mxu0 %v1667
        %1771 = vmatpush1.bf16.msra.mxu0 %v1666
        %1772 = vmatprep.subr.bf16.mxu0 %v1671
        %1773 = vmatpush1.bf16.msra.mxu0 %v1670
        %1774 = vmatprep.subr.bf16.mxu0 %v1675
        %1775 = vmatpush1.bf16.msra.mxu0 %v1674
        %1776 = vmatprep.subr.bf16.mxu0 %v1679
        %1777 = vmatpush1.bf16.msra.mxu0 %v1678
        %1778 = vmatprep.mubr.bf16.mxu0 %v1423
        %1779 = vmatmul.mubr.bf16.gmra.mrb[0].mxu0 %v1416
        %v1780 = vpop.f32.mrb[0].mxu0
        %v1781 = vadd.f32 0.0, %v1780
        %v1782 = vpop.f32.mrb[0].mxu0
        %v1783 = vadd.f32 0.0, %v1782
        %v1784 = vpop.f32.mrb[0].mxu0
        %v1785 = vpop.f32.mrb[0].mxu0
        %1786 = vdwg.mxu0
        %1787 = vmatprep.subr.bf16.mxu0 %v1621
        %1788 = vmatpush1.bf16.msra.mxu0 %v1620
        %1789 = vmatprep.subr.bf16.mxu0 %v1625
        %1790 = vmatpush1.bf16.msra.mxu0 %v1624
        %1791 = vmatprep.subr.bf16.mxu0 %v1629
        %1792 = vmatpush1.bf16.msra.mxu0 %v1628
        %1793 = vmatprep.subr.bf16.mxu0 %v1633
        %1794 = vmatpush1.bf16.msra.mxu0 %v1632
        %1795 = vmatprep.subr.bf16.mxu0 %v1637
        %1796 = vmatpush1.bf16.msra.mxu0 %v1636
        %1797 = vmatprep.subr.bf16.mxu0 %v1641
        %1798 = vmatpush1.bf16.msra.mxu0 %v1640
        %1799 = vmatprep.subr.bf16.mxu0 %v1645
        %1800 = vmatpush1.bf16.msra.mxu0 %v1644
        %1801 = vmatprep.subr.bf16.mxu0 %v1649
        %1802 = vmatpush1.bf16.msra.mxu0 %v1648
        %1803 = vmatprep.subr.bf16.mxu0 %v1653
        %1804 = vmatpush1.bf16.msra.mxu0 %v1652
        %1805 = vmatprep.subr.bf16.mxu0 %v1657
        %1806 = vmatpush1.bf16.msra.mxu0 %v1656
        %1807 = vmatprep.subr.bf16.mxu0 %v1661
        %1808 = vmatpush1.bf16.msra.mxu0 %v1660
        %1809 = vmatprep.subr.bf16.mxu0 %v1665
        %1810 = vmatpush1.bf16.msra.mxu0 %v1664
        %1811 = vmatprep.subr.bf16.mxu0 %v1669
        %1812 = vmatpush1.bf16.msra.mxu0 %v1668
        %1813 = vmatprep.subr.bf16.mxu0 %v1673
        %1814 = vmatpush1.bf16.msra.mxu0 %v1672
        %1815 = vmatprep.subr.bf16.mxu0 %v1677
        %1816 = vmatpush1.bf16.msra.mxu0 %v1676
        %1817 = vmatprep.subr.bf16.mxu0 %v1681
        %1818 = vmatpush1.bf16.msra.mxu0 %v1680
        %1819 = vmatprep.mubr.bf16.mxu0 %v1423
        %1820 = vmatmul.mubr.bf16.gmra.mrb[0].mxu0 %v1416
        %v1821 = vpop.f32.mrb[0].mxu0
        %v1822 = vadd.f32 0.0, %v1821
        %v1823 = vpop.f32.mrb[0].mxu0
        %v1824 = vadd.f32 0.0, %v1823
        %v1825 = vpop.f32.mrb[0].mxu0
        %v1826 = vpop.f32.mrb[0].mxu0
        %1827 = vdwg.mxu0
        %v1828 = vadd.f32 %v1289, %v1781
        %v1829 = vadd.f32 %v1291, %v1783
        %v1830 = vadd.f32 %v1330, %v1822
        %v1831 = vadd.f32 %v1332, %v1824
        %v1832 = vld [vmem:[%s3] sm:$0xf]
        %v1834 = vlaneseq
        %v1835 = vshrl.u32 %v1834, 7
        %v1836 = vsub.s32 0, %v1835
        %v1837 = vrot.slane %v1832, %v1836
        %v1838 = vlaneseq
        %v1839 = vshrl.u32 %v1838, 7
        %v1840 = vsub.s32 1, %v1839
        %v1841 = vrot.slane %v1832, %v1840
        %v1842 = vlaneseq
        %v1843 = vshrl.u32 %v1842, 7
        %v1844 = vsub.s32 2, %v1843
        %v1845 = vrot.slane %v1832, %v1844
        %v1846 = vlaneseq
        %v1847 = vshrl.u32 %v1846, 7
        %v1848 = vsub.s32 3, %v1847
        %v1849 = vrot.slane %v1832, %v1848
        %v1854 = vadd.f32 %v1828, %v1837
        %v1855 = vadd.f32 %v1829, %v1841
        %v1856 = vadd.f32 %v1830, %v1845
        %v1857 = vadd.f32 %v1831, %v1849
        %v1858 = vmax.f32 %v1854, 0.0
        %v1859 = vmax.f32 %v1855, 0.0
        %v1860 = vmax.f32 %v1856, 0.0
        %v1861 = vmax.f32 %v1857, 0.0
        %vm1862 = vcmask 1040384
        %vm1863 = vsmask.f32 256
        %vm1864 = vmand %vm1862, %vm1863
        %vm1865 = vcmask 1042434
        %vm1866 = vsmask.f32 2304
        %vm1867 = vmand %vm1865, %vm1866
        %vm1868 = vmor %vm1867, %vm1864
        %vm1869 = vcmask 1044484
        %vm1870 = vsmask.f32 4352
        %vm1871 = vmand %vm1869, %vm1870
        %vm1872 = vmor %vm1871, %vm1868
        %vm1873 = vcmask 1046534
        %vm1874 = vsmask.f32 6400
        %vm1875 = vmand %vm1873, %vm1874
        %vm1876 = vmor %vm1875, %vm1872
        %v1877 = vld [vmem:[#allocation2] sm:$0x55]
        %v1878 = vsel %vm1876, 0, %v1877
        %1879 = vst [vmem:[#allocation2] sm:$0x55] %v1878
        %vm1880 = vcmask 1041409
        %vm1881 = vsmask.f32 7942
        %vm1882 = vmand %vm1880, %vm1881
        %vm1883 = vcmask 1043459
        %vm1884 = vsmask.f32 7950
        %vm1885 = vmand %vm1883, %vm1884
        %vm1886 = vmor %vm1885, %vm1882
        %vm1887 = vcmask 1045509
        %vm1888 = vsmask.f32 7958
        %vm1889 = vmand %vm1887, %vm1888
        %vm1890 = vmor %vm1889, %vm1886
        %vm1891 = vcmask 1047559
        %vm1892 = vsmask.f32 7966
        %vm1893 = vmand %vm1891, %vm1892
        %vm1894 = vmor %vm1893, %vm1890
        %v1895 = vld [vmem:[#allocation2] sm:$0xaa]
        %v1896 = vsel %vm1894, 0, %v1895
        %1897 = vst [vmem:[#allocation2] sm:$0xaa] %v1896
        %v1898 = vpack.c.bf16 %v1858, %v1858
        %v1899 = vpack.c.bf16 %v1859, %v1859
        %v1900 = vpack.c.bf16 %v1860, %v1860
        %v1901 = vpack.c.bf16 %v1861, %v1861
        %v1906 = vcombine.low %v1898, %v1899
        %v1907 = vcombine.low %v1900, %v1901
        %v1909 = vunpack.c.l.s4 1983009808
        %v1910 = vunpack.c.0.s8 %v1909
        %v1911 = vlaneseq
        %v1912 = vshrl.u32 %v1911, 7
        %v1913 = vsub.s32 %v1910, %v1912
        %v1914 = vrot.slane %v1906, %v1913
        %v1916 = vunpack.c.l.s4 1983009808
        %v1917 = vunpack.c.0.s8 %v1916
        %v1918 = vlaneseq
        %v1919 = vshrl.u32 %v1918, 7
        %v1920 = vsub.s32 %v1917, %v1919
        %v1921 = vrot.slane %v1907, %v1920
        %v1922 = vcombine.low %v1914, %v1921
        %v1924 = vshrl.u32 %v1922, 16
        %v1926 = vrot.slane %v1924, 7
        %v1927 = vshll.u32 %v1922, 16
        %v1929 = vor.u32 %v1926, %v1927
        %vm1931 = vcmask 1041408
        %vm1932 = vsmask.f32 1282
        %vm1933 = vmand %vm1931, %vm1932
        %vm1934 = vcmask 1043458
        %vm1935 = vsmask.f32 3338
        %vm1936 = vmand %vm1934, %vm1935
        %vm1937 = vmor %vm1936, %vm1933
        %vm1938 = vcmask 1045508
        %vm1939 = vsmask.f32 5394
        %vm1940 = vmand %vm1938, %vm1939
        %vm1941 = vmor %vm1940, %vm1937
        %vm1942 = vcmask 1047558
        %vm1943 = vsmask.f32 7450
        %vm1944 = vmand %vm1942, %vm1943
        %vm1945 = vmor %vm1944, %vm1941
        %v1946 = vld [vmem:[#allocation2] sm:$0xff]
        %v1947 = vsel %vm1945, %v1929, %v1946
        %1948 = vst [vmem:[#allocation2] sm:$0xff] %v1947
        %v1949 = vld [vmem:[#allocation2] sm:$0x55]
        %v1950 = vld [vmem:[%s4] sm:$0xff]
        %v1951 = vld [vmem:[%s4 + $0x8] sm:$0xff]
        %v1952 = vld [vmem:[%s4 + $0x10] sm:$0xff]
        %v1953 = vld [vmem:[%s4 + $0x18] sm:$0xff]
        %v1954 = vld [vmem:[%s4 + $0x20] sm:$0xff]
        %v1955 = vld [vmem:[%s4 + $0x28] sm:$0xff]
        %v1956 = vld [vmem:[%s4 + $0x30] sm:$0xff]
        %v1957 = vld [vmem:[%s4 + $0x38] sm:$0xff]
        %v1958 = vld [vmem:[%s4 + $0x40] sm:$0xff]
        %v1959 = vld [vmem:[%s4 + $0x48] sm:$0xff]
        %v1960 = vld [vmem:[%s4 + $0x50] sm:$0xff]
        %v1961 = vld [vmem:[%s4 + $0x58] sm:$0xff]
        %v1962 = vld [vmem:[%s4 + $0x60] sm:$0xff]
        %v1963 = vld [vmem:[%s4 + $0x68] sm:$0xff]
        %v1964 = vld [vmem:[%s4 + $0x70] sm:$0xff]
        %v1965 = vld [vmem:[%s4 + $0x78] sm:$0xff]
        %v1966 = vld [vmem:[%s4 + $0x80] sm:$0xff]
        %v1967 = vld [vmem:[%s4 + $0x88] sm:$0xff]
        %v1968 = vld [vmem:[%s4 + $0x90] sm:$0xff]
        %v1969 = vld [vmem:[%s4 + $0x98] sm:$0xff]
        %v1970 = vld [vmem:[%s4 + $0xa0] sm:$0xff]
        %v1971 = vld [vmem:[%s4 + $0xa8] sm:$0xff]
        %v1972 = vld [vmem:[%s4 + $0xb0] sm:$0xff]
        %v1973 = vld [vmem:[%s4 + $0xb8] sm:$0xff]
        %v1974 = vld [vmem:[%s4 + $0xc0] sm:$0xff]
        %v1975 = vld [vmem:[%s4 + $0xc8] sm:$0xff]
        %v1976 = vld [vmem:[%s4 + $0xd0] sm:$0xff]
        %v1977 = vld [vmem:[%s4 + $0xd8] sm:$0xff]
        %v1978 = vld [vmem:[%s4 + $0xe0] sm:$0xff]
        %v1979 = vld [vmem:[%s4 + $0xe8] sm:$0xff]
        %v1980 = vld [vmem:[%s4 + $0xf0] sm:$0xff]
        %v1981 = vld [vmem:[%s4 + $0xf8] sm:$0xff]
        %v1982 = vld [vmem:[%s4 + $0x100] sm:$0xff]
        %v1983 = vld [vmem:[%s4 + $0x108] sm:$0xff]
        %v1984 = vld [vmem:[%s4 + $0x110] sm:$0xff]
        %v1985 = vld [vmem:[%s4 + $0x118] sm:$0xff]
        %v1986 = vld [vmem:[%s4 + $0x120] sm:$0xff]
        %v1987 = vld [vmem:[%s4 + $0x128] sm:$0xff]
        %v1988 = vld [vmem:[%s4 + $0x130] sm:$0xff]
        %v1989 = vld [vmem:[%s4 + $0x138] sm:$0xff]
        %v1990 = vld [vmem:[%s4 + $0x140] sm:$0xff]
        %v1991 = vld [vmem:[%s4 + $0x148] sm:$0xff]
        %v1992 = vld [vmem:[%s4 + $0x150] sm:$0xff]
        %v1993 = vld [vmem:[%s4 + $0x158] sm:$0xff]
        %v1994 = vld [vmem:[%s4 + $0x160] sm:$0xff]
        %v1995 = vld [vmem:[%s4 + $0x168] sm:$0xff]
        %v1996 = vld [vmem:[%s4 + $0x170] sm:$0xff]
        %v1997 = vld [vmem:[%s4 + $0x178] sm:$0xff]
        %v1998 = vld [vmem:[%s4 + $0x180] sm:$0xff]
        %v1999 = vld [vmem:[%s4 + $0x188] sm:$0xff]
        %v2000 = vld [vmem:[%s4 + $0x190] sm:$0xff]
        %v2001 = vld [vmem:[%s4 + $0x198] sm:$0xff]
        %v2002 = vld [vmem:[%s4 + $0x1a0] sm:$0xff]
        %v2003 = vld [vmem:[%s4 + $0x1a8] sm:$0xff]
        %v2004 = vld [vmem:[%s4 + $0x1b0] sm:$0xff]
        %v2005 = vld [vmem:[%s4 + $0x1b8] sm:$0xff]
        %v2006 = vld [vmem:[%s4 + $0x1c0] sm:$0xff]
        %v2007 = vld [vmem:[%s4 + $0x1c8] sm:$0xff]
        %v2008 = vld [vmem:[%s4 + $0x1d0] sm:$0xff]
        %v2009 = vld [vmem:[%s4 + $0x1d8] sm:$0xff]
        %v2010 = vld [vmem:[%s4 + $0x1e0] sm:$0xff]
        %v2011 = vld [vmem:[%s4 + $0x1e8] sm:$0xff]
        %v2012 = vld [vmem:[%s4 + $0x1f0] sm:$0xff]
        %v2013 = vld [vmem:[%s4 + $0x1f8] sm:$0xff]
        %v2014 = vld [vmem:[%s4 + $0x200] sm:$0xff]
        %v2015 = vld [vmem:[%s4 + $0x208] sm:$0xff]
        %v2016 = vld [vmem:[%s4 + $0x210] sm:$0xff]
        %v2017 = vld [vmem:[%s4 + $0x218] sm:$0xff]
        %v2018 = vld [vmem:[%s4 + $0x220] sm:$0xff]
        %v2019 = vld [vmem:[%s4 + $0x228] sm:$0xff]
        %v2020 = vld [vmem:[%s4 + $0x230] sm:$0xff]
        %v2021 = vld [vmem:[%s4 + $0x238] sm:$0xff]
        %v2022 = vld [vmem:[%s4 + $0x240] sm:$0xff]
        %v2023 = vld [vmem:[%s4 + $0x248] sm:$0xff]
        %v2024 = vld [vmem:[%s4 + $0x250] sm:$0xff]
        %v2025 = vld [vmem:[%s4 + $0x258] sm:$0xff]
        %v2026 = vld [vmem:[%s4 + $0x260] sm:$0xff]
        %v2027 = vld [vmem:[%s4 + $0x268] sm:$0xff]
        %v2028 = vld [vmem:[%s4 + $0x270] sm:$0xff]
        %v2029 = vld [vmem:[%s4 + $0x278] sm:$0xff]
        %v2030 = vld [vmem:[%s4 + $0x280] sm:$0xff]
        %v2031 = vld [vmem:[%s4 + $0x288] sm:$0xff]
        %v2032 = vld [vmem:[%s4 + $0x290] sm:$0xff]
        %v2033 = vld [vmem:[%s4 + $0x298] sm:$0xff]
        %v2034 = vld [vmem:[%s4 + $0x2a0] sm:$0xff]
        %v2035 = vld [vmem:[%s4 + $0x2a8] sm:$0xff]
        %v2036 = vld [vmem:[%s4 + $0x2b0] sm:$0xff]
        %v2037 = vld [vmem:[%s4 + $0x2b8] sm:$0xff]
        %v2038 = vld [vmem:[%s4 + $0x2c0] sm:$0xff]
        %v2039 = vld [vmem:[%s4 + $0x2c8] sm:$0xff]
        %v2040 = vld [vmem:[%s4 + $0x2d0] sm:$0xff]
        %v2041 = vld [vmem:[%s4 + $0x2d8] sm:$0xff]
        %v2042 = vld [vmem:[%s4 + $0x2e0] sm:$0xff]
        %v2043 = vld [vmem:[%s4 + $0x2e8] sm:$0xff]
        %v2044 = vld [vmem:[%s4 + $0x2f0] sm:$0xff]
        %v2045 = vld [vmem:[%s4 + $0x2f8] sm:$0xff]
        %v2046 = vld [vmem:[%s4 + $0x300] sm:$0xff]
        %v2047 = vld [vmem:[%s4 + $0x308] sm:$0xff]
        %v2048 = vld [vmem:[%s4 + $0x310] sm:$0xff]
        %v2049 = vld [vmem:[%s4 + $0x318] sm:$0xff]
        %v2050 = vld [vmem:[%s4 + $0x320] sm:$0xff]
        %v2051 = vld [vmem:[%s4 + $0x328] sm:$0xff]
        %v2052 = vld [vmem:[%s4 + $0x330] sm:$0xff]
        %v2053 = vld [vmem:[%s4 + $0x338] sm:$0xff]
        %v2054 = vld [vmem:[%s4 + $0x340] sm:$0xff]
        %v2055 = vld [vmem:[%s4 + $0x348] sm:$0xff]
        %v2056 = vld [vmem:[%s4 + $0x350] sm:$0xff]
        %v2057 = vld [vmem:[%s4 + $0x358] sm:$0xff]
        %v2058 = vld [vmem:[%s4 + $0x360] sm:$0xff]
        %v2059 = vld [vmem:[%s4 + $0x368] sm:$0xff]
        %v2060 = vld [vmem:[%s4 + $0x370] sm:$0xff]
        %v2061 = vld [vmem:[%s4 + $0x378] sm:$0xff]
        %v2062 = vld [vmem:[%s4 + $0x380] sm:$0xff]
        %v2063 = vld [vmem:[%s4 + $0x388] sm:$0xff]
        %v2064 = vld [vmem:[%s4 + $0x390] sm:$0xff]
        %v2065 = vld [vmem:[%s4 + $0x398] sm:$0xff]
        %v2066 = vld [vmem:[%s4 + $0x3a0] sm:$0xff]
        %v2067 = vld [vmem:[%s4 + $0x3a8] sm:$0xff]
        %v2068 = vld [vmem:[%s4 + $0x3b0] sm:$0xff]
        %v2069 = vld [vmem:[%s4 + $0x3b8] sm:$0xff]
        %v2070 = vld [vmem:[%s4 + $0x3c0] sm:$0xff]
        %v2071 = vld [vmem:[%s4 + $0x3c8] sm:$0xff]
        %v2072 = vld [vmem:[%s4 + $0x3d0] sm:$0xff]
        %v2073 = vld [vmem:[%s4 + $0x3d8] sm:$0xff]
        %v2074 = vld [vmem:[%s4 + $0x3e0] sm:$0xff]
        %v2075 = vld [vmem:[%s4 + $0x3e8] sm:$0xff]
        %v2076 = vld [vmem:[%s4 + $0x3f0] sm:$0xff]
        %v2077 = vld [vmem:[%s4 + $0x3f8] sm:$0xff]
        %v2078 = vld [vmem:[#allocation2] sm:$0xff]
        %s2079 = scalar_lea.vmem %s4, 1024
        %v2080 = vld [vmem:[%s2079] sm:$0xff]
        %v2081 = vld [vmem:[%s2079 + $0x8] sm:$0xff]
        %v2082 = vld [vmem:[%s2079 + $0x10] sm:$0xff]
        %v2083 = vld [vmem:[%s2079 + $0x18] sm:$0xff]
        %v2084 = vld [vmem:[%s2079 + $0x20] sm:$0xff]
        %v2085 = vld [vmem:[%s2079 + $0x28] sm:$0xff]
        %v2086 = vld [vmem:[%s2079 + $0x30] sm:$0xff]
        %v2087 = vld [vmem:[%s2079 + $0x38] sm:$0xff]
        %v2088 = vld [vmem:[%s2079 + $0x40] sm:$0xff]
        %v2089 = vld [vmem:[%s2079 + $0x48] sm:$0xff]
        %v2090 = vld [vmem:[%s2079 + $0x50] sm:$0xff]
        %v2091 = vld [vmem:[%s2079 + $0x58] sm:$0xff]
        %v2092 = vld [vmem:[%s2079 + $0x60] sm:$0xff]
        %v2093 = vld [vmem:[%s2079 + $0x68] sm:$0xff]
        %v2094 = vld [vmem:[%s2079 + $0x70] sm:$0xff]
        %v2095 = vld [vmem:[%s2079 + $0x78] sm:$0xff]
        %v2096 = vld [vmem:[%s2079 + $0x80] sm:$0xff]
        %v2097 = vld [vmem:[%s2079 + $0x88] sm:$0xff]
        %v2098 = vld [vmem:[%s2079 + $0x90] sm:$0xff]
        %v2099 = vld [vmem:[%s2079 + $0x98] sm:$0xff]
        %v2100 = vld [vmem:[%s2079 + $0xa0] sm:$0xff]
        %v2101 = vld [vmem:[%s2079 + $0xa8] sm:$0xff]
        %v2102 = vld [vmem:[%s2079 + $0xb0] sm:$0xff]
        %v2103 = vld [vmem:[%s2079 + $0xb8] sm:$0xff]
        %v2104 = vld [vmem:[%s2079 + $0xc0] sm:$0xff]
        %v2105 = vld [vmem:[%s2079 + $0xc8] sm:$0xff]
        %v2106 = vld [vmem:[%s2079 + $0xd0] sm:$0xff]
        %v2107 = vld [vmem:[%s2079 + $0xd8] sm:$0xff]
        %v2108 = vld [vmem:[%s2079 + $0xe0] sm:$0xff]
        %v2109 = vld [vmem:[%s2079 + $0xe8] sm:$0xff]
        %v2110 = vld [vmem:[%s2079 + $0xf0] sm:$0xff]
        %v2111 = vld [vmem:[%s2079 + $0xf8] sm:$0xff]
        %v2112 = vld [vmem:[%s2079 + $0x100] sm:$0xff]
        %v2113 = vld [vmem:[%s2079 + $0x108] sm:$0xff]
        %v2114 = vld [vmem:[%s2079 + $0x110] sm:$0xff]
        %v2115 = vld [vmem:[%s2079 + $0x118] sm:$0xff]
        %v2116 = vld [vmem:[%s2079 + $0x120] sm:$0xff]
        %v2117 = vld [vmem:[%s2079 + $0x128] sm:$0xff]
        %v2118 = vld [vmem:[%s2079 + $0x130] sm:$0xff]
        %v2119 = vld [vmem:[%s2079 + $0x138] sm:$0xff]
        %v2120 = vld [vmem:[%s2079 + $0x140] sm:$0xff]
        %v2121 = vld [vmem:[%s2079 + $0x148] sm:$0xff]
        %v2122 = vld [vmem:[%s2079 + $0x150] sm:$0xff]
        %v2123 = vld [vmem:[%s2079 + $0x158] sm:$0xff]
        %v2124 = vld [vmem:[%s2079 + $0x160] sm:$0xff]
        %v2125 = vld [vmem:[%s2079 + $0x168] sm:$0xff]
        %v2126 = vld [vmem:[%s2079 + $0x170] sm:$0xff]
        %v2127 = vld [vmem:[%s2079 + $0x178] sm:$0xff]
        %v2128 = vld [vmem:[%s2079 + $0x180] sm:$0xff]
        %v2129 = vld [vmem:[%s2079 + $0x188] sm:$0xff]
        %v2130 = vld [vmem:[%s2079 + $0x190] sm:$0xff]
        %v2131 = vld [vmem:[%s2079 + $0x198] sm:$0xff]
        %v2132 = vld [vmem:[%s2079 + $0x1a0] sm:$0xff]
        %v2133 = vld [vmem:[%s2079 + $0x1a8] sm:$0xff]
        %v2134 = vld [vmem:[%s2079 + $0x1b0] sm:$0xff]
        %v2135 = vld [vmem:[%s2079 + $0x1b8] sm:$0xff]
        %v2136 = vld [vmem:[%s2079 + $0x1c0] sm:$0xff]
        %v2137 = vld [vmem:[%s2079 + $0x1c8] sm:$0xff]
        %v2138 = vld [vmem:[%s2079 + $0x1d0] sm:$0xff]
        %v2139 = vld [vmem:[%s2079 + $0x1d8] sm:$0xff]
        %v2140 = vld [vmem:[%s2079 + $0x1e0] sm:$0xff]
        %v2141 = vld [vmem:[%s2079 + $0x1e8] sm:$0xff]
        %v2142 = vld [vmem:[%s2079 + $0x1f0] sm:$0xff]
        %v2143 = vld [vmem:[%s2079 + $0x1f8] sm:$0xff]
        %v2144 = vld [vmem:[%s2079 + $0x200] sm:$0xff]
        %v2145 = vld [vmem:[%s2079 + $0x208] sm:$0xff]
        %v2146 = vld [vmem:[%s2079 + $0x210] sm:$0xff]
        %v2147 = vld [vmem:[%s2079 + $0x218] sm:$0xff]
        %v2148 = vld [vmem:[%s2079 + $0x220] sm:$0xff]
        %v2149 = vld [vmem:[%s2079 + $0x228] sm:$0xff]
        %v2150 = vld [vmem:[%s2079 + $0x230] sm:$0xff]
        %v2151 = vld [vmem:[%s2079 + $0x238] sm:$0xff]
        %v2152 = vld [vmem:[%s2079 + $0x240] sm:$0xff]
        %v2153 = vld [vmem:[%s2079 + $0x248] sm:$0xff]
        %v2154 = vld [vmem:[%s2079 + $0x250] sm:$0xff]
        %v2155 = vld [vmem:[%s2079 + $0x258] sm:$0xff]
        %v2156 = vld [vmem:[%s2079 + $0x260] sm:$0xff]
        %v2157 = vld [vmem:[%s2079 + $0x268] sm:$0xff]
        %v2158 = vld [vmem:[%s2079 + $0x270] sm:$0xff]
        %v2159 = vld [vmem:[%s2079 + $0x278] sm:$0xff]
        %v2160 = vld [vmem:[%s2079 + $0x280] sm:$0xff]
        %v2161 = vld [vmem:[%s2079 + $0x288] sm:$0xff]
        %v2162 = vld [vmem:[%s2079 + $0x290] sm:$0xff]
        %v2163 = vld [vmem:[%s2079 + $0x298] sm:$0xff]
        %v2164 = vld [vmem:[%s2079 + $0x2a0] sm:$0xff]
        %v2165 = vld [vmem:[%s2079 + $0x2a8] sm:$0xff]
        %v2166 = vld [vmem:[%s2079 + $0x2b0] sm:$0xff]
        %v2167 = vld [vmem:[%s2079 + $0x2b8] sm:$0xff]
        %v2168 = vld [vmem:[%s2079 + $0x2c0] sm:$0xff]
        %v2169 = vld [vmem:[%s2079 + $0x2c8] sm:$0xff]
        %v2170 = vld [vmem:[%s2079 + $0x2d0] sm:$0xff]
        %v2171 = vld [vmem:[%s2079 + $0x2d8] sm:$0xff]
        %v2172 = vld [vmem:[%s2079 + $0x2e0] sm:$0xff]
        %v2173 = vld [vmem:[%s2079 + $0x2e8] sm:$0xff]
        %v2174 = vld [vmem:[%s2079 + $0x2f0] sm:$0xff]
        %v2175 = vld [vmem:[%s2079 + $0x2f8] sm:$0xff]
        %v2176 = vld [vmem:[%s2079 + $0x300] sm:$0xff]
        %v2177 = vld [vmem:[%s2079 + $0x308] sm:$0xff]
        %v2178 = vld [vmem:[%s2079 + $0x310] sm:$0xff]
        %v2179 = vld [vmem:[%s2079 + $0x318] sm:$0xff]
        %v2180 = vld [vmem:[%s2079 + $0x320] sm:$0xff]
        %v2181 = vld [vmem:[%s2079 + $0x328] sm:$0xff]
        %v2182 = vld [vmem:[%s2079 + $0x330] sm:$0xff]
        %v2183 = vld [vmem:[%s2079 + $0x338] sm:$0xff]
        %v2184 = vld [vmem:[%s2079 + $0x340] sm:$0xff]
        %v2185 = vld [vmem:[%s2079 + $0x348] sm:$0xff]
        %v2186 = vld [vmem:[%s2079 + $0x350] sm:$0xff]
        %v2187 = vld [vmem:[%s2079 + $0x358] sm:$0xff]
        %v2188 = vld [vmem:[%s2079 + $0x360] sm:$0xff]
        %v2189 = vld [vmem:[%s2079 + $0x368] sm:$0xff]
        %v2190 = vld [vmem:[%s2079 + $0x370] sm:$0xff]
        %v2191 = vld [vmem:[%s2079 + $0x378] sm:$0xff]
        %v2192 = vld [vmem:[%s2079 + $0x380] sm:$0xff]
        %v2193 = vld [vmem:[%s2079 + $0x388] sm:$0xff]
        %v2194 = vld [vmem:[%s2079 + $0x390] sm:$0xff]
        %v2195 = vld [vmem:[%s2079 + $0x398] sm:$0xff]
        %v2196 = vld [vmem:[%s2079 + $0x3a0] sm:$0xff]
        %v2197 = vld [vmem:[%s2079 + $0x3a8] sm:$0xff]
        %v2198 = vld [vmem:[%s2079 + $0x3b0] sm:$0xff]
        %v2199 = vld [vmem:[%s2079 + $0x3b8] sm:$0xff]
        %v2200 = vld [vmem:[%s2079 + $0x3c0] sm:$0xff]
        %v2201 = vld [vmem:[%s2079 + $0x3c8] sm:$0xff]
        %v2202 = vld [vmem:[%s2079 + $0x3d0] sm:$0xff]
        %v2203 = vld [vmem:[%s2079 + $0x3d8] sm:$0xff]
        %v2204 = vld [vmem:[%s2079 + $0x3e0] sm:$0xff]
        %v2205 = vld [vmem:[%s2079 + $0x3e8] sm:$0xff]
        %v2206 = vld [vmem:[%s2079 + $0x3f0] sm:$0xff]
        %v2207 = vld [vmem:[%s2079 + $0x3f8] sm:$0xff]
        %v2209 = vcombine.high %v2078, %v2078
        %v2211 = vunpack.c.l.s4 1983009808
        %v2212 = vunpack.c.0.s8 %v2211
        %v2213 = vlaneseq
        %v2214 = vshrl.u32 %v2213, 7
        %v2215 = vsub.s32 %v2212, %v2214
        %v2216 = vrot.slane %v2078, %v2215
        %v2218 = vunpack.c.l.s4 1983009808
        %v2219 = vunpack.c.0.s8 %v2218
        %v2220 = vlaneseq
        %v2221 = vshrl.u32 %v2220, 7
        %v2222 = vsub.s32 %v2219, %v2221
        %v2223 = vrot.slane %v2209, %v2222
        %v2224 = vcombine.high %v2216, %v2216
        %v2225 = vcombine.high %v2223, %v2223
        %v2227 = vshrl.u32 %v2216, 16
        %v2229 = vshll.u32 %v2216, 16
        %v2231 = vrot.slane %v2229, 1
        %v2232 = vor.u32 %v2227, %v2231
        %v2234 = vshrl.u32 %v2224, 16
        %v2236 = vshll.u32 %v2224, 16
        %v2238 = vrot.slane %v2236, 1
        %v2239 = vor.u32 %v2234, %v2238
        %v2241 = vshrl.u32 %v2223, 16
        %v2243 = vshll.u32 %v2223, 16
        %v2245 = vrot.slane %v2243, 1
        %v2246 = vor.u32 %v2241, %v2245
        %v2248 = vshrl.u32 %v2225, 16
        %v2250 = vshll.u32 %v2225, 16
        %v2252 = vrot.slane %v2250, 1
        %v2253 = vor.u32 %v2248, %v2252
        %v2386 = vunpack.c.l.b16 %v2080
        %v2387 = vunpack.c.h.b16 %v2080
        %v2388 = vunpack.c.l.b16 %v2081
        %v2389 = vunpack.c.h.b16 %v2081
        %v2390 = vunpack.c.l.b16 %v2082
        %v2391 = vunpack.c.h.b16 %v2082
        %v2392 = vunpack.c.l.b16 %v2083
        %v2393 = vunpack.c.h.b16 %v2083
        %v2394 = vunpack.c.l.b16 %v2084
        %v2395 = vunpack.c.h.b16 %v2084
        %v2396 = vunpack.c.l.b16 %v2085
        %v2397 = vunpack.c.h.b16 %v2085
        %v2398 = vunpack.c.l.b16 %v2086
        %v2399 = vunpack.c.h.b16 %v2086
        %v2400 = vunpack.c.l.b16 %v2087
        %v2401 = vunpack.c.h.b16 %v2087
        %v2402 = vunpack.c.l.b16 %v2088
        %v2403 = vunpack.c.h.b16 %v2088
        %v2404 = vunpack.c.l.b16 %v2089
        %v2405 = vunpack.c.h.b16 %v2089
        %v2406 = vunpack.c.l.b16 %v2090
        %v2407 = vunpack.c.h.b16 %v2090
        %v2408 = vunpack.c.l.b16 %v2091
        %v2409 = vunpack.c.h.b16 %v2091
        %v2410 = vunpack.c.l.b16 %v2092
        %v2411 = vunpack.c.h.b16 %v2092
        %v2412 = vunpack.c.l.b16 %v2093
        %v2413 = vunpack.c.h.b16 %v2093
        %v2414 = vunpack.c.l.b16 %v2094
        %v2415 = vunpack.c.h.b16 %v2094
        %v2416 = vunpack.c.l.b16 %v2095
        %v2417 = vunpack.c.h.b16 %v2095
        %v2418 = vunpack.c.l.b16 %v2096
        %v2419 = vunpack.c.h.b16 %v2096
        %v2420 = vunpack.c.l.b16 %v2097
        %v2421 = vunpack.c.h.b16 %v2097
        %v2422 = vunpack.c.l.b16 %v2098
        %v2423 = vunpack.c.h.b16 %v2098
        %v2424 = vunpack.c.l.b16 %v2099
        %v2425 = vunpack.c.h.b16 %v2099
        %v2426 = vunpack.c.l.b16 %v2100
        %v2427 = vunpack.c.h.b16 %v2100
        %v2428 = vunpack.c.l.b16 %v2101
        %v2429 = vunpack.c.h.b16 %v2101
        %v2430 = vunpack.c.l.b16 %v2102
        %v2431 = vunpack.c.h.b16 %v2102
        %v2432 = vunpack.c.l.b16 %v2103
        %v2433 = vunpack.c.h.b16 %v2103
        %v2434 = vunpack.c.l.b16 %v2104
        %v2435 = vunpack.c.h.b16 %v2104
        %v2436 = vunpack.c.l.b16 %v2105
        %v2437 = vunpack.c.h.b16 %v2105
        %v2438 = vunpack.c.l.b16 %v2106
        %v2439 = vunpack.c.h.b16 %v2106
        %v2440 = vunpack.c.l.b16 %v2107
        %v2441 = vunpack.c.h.b16 %v2107
        %v2442 = vunpack.c.l.b16 %v2108
        %v2443 = vunpack.c.h.b16 %v2108
        %v2444 = vunpack.c.l.b16 %v2109
        %v2445 = vunpack.c.h.b16 %v2109
        %v2446 = vunpack.c.l.b16 %v2110
        %v2447 = vunpack.c.h.b16 %v2110
        %v2448 = vunpack.c.l.b16 %v2111
        %v2449 = vunpack.c.h.b16 %v2111
        %v2450 = vunpack.c.l.b16 %v2112
        %v2451 = vunpack.c.h.b16 %v2112
        %v2452 = vunpack.c.l.b16 %v2113
        %v2453 = vunpack.c.h.b16 %v2113
        %v2454 = vunpack.c.l.b16 %v2114
        %v2455 = vunpack.c.h.b16 %v2114
        %v2456 = vunpack.c.l.b16 %v2115
        %v2457 = vunpack.c.h.b16 %v2115
        %v2458 = vunpack.c.l.b16 %v2116
        %v2459 = vunpack.c.h.b16 %v2116
        %v2460 = vunpack.c.l.b16 %v2117
        %v2461 = vunpack.c.h.b16 %v2117
        %v2462 = vunpack.c.l.b16 %v2118
        %v2463 = vunpack.c.h.b16 %v2118
        %v2464 = vunpack.c.l.b16 %v2119
        %v2465 = vunpack.c.h.b16 %v2119
        %v2466 = vunpack.c.l.b16 %v2120
        %v2467 = vunpack.c.h.b16 %v2120
        %v2468 = vunpack.c.l.b16 %v2121
        %v2469 = vunpack.c.h.b16 %v2121
        %v2470 = vunpack.c.l.b16 %v2122
        %v2471 = vunpack.c.h.b16 %v2122
        %v2472 = vunpack.c.l.b16 %v2123
        %v2473 = vunpack.c.h.b16 %v2123
        %v2474 = vunpack.c.l.b16 %v2124
        %v2475 = vunpack.c.h.b16 %v2124
        %v2476 = vunpack.c.l.b16 %v2125
        %v2477 = vunpack.c.h.b16 %v2125
        %v2478 = vunpack.c.l.b16 %v2126
        %v2479 = vunpack.c.h.b16 %v2126
        %v2480 = vunpack.c.l.b16 %v2127
        %v2481 = vunpack.c.h.b16 %v2127
        %v2482 = vunpack.c.l.b16 %v2128
        %v2483 = vunpack.c.h.b16 %v2128
        %v2484 = vunpack.c.l.b16 %v2129
        %v2485 = vunpack.c.h.b16 %v2129
        %v2486 = vunpack.c.l.b16 %v2130
        %v2487 = vunpack.c.h.b16 %v2130
        %v2488 = vunpack.c.l.b16 %v2131
        %v2489 = vunpack.c.h.b16 %v2131
        %v2490 = vunpack.c.l.b16 %v2132
        %v2491 = vunpack.c.h.b16 %v2132
        %v2492 = vunpack.c.l.b16 %v2133
        %v2493 = vunpack.c.h.b16 %v2133
        %v2494 = vunpack.c.l.b16 %v2134
        %v2495 = vunpack.c.h.b16 %v2134
        %v2496 = vunpack.c.l.b16 %v2135
        %v2497 = vunpack.c.h.b16 %v2135
        %v2498 = vunpack.c.l.b16 %v2136
        %v2499 = vunpack.c.h.b16 %v2136
        %v2500 = vunpack.c.l.b16 %v2137
        %v2501 = vunpack.c.h.b16 %v2137
        %v2502 = vunpack.c.l.b16 %v2138
        %v2503 = vunpack.c.h.b16 %v2138
        %v2504 = vunpack.c.l.b16 %v2139
        %v2505 = vunpack.c.h.b16 %v2139
        %v2506 = vunpack.c.l.b16 %v2140
        %v2507 = vunpack.c.h.b16 %v2140
        %v2508 = vunpack.c.l.b16 %v2141
        %v2509 = vunpack.c.h.b16 %v2141
        %v2510 = vunpack.c.l.b16 %v2142
        %v2511 = vunpack.c.h.b16 %v2142
        %v2512 = vunpack.c.l.b16 %v2143
        %v2513 = vunpack.c.h.b16 %v2143
        %v2514 = vunpack.c.l.b16 %v2144
        %v2515 = vunpack.c.h.b16 %v2144
        %v2516 = vunpack.c.l.b16 %v2145
        %v2517 = vunpack.c.h.b16 %v2145
        %v2518 = vunpack.c.l.b16 %v2146
        %v2519 = vunpack.c.h.b16 %v2146
        %v2520 = vunpack.c.l.b16 %v2147
        %v2521 = vunpack.c.h.b16 %v2147
        %v2522 = vunpack.c.l.b16 %v2148
        %v2523 = vunpack.c.h.b16 %v2148
        %v2524 = vunpack.c.l.b16 %v2149
        %v2525 = vunpack.c.h.b16 %v2149
        %v2526 = vunpack.c.l.b16 %v2150
        %v2527 = vunpack.c.h.b16 %v2150
        %v2528 = vunpack.c.l.b16 %v2151
        %v2529 = vunpack.c.h.b16 %v2151
        %v2530 = vunpack.c.l.b16 %v2152
        %v2531 = vunpack.c.h.b16 %v2152
        %v2532 = vunpack.c.l.b16 %v2153
        %v2533 = vunpack.c.h.b16 %v2153
        %v2534 = vunpack.c.l.b16 %v2154
        %v2535 = vunpack.c.h.b16 %v2154
        %v2536 = vunpack.c.l.b16 %v2155
        %v2537 = vunpack.c.h.b16 %v2155
        %v2538 = vunpack.c.l.b16 %v2156
        %v2539 = vunpack.c.h.b16 %v2156
        %v2540 = vunpack.c.l.b16 %v2157
        %v2541 = vunpack.c.h.b16 %v2157
        %v2542 = vunpack.c.l.b16 %v2158
        %v2543 = vunpack.c.h.b16 %v2158
        %v2544 = vunpack.c.l.b16 %v2159
        %v2545 = vunpack.c.h.b16 %v2159
        %v2546 = vunpack.c.l.b16 %v2160
        %v2547 = vunpack.c.h.b16 %v2160
        %v2548 = vunpack.c.l.b16 %v2161
        %v2549 = vunpack.c.h.b16 %v2161
        %v2550 = vunpack.c.l.b16 %v2162
        %v2551 = vunpack.c.h.b16 %v2162
        %v2552 = vunpack.c.l.b16 %v2163
        %v2553 = vunpack.c.h.b16 %v2163
        %v2554 = vunpack.c.l.b16 %v2164
        %v2555 = vunpack.c.h.b16 %v2164
        %v2556 = vunpack.c.l.b16 %v2165
        %v2557 = vunpack.c.h.b16 %v2165
        %v2558 = vunpack.c.l.b16 %v2166
        %v2559 = vunpack.c.h.b16 %v2166
        %v2560 = vunpack.c.l.b16 %v2167
        %v2561 = vunpack.c.h.b16 %v2167
        %v2562 = vunpack.c.l.b16 %v2168
        %v2563 = vunpack.c.h.b16 %v2168
        %v2564 = vunpack.c.l.b16 %v2169
        %v2565 = vunpack.c.h.b16 %v2169
        %v2566 = vunpack.c.l.b16 %v2170
        %v2567 = vunpack.c.h.b16 %v2170
        %v2568 = vunpack.c.l.b16 %v2171
        %v2569 = vunpack.c.h.b16 %v2171
        %v2570 = vunpack.c.l.b16 %v2172
        %v2571 = vunpack.c.h.b16 %v2172
        %v2572 = vunpack.c.l.b16 %v2173
        %v2573 = vunpack.c.h.b16 %v2173
        %v2574 = vunpack.c.l.b16 %v2174
        %v2575 = vunpack.c.h.b16 %v2174
        %v2576 = vunpack.c.l.b16 %v2175
        %v2577 = vunpack.c.h.b16 %v2175
        %v2578 = vunpack.c.l.b16 %v2176
        %v2579 = vunpack.c.h.b16 %v2176
        %v2580 = vunpack.c.l.b16 %v2177
        %v2581 = vunpack.c.h.b16 %v2177
        %v2582 = vunpack.c.l.b16 %v2178
        %v2583 = vunpack.c.h.b16 %v2178
        %v2584 = vunpack.c.l.b16 %v2179
        %v2585 = vunpack.c.h.b16 %v2179
        %v2586 = vunpack.c.l.b16 %v2180
        %v2587 = vunpack.c.h.b16 %v2180
        %v2588 = vunpack.c.l.b16 %v2181
        %v2589 = vunpack.c.h.b16 %v2181
        %v2590 = vunpack.c.l.b16 %v2182
        %v2591 = vunpack.c.h.b16 %v2182
        %v2592 = vunpack.c.l.b16 %v2183
        %v2593 = vunpack.c.h.b16 %v2183
        %v2594 = vunpack.c.l.b16 %v2184
        %v2595 = vunpack.c.h.b16 %v2184
        %v2596 = vunpack.c.l.b16 %v2185
        %v2597 = vunpack.c.h.b16 %v2185
        %v2598 = vunpack.c.l.b16 %v2186
        %v2599 = vunpack.c.h.b16 %v2186
        %v2600 = vunpack.c.l.b16 %v2187
        %v2601 = vunpack.c.h.b16 %v2187
        %v2602 = vunpack.c.l.b16 %v2188
        %v2603 = vunpack.c.h.b16 %v2188
        %v2604 = vunpack.c.l.b16 %v2189
        %v2605 = vunpack.c.h.b16 %v2189
        %v2606 = vunpack.c.l.b16 %v2190
        %v2607 = vunpack.c.h.b16 %v2190
        %v2608 = vunpack.c.l.b16 %v2191
        %v2609 = vunpack.c.h.b16 %v2191
        %v2610 = vunpack.c.l.b16 %v2192
        %v2611 = vunpack.c.h.b16 %v2192
        %v2612 = vunpack.c.l.b16 %v2193
        %v2613 = vunpack.c.h.b16 %v2193
        %v2614 = vunpack.c.l.b16 %v2194
        %v2615 = vunpack.c.h.b16 %v2194
        %v2616 = vunpack.c.l.b16 %v2195
        %v2617 = vunpack.c.h.b16 %v2195
        %v2618 = vunpack.c.l.b16 %v2196
        %v2619 = vunpack.c.h.b16 %v2196
        %v2620 = vunpack.c.l.b16 %v2197
        %v2621 = vunpack.c.h.b16 %v2197
        %v2622 = vunpack.c.l.b16 %v2198
        %v2623 = vunpack.c.h.b16 %v2198
        %v2624 = vunpack.c.l.b16 %v2199
        %v2625 = vunpack.c.h.b16 %v2199
        %v2626 = vunpack.c.l.b16 %v2200
        %v2627 = vunpack.c.h.b16 %v2200
        %v2628 = vunpack.c.l.b16 %v2201
        %v2629 = vunpack.c.h.b16 %v2201
        %v2630 = vunpack.c.l.b16 %v2202
        %v2631 = vunpack.c.h.b16 %v2202
        %v2632 = vunpack.c.l.b16 %v2203
        %v2633 = vunpack.c.h.b16 %v2203
        %v2634 = vunpack.c.l.b16 %v2204
        %v2635 = vunpack.c.h.b16 %v2204
        %v2636 = vunpack.c.l.b16 %v2205
        %v2637 = vunpack.c.h.b16 %v2205
        %v2638 = vunpack.c.l.b16 %v2206
        %v2639 = vunpack.c.h.b16 %v2206
        %v2640 = vunpack.c.l.b16 %v2207
        %v2641 = vunpack.c.h.b16 %v2207
        %v2642 = vpack.c.b16 %v2390, %v2386
        %v2643 = vpack.c.b16 %v2391, %v2387
        %v2644 = vpack.c.b16 %v2392, %v2388
        %v2645 = vpack.c.b16 %v2393, %v2389
        %v2646 = vpack.c.b16 %v2398, %v2394
        %v2647 = vpack.c.b16 %v2399, %v2395
        %v2648 = vpack.c.b16 %v2400, %v2396
        %v2649 = vpack.c.b16 %v2401, %v2397
        %v2650 = vpack.c.b16 %v2406, %v2402
        %v2651 = vpack.c.b16 %v2407, %v2403
        %v2652 = vpack.c.b16 %v2408, %v2404
        %v2653 = vpack.c.b16 %v2409, %v2405
        %v2654 = vpack.c.b16 %v2414, %v2410
        %v2655 = vpack.c.b16 %v2415, %v2411
        %v2656 = vpack.c.b16 %v2416, %v2412
        %v2657 = vpack.c.b16 %v2417, %v2413
        %v2658 = vpack.c.b16 %v2422, %v2418
        %v2659 = vpack.c.b16 %v2423, %v2419
        %v2660 = vpack.c.b16 %v2424, %v2420
        %v2661 = vpack.c.b16 %v2425, %v2421
        %v2662 = vpack.c.b16 %v2430, %v2426
        %v2663 = vpack.c.b16 %v2431, %v2427
        %v2664 = vpack.c.b16 %v2432, %v2428
        %v2665 = vpack.c.b16 %v2433, %v2429
        %v2666 = vpack.c.b16 %v2438, %v2434
        %v2667 = vpack.c.b16 %v2439, %v2435
        %v2668 = vpack.c.b16 %v2440, %v2436
        %v2669 = vpack.c.b16 %v2441, %v2437
        %v2670 = vpack.c.b16 %v2446, %v2442
        %v2671 = vpack.c.b16 %v2447, %v2443
        %v2672 = vpack.c.b16 %v2448, %v2444
        %v2673 = vpack.c.b16 %v2449, %v2445
        %v2674 = vpack.c.b16 %v2454, %v2450
        %v2675 = vpack.c.b16 %v2455, %v2451
        %v2676 = vpack.c.b16 %v2456, %v2452
        %v2677 = vpack.c.b16 %v2457, %v2453
        %v2678 = vpack.c.b16 %v2462, %v2458
        %v2679 = vpack.c.b16 %v2463, %v2459
        %v2680 = vpack.c.b16 %v2464, %v2460
        %v2681 = vpack.c.b16 %v2465, %v2461
        %v2682 = vpack.c.b16 %v2470, %v2466
        %v2683 = vpack.c.b16 %v2471, %v2467
        %v2684 = vpack.c.b16 %v2472, %v2468
        %v2685 = vpack.c.b16 %v2473, %v2469
        %v2686 = vpack.c.b16 %v2478, %v2474
        %v2687 = vpack.c.b16 %v2479, %v2475
        %v2688 = vpack.c.b16 %v2480, %v2476
        %v2689 = vpack.c.b16 %v2481, %v2477
        %v2690 = vpack.c.b16 %v2486, %v2482
        %v2691 = vpack.c.b16 %v2487, %v2483
        %v2692 = vpack.c.b16 %v2488, %v2484
        %v2693 = vpack.c.b16 %v2489, %v2485
        %v2694 = vpack.c.b16 %v2494, %v2490
        %v2695 = vpack.c.b16 %v2495, %v2491
        %v2696 = vpack.c.b16 %v2496, %v2492
        %v2697 = vpack.c.b16 %v2497, %v2493
        %v2698 = vpack.c.b16 %v2502, %v2498
        %v2699 = vpack.c.b16 %v2503, %v2499
        %v2700 = vpack.c.b16 %v2504, %v2500
        %v2701 = vpack.c.b16 %v2505, %v2501
        %v2702 = vpack.c.b16 %v2510, %v2506
        %v2703 = vpack.c.b16 %v2511, %v2507
        %v2704 = vpack.c.b16 %v2512, %v2508
        %v2705 = vpack.c.b16 %v2513, %v2509
        %v2706 = vpack.c.b16 %v2518, %v2514
        %v2707 = vpack.c.b16 %v2519, %v2515
        %v2708 = vpack.c.b16 %v2520, %v2516
        %v2709 = vpack.c.b16 %v2521, %v2517
        %v2710 = vpack.c.b16 %v2526, %v2522
        %v2711 = vpack.c.b16 %v2527, %v2523
        %v2712 = vpack.c.b16 %v2528, %v2524
        %v2713 = vpack.c.b16 %v2529, %v2525
        %v2714 = vpack.c.b16 %v2534, %v2530
        %v2715 = vpack.c.b16 %v2535, %v2531
        %v2716 = vpack.c.b16 %v2536, %v2532
        %v2717 = vpack.c.b16 %v2537, %v2533
        %v2718 = vpack.c.b16 %v2542, %v2538
        %v2719 = vpack.c.b16 %v2543, %v2539
        %v2720 = vpack.c.b16 %v2544, %v2540
        %v2721 = vpack.c.b16 %v2545, %v2541
        %v2722 = vpack.c.b16 %v2550, %v2546
        %v2723 = vpack.c.b16 %v2551, %v2547
        %v2724 = vpack.c.b16 %v2552, %v2548
        %v2725 = vpack.c.b16 %v2553, %v2549
        %v2726 = vpack.c.b16 %v2558, %v2554
        %v2727 = vpack.c.b16 %v2559, %v2555
        %v2728 = vpack.c.b16 %v2560, %v2556
        %v2729 = vpack.c.b16 %v2561, %v2557
        %v2730 = vpack.c.b16 %v2566, %v2562
        %v2731 = vpack.c.b16 %v2567, %v2563
        %v2732 = vpack.c.b16 %v2568, %v2564
        %v2733 = vpack.c.b16 %v2569, %v2565
        %v2734 = vpack.c.b16 %v2574, %v2570
        %v2735 = vpack.c.b16 %v2575, %v2571
        %v2736 = vpack.c.b16 %v2576, %v2572
        %v2737 = vpack.c.b16 %v2577, %v2573
        %v2738 = vpack.c.b16 %v2582, %v2578
        %v2739 = vpack.c.b16 %v2583, %v2579
        %v2740 = vpack.c.b16 %v2584, %v2580
        %v2741 = vpack.c.b16 %v2585, %v2581
        %v2742 = vpack.c.b16 %v2590, %v2586
        %v2743 = vpack.c.b16 %v2591, %v2587
        %v2744 = vpack.c.b16 %v2592, %v2588
        %v2745 = vpack.c.b16 %v2593, %v2589
        %v2746 = vpack.c.b16 %v2598, %v2594
        %v2747 = vpack.c.b16 %v2599, %v2595
        %v2748 = vpack.c.b16 %v2600, %v2596
        %v2749 = vpack.c.b16 %v2601, %v2597
        %v2750 = vpack.c.b16 %v2606, %v2602
        %v2751 = vpack.c.b16 %v2607, %v2603
        %v2752 = vpack.c.b16 %v2608, %v2604
        %v2753 = vpack.c.b16 %v2609, %v2605
        %v2754 = vpack.c.b16 %v2614, %v2610
        %v2755 = vpack.c.b16 %v2615, %v2611
        %v2756 = vpack.c.b16 %v2616, %v2612
        %v2757 = vpack.c.b16 %v2617, %v2613
        %v2758 = vpack.c.b16 %v2622, %v2618
        %v2759 = vpack.c.b16 %v2623, %v2619
        %v2760 = vpack.c.b16 %v2624, %v2620
        %v2761 = vpack.c.b16 %v2625, %v2621
        %v2762 = vpack.c.b16 %v2630, %v2626
        %v2763 = vpack.c.b16 %v2631, %v2627
        %v2764 = vpack.c.b16 %v2632, %v2628
        %v2765 = vpack.c.b16 %v2633, %v2629
        %v2766 = vpack.c.b16 %v2638, %v2634
        %v2767 = vpack.c.b16 %v2639, %v2635
        %v2768 = vpack.c.b16 %v2640, %v2636
        %v2769 = vpack.c.b16 %v2641, %v2637
        %2898 = vmatprep.subr.bf16.mxu0 %v2643
        %2899 = vmatpush1.bf16.msra.mxu0 %v2642
        %2900 = vmatprep.subr.bf16.mxu0 %v2647
        %2901 = vmatpush1.bf16.msra.mxu0 %v2646
        %2902 = vmatprep.subr.bf16.mxu0 %v2651
        %2903 = vmatpush1.bf16.msra.mxu0 %v2650
        %2904 = vmatprep.subr.bf16.mxu0 %v2655
        %2905 = vmatpush1.bf16.msra.mxu0 %v2654
        %2906 = vmatprep.subr.bf16.mxu0 %v2659
        %2907 = vmatpush1.bf16.msra.mxu0 %v2658
        %2908 = vmatprep.subr.bf16.mxu0 %v2663
        %2909 = vmatpush1.bf16.msra.mxu0 %v2662
        %2910 = vmatprep.subr.bf16.mxu0 %v2667
        %2911 = vmatpush1.bf16.msra.mxu0 %v2666
        %2912 = vmatprep.subr.bf16.mxu0 %v2671
        %2913 = vmatpush1.bf16.msra.mxu0 %v2670
        %2914 = vmatprep.subr.bf16.mxu0 %v2675
        %2915 = vmatpush1.bf16.msra.mxu0 %v2674
        %2916 = vmatprep.subr.bf16.mxu0 %v2679
        %2917 = vmatpush1.bf16.msra.mxu0 %v2678
        %2918 = vmatprep.subr.bf16.mxu0 %v2683
        %2919 = vmatpush1.bf16.msra.mxu0 %v2682
        %2920 = vmatprep.subr.bf16.mxu0 %v2687
        %2921 = vmatpush1.bf16.msra.mxu0 %v2686
        %2922 = vmatprep.subr.bf16.mxu0 %v2691
        %2923 = vmatpush1.bf16.msra.mxu0 %v2690
        %2924 = vmatprep.subr.bf16.mxu0 %v2695
        %2925 = vmatpush1.bf16.msra.mxu0 %v2694
        %2926 = vmatprep.subr.bf16.mxu0 %v2699
        %2927 = vmatpush1.bf16.msra.mxu0 %v2698
        %2928 = vmatprep.subr.bf16.mxu0 %v2703
        %2929 = vmatpush1.bf16.msra.mxu0 %v2702
        %2930 = vmatprep.mubr.bf16.mxu0 %v2239
        %2931 = vmatmul.mubr.bf16.gmra.mrb[0].mxu0 %v2232
        %v2932 = vpop.f32.mrb[0].mxu0
        %v2933 = vadd.f32 0.0, %v2932
        %v2934 = vpop.f32.mrb[0].mxu0
        %v2935 = vadd.f32 0.0, %v2934
        %v2936 = vpop.f32.mrb[0].mxu0
        %v2937 = vpop.f32.mrb[0].mxu0
        %2938 = vdwg.mxu0
        %2939 = vmatprep.subr.bf16.mxu0 %v2707
        %2940 = vmatpush1.bf16.msra.mxu0 %v2706
        %2941 = vmatprep.subr.bf16.mxu0 %v2711
        %2942 = vmatpush1.bf16.msra.mxu0 %v2710
        %2943 = vmatprep.subr.bf16.mxu0 %v2715
        %2944 = vmatpush1.bf16.msra.mxu0 %v2714
        %2945 = vmatprep.subr.bf16.mxu0 %v2719
        %2946 = vmatpush1.bf16.msra.mxu0 %v2718
        %2947 = vmatprep.subr.bf16.mxu0 %v2723
        %2948 = vmatpush1.bf16.msra.mxu0 %v2722
        %2949 = vmatprep.subr.bf16.mxu0 %v2727
        %2950 = vmatpush1.bf16.msra.mxu0 %v2726
        %2951 = vmatprep.subr.bf16.mxu0 %v2731
        %2952 = vmatpush1.bf16.msra.mxu0 %v2730
        %2953 = vmatprep.subr.bf16.mxu0 %v2735
        %2954 = vmatpush1.bf16.msra.mxu0 %v2734
        %2955 = vmatprep.subr.bf16.mxu0 %v2739
        %2956 = vmatpush1.bf16.msra.mxu0 %v2738
        %2957 = vmatprep.subr.bf16.mxu0 %v2743
        %2958 = vmatpush1.bf16.msra.mxu0 %v2742
        %2959 = vmatprep.subr.bf16.mxu0 %v2747
        %2960 = vmatpush1.bf16.msra.mxu0 %v2746
        %2961 = vmatprep.subr.bf16.mxu0 %v2751
        %2962 = vmatpush1.bf16.msra.mxu0 %v2750
        %2963 = vmatprep.subr.bf16.mxu0 %v2755
        %2964 = vmatpush1.bf16.msra.mxu0 %v2754
        %2965 = vmatprep.subr.bf16.mxu0 %v2759
        %2966 = vmatpush1.bf16.msra.mxu0 %v2758
        %2967 = vmatprep.subr.bf16.mxu0 %v2763
        %2968 = vmatpush1.bf16.msra.mxu0 %v2762
        %2969 = vmatprep.subr.bf16.mxu0 %v2767
        %2970 = vmatpush1.bf16.msra.mxu0 %v2766
        %2971 = vmatprep.mubr.bf16.mxu0 %v2253
        %2972 = vmatmul.mubr.bf16.gmra.mrb[0].mxu0 %v2246
        %v2973 = vpop.f32.mrb[0].mxu0
        %v2974 = vadd.f32 %v2933, %v2973
        %v2975 = vpop.f32.mrb[0].mxu0
        %v2976 = vadd.f32 %v2935, %v2975
        %v2977 = vpop.f32.mrb[0].mxu0
        %v2978 = vpop.f32.mrb[0].mxu0
        %2979 = vdwg.mxu0
        %2980 = vmatprep.subr.bf16.mxu0 %v2645
        %2981 = vmatpush1.bf16.msra.mxu0 %v2644
        %2982 = vmatprep.subr.bf16.mxu0 %v2649
        %2983 = vmatpush1.bf16.msra.mxu0 %v2648
        %2984 = vmatprep.subr.bf16.mxu0 %v2653
        %2985 = vmatpush1.bf16.msra.mxu0 %v2652
        %2986 = vmatprep.subr.bf16.mxu0 %v2657
        %2987 = vmatpush1.bf16.msra.mxu0 %v2656
        %2988 = vmatprep.subr.bf16.mxu0 %v2661
        %2989 = vmatpush1.bf16.msra.mxu0 %v2660
        %2990 = vmatprep.subr.bf16.mxu0 %v2665
        %2991 = vmatpush1.bf16.msra.mxu0 %v2664
        %2992 = vmatprep.subr.bf16.mxu0 %v2669
        %2993 = vmatpush1.bf16.msra.mxu0 %v2668
        %2994 = vmatprep.subr.bf16.mxu0 %v2673
        %2995 = vmatpush1.bf16.msra.mxu0 %v2672
        %2996 = vmatprep.subr.bf16.mxu0 %v2677
        %2997 = vmatpush1.bf16.msra.mxu0 %v2676
        %2998 = vmatprep.subr.bf16.mxu0 %v2681
        %2999 = vmatpush1.bf16.msra.mxu0 %v2680
        %3000 = vmatprep.subr.bf16.mxu0 %v2685
        %3001 = vmatpush1.bf16.msra.mxu0 %v2684
        %3002 = vmatprep.subr.bf16.mxu0 %v2689
        %3003 = vmatpush1.bf16.msra.mxu0 %v2688
        %3004 = vmatprep.subr.bf16.mxu0 %v2693
        %3005 = vmatpush1.bf16.msra.mxu0 %v2692
        %3006 = vmatprep.subr.bf16.mxu0 %v2697
        %3007 = vmatpush1.bf16.msra.mxu0 %v2696
        %3008 = vmatprep.subr.bf16.mxu0 %v2701
        %3009 = vmatpush1.bf16.msra.mxu0 %v2700
        %3010 = vmatprep.subr.bf16.mxu0 %v2705
        %3011 = vmatpush1.bf16.msra.mxu0 %v2704
        %3012 = vmatprep.mubr.bf16.mxu0 %v2239
        %3013 = vmatmul.mubr.bf16.gmra.mrb[0].mxu0 %v2232
        %v3014 = vpop.f32.mrb[0].mxu0
        %v3015 = vadd.f32 0.0, %v3014
        %v3016 = vpop.f32.mrb[0].mxu0
        %v3017 = vadd.f32 0.0, %v3016
        %v3018 = vpop.f32.mrb[0].mxu0
        %v3019 = vpop.f32.mrb[0].mxu0
        %3020 = vdwg.mxu0
        %3021 = vmatprep.subr.bf16.mxu0 %v2709
        %3022 = vmatpush1.bf16.msra.mxu0 %v2708
        %3023 = vmatprep.subr.bf16.mxu0 %v2713
        %3024 = vmatpush1.bf16.msra.mxu0 %v2712
        %3025 = vmatprep.subr.bf16.mxu0 %v2717
        %3026 = vmatpush1.bf16.msra.mxu0 %v2716
        %3027 = vmatprep.subr.bf16.mxu0 %v2721
        %3028 = vmatpush1.bf16.msra.mxu0 %v2720
        %3029 = vmatprep.subr.bf16.mxu0 %v2725
        %3030 = vmatpush1.bf16.msra.mxu0 %v2724
        %3031 = vmatprep.subr.bf16.mxu0 %v2729
        %3032 = vmatpush1.bf16.msra.mxu0 %v2728
        %3033 = vmatprep.subr.bf16.mxu0 %v2733
        %3034 = vmatpush1.bf16.msra.mxu0 %v2732
        %3035 = vmatprep.subr.bf16.mxu0 %v2737
        %3036 = vmatpush1.bf16.msra.mxu0 %v2736
        %3037 = vmatprep.subr.bf16.mxu0 %v2741
        %3038 = vmatpush1.bf16.msra.mxu0 %v2740
        %3039 = vmatprep.subr.bf16.mxu0 %v2745
        %3040 = vmatpush1.bf16.msra.mxu0 %v2744
        %3041 = vmatprep.subr.bf16.mxu0 %v2749
        %3042 = vmatpush1.bf16.msra.mxu0 %v2748
        %3043 = vmatprep.subr.bf16.mxu0 %v2753
        %3044 = vmatpush1.bf16.msra.mxu0 %v2752
        %3045 = vmatprep.subr.bf16.mxu0 %v2757
        %3046 = vmatpush1.bf16.msra.mxu0 %v2756
        %3047 = vmatprep.subr.bf16.mxu0 %v2761
        %3048 = vmatpush1.bf16.msra.mxu0 %v2760
        %3049 = vmatprep.subr.bf16.mxu0 %v2765
        %3050 = vmatpush1.bf16.msra.mxu0 %v2764
        %3051 = vmatprep.subr.bf16.mxu0 %v2769
        %3052 = vmatpush1.bf16.msra.mxu0 %v2768
        %3053 = vmatprep.mubr.bf16.mxu0 %v2253
        %3054 = vmatmul.mubr.bf16.gmra.mrb[0].mxu0 %v2246
        %v3055 = vpop.f32.mrb[0].mxu0
        %v3056 = vadd.f32 %v3015, %v3055
        %v3057 = vpop.f32.mrb[0].mxu0
        %v3058 = vadd.f32 %v3017, %v3057
        %v3059 = vpop.f32.mrb[0].mxu0
        %v3060 = vpop.f32.mrb[0].mxu0
        %3061 = vdwg.mxu0
        %v3063 = vcombine.high %v1949, %v1949
        %v3065 = vunpack.c.l.s4 1983009808
        %v3066 = vunpack.c.0.s8 %v3065
        %v3067 = vlaneseq
        %v3068 = vshrl.u32 %v3067, 7
        %v3069 = vsub.s32 %v3066, %v3068
        %v3070 = vrot.slane %v1949, %v3069
        %v3072 = vunpack.c.l.s4 1983009808
        %v3073 = vunpack.c.0.s8 %v3072
        %v3074 = vlaneseq
        %v3075 = vshrl.u32 %v3074, 7
        %v3076 = vsub.s32 %v3073, %v3075
        %v3077 = vrot.slane %v3063, %v3076
        %v3078 = vcombine.high %v3070, %v3070
        %v3079 = vcombine.high %v3077, %v3077
        %v3212 = vunpack.c.l.b16 %v1950
        %v3213 = vunpack.c.h.b16 %v1950
        %v3214 = vunpack.c.l.b16 %v1951
        %v3215 = vunpack.c.h.b16 %v1951
        %v3216 = vunpack.c.l.b16 %v1952
        %v3217 = vunpack.c.h.b16 %v1952
        %v3218 = vunpack.c.l.b16 %v1953
        %v3219 = vunpack.c.h.b16 %v1953
        %v3220 = vunpack.c.l.b16 %v1954
        %v3221 = vunpack.c.h.b16 %v1954
        %v3222 = vunpack.c.l.b16 %v1955
        %v3223 = vunpack.c.h.b16 %v1955
        %v3224 = vunpack.c.l.b16 %v1956
        %v3225 = vunpack.c.h.b16 %v1956
        %v3226 = vunpack.c.l.b16 %v1957
        %v3227 = vunpack.c.h.b16 %v1957
        %v3228 = vunpack.c.l.b16 %v1958
        %v3229 = vunpack.c.h.b16 %v1958
        %v3230 = vunpack.c.l.b16 %v1959
        %v3231 = vunpack.c.h.b16 %v1959
        %v3232 = vunpack.c.l.b16 %v1960
        %v3233 = vunpack.c.h.b16 %v1960
        %v3234 = vunpack.c.l.b16 %v1961
        %v3235 = vunpack.c.h.b16 %v1961
        %v3236 = vunpack.c.l.b16 %v1962
        %v3237 = vunpack.c.h.b16 %v1962
        %v3238 = vunpack.c.l.b16 %v1963
        %v3239 = vunpack.c.h.b16 %v1963
        %v3240 = vunpack.c.l.b16 %v1964
        %v3241 = vunpack.c.h.b16 %v1964
        %v3242 = vunpack.c.l.b16 %v1965
        %v3243 = vunpack.c.h.b16 %v1965
        %v3244 = vunpack.c.l.b16 %v1966
        %v3245 = vunpack.c.h.b16 %v1966
        %v3246 = vunpack.c.l.b16 %v1967
        %v3247 = vunpack.c.h.b16 %v1967
        %v3248 = vunpack.c.l.b16 %v1968
        %v3249 = vunpack.c.h.b16 %v1968
        %v3250 = vunpack.c.l.b16 %v1969
        %v3251 = vunpack.c.h.b16 %v1969
        %v3252 = vunpack.c.l.b16 %v1970
        %v3253 = vunpack.c.h.b16 %v1970
        %v3254 = vunpack.c.l.b16 %v1971
        %v3255 = vunpack.c.h.b16 %v1971
        %v3256 = vunpack.c.l.b16 %v1972
        %v3257 = vunpack.c.h.b16 %v1972
        %v3258 = vunpack.c.l.b16 %v1973
        %v3259 = vunpack.c.h.b16 %v1973
        %v3260 = vunpack.c.l.b16 %v1974
        %v3261 = vunpack.c.h.b16 %v1974
        %v3262 = vunpack.c.l.b16 %v1975
        %v3263 = vunpack.c.h.b16 %v1975
        %v3264 = vunpack.c.l.b16 %v1976
        %v3265 = vunpack.c.h.b16 %v1976
        %v3266 = vunpack.c.l.b16 %v1977
        %v3267 = vunpack.c.h.b16 %v1977
        %v3268 = vunpack.c.l.b16 %v1978
        %v3269 = vunpack.c.h.b16 %v1978
        %v3270 = vunpack.c.l.b16 %v1979
        %v3271 = vunpack.c.h.b16 %v1979
        %v3272 = vunpack.c.l.b16 %v1980
        %v3273 = vunpack.c.h.b16 %v1980
        %v3274 = vunpack.c.l.b16 %v1981
        %v3275 = vunpack.c.h.b16 %v1981
        %v3276 = vunpack.c.l.b16 %v1982
        %v3277 = vunpack.c.h.b16 %v1982
        %v3278 = vunpack.c.l.b16 %v1983
        %v3279 = vunpack.c.h.b16 %v1983
        %v3280 = vunpack.c.l.b16 %v1984
        %v3281 = vunpack.c.h.b16 %v1984
        %v3282 = vunpack.c.l.b16 %v1985
        %v3283 = vunpack.c.h.b16 %v1985
        %v3284 = vunpack.c.l.b16 %v1986
        %v3285 = vunpack.c.h.b16 %v1986
        %v3286 = vunpack.c.l.b16 %v1987
        %v3287 = vunpack.c.h.b16 %v1987
        %v3288 = vunpack.c.l.b16 %v1988
        %v3289 = vunpack.c.h.b16 %v1988
        %v3290 = vunpack.c.l.b16 %v1989
        %v3291 = vunpack.c.h.b16 %v1989
        %v3292 = vunpack.c.l.b16 %v1990
        %v3293 = vunpack.c.h.b16 %v1990
        %v3294 = vunpack.c.l.b16 %v1991
        %v3295 = vunpack.c.h.b16 %v1991
        %v3296 = vunpack.c.l.b16 %v1992
        %v3297 = vunpack.c.h.b16 %v1992
        %v3298 = vunpack.c.l.b16 %v1993
        %v3299 = vunpack.c.h.b16 %v1993
        %v3300 = vunpack.c.l.b16 %v1994
        %v3301 = vunpack.c.h.b16 %v1994
        %v3302 = vunpack.c.l.b16 %v1995
        %v3303 = vunpack.c.h.b16 %v1995
        %v3304 = vunpack.c.l.b16 %v1996
        %v3305 = vunpack.c.h.b16 %v1996
        %v3306 = vunpack.c.l.b16 %v1997
        %v3307 = vunpack.c.h.b16 %v1997
        %v3308 = vunpack.c.l.b16 %v1998
        %v3309 = vunpack.c.h.b16 %v1998
        %v3310 = vunpack.c.l.b16 %v1999
        %v3311 = vunpack.c.h.b16 %v1999
        %v3312 = vunpack.c.l.b16 %v2000
        %v3313 = vunpack.c.h.b16 %v2000
        %v3314 = vunpack.c.l.b16 %v2001
        %v3315 = vunpack.c.h.b16 %v2001
        %v3316 = vunpack.c.l.b16 %v2002
        %v3317 = vunpack.c.h.b16 %v2002
        %v3318 = vunpack.c.l.b16 %v2003
        %v3319 = vunpack.c.h.b16 %v2003
        %v3320 = vunpack.c.l.b16 %v2004
        %v3321 = vunpack.c.h.b16 %v2004
        %v3322 = vunpack.c.l.b16 %v2005
        %v3323 = vunpack.c.h.b16 %v2005
        %v3324 = vunpack.c.l.b16 %v2006
        %v3325 = vunpack.c.h.b16 %v2006
        %v3326 = vunpack.c.l.b16 %v2007
        %v3327 = vunpack.c.h.b16 %v2007
        %v3328 = vunpack.c.l.b16 %v2008
        %v3329 = vunpack.c.h.b16 %v2008
        %v3330 = vunpack.c.l.b16 %v2009
        %v3331 = vunpack.c.h.b16 %v2009
        %v3332 = vunpack.c.l.b16 %v2010
        %v3333 = vunpack.c.h.b16 %v2010
        %v3334 = vunpack.c.l.b16 %v2011
        %v3335 = vunpack.c.h.b16 %v2011
        %v3336 = vunpack.c.l.b16 %v2012
        %v3337 = vunpack.c.h.b16 %v2012
        %v3338 = vunpack.c.l.b16 %v2013
        %v3339 = vunpack.c.h.b16 %v2013
        %v3340 = vunpack.c.l.b16 %v2014
        %v3341 = vunpack.c.h.b16 %v2014
        %v3342 = vunpack.c.l.b16 %v2015
        %v3343 = vunpack.c.h.b16 %v2015
        %v3344 = vunpack.c.l.b16 %v2016
        %v3345 = vunpack.c.h.b16 %v2016
        %v3346 = vunpack.c.l.b16 %v2017
        %v3347 = vunpack.c.h.b16 %v2017
        %v3348 = vunpack.c.l.b16 %v2018
        %v3349 = vunpack.c.h.b16 %v2018
        %v3350 = vunpack.c.l.b16 %v2019
        %v3351 = vunpack.c.h.b16 %v2019
        %v3352 = vunpack.c.l.b16 %v2020
        %v3353 = vunpack.c.h.b16 %v2020
        %v3354 = vunpack.c.l.b16 %v2021
        %v3355 = vunpack.c.h.b16 %v2021
        %v3356 = vunpack.c.l.b16 %v2022
        %v3357 = vunpack.c.h.b16 %v2022
        %v3358 = vunpack.c.l.b16 %v2023
        %v3359 = vunpack.c.h.b16 %v2023
        %v3360 = vunpack.c.l.b16 %v2024
        %v3361 = vunpack.c.h.b16 %v2024
        %v3362 = vunpack.c.l.b16 %v2025
        %v3363 = vunpack.c.h.b16 %v2025
        %v3364 = vunpack.c.l.b16 %v2026
        %v3365 = vunpack.c.h.b16 %v2026
        %v3366 = vunpack.c.l.b16 %v2027
        %v3367 = vunpack.c.h.b16 %v2027
        %v3368 = vunpack.c.l.b16 %v2028
        %v3369 = vunpack.c.h.b16 %v2028
        %v3370 = vunpack.c.l.b16 %v2029
        %v3371 = vunpack.c.h.b16 %v2029
        %v3372 = vunpack.c.l.b16 %v2030
        %v3373 = vunpack.c.h.b16 %v2030
        %v3374 = vunpack.c.l.b16 %v2031
        %v3375 = vunpack.c.h.b16 %v2031
        %v3376 = vunpack.c.l.b16 %v2032
        %v3377 = vunpack.c.h.b16 %v2032
        %v3378 = vunpack.c.l.b16 %v2033
        %v3379 = vunpack.c.h.b16 %v2033
        %v3380 = vunpack.c.l.b16 %v2034
        %v3381 = vunpack.c.h.b16 %v2034
        %v3382 = vunpack.c.l.b16 %v2035
        %v3383 = vunpack.c.h.b16 %v2035
        %v3384 = vunpack.c.l.b16 %v2036
        %v3385 = vunpack.c.h.b16 %v2036
        %v3386 = vunpack.c.l.b16 %v2037
        %v3387 = vunpack.c.h.b16 %v2037
        %v3388 = vunpack.c.l.b16 %v2038
        %v3389 = vunpack.c.h.b16 %v2038
        %v3390 = vunpack.c.l.b16 %v2039
        %v3391 = vunpack.c.h.b16 %v2039
        %v3392 = vunpack.c.l.b16 %v2040
        %v3393 = vunpack.c.h.b16 %v2040
        %v3394 = vunpack.c.l.b16 %v2041
        %v3395 = vunpack.c.h.b16 %v2041
        %v3396 = vunpack.c.l.b16 %v2042
        %v3397 = vunpack.c.h.b16 %v2042
        %v3398 = vunpack.c.l.b16 %v2043
        %v3399 = vunpack.c.h.b16 %v2043
        %v3400 = vunpack.c.l.b16 %v2044
        %v3401 = vunpack.c.h.b16 %v2044
        %v3402 = vunpack.c.l.b16 %v2045
        %v3403 = vunpack.c.h.b16 %v2045
        %v3404 = vunpack.c.l.b16 %v2046
        %v3405 = vunpack.c.h.b16 %v2046
        %v3406 = vunpack.c.l.b16 %v2047
        %v3407 = vunpack.c.h.b16 %v2047
        %v3408 = vunpack.c.l.b16 %v2048
        %v3409 = vunpack.c.h.b16 %v2048
        %v3410 = vunpack.c.l.b16 %v2049
        %v3411 = vunpack.c.h.b16 %v2049
        %v3412 = vunpack.c.l.b16 %v2050
        %v3413 = vunpack.c.h.b16 %v2050
        %v3414 = vunpack.c.l.b16 %v2051
        %v3415 = vunpack.c.h.b16 %v2051
        %v3416 = vunpack.c.l.b16 %v2052
        %v3417 = vunpack.c.h.b16 %v2052
        %v3418 = vunpack.c.l.b16 %v2053
        %v3419 = vunpack.c.h.b16 %v2053
        %v3420 = vunpack.c.l.b16 %v2054
        %v3421 = vunpack.c.h.b16 %v2054
        %v3422 = vunpack.c.l.b16 %v2055
        %v3423 = vunpack.c.h.b16 %v2055
        %v3424 = vunpack.c.l.b16 %v2056
        %v3425 = vunpack.c.h.b16 %v2056
        %v3426 = vunpack.c.l.b16 %v2057
        %v3427 = vunpack.c.h.b16 %v2057
        %v3428 = vunpack.c.l.b16 %v2058
        %v3429 = vunpack.c.h.b16 %v2058
        %v3430 = vunpack.c.l.b16 %v2059
        %v3431 = vunpack.c.h.b16 %v2059
        %v3432 = vunpack.c.l.b16 %v2060
        %v3433 = vunpack.c.h.b16 %v2060
        %v3434 = vunpack.c.l.b16 %v2061
        %v3435 = vunpack.c.h.b16 %v2061
        %v3436 = vunpack.c.l.b16 %v2062
        %v3437 = vunpack.c.h.b16 %v2062
        %v3438 = vunpack.c.l.b16 %v2063
        %v3439 = vunpack.c.h.b16 %v2063
        %v3440 = vunpack.c.l.b16 %v2064
        %v3441 = vunpack.c.h.b16 %v2064
        %v3442 = vunpack.c.l.b16 %v2065
        %v3443 = vunpack.c.h.b16 %v2065
        %v3444 = vunpack.c.l.b16 %v2066
        %v3445 = vunpack.c.h.b16 %v2066
        %v3446 = vunpack.c.l.b16 %v2067
        %v3447 = vunpack.c.h.b16 %v2067
        %v3448 = vunpack.c.l.b16 %v2068
        %v3449 = vunpack.c.h.b16 %v2068
        %v3450 = vunpack.c.l.b16 %v2069
        %v3451 = vunpack.c.h.b16 %v2069
        %v3452 = vunpack.c.l.b16 %v2070
        %v3453 = vunpack.c.h.b16 %v2070
        %v3454 = vunpack.c.l.b16 %v2071
        %v3455 = vunpack.c.h.b16 %v2071
        %v3456 = vunpack.c.l.b16 %v2072
        %v3457 = vunpack.c.h.b16 %v2072
        %v3458 = vunpack.c.l.b16 %v2073
        %v3459 = vunpack.c.h.b16 %v2073
        %v3460 = vunpack.c.l.b16 %v2074
        %v3461 = vunpack.c.h.b16 %v2074
        %v3462 = vunpack.c.l.b16 %v2075
        %v3463 = vunpack.c.h.b16 %v2075
        %v3464 = vunpack.c.l.b16 %v2076
        %v3465 = vunpack.c.h.b16 %v2076
        %v3466 = vunpack.c.l.b16 %v2077
        %v3467 = vunpack.c.h.b16 %v2077
        %v3468 = vpack.c.b16 %v3216, %v3212
        %v3469 = vpack.c.b16 %v3217, %v3213
        %v3470 = vpack.c.b16 %v3218, %v3214
        %v3471 = vpack.c.b16 %v3219, %v3215
        %v3472 = vpack.c.b16 %v3224, %v3220
        %v3473 = vpack.c.b16 %v3225, %v3221
        %v3474 = vpack.c.b16 %v3226, %v3222
        %v3475 = vpack.c.b16 %v3227, %v3223
        %v3476 = vpack.c.b16 %v3232, %v3228
        %v3477 = vpack.c.b16 %v3233, %v3229
        %v3478 = vpack.c.b16 %v3234, %v3230
        %v3479 = vpack.c.b16 %v3235, %v3231
        %v3480 = vpack.c.b16 %v3240, %v3236
        %v3481 = vpack.c.b16 %v3241, %v3237
        %v3482 = vpack.c.b16 %v3242, %v3238
        %v3483 = vpack.c.b16 %v3243, %v3239
        %v3484 = vpack.c.b16 %v3248, %v3244
        %v3485 = vpack.c.b16 %v3249, %v3245
        %v3486 = vpack.c.b16 %v3250, %v3246
        %v3487 = vpack.c.b16 %v3251, %v3247
        %v3488 = vpack.c.b16 %v3256, %v3252
        %v3489 = vpack.c.b16 %v3257, %v3253
        %v3490 = vpack.c.b16 %v3258, %v3254
        %v3491 = vpack.c.b16 %v3259, %v3255
        %v3492 = vpack.c.b16 %v3264, %v3260
        %v3493 = vpack.c.b16 %v3265, %v3261
        %v3494 = vpack.c.b16 %v3266, %v3262
        %v3495 = vpack.c.b16 %v3267, %v3263
        %v3496 = vpack.c.b16 %v3272, %v3268
        %v3497 = vpack.c.b16 %v3273, %v3269
        %v3498 = vpack.c.b16 %v3274, %v3270
        %v3499 = vpack.c.b16 %v3275, %v3271
        %v3500 = vpack.c.b16 %v3280, %v3276
        %v3501 = vpack.c.b16 %v3281, %v3277
        %v3502 = vpack.c.b16 %v3282, %v3278
        %v3503 = vpack.c.b16 %v3283, %v3279
        %v3504 = vpack.c.b16 %v3288, %v3284
        %v3505 = vpack.c.b16 %v3289, %v3285
        %v3506 = vpack.c.b16 %v3290, %v3286
        %v3507 = vpack.c.b16 %v3291, %v3287
        %v3508 = vpack.c.b16 %v3296, %v3292
        %v3509 = vpack.c.b16 %v3297, %v3293
        %v3510 = vpack.c.b16 %v3298, %v3294
        %v3511 = vpack.c.b16 %v3299, %v3295
        %v3512 = vpack.c.b16 %v3304, %v3300
        %v3513 = vpack.c.b16 %v3305, %v3301
        %v3514 = vpack.c.b16 %v3306, %v3302
        %v3515 = vpack.c.b16 %v3307, %v3303
        %v3516 = vpack.c.b16 %v3312, %v3308
        %v3517 = vpack.c.b16 %v3313, %v3309
        %v3518 = vpack.c.b16 %v3314, %v3310
        %v3519 = vpack.c.b16 %v3315, %v3311
        %v3520 = vpack.c.b16 %v3320, %v3316
        %v3521 = vpack.c.b16 %v3321, %v3317
        %v3522 = vpack.c.b16 %v3322, %v3318
        %v3523 = vpack.c.b16 %v3323, %v3319
        %v3524 = vpack.c.b16 %v3328, %v3324
        %v3525 = vpack.c.b16 %v3329, %v3325
        %v3526 = vpack.c.b16 %v3330, %v3326
        %v3527 = vpack.c.b16 %v3331, %v3327
        %v3528 = vpack.c.b16 %v3336, %v3332
        %v3529 = vpack.c.b16 %v3337, %v3333
        %v3530 = vpack.c.b16 %v3338, %v3334
        %v3531 = vpack.c.b16 %v3339, %v3335
        %v3532 = vpack.c.b16 %v3344, %v3340
        %v3533 = vpack.c.b16 %v3345, %v3341
        %v3534 = vpack.c.b16 %v3346, %v3342
        %v3535 = vpack.c.b16 %v3347, %v3343
        %v3536 = vpack.c.b16 %v3352, %v3348
        %v3537 = vpack.c.b16 %v3353, %v3349
        %v3538 = vpack.c.b16 %v3354, %v3350
        %v3539 = vpack.c.b16 %v3355, %v3351
        %v3540 = vpack.c.b16 %v3360, %v3356
        %v3541 = vpack.c.b16 %v3361, %v3357
        %v3542 = vpack.c.b16 %v3362, %v3358
        %v3543 = vpack.c.b16 %v3363, %v3359
        %v3544 = vpack.c.b16 %v3368, %v3364
        %v3545 = vpack.c.b16 %v3369, %v3365
        %v3546 = vpack.c.b16 %v3370, %v3366
        %v3547 = vpack.c.b16 %v3371, %v3367
        %v3548 = vpack.c.b16 %v3376, %v3372
        %v3549 = vpack.c.b16 %v3377, %v3373
        %v3550 = vpack.c.b16 %v3378, %v3374
        %v3551 = vpack.c.b16 %v3379, %v3375
        %v3552 = vpack.c.b16 %v3384, %v3380
        %v3553 = vpack.c.b16 %v3385, %v3381
        %v3554 = vpack.c.b16 %v3386, %v3382
        %v3555 = vpack.c.b16 %v3387, %v3383
        %v3556 = vpack.c.b16 %v3392, %v3388
        %v3557 = vpack.c.b16 %v3393, %v3389
        %v3558 = vpack.c.b16 %v3394, %v3390
        %v3559 = vpack.c.b16 %v3395, %v3391
        %v3560 = vpack.c.b16 %v3400, %v3396
        %v3561 = vpack.c.b16 %v3401, %v3397
        %v3562 = vpack.c.b16 %v3402, %v3398
        %v3563 = vpack.c.b16 %v3403, %v3399
        %v3564 = vpack.c.b16 %v3408, %v3404
        %v3565 = vpack.c.b16 %v3409, %v3405
        %v3566 = vpack.c.b16 %v3410, %v3406
        %v3567 = vpack.c.b16 %v3411, %v3407
        %v3568 = vpack.c.b16 %v3416, %v3412
        %v3569 = vpack.c.b16 %v3417, %v3413
        %v3570 = vpack.c.b16 %v3418, %v3414
        %v3571 = vpack.c.b16 %v3419, %v3415
        %v3572 = vpack.c.b16 %v3424, %v3420
        %v3573 = vpack.c.b16 %v3425, %v3421
        %v3574 = vpack.c.b16 %v3426, %v3422
        %v3575 = vpack.c.b16 %v3427, %v3423
        %v3576 = vpack.c.b16 %v3432, %v3428
        %v3577 = vpack.c.b16 %v3433, %v3429
        %v3578 = vpack.c.b16 %v3434, %v3430
        %v3579 = vpack.c.b16 %v3435, %v3431
        %v3580 = vpack.c.b16 %v3440, %v3436
        %v3581 = vpack.c.b16 %v3441, %v3437
        %v3582 = vpack.c.b16 %v3442, %v3438
        %v3583 = vpack.c.b16 %v3443, %v3439
        %v3584 = vpack.c.b16 %v3448, %v3444
        %v3585 = vpack.c.b16 %v3449, %v3445
        %v3586 = vpack.c.b16 %v3450, %v3446
        %v3587 = vpack.c.b16 %v3451, %v3447
        %v3588 = vpack.c.b16 %v3456, %v3452
        %v3589 = vpack.c.b16 %v3457, %v3453
        %v3590 = vpack.c.b16 %v3458, %v3454
        %v3591 = vpack.c.b16 %v3459, %v3455
        %v3592 = vpack.c.b16 %v3464, %v3460
        %v3593 = vpack.c.b16 %v3465, %v3461
        %v3594 = vpack.c.b16 %v3466, %v3462
        %v3595 = vpack.c.b16 %v3467, %v3463
        %3724 = vmatprep.subr.bf16.mxu0 %v3469
        %3725 = vmatpush1.bf16.msra.mxu0 %v3468
        %3726 = vmatprep.subr.bf16.mxu0 %v3473
        %3727 = vmatpush1.bf16.msra.mxu0 %v3472
        %3728 = vmatprep.subr.bf16.mxu0 %v3477
        %3729 = vmatpush1.bf16.msra.mxu0 %v3476
        %3730 = vmatprep.subr.bf16.mxu0 %v3481
        %3731 = vmatpush1.bf16.msra.mxu0 %v3480
        %3732 = vmatprep.subr.bf16.mxu0 %v3485
        %3733 = vmatpush1.bf16.msra.mxu0 %v3484
        %3734 = vmatprep.subr.bf16.mxu0 %v3489
        %3735 = vmatpush1.bf16.msra.mxu0 %v3488
        %3736 = vmatprep.subr.bf16.mxu0 %v3493
        %3737 = vmatpush1.bf16.msra.mxu0 %v3492
        %3738 = vmatprep.subr.bf16.mxu0 %v3497
        %3739 = vmatpush1.bf16.msra.mxu0 %v3496
        %3740 = vmatprep.subr.bf16.mxu0 %v3501
        %3741 = vmatpush1.bf16.msra.mxu0 %v3500
        %3742 = vmatprep.subr.bf16.mxu0 %v3505
        %3743 = vmatpush1.bf16.msra.mxu0 %v3504
        %3744 = vmatprep.subr.bf16.mxu0 %v3509
        %3745 = vmatpush1.bf16.msra.mxu0 %v3508
        %3746 = vmatprep.subr.bf16.mxu0 %v3513
        %3747 = vmatpush1.bf16.msra.mxu0 %v3512
        %3748 = vmatprep.subr.bf16.mxu0 %v3517
        %3749 = vmatpush1.bf16.msra.mxu0 %v3516
        %3750 = vmatprep.subr.bf16.mxu0 %v3521
        %3751 = vmatpush1.bf16.msra.mxu0 %v3520
        %3752 = vmatprep.subr.bf16.mxu0 %v3525
        %3753 = vmatpush1.bf16.msra.mxu0 %v3524
        %3754 = vmatprep.subr.bf16.mxu0 %v3529
        %3755 = vmatpush1.bf16.msra.mxu0 %v3528
        %3756 = vmatprep.mubr.bf16.mxu0 %v3078
        %3757 = vmatmul.mubr.bf16.gmra.mrb[0].mxu0 %v3070
        %v3758 = vpop.f32.mrb[0].mxu0
        %v3759 = vadd.f32 %v2974, %v3758
        %v3760 = vpop.f32.mrb[0].mxu0
        %v3761 = vadd.f32 %v2976, %v3760
        %v3762 = vpop.f32.mrb[0].mxu0
        %v3763 = vpop.f32.mrb[0].mxu0
        %3764 = vdwg.mxu0
        %3765 = vmatprep.subr.bf16.mxu0 %v3533
        %3766 = vmatpush1.bf16.msra.mxu0 %v3532
        %3767 = vmatprep.subr.bf16.mxu0 %v3537
        %3768 = vmatpush1.bf16.msra.mxu0 %v3536
        %3769 = vmatprep.subr.bf16.mxu0 %v3541
        %3770 = vmatpush1.bf16.msra.mxu0 %v3540
        %3771 = vmatprep.subr.bf16.mxu0 %v3545
        %3772 = vmatpush1.bf16.msra.mxu0 %v3544
        %3773 = vmatprep.subr.bf16.mxu0 %v3549
        %3774 = vmatpush1.bf16.msra.mxu0 %v3548
        %3775 = vmatprep.subr.bf16.mxu0 %v3553
        %3776 = vmatpush1.bf16.msra.mxu0 %v3552
        %3777 = vmatprep.subr.bf16.mxu0 %v3557
        %3778 = vmatpush1.bf16.msra.mxu0 %v3556
        %3779 = vmatprep.subr.bf16.mxu0 %v3561
        %3780 = vmatpush1.bf16.msra.mxu0 %v3560
        %3781 = vmatprep.subr.bf16.mxu0 %v3565
        %3782 = vmatpush1.bf16.msra.mxu0 %v3564
        %3783 = vmatprep.subr.bf16.mxu0 %v3569
        %3784 = vmatpush1.bf16.msra.mxu0 %v3568
        %3785 = vmatprep.subr.bf16.mxu0 %v3573
        %3786 = vmatpush1.bf16.msra.mxu0 %v3572
        %3787 = vmatprep.subr.bf16.mxu0 %v3577
        %3788 = vmatpush1.bf16.msra.mxu0 %v3576
        %3789 = vmatprep.subr.bf16.mxu0 %v3581
        %3790 = vmatpush1.bf16.msra.mxu0 %v3580
        %3791 = vmatprep.subr.bf16.mxu0 %v3585
        %3792 = vmatpush1.bf16.msra.mxu0 %v3584
        %3793 = vmatprep.subr.bf16.mxu0 %v3589
        %3794 = vmatpush1.bf16.msra.mxu0 %v3588
        %3795 = vmatprep.subr.bf16.mxu0 %v3593
        %3796 = vmatpush1.bf16.msra.mxu0 %v3592
        %3797 = vmatprep.mubr.bf16.mxu0 %v3079
        %3798 = vmatmul.mubr.bf16.gmra.mrb[0].mxu0 %v3077
        %v3799 = vpop.f32.mrb[0].mxu0
        %v3800 = vadd.f32 %v3759, %v3799
        %v3801 = vpop.f32.mrb[0].mxu0
        %v3802 = vadd.f32 %v3761, %v3801
        %v3803 = vpop.f32.mrb[0].mxu0
        %v3804 = vpop.f32.mrb[0].mxu0
        %3805 = vdwg.mxu0
        %3806 = vmatprep.subr.bf16.mxu0 %v3471
        %3807 = vmatpush1.bf16.msra.mxu0 %v3470
        %3808 = vmatprep.subr.bf16.mxu0 %v3475
        %3809 = vmatpush1.bf16.msra.mxu0 %v3474
        %3810 = vmatprep.subr.bf16.mxu0 %v3479
        %3811 = vmatpush1.bf16.msra.mxu0 %v3478
        %3812 = vmatprep.subr.bf16.mxu0 %v3483
        %3813 = vmatpush1.bf16.msra.mxu0 %v3482
        %3814 = vmatprep.subr.bf16.mxu0 %v3487
        %3815 = vmatpush1.bf16.msra.mxu0 %v3486
        %3816 = vmatprep.subr.bf16.mxu0 %v3491
        %3817 = vmatpush1.bf16.msra.mxu0 %v3490
        %3818 = vmatprep.subr.bf16.mxu0 %v3495
        %3819 = vmatpush1.bf16.msra.mxu0 %v3494
        %3820 = vmatprep.subr.bf16.mxu0 %v3499
        %3821 = vmatpush1.bf16.msra.mxu0 %v3498
        %3822 = vmatprep.subr.bf16.mxu0 %v3503
        %3823 = vmatpush1.bf16.msra.mxu0 %v3502
        %3824 = vmatprep.subr.bf16.mxu0 %v3507
        %3825 = vmatpush1.bf16.msra.mxu0 %v3506
        %3826 = vmatprep.subr.bf16.mxu0 %v3511
        %3827 = vmatpush1.bf16.msra.mxu0 %v3510
        %3828 = vmatprep.subr.bf16.mxu0 %v3515
        %3829 = vmatpush1.bf16.msra.mxu0 %v3514
        %3830 = vmatprep.subr.bf16.mxu0 %v3519
        %3831 = vmatpush1.bf16.msra.mxu0 %v3518
        %3832 = vmatprep.subr.bf16.mxu0 %v3523
        %3833 = vmatpush1.bf16.msra.mxu0 %v3522
        %3834 = vmatprep.subr.bf16.mxu0 %v3527
        %3835 = vmatpush1.bf16.msra.mxu0 %v3526
        %3836 = vmatprep.subr.bf16.mxu0 %v3531
        %3837 = vmatpush1.bf16.msra.mxu0 %v3530
        %3838 = vmatprep.mubr.bf16.mxu0 %v3078
        %3839 = vmatmul.mubr.bf16.gmra.mrb[0].mxu0 %v3070
        %v3840 = vpop.f32.mrb[0].mxu0
        %v3841 = vadd.f32 %v3056, %v3840
        %v3842 = vpop.f32.mrb[0].mxu0
        %v3843 = vadd.f32 %v3058, %v3842
        %v3844 = vpop.f32.mrb[0].mxu0
        %v3845 = vpop.f32.mrb[0].mxu0
        %3846 = vdwg.mxu0
        %3847 = vmatprep.subr.bf16.mxu0 %v3535
        %3848 = vmatpush1.bf16.msra.mxu0 %v3534
        %3849 = vmatprep.subr.bf16.mxu0 %v3539
        %3850 = vmatpush1.bf16.msra.mxu0 %v3538
        %3851 = vmatprep.subr.bf16.mxu0 %v3543
        %3852 = vmatpush1.bf16.msra.mxu0 %v3542
        %3853 = vmatprep.subr.bf16.mxu0 %v3547
        %3854 = vmatpush1.bf16.msra.mxu0 %v3546
        %3855 = vmatprep.subr.bf16.mxu0 %v3551
        %3856 = vmatpush1.bf16.msra.mxu0 %v3550
        %3857 = vmatprep.subr.bf16.mxu0 %v3555
        %3858 = vmatpush1.bf16.msra.mxu0 %v3554
        %3859 = vmatprep.subr.bf16.mxu0 %v3559
        %3860 = vmatpush1.bf16.msra.mxu0 %v3558
        %3861 = vmatprep.subr.bf16.mxu0 %v3563
        %3862 = vmatpush1.bf16.msra.mxu0 %v3562
        %3863 = vmatprep.subr.bf16.mxu0 %v3567
        %3864 = vmatpush1.bf16.msra.mxu0 %v3566
        %3865 = vmatprep.subr.bf16.mxu0 %v3571
        %3866 = vmatpush1.bf16.msra.mxu0 %v3570
        %3867 = vmatprep.subr.bf16.mxu0 %v3575
        %3868 = vmatpush1.bf16.msra.mxu0 %v3574
        %3869 = vmatprep.subr.bf16.mxu0 %v3579
        %3870 = vmatpush1.bf16.msra.mxu0 %v3578
        %3871 = vmatprep.subr.bf16.mxu0 %v3583
        %3872 = vmatpush1.bf16.msra.mxu0 %v3582
        %3873 = vmatprep.subr.bf16.mxu0 %v3587
        %3874 = vmatpush1.bf16.msra.mxu0 %v3586
        %3875 = vmatprep.subr.bf16.mxu0 %v3591
        %3876 = vmatpush1.bf16.msra.mxu0 %v3590
        %3877 = vmatprep.subr.bf16.mxu0 %v3595
        %3878 = vmatpush1.bf16.msra.mxu0 %v3594
        %3879 = vmatprep.mubr.bf16.mxu0 %v3079
        %3880 = vmatmul.mubr.bf16.gmra.mrb[0].mxu0 %v3077
        %v3881 = vpop.f32.mrb[0].mxu0
        %v3882 = vadd.f32 %v3841, %v3881
        %v3883 = vpop.f32.mrb[0].mxu0
        %v3884 = vadd.f32 %v3843, %v3883
        %v3885 = vpop.f32.mrb[0].mxu0
        %v3886 = vpop.f32.mrb[0].mxu0
        %3887 = vdwg.mxu0
        %v3888 = vld [vmem:[#allocation2] sm:$0xaa]
        %s3889 = scalar_lea.vmem %s4, 2048
        %v3890 = vld [vmem:[%s3889] sm:$0xff]
        %v3891 = vld [vmem:[%s3889 + $0x8] sm:$0xff]
        %v3892 = vld [vmem:[%s3889 + $0x10] sm:$0xff]
        %v3893 = vld [vmem:[%s3889 + $0x18] sm:$0xff]
        %v3894 = vld [vmem:[%s3889 + $0x20] sm:$0xff]
        %v3895 = vld [vmem:[%s3889 + $0x28] sm:$0xff]
        %v3896 = vld [vmem:[%s3889 + $0x30] sm:$0xff]
        %v3897 = vld [vmem:[%s3889 + $0x38] sm:$0xff]
        %v3898 = vld [vmem:[%s3889 + $0x40] sm:$0xff]
        %v3899 = vld [vmem:[%s3889 + $0x48] sm:$0xff]
        %v3900 = vld [vmem:[%s3889 + $0x50] sm:$0xff]
        %v3901 = vld [vmem:[%s3889 + $0x58] sm:$0xff]
        %v3902 = vld [vmem:[%s3889 + $0x60] sm:$0xff]
        %v3903 = vld [vmem:[%s3889 + $0x68] sm:$0xff]
        %v3904 = vld [vmem:[%s3889 + $0x70] sm:$0xff]
        %v3905 = vld [vmem:[%s3889 + $0x78] sm:$0xff]
        %v3906 = vld [vmem:[%s3889 + $0x80] sm:$0xff]
        %v3907 = vld [vmem:[%s3889 + $0x88] sm:$0xff]
        %v3908 = vld [vmem:[%s3889 + $0x90] sm:$0xff]
        %v3909 = vld [vmem:[%s3889 + $0x98] sm:$0xff]
        %v3910 = vld [vmem:[%s3889 + $0xa0] sm:$0xff]
        %v3911 = vld [vmem:[%s3889 + $0xa8] sm:$0xff]
        %v3912 = vld [vmem:[%s3889 + $0xb0] sm:$0xff]
        %v3913 = vld [vmem:[%s3889 + $0xb8] sm:$0xff]
        %v3914 = vld [vmem:[%s3889 + $0xc0] sm:$0xff]
        %v3915 = vld [vmem:[%s3889 + $0xc8] sm:$0xff]
        %v3916 = vld [vmem:[%s3889 + $0xd0] sm:$0xff]
        %v3917 = vld [vmem:[%s3889 + $0xd8] sm:$0xff]
        %v3918 = vld [vmem:[%s3889 + $0xe0] sm:$0xff]
        %v3919 = vld [vmem:[%s3889 + $0xe8] sm:$0xff]
        %v3920 = vld [vmem:[%s3889 + $0xf0] sm:$0xff]
        %v3921 = vld [vmem:[%s3889 + $0xf8] sm:$0xff]
        %v3922 = vld [vmem:[%s3889 + $0x100] sm:$0xff]
        %v3923 = vld [vmem:[%s3889 + $0x108] sm:$0xff]
        %v3924 = vld [vmem:[%s3889 + $0x110] sm:$0xff]
        %v3925 = vld [vmem:[%s3889 + $0x118] sm:$0xff]
        %v3926 = vld [vmem:[%s3889 + $0x120] sm:$0xff]
        %v3927 = vld [vmem:[%s3889 + $0x128] sm:$0xff]
        %v3928 = vld [vmem:[%s3889 + $0x130] sm:$0xff]
        %v3929 = vld [vmem:[%s3889 + $0x138] sm:$0xff]
        %v3930 = vld [vmem:[%s3889 + $0x140] sm:$0xff]
        %v3931 = vld [vmem:[%s3889 + $0x148] sm:$0xff]
        %v3932 = vld [vmem:[%s3889 + $0x150] sm:$0xff]
        %v3933 = vld [vmem:[%s3889 + $0x158] sm:$0xff]
        %v3934 = vld [vmem:[%s3889 + $0x160] sm:$0xff]
        %v3935 = vld [vmem:[%s3889 + $0x168] sm:$0xff]
        %v3936 = vld [vmem:[%s3889 + $0x170] sm:$0xff]
        %v3937 = vld [vmem:[%s3889 + $0x178] sm:$0xff]
        %v3938 = vld [vmem:[%s3889 + $0x180] sm:$0xff]
        %v3939 = vld [vmem:[%s3889 + $0x188] sm:$0xff]
        %v3940 = vld [vmem:[%s3889 + $0x190] sm:$0xff]
        %v3941 = vld [vmem:[%s3889 + $0x198] sm:$0xff]
        %v3942 = vld [vmem:[%s3889 + $0x1a0] sm:$0xff]
        %v3943 = vld [vmem:[%s3889 + $0x1a8] sm:$0xff]
        %v3944 = vld [vmem:[%s3889 + $0x1b0] sm:$0xff]
        %v3945 = vld [vmem:[%s3889 + $0x1b8] sm:$0xff]
        %v3946 = vld [vmem:[%s3889 + $0x1c0] sm:$0xff]
        %v3947 = vld [vmem:[%s3889 + $0x1c8] sm:$0xff]
        %v3948 = vld [vmem:[%s3889 + $0x1d0] sm:$0xff]
        %v3949 = vld [vmem:[%s3889 + $0x1d8] sm:$0xff]
        %v3950 = vld [vmem:[%s3889 + $0x1e0] sm:$0xff]
        %v3951 = vld [vmem:[%s3889 + $0x1e8] sm:$0xff]
        %v3952 = vld [vmem:[%s3889 + $0x1f0] sm:$0xff]
        %v3953 = vld [vmem:[%s3889 + $0x1f8] sm:$0xff]
        %v3954 = vld [vmem:[%s3889 + $0x200] sm:$0xff]
        %v3955 = vld [vmem:[%s3889 + $0x208] sm:$0xff]
        %v3956 = vld [vmem:[%s3889 + $0x210] sm:$0xff]
        %v3957 = vld [vmem:[%s3889 + $0x218] sm:$0xff]
        %v3958 = vld [vmem:[%s3889 + $0x220] sm:$0xff]
        %v3959 = vld [vmem:[%s3889 + $0x228] sm:$0xff]
        %v3960 = vld [vmem:[%s3889 + $0x230] sm:$0xff]
        %v3961 = vld [vmem:[%s3889 + $0x238] sm:$0xff]
        %v3962 = vld [vmem:[%s3889 + $0x240] sm:$0xff]
        %v3963 = vld [vmem:[%s3889 + $0x248] sm:$0xff]
        %v3964 = vld [vmem:[%s3889 + $0x250] sm:$0xff]
        %v3965 = vld [vmem:[%s3889 + $0x258] sm:$0xff]
        %v3966 = vld [vmem:[%s3889 + $0x260] sm:$0xff]
        %v3967 = vld [vmem:[%s3889 + $0x268] sm:$0xff]
        %v3968 = vld [vmem:[%s3889 + $0x270] sm:$0xff]
        %v3969 = vld [vmem:[%s3889 + $0x278] sm:$0xff]
        %v3970 = vld [vmem:[%s3889 + $0x280] sm:$0xff]
        %v3971 = vld [vmem:[%s3889 + $0x288] sm:$0xff]
        %v3972 = vld [vmem:[%s3889 + $0x290] sm:$0xff]
        %v3973 = vld [vmem:[%s3889 + $0x298] sm:$0xff]
        %v3974 = vld [vmem:[%s3889 + $0x2a0] sm:$0xff]
        %v3975 = vld [vmem:[%s3889 + $0x2a8] sm:$0xff]
        %v3976 = vld [vmem:[%s3889 + $0x2b0] sm:$0xff]
        %v3977 = vld [vmem:[%s3889 + $0x2b8] sm:$0xff]
        %v3978 = vld [vmem:[%s3889 + $0x2c0] sm:$0xff]
        %v3979 = vld [vmem:[%s3889 + $0x2c8] sm:$0xff]
        %v3980 = vld [vmem:[%s3889 + $0x2d0] sm:$0xff]
        %v3981 = vld [vmem:[%s3889 + $0x2d8] sm:$0xff]
        %v3982 = vld [vmem:[%s3889 + $0x2e0] sm:$0xff]
        %v3983 = vld [vmem:[%s3889 + $0x2e8] sm:$0xff]
        %v3984 = vld [vmem:[%s3889 + $0x2f0] sm:$0xff]
        %v3985 = vld [vmem:[%s3889 + $0x2f8] sm:$0xff]
        %v3986 = vld [vmem:[%s3889 + $0x300] sm:$0xff]
        %v3987 = vld [vmem:[%s3889 + $0x308] sm:$0xff]
        %v3988 = vld [vmem:[%s3889 + $0x310] sm:$0xff]
        %v3989 = vld [vmem:[%s3889 + $0x318] sm:$0xff]
        %v3990 = vld [vmem:[%s3889 + $0x320] sm:$0xff]
        %v3991 = vld [vmem:[%s3889 + $0x328] sm:$0xff]
        %v3992 = vld [vmem:[%s3889 + $0x330] sm:$0xff]
        %v3993 = vld [vmem:[%s3889 + $0x338] sm:$0xff]
        %v3994 = vld [vmem:[%s3889 + $0x340] sm:$0xff]
        %v3995 = vld [vmem:[%s3889 + $0x348] sm:$0xff]
        %v3996 = vld [vmem:[%s3889 + $0x350] sm:$0xff]
        %v3997 = vld [vmem:[%s3889 + $0x358] sm:$0xff]
        %v3998 = vld [vmem:[%s3889 + $0x360] sm:$0xff]
        %v3999 = vld [vmem:[%s3889 + $0x368] sm:$0xff]
        %v4000 = vld [vmem:[%s3889 + $0x370] sm:$0xff]
        %v4001 = vld [vmem:[%s3889 + $0x378] sm:$0xff]
        %v4002 = vld [vmem:[%s3889 + $0x380] sm:$0xff]
        %v4003 = vld [vmem:[%s3889 + $0x388] sm:$0xff]
        %v4004 = vld [vmem:[%s3889 + $0x390] sm:$0xff]
        %v4005 = vld [vmem:[%s3889 + $0x398] sm:$0xff]
        %v4006 = vld [vmem:[%s3889 + $0x3a0] sm:$0xff]
        %v4007 = vld [vmem:[%s3889 + $0x3a8] sm:$0xff]
        %v4008 = vld [vmem:[%s3889 + $0x3b0] sm:$0xff]
        %v4009 = vld [vmem:[%s3889 + $0x3b8] sm:$0xff]
        %v4010 = vld [vmem:[%s3889 + $0x3c0] sm:$0xff]
        %v4011 = vld [vmem:[%s3889 + $0x3c8] sm:$0xff]
        %v4012 = vld [vmem:[%s3889 + $0x3d0] sm:$0xff]
        %v4013 = vld [vmem:[%s3889 + $0x3d8] sm:$0xff]
        %v4014 = vld [vmem:[%s3889 + $0x3e0] sm:$0xff]
        %v4015 = vld [vmem:[%s3889 + $0x3e8] sm:$0xff]
        %v4016 = vld [vmem:[%s3889 + $0x3f0] sm:$0xff]
        %v4017 = vld [vmem:[%s3889 + $0x3f8] sm:$0xff]
        %v4019 = vcombine.high %v3888, %v3888
        %v4021 = vunpack.c.l.s4 1983009808
        %v4022 = vunpack.c.0.s8 %v4021
        %v4023 = vlaneseq
        %v4024 = vshrl.u32 %v4023, 7
        %v4025 = vsub.s32 %v4022, %v4024
        %v4026 = vrot.slane %v3888, %v4025
        %v4028 = vunpack.c.l.s4 1983009808
        %v4029 = vunpack.c.0.s8 %v4028
        %v4030 = vlaneseq
        %v4031 = vshrl.u32 %v4030, 7
        %v4032 = vsub.s32 %v4029, %v4031
        %v4033 = vrot.slane %v4019, %v4032
        %v4034 = vcombine.high %v4026, %v4026
        %v4035 = vcombine.high %v4033, %v4033
        %v4036 = vrot.slane %v4026, 1
        %v4037 = vrot.slane %v4034, 1
        %v4038 = vrot.slane %v4033, 1
        %v4039 = vrot.slane %v4035, 1
        %v4172 = vunpack.c.l.b16 %v3890
        %v4173 = vunpack.c.h.b16 %v3890
        %v4174 = vunpack.c.l.b16 %v3891
        %v4175 = vunpack.c.h.b16 %v3891
        %v4176 = vunpack.c.l.b16 %v3892
        %v4177 = vunpack.c.h.b16 %v3892
        %v4178 = vunpack.c.l.b16 %v3893
        %v4179 = vunpack.c.h.b16 %v3893
        %v4180 = vunpack.c.l.b16 %v3894
        %v4181 = vunpack.c.h.b16 %v3894
        %v4182 = vunpack.c.l.b16 %v3895
        %v4183 = vunpack.c.h.b16 %v3895
        %v4184 = vunpack.c.l.b16 %v3896
        %v4185 = vunpack.c.h.b16 %v3896
        %v4186 = vunpack.c.l.b16 %v3897
        %v4187 = vunpack.c.h.b16 %v3897
        %v4188 = vunpack.c.l.b16 %v3898
        %v4189 = vunpack.c.h.b16 %v3898
        %v4190 = vunpack.c.l.b16 %v3899
        %v4191 = vunpack.c.h.b16 %v3899
        %v4192 = vunpack.c.l.b16 %v3900
        %v4193 = vunpack.c.h.b16 %v3900
        %v4194 = vunpack.c.l.b16 %v3901
        %v4195 = vunpack.c.h.b16 %v3901
        %v4196 = vunpack.c.l.b16 %v3902
        %v4197 = vunpack.c.h.b16 %v3902
        %v4198 = vunpack.c.l.b16 %v3903
        %v4199 = vunpack.c.h.b16 %v3903
        %v4200 = vunpack.c.l.b16 %v3904
        %v4201 = vunpack.c.h.b16 %v3904
        %v4202 = vunpack.c.l.b16 %v3905
        %v4203 = vunpack.c.h.b16 %v3905
        %v4204 = vunpack.c.l.b16 %v3906
        %v4205 = vunpack.c.h.b16 %v3906
        %v4206 = vunpack.c.l.b16 %v3907
        %v4207 = vunpack.c.h.b16 %v3907
        %v4208 = vunpack.c.l.b16 %v3908
        %v4209 = vunpack.c.h.b16 %v3908
        %v4210 = vunpack.c.l.b16 %v3909
        %v4211 = vunpack.c.h.b16 %v3909
        %v4212 = vunpack.c.l.b16 %v3910
        %v4213 = vunpack.c.h.b16 %v3910
        %v4214 = vunpack.c.l.b16 %v3911
        %v4215 = vunpack.c.h.b16 %v3911
        %v4216 = vunpack.c.l.b16 %v3912
        %v4217 = vunpack.c.h.b16 %v3912
        %v4218 = vunpack.c.l.b16 %v3913
        %v4219 = vunpack.c.h.b16 %v3913
        %v4220 = vunpack.c.l.b16 %v3914
        %v4221 = vunpack.c.h.b16 %v3914
        %v4222 = vunpack.c.l.b16 %v3915
        %v4223 = vunpack.c.h.b16 %v3915
        %v4224 = vunpack.c.l.b16 %v3916
        %v4225 = vunpack.c.h.b16 %v3916
        %v4226 = vunpack.c.l.b16 %v3917
        %v4227 = vunpack.c.h.b16 %v3917
        %v4228 = vunpack.c.l.b16 %v3918
        %v4229 = vunpack.c.h.b16 %v3918
        %v4230 = vunpack.c.l.b16 %v3919
        %v4231 = vunpack.c.h.b16 %v3919
        %v4232 = vunpack.c.l.b16 %v3920
        %v4233 = vunpack.c.h.b16 %v3920
        %v4234 = vunpack.c.l.b16 %v3921
        %v4235 = vunpack.c.h.b16 %v3921
        %v4236 = vunpack.c.l.b16 %v3922
        %v4237 = vunpack.c.h.b16 %v3922
        %v4238 = vunpack.c.l.b16 %v3923
        %v4239 = vunpack.c.h.b16 %v3923
        %v4240 = vunpack.c.l.b16 %v3924
        %v4241 = vunpack.c.h.b16 %v3924
        %v4242 = vunpack.c.l.b16 %v3925
        %v4243 = vunpack.c.h.b16 %v3925
        %v4244 = vunpack.c.l.b16 %v3926
        %v4245 = vunpack.c.h.b16 %v3926
        %v4246 = vunpack.c.l.b16 %v3927
        %v4247 = vunpack.c.h.b16 %v3927
        %v4248 = vunpack.c.l.b16 %v3928
        %v4249 = vunpack.c.h.b16 %v3928
        %v4250 = vunpack.c.l.b16 %v3929
        %v4251 = vunpack.c.h.b16 %v3929
        %v4252 = vunpack.c.l.b16 %v3930
        %v4253 = vunpack.c.h.b16 %v3930
        %v4254 = vunpack.c.l.b16 %v3931
        %v4255 = vunpack.c.h.b16 %v3931
        %v4256 = vunpack.c.l.b16 %v3932
        %v4257 = vunpack.c.h.b16 %v3932
        %v4258 = vunpack.c.l.b16 %v3933
        %v4259 = vunpack.c.h.b16 %v3933
        %v4260 = vunpack.c.l.b16 %v3934
        %v4261 = vunpack.c.h.b16 %v3934
        %v4262 = vunpack.c.l.b16 %v3935
        %v4263 = vunpack.c.h.b16 %v3935
        %v4264 = vunpack.c.l.b16 %v3936
        %v4265 = vunpack.c.h.b16 %v3936
        %v4266 = vunpack.c.l.b16 %v3937
        %v4267 = vunpack.c.h.b16 %v3937
        %v4268 = vunpack.c.l.b16 %v3938
        %v4269 = vunpack.c.h.b16 %v3938
        %v4270 = vunpack.c.l.b16 %v3939
        %v4271 = vunpack.c.h.b16 %v3939
        %v4272 = vunpack.c.l.b16 %v3940
        %v4273 = vunpack.c.h.b16 %v3940
        %v4274 = vunpack.c.l.b16 %v3941
        %v4275 = vunpack.c.h.b16 %v3941
        %v4276 = vunpack.c.l.b16 %v3942
        %v4277 = vunpack.c.h.b16 %v3942
        %v4278 = vunpack.c.l.b16 %v3943
        %v4279 = vunpack.c.h.b16 %v3943
        %v4280 = vunpack.c.l.b16 %v3944
        %v4281 = vunpack.c.h.b16 %v3944
        %v4282 = vunpack.c.l.b16 %v3945
        %v4283 = vunpack.c.h.b16 %v3945
        %v4284 = vunpack.c.l.b16 %v3946
        %v4285 = vunpack.c.h.b16 %v3946
        %v4286 = vunpack.c.l.b16 %v3947
        %v4287 = vunpack.c.h.b16 %v3947
        %v4288 = vunpack.c.l.b16 %v3948
        %v4289 = vunpack.c.h.b16 %v3948
        %v4290 = vunpack.c.l.b16 %v3949
        %v4291 = vunpack.c.h.b16 %v3949
        %v4292 = vunpack.c.l.b16 %v3950
        %v4293 = vunpack.c.h.b16 %v3950
        %v4294 = vunpack.c.l.b16 %v3951
        %v4295 = vunpack.c.h.b16 %v3951
        %v4296 = vunpack.c.l.b16 %v3952
        %v4297 = vunpack.c.h.b16 %v3952
        %v4298 = vunpack.c.l.b16 %v3953
        %v4299 = vunpack.c.h.b16 %v3953
        %v4300 = vunpack.c.l.b16 %v3954
        %v4301 = vunpack.c.h.b16 %v3954
        %v4302 = vunpack.c.l.b16 %v3955
        %v4303 = vunpack.c.h.b16 %v3955
        %v4304 = vunpack.c.l.b16 %v3956
        %v4305 = vunpack.c.h.b16 %v3956
        %v4306 = vunpack.c.l.b16 %v3957
        %v4307 = vunpack.c.h.b16 %v3957
        %v4308 = vunpack.c.l.b16 %v3958
        %v4309 = vunpack.c.h.b16 %v3958
        %v4310 = vunpack.c.l.b16 %v3959
        %v4311 = vunpack.c.h.b16 %v3959
        %v4312 = vunpack.c.l.b16 %v3960
        %v4313 = vunpack.c.h.b16 %v3960
        %v4314 = vunpack.c.l.b16 %v3961
        %v4315 = vunpack.c.h.b16 %v3961
        %v4316 = vunpack.c.l.b16 %v3962
        %v4317 = vunpack.c.h.b16 %v3962
        %v4318 = vunpack.c.l.b16 %v3963
        %v4319 = vunpack.c.h.b16 %v3963
        %v4320 = vunpack.c.l.b16 %v3964
        %v4321 = vunpack.c.h.b16 %v3964
        %v4322 = vunpack.c.l.b16 %v3965
        %v4323 = vunpack.c.h.b16 %v3965
        %v4324 = vunpack.c.l.b16 %v3966
        %v4325 = vunpack.c.h.b16 %v3966
        %v4326 = vunpack.c.l.b16 %v3967
        %v4327 = vunpack.c.h.b16 %v3967
        %v4328 = vunpack.c.l.b16 %v3968
        %v4329 = vunpack.c.h.b16 %v3968
        %v4330 = vunpack.c.l.b16 %v3969
        %v4331 = vunpack.c.h.b16 %v3969
        %v4332 = vunpack.c.l.b16 %v3970
        %v4333 = vunpack.c.h.b16 %v3970
        %v4334 = vunpack.c.l.b16 %v3971
        %v4335 = vunpack.c.h.b16 %v3971
        %v4336 = vunpack.c.l.b16 %v3972
        %v4337 = vunpack.c.h.b16 %v3972
        %v4338 = vunpack.c.l.b16 %v3973
        %v4339 = vunpack.c.h.b16 %v3973
        %v4340 = vunpack.c.l.b16 %v3974
        %v4341 = vunpack.c.h.b16 %v3974
        %v4342 = vunpack.c.l.b16 %v3975
        %v4343 = vunpack.c.h.b16 %v3975
        %v4344 = vunpack.c.l.b16 %v3976
        %v4345 = vunpack.c.h.b16 %v3976
        %v4346 = vunpack.c.l.b16 %v3977
        %v4347 = vunpack.c.h.b16 %v3977
        %v4348 = vunpack.c.l.b16 %v3978
        %v4349 = vunpack.c.h.b16 %v3978
        %v4350 = vunpack.c.l.b16 %v3979
        %v4351 = vunpack.c.h.b16 %v3979
        %v4352 = vunpack.c.l.b16 %v3980
        %v4353 = vunpack.c.h.b16 %v3980
        %v4354 = vunpack.c.l.b16 %v3981
        %v4355 = vunpack.c.h.b16 %v3981
        %v4356 = vunpack.c.l.b16 %v3982
        %v4357 = vunpack.c.h.b16 %v3982
        %v4358 = vunpack.c.l.b16 %v3983
        %v4359 = vunpack.c.h.b16 %v3983
        %v4360 = vunpack.c.l.b16 %v3984
        %v4361 = vunpack.c.h.b16 %v3984
        %v4362 = vunpack.c.l.b16 %v3985
        %v4363 = vunpack.c.h.b16 %v3985
        %v4364 = vunpack.c.l.b16 %v3986
        %v4365 = vunpack.c.h.b16 %v3986
        %v4366 = vunpack.c.l.b16 %v3987
        %v4367 = vunpack.c.h.b16 %v3987
        %v4368 = vunpack.c.l.b16 %v3988
        %v4369 = vunpack.c.h.b16 %v3988
        %v4370 = vunpack.c.l.b16 %v3989
        %v4371 = vunpack.c.h.b16 %v3989
        %v4372 = vunpack.c.l.b16 %v3990
        %v4373 = vunpack.c.h.b16 %v3990
        %v4374 = vunpack.c.l.b16 %v3991
        %v4375 = vunpack.c.h.b16 %v3991
        %v4376 = vunpack.c.l.b16 %v3992
        %v4377 = vunpack.c.h.b16 %v3992
        %v4378 = vunpack.c.l.b16 %v3993
        %v4379 = vunpack.c.h.b16 %v3993
        %v4380 = vunpack.c.l.b16 %v3994
        %v4381 = vunpack.c.h.b16 %v3994
        %v4382 = vunpack.c.l.b16 %v3995
        %v4383 = vunpack.c.h.b16 %v3995
        %v4384 = vunpack.c.l.b16 %v3996
        %v4385 = vunpack.c.h.b16 %v3996
        %v4386 = vunpack.c.l.b16 %v3997
        %v4387 = vunpack.c.h.b16 %v3997
        %v4388 = vunpack.c.l.b16 %v3998
        %v4389 = vunpack.c.h.b16 %v3998
        %v4390 = vunpack.c.l.b16 %v3999
        %v4391 = vunpack.c.h.b16 %v3999
        %v4392 = vunpack.c.l.b16 %v4000
        %v4393 = vunpack.c.h.b16 %v4000
        %v4394 = vunpack.c.l.b16 %v4001
        %v4395 = vunpack.c.h.b16 %v4001
        %v4396 = vunpack.c.l.b16 %v4002
        %v4397 = vunpack.c.h.b16 %v4002
        %v4398 = vunpack.c.l.b16 %v4003
        %v4399 = vunpack.c.h.b16 %v4003
        %v4400 = vunpack.c.l.b16 %v4004
        %v4401 = vunpack.c.h.b16 %v4004
        %v4402 = vunpack.c.l.b16 %v4005
        %v4403 = vunpack.c.h.b16 %v4005
        %v4404 = vunpack.c.l.b16 %v4006
        %v4405 = vunpack.c.h.b16 %v4006
        %v4406 = vunpack.c.l.b16 %v4007
        %v4407 = vunpack.c.h.b16 %v4007
        %v4408 = vunpack.c.l.b16 %v4008
        %v4409 = vunpack.c.h.b16 %v4008
        %v4410 = vunpack.c.l.b16 %v4009
        %v4411 = vunpack.c.h.b16 %v4009
        %v4412 = vunpack.c.l.b16 %v4010
        %v4413 = vunpack.c.h.b16 %v4010
        %v4414 = vunpack.c.l.b16 %v4011
        %v4415 = vunpack.c.h.b16 %v4011
        %v4416 = vunpack.c.l.b16 %v4012
        %v4417 = vunpack.c.h.b16 %v4012
        %v4418 = vunpack.c.l.b16 %v4013
        %v4419 = vunpack.c.h.b16 %v4013
        %v4420 = vunpack.c.l.b16 %v4014
        %v4421 = vunpack.c.h.b16 %v4014
        %v4422 = vunpack.c.l.b16 %v4015
        %v4423 = vunpack.c.h.b16 %v4015
        %v4424 = vunpack.c.l.b16 %v4016
        %v4425 = vunpack.c.h.b16 %v4016
        %v4426 = vunpack.c.l.b16 %v4017
        %v4427 = vunpack.c.h.b16 %v4017
        %v4428 = vpack.c.b16 %v4176, %v4172
        %v4429 = vpack.c.b16 %v4177, %v4173
        %v4430 = vpack.c.b16 %v4178, %v4174
        %v4431 = vpack.c.b16 %v4179, %v4175
        %v4432 = vpack.c.b16 %v4184, %v4180
        %v4433 = vpack.c.b16 %v4185, %v4181
        %v4434 = vpack.c.b16 %v4186, %v4182
        %v4435 = vpack.c.b16 %v4187, %v4183
        %v4436 = vpack.c.b16 %v4192, %v4188
        %v4437 = vpack.c.b16 %v4193, %v4189
        %v4438 = vpack.c.b16 %v4194, %v4190
        %v4439 = vpack.c.b16 %v4195, %v4191
        %v4440 = vpack.c.b16 %v4200, %v4196
        %v4441 = vpack.c.b16 %v4201, %v4197
        %v4442 = vpack.c.b16 %v4202, %v4198
        %v4443 = vpack.c.b16 %v4203, %v4199
        %v4444 = vpack.c.b16 %v4208, %v4204
        %v4445 = vpack.c.b16 %v4209, %v4205
        %v4446 = vpack.c.b16 %v4210, %v4206
        %v4447 = vpack.c.b16 %v4211, %v4207
        %v4448 = vpack.c.b16 %v4216, %v4212
        %v4449 = vpack.c.b16 %v4217, %v4213
        %v4450 = vpack.c.b16 %v4218, %v4214
        %v4451 = vpack.c.b16 %v4219, %v4215
        %v4452 = vpack.c.b16 %v4224, %v4220
        %v4453 = vpack.c.b16 %v4225, %v4221
        %v4454 = vpack.c.b16 %v4226, %v4222
        %v4455 = vpack.c.b16 %v4227, %v4223
        %v4456 = vpack.c.b16 %v4232, %v4228
        %v4457 = vpack.c.b16 %v4233, %v4229
        %v4458 = vpack.c.b16 %v4234, %v4230
        %v4459 = vpack.c.b16 %v4235, %v4231
        %v4460 = vpack.c.b16 %v4240, %v4236
        %v4461 = vpack.c.b16 %v4241, %v4237
        %v4462 = vpack.c.b16 %v4242, %v4238
        %v4463 = vpack.c.b16 %v4243, %v4239
        %v4464 = vpack.c.b16 %v4248, %v4244
        %v4465 = vpack.c.b16 %v4249, %v4245
        %v4466 = vpack.c.b16 %v4250, %v4246
        %v4467 = vpack.c.b16 %v4251, %v4247
        %v4468 = vpack.c.b16 %v4256, %v4252
        %v4469 = vpack.c.b16 %v4257, %v4253
        %v4470 = vpack.c.b16 %v4258, %v4254
        %v4471 = vpack.c.b16 %v4259, %v4255
        %v4472 = vpack.c.b16 %v4264, %v4260
        %v4473 = vpack.c.b16 %v4265, %v4261
        %v4474 = vpack.c.b16 %v4266, %v4262
        %v4475 = vpack.c.b16 %v4267, %v4263
        %v4476 = vpack.c.b16 %v4272, %v4268
        %v4477 = vpack.c.b16 %v4273, %v4269
        %v4478 = vpack.c.b16 %v4274, %v4270
        %v4479 = vpack.c.b16 %v4275, %v4271
        %v4480 = vpack.c.b16 %v4280, %v4276
        %v4481 = vpack.c.b16 %v4281, %v4277
        %v4482 = vpack.c.b16 %v4282, %v4278
        %v4483 = vpack.c.b16 %v4283, %v4279
        %v4484 = vpack.c.b16 %v4288, %v4284
        %v4485 = vpack.c.b16 %v4289, %v4285
        %v4486 = vpack.c.b16 %v4290, %v4286
        %v4487 = vpack.c.b16 %v4291, %v4287
        %v4488 = vpack.c.b16 %v4296, %v4292
        %v4489 = vpack.c.b16 %v4297, %v4293
        %v4490 = vpack.c.b16 %v4298, %v4294
        %v4491 = vpack.c.b16 %v4299, %v4295
        %v4492 = vpack.c.b16 %v4304, %v4300
        %v4493 = vpack.c.b16 %v4305, %v4301
        %v4494 = vpack.c.b16 %v4306, %v4302
        %v4495 = vpack.c.b16 %v4307, %v4303
        %v4496 = vpack.c.b16 %v4312, %v4308
        %v4497 = vpack.c.b16 %v4313, %v4309
        %v4498 = vpack.c.b16 %v4314, %v4310
        %v4499 = vpack.c.b16 %v4315, %v4311
        %v4500 = vpack.c.b16 %v4320, %v4316
        %v4501 = vpack.c.b16 %v4321, %v4317
        %v4502 = vpack.c.b16 %v4322, %v4318
        %v4503 = vpack.c.b16 %v4323, %v4319
        %v4504 = vpack.c.b16 %v4328, %v4324
        %v4505 = vpack.c.b16 %v4329, %v4325
        %v4506 = vpack.c.b16 %v4330, %v4326
        %v4507 = vpack.c.b16 %v4331, %v4327
        %v4508 = vpack.c.b16 %v4336, %v4332
        %v4509 = vpack.c.b16 %v4337, %v4333
        %v4510 = vpack.c.b16 %v4338, %v4334
        %v4511 = vpack.c.b16 %v4339, %v4335
        %v4512 = vpack.c.b16 %v4344, %v4340
        %v4513 = vpack.c.b16 %v4345, %v4341
        %v4514 = vpack.c.b16 %v4346, %v4342
        %v4515 = vpack.c.b16 %v4347, %v4343
        %v4516 = vpack.c.b16 %v4352, %v4348
        %v4517 = vpack.c.b16 %v4353, %v4349
        %v4518 = vpack.c.b16 %v4354, %v4350
        %v4519 = vpack.c.b16 %v4355, %v4351
        %v4520 = vpack.c.b16 %v4360, %v4356
        %v4521 = vpack.c.b16 %v4361, %v4357
        %v4522 = vpack.c.b16 %v4362, %v4358
        %v4523 = vpack.c.b16 %v4363, %v4359
        %v4524 = vpack.c.b16 %v4368, %v4364
        %v4525 = vpack.c.b16 %v4369, %v4365
        %v4526 = vpack.c.b16 %v4370, %v4366
        %v4527 = vpack.c.b16 %v4371, %v4367
        %v4528 = vpack.c.b16 %v4376, %v4372
        %v4529 = vpack.c.b16 %v4377, %v4373
        %v4530 = vpack.c.b16 %v4378, %v4374
        %v4531 = vpack.c.b16 %v4379, %v4375
        %v4532 = vpack.c.b16 %v4384, %v4380
        %v4533 = vpack.c.b16 %v4385, %v4381
        %v4534 = vpack.c.b16 %v4386, %v4382
        %v4535 = vpack.c.b16 %v4387, %v4383
        %v4536 = vpack.c.b16 %v4392, %v4388
        %v4537 = vpack.c.b16 %v4393, %v4389
        %v4538 = vpack.c.b16 %v4394, %v4390
        %v4539 = vpack.c.b16 %v4395, %v4391
        %v4540 = vpack.c.b16 %v4400, %v4396
        %v4541 = vpack.c.b16 %v4401, %v4397
        %v4542 = vpack.c.b16 %v4402, %v4398
        %v4543 = vpack.c.b16 %v4403, %v4399
        %v4544 = vpack.c.b16 %v4408, %v4404
        %v4545 = vpack.c.b16 %v4409, %v4405
        %v4546 = vpack.c.b16 %v4410, %v4406
        %v4547 = vpack.c.b16 %v4411, %v4407
        %v4548 = vpack.c.b16 %v4416, %v4412
        %v4549 = vpack.c.b16 %v4417, %v4413
        %v4550 = vpack.c.b16 %v4418, %v4414
        %v4551 = vpack.c.b16 %v4419, %v4415
        %v4552 = vpack.c.b16 %v4424, %v4420
        %v4553 = vpack.c.b16 %v4425, %v4421
        %v4554 = vpack.c.b16 %v4426, %v4422
        %v4555 = vpack.c.b16 %v4427, %v4423
        %4684 = vmatprep.subr.bf16.mxu0 %v4429
        %4685 = vmatpush1.bf16.msra.mxu0 %v4428
        %4686 = vmatprep.subr.bf16.mxu0 %v4433
        %4687 = vmatpush1.bf16.msra.mxu0 %v4432
        %4688 = vmatprep.subr.bf16.mxu0 %v4437
        %4689 = vmatpush1.bf16.msra.mxu0 %v4436
        %4690 = vmatprep.subr.bf16.mxu0 %v4441
        %4691 = vmatpush1.bf16.msra.mxu0 %v4440
        %4692 = vmatprep.subr.bf16.mxu0 %v4445
        %4693 = vmatpush1.bf16.msra.mxu0 %v4444
        %4694 = vmatprep.subr.bf16.mxu0 %v4449
        %4695 = vmatpush1.bf16.msra.mxu0 %v4448
        %4696 = vmatprep.subr.bf16.mxu0 %v4453
        %4697 = vmatpush1.bf16.msra.mxu0 %v4452
        %4698 = vmatprep.subr.bf16.mxu0 %v4457
        %4699 = vmatpush1.bf16.msra.mxu0 %v4456
        %4700 = vmatprep.subr.bf16.mxu0 %v4461
        %4701 = vmatpush1.bf16.msra.mxu0 %v4460
        %4702 = vmatprep.subr.bf16.mxu0 %v4465
        %4703 = vmatpush1.bf16.msra.mxu0 %v4464
        %4704 = vmatprep.subr.bf16.mxu0 %v4469
        %4705 = vmatpush1.bf16.msra.mxu0 %v4468
        %4706 = vmatprep.subr.bf16.mxu0 %v4473
        %4707 = vmatpush1.bf16.msra.mxu0 %v4472
        %4708 = vmatprep.subr.bf16.mxu0 %v4477
        %4709 = vmatpush1.bf16.msra.mxu0 %v4476
        %4710 = vmatprep.subr.bf16.mxu0 %v4481
        %4711 = vmatpush1.bf16.msra.mxu0 %v4480
        %4712 = vmatprep.subr.bf16.mxu0 %v4485
        %4713 = vmatpush1.bf16.msra.mxu0 %v4484
        %4714 = vmatprep.subr.bf16.mxu0 %v4489
        %4715 = vmatpush1.bf16.msra.mxu0 %v4488
        %4716 = vmatprep.mubr.bf16.mxu0 %v4037
        %4717 = vmatmul.mubr.bf16.gmra.mrb[0].mxu0 %v4036
        %v4718 = vpop.f32.mrb[0].mxu0
        %v4719 = vadd.f32 0.0, %v4718
        %v4720 = vpop.f32.mrb[0].mxu0
        %v4721 = vadd.f32 0.0, %v4720
        %v4722 = vpop.f32.mrb[0].mxu0
        %v4723 = vpop.f32.mrb[0].mxu0
        %4724 = vdwg.mxu0
        %4725 = vmatprep.subr.bf16.mxu0 %v4493
        %4726 = vmatpush1.bf16.msra.mxu0 %v4492
        %4727 = vmatprep.subr.bf16.mxu0 %v4497
        %4728 = vmatpush1.bf16.msra.mxu0 %v4496
        %4729 = vmatprep.subr.bf16.mxu0 %v4501
        %4730 = vmatpush1.bf16.msra.mxu0 %v4500
        %4731 = vmatprep.subr.bf16.mxu0 %v4505
        %4732 = vmatpush1.bf16.msra.mxu0 %v4504
        %4733 = vmatprep.subr.bf16.mxu0 %v4509
        %4734 = vmatpush1.bf16.msra.mxu0 %v4508
        %4735 = vmatprep.subr.bf16.mxu0 %v4513
        %4736 = vmatpush1.bf16.msra.mxu0 %v4512
        %4737 = vmatprep.subr.bf16.mxu0 %v4517
        %4738 = vmatpush1.bf16.msra.mxu0 %v4516
        %4739 = vmatprep.subr.bf16.mxu0 %v4521
        %4740 = vmatpush1.bf16.msra.mxu0 %v4520
        %4741 = vmatprep.subr.bf16.mxu0 %v4525
        %4742 = vmatpush1.bf16.msra.mxu0 %v4524
        %4743 = vmatprep.subr.bf16.mxu0 %v4529
        %4744 = vmatpush1.bf16.msra.mxu0 %v4528
        %4745 = vmatprep.subr.bf16.mxu0 %v4533
        %4746 = vmatpush1.bf16.msra.mxu0 %v4532
        %4747 = vmatprep.subr.bf16.mxu0 %v4537
        %4748 = vmatpush1.bf16.msra.mxu0 %v4536
        %4749 = vmatprep.subr.bf16.mxu0 %v4541
        %4750 = vmatpush1.bf16.msra.mxu0 %v4540
        %4751 = vmatprep.subr.bf16.mxu0 %v4545
        %4752 = vmatpush1.bf16.msra.mxu0 %v4544
        %4753 = vmatprep.subr.bf16.mxu0 %v4549
        %4754 = vmatpush1.bf16.msra.mxu0 %v4548
        %4755 = vmatprep.subr.bf16.mxu0 %v4553
        %4756 = vmatpush1.bf16.msra.mxu0 %v4552
        %4757 = vmatprep.mubr.bf16.mxu0 %v4039
        %4758 = vmatmul.mubr.bf16.gmra.mrb[0].mxu0 %v4038
        %v4759 = vpop.f32.mrb[0].mxu0
        %v4760 = vadd.f32 %v4719, %v4759
        %v4761 = vpop.f32.mrb[0].mxu0
        %v4762 = vadd.f32 %v4721, %v4761
        %v4763 = vpop.f32.mrb[0].mxu0
        %v4764 = vpop.f32.mrb[0].mxu0
        %4765 = vdwg.mxu0
        %4766 = vmatprep.subr.bf16.mxu0 %v4431
        %4767 = vmatpush1.bf16.msra.mxu0 %v4430
        %4768 = vmatprep.subr.bf16.mxu0 %v4435
        %4769 = vmatpush1.bf16.msra.mxu0 %v4434
        %4770 = vmatprep.subr.bf16.mxu0 %v4439
        %4771 = vmatpush1.bf16.msra.mxu0 %v4438
        %4772 = vmatprep.subr.bf16.mxu0 %v4443
        %4773 = vmatpush1.bf16.msra.mxu0 %v4442
        %4774 = vmatprep.subr.bf16.mxu0 %v4447
        %4775 = vmatpush1.bf16.msra.mxu0 %v4446
        %4776 = vmatprep.subr.bf16.mxu0 %v4451
        %4777 = vmatpush1.bf16.msra.mxu0 %v4450
        %4778 = vmatprep.subr.bf16.mxu0 %v4455
        %4779 = vmatpush1.bf16.msra.mxu0 %v4454
        %4780 = vmatprep.subr.bf16.mxu0 %v4459
        %4781 = vmatpush1.bf16.msra.mxu0 %v4458
        %4782 = vmatprep.subr.bf16.mxu0 %v4463
        %4783 = vmatpush1.bf16.msra.mxu0 %v4462
        %4784 = vmatprep.subr.bf16.mxu0 %v4467
        %4785 = vmatpush1.bf16.msra.mxu0 %v4466
        %4786 = vmatprep.subr.bf16.mxu0 %v4471
        %4787 = vmatpush1.bf16.msra.mxu0 %v4470
        %4788 = vmatprep.subr.bf16.mxu0 %v4475
        %4789 = vmatpush1.bf16.msra.mxu0 %v4474
        %4790 = vmatprep.subr.bf16.mxu0 %v4479
        %4791 = vmatpush1.bf16.msra.mxu0 %v4478
        %4792 = vmatprep.subr.bf16.mxu0 %v4483
        %4793 = vmatpush1.bf16.msra.mxu0 %v4482
        %4794 = vmatprep.subr.bf16.mxu0 %v4487
        %4795 = vmatpush1.bf16.msra.mxu0 %v4486
        %4796 = vmatprep.subr.bf16.mxu0 %v4491
        %4797 = vmatpush1.bf16.msra.mxu0 %v4490
        %4798 = vmatprep.mubr.bf16.mxu0 %v4037
        %4799 = vmatmul.mubr.bf16.gmra.mrb[0].mxu0 %v4036
        %v4800 = vpop.f32.mrb[0].mxu0
        %v4801 = vadd.f32 0.0, %v4800
        %v4802 = vpop.f32.mrb[0].mxu0
        %v4803 = vadd.f32 0.0, %v4802
        %v4804 = vpop.f32.mrb[0].mxu0
        %v4805 = vpop.f32.mrb[0].mxu0
        %4806 = vdwg.mxu0
        %4807 = vmatprep.subr.bf16.mxu0 %v4495
        %4808 = vmatpush1.bf16.msra.mxu0 %v4494
        %4809 = vmatprep.subr.bf16.mxu0 %v4499
        %4810 = vmatpush1.bf16.msra.mxu0 %v4498
        %4811 = vmatprep.subr.bf16.mxu0 %v4503
        %4812 = vmatpush1.bf16.msra.mxu0 %v4502
        %4813 = vmatprep.subr.bf16.mxu0 %v4507
        %4814 = vmatpush1.bf16.msra.mxu0 %v4506
        %4815 = vmatprep.subr.bf16.mxu0 %v4511
        %4816 = vmatpush1.bf16.msra.mxu0 %v4510
        %4817 = vmatprep.subr.bf16.mxu0 %v4515
        %4818 = vmatpush1.bf16.msra.mxu0 %v4514
        %4819 = vmatprep.subr.bf16.mxu0 %v4519
        %4820 = vmatpush1.bf16.msra.mxu0 %v4518
        %4821 = vmatprep.subr.bf16.mxu0 %v4523
        %4822 = vmatpush1.bf16.msra.mxu0 %v4522
        %4823 = vmatprep.subr.bf16.mxu0 %v4527
        %4824 = vmatpush1.bf16.msra.mxu0 %v4526
        %4825 = vmatprep.subr.bf16.mxu0 %v4531
        %4826 = vmatpush1.bf16.msra.mxu0 %v4530
        %4827 = vmatprep.subr.bf16.mxu0 %v4535
        %4828 = vmatpush1.bf16.msra.mxu0 %v4534
        %4829 = vmatprep.subr.bf16.mxu0 %v4539
        %4830 = vmatpush1.bf16.msra.mxu0 %v4538
        %4831 = vmatprep.subr.bf16.mxu0 %v4543
        %4832 = vmatpush1.bf16.msra.mxu0 %v4542
        %4833 = vmatprep.subr.bf16.mxu0 %v4547
        %4834 = vmatpush1.bf16.msra.mxu0 %v4546
        %4835 = vmatprep.subr.bf16.mxu0 %v4551
        %4836 = vmatpush1.bf16.msra.mxu0 %v4550
        %4837 = vmatprep.subr.bf16.mxu0 %v4555
        %4838 = vmatpush1.bf16.msra.mxu0 %v4554
        %4839 = vmatprep.mubr.bf16.mxu0 %v4039
        %4840 = vmatmul.mubr.bf16.gmra.mrb[0].mxu0 %v4038
        %v4841 = vpop.f32.mrb[0].mxu0
        %v4842 = vadd.f32 %v4801, %v4841
        %v4843 = vpop.f32.mrb[0].mxu0
        %v4844 = vadd.f32 %v4803, %v4843
        %v4845 = vpop.f32.mrb[0].mxu0
        %v4846 = vpop.f32.mrb[0].mxu0
        %4847 = vdwg.mxu0
        %v4848 = vadd.f32 %v3800, %v4760
        %v4849 = vadd.f32 %v3802, %v4762
        %v4850 = vadd.f32 %v3882, %v4842
        %v4851 = vadd.f32 %v3884, %v4844
        %v4852 = vld [vmem:[%s6] sm:$0xff]
        %v4853 = vld [vmem:[%s6 + $0x8] sm:$0xff]
        %v4854 = vld [vmem:[%s6 + $0x10] sm:$0xff]
        %v4855 = vld [vmem:[%s6 + $0x18] sm:$0xff]
        %v4856 = vld [vmem:[%s6 + $0x20] sm:$0xff]
        %v4857 = vld [vmem:[%s6 + $0x28] sm:$0xff]
        %v4858 = vld [vmem:[%s6 + $0x30] sm:$0xff]
        %v4859 = vld [vmem:[%s6 + $0x38] sm:$0xff]
        %v4860 = vld [vmem:[%s6 + $0x40] sm:$0xff]
        %v4861 = vld [vmem:[%s6 + $0x48] sm:$0xff]
        %v4862 = vld [vmem:[%s6 + $0x50] sm:$0xff]
        %v4863 = vld [vmem:[%s6 + $0x58] sm:$0xff]
        %v4864 = vld [vmem:[%s6 + $0x60] sm:$0xff]
        %v4865 = vld [vmem:[%s6 + $0x68] sm:$0xff]
        %v4866 = vld [vmem:[%s6 + $0x70] sm:$0xff]
        %v4867 = vld [vmem:[%s6 + $0x78] sm:$0xff]
        %v4868 = vld [vmem:[%s6 + $0x80] sm:$0xff]
        %v4869 = vld [vmem:[%s6 + $0x88] sm:$0xff]
        %v4870 = vld [vmem:[%s6 + $0x90] sm:$0xff]
        %v4871 = vld [vmem:[%s6 + $0x98] sm:$0xff]
        %v4872 = vld [vmem:[%s6 + $0xa0] sm:$0xff]
        %v4873 = vld [vmem:[%s6 + $0xa8] sm:$0xff]
        %v4874 = vld [vmem:[%s6 + $0xb0] sm:$0xff]
        %v4875 = vld [vmem:[%s6 + $0xb8] sm:$0xff]
        %v4876 = vld [vmem:[%s6 + $0xc0] sm:$0xff]
        %v4877 = vld [vmem:[%s6 + $0xc8] sm:$0xff]
        %v4878 = vld [vmem:[%s6 + $0xd0] sm:$0xff]
        %v4879 = vld [vmem:[%s6 + $0xd8] sm:$0xff]
        %v4880 = vld [vmem:[%s6 + $0xe0] sm:$0xff]
        %v4881 = vld [vmem:[%s6 + $0xe8] sm:$0xff]
        %v4882 = vld [vmem:[%s6 + $0xf0] sm:$0xff]
        %v4883 = vld [vmem:[%s6 + $0xf8] sm:$0xff]
        %v4884 = vld [vmem:[%s6 + $0x100] sm:$0xff]
        %v4885 = vld [vmem:[%s6 + $0x108] sm:$0xff]
        %v4886 = vld [vmem:[%s6 + $0x110] sm:$0xff]
        %v4887 = vld [vmem:[%s6 + $0x118] sm:$0xff]
        %v4888 = vld [vmem:[%s6 + $0x120] sm:$0xff]
        %v4889 = vld [vmem:[%s6 + $0x128] sm:$0xff]
        %v4890 = vld [vmem:[%s6 + $0x130] sm:$0xff]
        %v4891 = vld [vmem:[%s6 + $0x138] sm:$0xff]
        %v4892 = vld [vmem:[%s6 + $0x140] sm:$0xff]
        %v4893 = vld [vmem:[%s6 + $0x148] sm:$0xff]
        %v4894 = vld [vmem:[%s6 + $0x150] sm:$0xff]
        %v4895 = vld [vmem:[%s6 + $0x158] sm:$0xff]
        %v4896 = vld [vmem:[%s6 + $0x160] sm:$0xff]
        %v4897 = vld [vmem:[%s6 + $0x168] sm:$0xff]
        %v4898 = vld [vmem:[%s6 + $0x170] sm:$0xff]
        %v4899 = vld [vmem:[%s6 + $0x178] sm:$0xff]
        %v4900 = vld [vmem:[%s6 + $0x180] sm:$0xff]
        %v4901 = vld [vmem:[%s6 + $0x188] sm:$0xff]
        %v4902 = vld [vmem:[%s6 + $0x190] sm:$0xff]
        %v4903 = vld [vmem:[%s6 + $0x198] sm:$0xff]
        %v4904 = vld [vmem:[%s6 + $0x1a0] sm:$0xff]
        %v4905 = vld [vmem:[%s6 + $0x1a8] sm:$0xff]
        %v4906 = vld [vmem:[%s6 + $0x1b0] sm:$0xff]
        %v4907 = vld [vmem:[%s6 + $0x1b8] sm:$0xff]
        %v4908 = vld [vmem:[%s6 + $0x1c0] sm:$0xff]
        %v4909 = vld [vmem:[%s6 + $0x1c8] sm:$0xff]
        %v4910 = vld [vmem:[%s6 + $0x1d0] sm:$0xff]
        %v4911 = vld [vmem:[%s6 + $0x1d8] sm:$0xff]
        %v4912 = vld [vmem:[%s6 + $0x1e0] sm:$0xff]
        %v4913 = vld [vmem:[%s6 + $0x1e8] sm:$0xff]
        %v4914 = vld [vmem:[%s6 + $0x1f0] sm:$0xff]
        %v4915 = vld [vmem:[%s6 + $0x1f8] sm:$0xff]
        %v4916 = vld [vmem:[%s7] sm:$0xf]
        %v4918 = vlaneseq
        %v4919 = vshrl.u32 %v4918, 7
        %v4920 = vsub.s32 0, %v4919
        %v4921 = vrot.slane %v4916, %v4920
        %v4922 = vlaneseq
        %v4923 = vshrl.u32 %v4922, 7
        %v4924 = vsub.s32 1, %v4923
        %v4925 = vrot.slane %v4916, %v4924
        %v4926 = vlaneseq
        %v4927 = vshrl.u32 %v4926, 7
        %v4928 = vsub.s32 2, %v4927
        %v4929 = vrot.slane %v4916, %v4928
        %v4930 = vlaneseq
        %v4931 = vshrl.u32 %v4930, 7
        %v4932 = vsub.s32 3, %v4931
        %v4933 = vrot.slane %v4916, %v4932
        %v5002 = vunpack.c.l.b16 %v4852
        %v5003 = vunpack.c.h.b16 %v4852
        %v5004 = vunpack.c.l.b16 %v4853
        %v5005 = vunpack.c.h.b16 %v4853
        %v5006 = vunpack.c.l.b16 %v4854
        %v5007 = vunpack.c.h.b16 %v4854
        %v5008 = vunpack.c.l.b16 %v4855
        %v5009 = vunpack.c.h.b16 %v4855
        %v5010 = vunpack.c.l.b16 %v4856
        %v5011 = vunpack.c.h.b16 %v4856
        %v5012 = vunpack.c.l.b16 %v4857
        %v5013 = vunpack.c.h.b16 %v4857
        %v5014 = vunpack.c.l.b16 %v4858
        %v5015 = vunpack.c.h.b16 %v4858
        %v5016 = vunpack.c.l.b16 %v4859
        %v5017 = vunpack.c.h.b16 %v4859
        %v5018 = vunpack.c.l.b16 %v4860
        %v5019 = vunpack.c.h.b16 %v4860
        %v5020 = vunpack.c.l.b16 %v4861
        %v5021 = vunpack.c.h.b16 %v4861
        %v5022 = vunpack.c.l.b16 %v4862
        %v5023 = vunpack.c.h.b16 %v4862
        %v5024 = vunpack.c.l.b16 %v4863
        %v5025 = vunpack.c.h.b16 %v4863
        %v5026 = vunpack.c.l.b16 %v4864
        %v5027 = vunpack.c.h.b16 %v4864
        %v5028 = vunpack.c.l.b16 %v4865
        %v5029 = vunpack.c.h.b16 %v4865
        %v5030 = vunpack.c.l.b16 %v4866
        %v5031 = vunpack.c.h.b16 %v4866
        %v5032 = vunpack.c.l.b16 %v4867
        %v5033 = vunpack.c.h.b16 %v4867
        %v5034 = vunpack.c.l.b16 %v4868
        %v5035 = vunpack.c.h.b16 %v4868
        %v5036 = vunpack.c.l.b16 %v4869
        %v5037 = vunpack.c.h.b16 %v4869
        %v5038 = vunpack.c.l.b16 %v4870
        %v5039 = vunpack.c.h.b16 %v4870
        %v5040 = vunpack.c.l.b16 %v4871
        %v5041 = vunpack.c.h.b16 %v4871
        %v5042 = vunpack.c.l.b16 %v4872
        %v5043 = vunpack.c.h.b16 %v4872
        %v5044 = vunpack.c.l.b16 %v4873
        %v5045 = vunpack.c.h.b16 %v4873
        %v5046 = vunpack.c.l.b16 %v4874
        %v5047 = vunpack.c.h.b16 %v4874
        %v5048 = vunpack.c.l.b16 %v4875
        %v5049 = vunpack.c.h.b16 %v4875
        %v5050 = vunpack.c.l.b16 %v4876
        %v5051 = vunpack.c.h.b16 %v4876
        %v5052 = vunpack.c.l.b16 %v4877
        %v5053 = vunpack.c.h.b16 %v4877
        %v5054 = vunpack.c.l.b16 %v4878
        %v5055 = vunpack.c.h.b16 %v4878
        %v5056 = vunpack.c.l.b16 %v4879
        %v5057 = vunpack.c.h.b16 %v4879
        %v5058 = vunpack.c.l.b16 %v4880
        %v5059 = vunpack.c.h.b16 %v4880
        %v5060 = vunpack.c.l.b16 %v4881
        %v5061 = vunpack.c.h.b16 %v4881
        %v5062 = vunpack.c.l.b16 %v4882
        %v5063 = vunpack.c.h.b16 %v4882
        %v5064 = vunpack.c.l.b16 %v4883
        %v5065 = vunpack.c.h.b16 %v4883
        %v5066 = vunpack.c.l.b16 %v4884
        %v5067 = vunpack.c.h.b16 %v4884
        %v5068 = vunpack.c.l.b16 %v4885
        %v5069 = vunpack.c.h.b16 %v4885
        %v5070 = vunpack.c.l.b16 %v4886
        %v5071 = vunpack.c.h.b16 %v4886
        %v5072 = vunpack.c.l.b16 %v4887
        %v5073 = vunpack.c.h.b16 %v4887
        %v5074 = vunpack.c.l.b16 %v4888
        %v5075 = vunpack.c.h.b16 %v4888
        %v5076 = vunpack.c.l.b16 %v4889
        %v5077 = vunpack.c.h.b16 %v4889
        %v5078 = vunpack.c.l.b16 %v4890
        %v5079 = vunpack.c.h.b16 %v4890
        %v5080 = vunpack.c.l.b16 %v4891
        %v5081 = vunpack.c.h.b16 %v4891
        %v5082 = vunpack.c.l.b16 %v4892
        %v5083 = vunpack.c.h.b16 %v4892
        %v5084 = vunpack.c.l.b16 %v4893
        %v5085 = vunpack.c.h.b16 %v4893
        %v5086 = vunpack.c.l.b16 %v4894
        %v5087 = vunpack.c.h.b16 %v4894
        %v5088 = vunpack.c.l.b16 %v4895
        %v5089 = vunpack.c.h.b16 %v4895
        %v5090 = vunpack.c.l.b16 %v4896
        %v5091 = vunpack.c.h.b16 %v4896
        %v5092 = vunpack.c.l.b16 %v4897
        %v5093 = vunpack.c.h.b16 %v4897
        %v5094 = vunpack.c.l.b16 %v4898
        %v5095 = vunpack.c.h.b16 %v4898
        %v5096 = vunpack.c.l.b16 %v4899
        %v5097 = vunpack.c.h.b16 %v4899
        %v5098 = vunpack.c.l.b16 %v4900
        %v5099 = vunpack.c.h.b16 %v4900
        %v5100 = vunpack.c.l.b16 %v4901
        %v5101 = vunpack.c.h.b16 %v4901
        %v5102 = vunpack.c.l.b16 %v4902
        %v5103 = vunpack.c.h.b16 %v4902
        %v5104 = vunpack.c.l.b16 %v4903
        %v5105 = vunpack.c.h.b16 %v4903
        %v5106 = vunpack.c.l.b16 %v4904
        %v5107 = vunpack.c.h.b16 %v4904
        %v5108 = vunpack.c.l.b16 %v4905
        %v5109 = vunpack.c.h.b16 %v4905
        %v5110 = vunpack.c.l.b16 %v4906
        %v5111 = vunpack.c.h.b16 %v4906
        %v5112 = vunpack.c.l.b16 %v4907
        %v5113 = vunpack.c.h.b16 %v4907
        %v5114 = vunpack.c.l.b16 %v4908
        %v5115 = vunpack.c.h.b16 %v4908
        %v5116 = vunpack.c.l.b16 %v4909
        %v5117 = vunpack.c.h.b16 %v4909
        %v5118 = vunpack.c.l.b16 %v4910
        %v5119 = vunpack.c.h.b16 %v4910
        %v5120 = vunpack.c.l.b16 %v4911
        %v5121 = vunpack.c.h.b16 %v4911
        %v5122 = vunpack.c.l.b16 %v4912
        %v5123 = vunpack.c.h.b16 %v4912
        %v5124 = vunpack.c.l.b16 %v4913
        %v5125 = vunpack.c.h.b16 %v4913
        %v5126 = vunpack.c.l.b16 %v4914
        %v5127 = vunpack.c.h.b16 %v4914
        %v5128 = vunpack.c.l.b16 %v4915
        %v5129 = vunpack.c.h.b16 %v4915
        %v5130 = vpack.c.b16 %v5006, %v5002
        %v5131 = vpack.c.b16 %v5007, %v5003
        %v5132 = vpack.c.b16 %v5008, %v5004
        %v5133 = vpack.c.b16 %v5009, %v5005
        %v5134 = vpack.c.b16 %v5014, %v5010
        %v5135 = vpack.c.b16 %v5015, %v5011
        %v5136 = vpack.c.b16 %v5016, %v5012
        %v5137 = vpack.c.b16 %v5017, %v5013
        %v5138 = vpack.c.b16 %v5022, %v5018
        %v5139 = vpack.c.b16 %v5023, %v5019
        %v5140 = vpack.c.b16 %v5024, %v5020
        %v5141 = vpack.c.b16 %v5025, %v5021
        %v5142 = vpack.c.b16 %v5030, %v5026
        %v5143 = vpack.c.b16 %v5031, %v5027
        %v5144 = vpack.c.b16 %v5032, %v5028
        %v5145 = vpack.c.b16 %v5033, %v5029
        %v5146 = vpack.c.b16 %v5038, %v5034
        %v5147 = vpack.c.b16 %v5039, %v5035
        %v5148 = vpack.c.b16 %v5040, %v5036
        %v5149 = vpack.c.b16 %v5041, %v5037
        %v5150 = vpack.c.b16 %v5046, %v5042
        %v5151 = vpack.c.b16 %v5047, %v5043
        %v5152 = vpack.c.b16 %v5048, %v5044
        %v5153 = vpack.c.b16 %v5049, %v5045
        %v5154 = vpack.c.b16 %v5054, %v5050
        %v5155 = vpack.c.b16 %v5055, %v5051
        %v5156 = vpack.c.b16 %v5056, %v5052
        %v5157 = vpack.c.b16 %v5057, %v5053
        %v5158 = vpack.c.b16 %v5062, %v5058
        %v5159 = vpack.c.b16 %v5063, %v5059
        %v5160 = vpack.c.b16 %v5064, %v5060
        %v5161 = vpack.c.b16 %v5065, %v5061
        %v5162 = vpack.c.b16 %v5070, %v5066
        %v5163 = vpack.c.b16 %v5071, %v5067
        %v5164 = vpack.c.b16 %v5072, %v5068
        %v5165 = vpack.c.b16 %v5073, %v5069
        %v5166 = vpack.c.b16 %v5078, %v5074
        %v5167 = vpack.c.b16 %v5079, %v5075
        %v5168 = vpack.c.b16 %v5080, %v5076
        %v5169 = vpack.c.b16 %v5081, %v5077
        %v5170 = vpack.c.b16 %v5086, %v5082
        %v5171 = vpack.c.b16 %v5087, %v5083
        %v5172 = vpack.c.b16 %v5088, %v5084
        %v5173 = vpack.c.b16 %v5089, %v5085
        %v5174 = vpack.c.b16 %v5094, %v5090
        %v5175 = vpack.c.b16 %v5095, %v5091
        %v5176 = vpack.c.b16 %v5096, %v5092
        %v5177 = vpack.c.b16 %v5097, %v5093
        %v5178 = vpack.c.b16 %v5102, %v5098
        %v5179 = vpack.c.b16 %v5103, %v5099
        %v5180 = vpack.c.b16 %v5104, %v5100
        %v5181 = vpack.c.b16 %v5105, %v5101
        %v5182 = vpack.c.b16 %v5110, %v5106
        %v5183 = vpack.c.b16 %v5111, %v5107
        %v5184 = vpack.c.b16 %v5112, %v5108
        %v5185 = vpack.c.b16 %v5113, %v5109
        %v5186 = vpack.c.b16 %v5118, %v5114
        %v5187 = vpack.c.b16 %v5119, %v5115
        %v5188 = vpack.c.b16 %v5120, %v5116
        %v5189 = vpack.c.b16 %v5121, %v5117
        %v5190 = vpack.c.b16 %v5126, %v5122
        %v5191 = vpack.c.b16 %v5127, %v5123
        %v5192 = vpack.c.b16 %v5128, %v5124
        %v5193 = vpack.c.b16 %v5129, %v5125
        %5258 = vmatprep.subr.bf16.mxu0 %v5131
        %5259 = vmatpush1.bf16.msra.mxu0 %v5130
        %5260 = vmatprep.subr.bf16.mxu0 %v5135
        %5261 = vmatpush1.bf16.msra.mxu0 %v5134
        %5262 = vmatprep.subr.bf16.mxu0 %v5139
        %5263 = vmatpush1.bf16.msra.mxu0 %v5138
        %5264 = vmatprep.subr.bf16.mxu0 %v5143
        %5265 = vmatpush1.bf16.msra.mxu0 %v5142
        %5266 = vmatprep.subr.bf16.mxu0 %v5147
        %5267 = vmatpush1.bf16.msra.mxu0 %v5146
        %5268 = vmatprep.subr.bf16.mxu0 %v5151
        %5269 = vmatpush1.bf16.msra.mxu0 %v5150
        %5270 = vmatprep.subr.bf16.mxu0 %v5155
        %5271 = vmatpush1.bf16.msra.mxu0 %v5154
        %5272 = vmatprep.subr.bf16.mxu0 %v5159
        %5273 = vmatpush1.bf16.msra.mxu0 %v5158
        %5274 = vmatprep.subr.bf16.mxu0 %v5163
        %5275 = vmatpush1.bf16.msra.mxu0 %v5162
        %5276 = vmatprep.subr.bf16.mxu0 %v5167
        %5277 = vmatpush1.bf16.msra.mxu0 %v5166
        %5278 = vmatprep.subr.bf16.mxu0 %v5171
        %5279 = vmatpush1.bf16.msra.mxu0 %v5170
        %5280 = vmatprep.subr.bf16.mxu0 %v5175
        %5281 = vmatpush1.bf16.msra.mxu0 %v5174
        %5282 = vmatprep.subr.bf16.mxu0 %v5179
        %5283 = vmatpush1.bf16.msra.mxu0 %v5178
        %5284 = vmatprep.subr.bf16.mxu0 %v5183
        %5285 = vmatpush1.bf16.msra.mxu0 %v5182
        %5286 = vmatprep.subr.bf16.mxu0 %v5187
        %5287 = vmatpush1.bf16.msra.mxu0 %v5186
        %5288 = vmatprep.subr.bf16.mxu0 %v5191
        %5289 = vmatpush1.bf16.msra.mxu0 %v5190
        %5290 = vmatprep.mubr.bf16.mxu0 %v518
        %5291 = vmatmul.mubr.bf16.gmra.mrb[0].mxu0 %v517
        %v5292 = vpop.f32.mrb[0].mxu0
        %v5293 = vadd.f32 %v4921, %v5292
        %v5294 = vpop.f32.mrb[0].mxu0
        %v5295 = vadd.f32 %v4925, %v5294
        %v5296 = vpop.f32.mrb[0].mxu0
        %v5297 = vpop.f32.mrb[0].mxu0
        %5298 = vdwg.mxu0
        %5299 = vmatprep.subr.bf16.mxu0 %v5133
        %5300 = vmatpush1.bf16.msra.mxu0 %v5132
        %5301 = vmatprep.subr.bf16.mxu0 %v5137
        %5302 = vmatpush1.bf16.msra.mxu0 %v5136
        %5303 = vmatprep.subr.bf16.mxu0 %v5141
        %5304 = vmatpush1.bf16.msra.mxu0 %v5140
        %5305 = vmatprep.subr.bf16.mxu0 %v5145
        %5306 = vmatpush1.bf16.msra.mxu0 %v5144
        %5307 = vmatprep.subr.bf16.mxu0 %v5149
        %5308 = vmatpush1.bf16.msra.mxu0 %v5148
        %5309 = vmatprep.subr.bf16.mxu0 %v5153
        %5310 = vmatpush1.bf16.msra.mxu0 %v5152
        %5311 = vmatprep.subr.bf16.mxu0 %v5157
        %5312 = vmatpush1.bf16.msra.mxu0 %v5156
        %5313 = vmatprep.subr.bf16.mxu0 %v5161
        %5314 = vmatpush1.bf16.msra.mxu0 %v5160
        %5315 = vmatprep.subr.bf16.mxu0 %v5165
        %5316 = vmatpush1.bf16.msra.mxu0 %v5164
        %5317 = vmatprep.subr.bf16.mxu0 %v5169
        %5318 = vmatpush1.bf16.msra.mxu0 %v5168
        %5319 = vmatprep.subr.bf16.mxu0 %v5173
        %5320 = vmatpush1.bf16.msra.mxu0 %v5172
        %5321 = vmatprep.subr.bf16.mxu0 %v5177
        %5322 = vmatpush1.bf16.msra.mxu0 %v5176
        %5323 = vmatprep.subr.bf16.mxu0 %v5181
        %5324 = vmatpush1.bf16.msra.mxu0 %v5180
        %5325 = vmatprep.subr.bf16.mxu0 %v5185
        %5326 = vmatpush1.bf16.msra.mxu0 %v5184
        %5327 = vmatprep.subr.bf16.mxu0 %v5189
        %5328 = vmatpush1.bf16.msra.mxu0 %v5188
        %5329 = vmatprep.subr.bf16.mxu0 %v5193
        %5330 = vmatpush1.bf16.msra.mxu0 %v5192
        %5331 = vmatprep.mubr.bf16.mxu0 %v518
        %5332 = vmatmul.mubr.bf16.gmra.mrb[0].mxu0 %v517
        %v5333 = vpop.f32.mrb[0].mxu0
        %v5334 = vadd.f32 %v4929, %v5333
        %v5335 = vpop.f32.mrb[0].mxu0
        %v5336 = vadd.f32 %v4933, %v5335
        %v5337 = vpop.f32.mrb[0].mxu0
        %v5338 = vpop.f32.mrb[0].mxu0
        %5339 = vdwg.mxu0
        %v5340 = vld [vmem:[%s5] sm:$0xf]
        %v5342 = vlaneseq
        %v5343 = vshrl.u32 %v5342, 7
        %v5344 = vsub.s32 0, %v5343
        %v5345 = vrot.slane %v5340, %v5344
        %v5346 = vlaneseq
        %v5347 = vshrl.u32 %v5346, 7
        %v5348 = vsub.s32 1, %v5347
        %v5349 = vrot.slane %v5340, %v5348
        %v5350 = vlaneseq
        %v5351 = vshrl.u32 %v5350, 7
        %v5352 = vsub.s32 2, %v5351
        %v5353 = vrot.slane %v5340, %v5352
        %v5354 = vlaneseq
        %v5355 = vshrl.u32 %v5354, 7
        %v5356 = vsub.s32 3, %v5355
        %v5357 = vrot.slane %v5340, %v5356
        %v5362 = vadd.f32 %v4848, %v5345
        %v5363 = vadd.f32 %v4849, %v5349
        %v5364 = vadd.f32 %v4850, %v5353
        %v5365 = vadd.f32 %v4851, %v5357
        %v5366 = vadd.f32 %v5362, %v5293
        %v5367 = vadd.f32 %v5363, %v5295
        %v5368 = vadd.f32 %v5364, %v5334
        %v5369 = vadd.f32 %v5365, %v5336
        %v5370 = vmax.f32 %v5366, 0.0
        %v5371 = vmax.f32 %v5367, 0.0
        %v5372 = vmax.f32 %v5368, 0.0
        %v5373 = vmax.f32 %v5369, 0.0
        %vm5374 = vcmask 1041408
        %v5375 = vsel %vm5374, %v5370, 0.0
        %v5376 = vrot.slane %v5375, 4
        %v5377 = vadd.f32 %v5375, %v5376
        %v5378 = vrot.slane %v5377, 2
        %v5379 = vadd.f32 %v5377, %v5378
        %v5380 = vrot.slane %v5379, 1
        %v5381 = vadd.f32 %v5379, %v5380
        %v5382 = vsel %vm5374, %v5371, 0.0
        %v5383 = vrot.slane %v5382, 4
        %v5384 = vadd.f32 %v5382, %v5383
        %v5385 = vrot.slane %v5384, 2
        %v5386 = vadd.f32 %v5384, %v5385
        %v5387 = vrot.slane %v5386, 1
        %v5388 = vadd.f32 %v5386, %v5387
        %v5389 = vsel %vm5374, %v5372, 0.0
        %v5390 = vrot.slane %v5389, 4
        %v5391 = vadd.f32 %v5389, %v5390
        %v5392 = vrot.slane %v5391, 2
        %v5393 = vadd.f32 %v5391, %v5392
        %v5394 = vrot.slane %v5393, 1
        %v5395 = vadd.f32 %v5393, %v5394
        %v5396 = vsel %vm5374, %v5373, 0.0
        %v5397 = vrot.slane %v5396, 4
        %v5398 = vadd.f32 %v5396, %v5397
        %v5399 = vrot.slane %v5398, 2
        %v5400 = vadd.f32 %v5398, %v5399
        %v5401 = vrot.slane %v5400, 1
        %v5402 = vadd.f32 %v5400, %v5401
        %v5403 = vrcp.pop 2.0
        %v5404 = vmul.f32 %v5381, %v5403
        %v5405 = vmul.f32 %v5388, %v5403
        %v5406 = vmul.f32 %v5395, %v5403
        %v5407 = vmul.f32 %v5402, %v5403
        %v5408 = vld [vmem:[%s8] sm:$0xff]
        %v5409 = vld [vmem:[%s8 + $0x8] sm:$0xff]
        %v5410 = vld [vmem:[%s8 + $0x10] sm:$0xff]
        %v5411 = vld [vmem:[%s8 + $0x18] sm:$0xff]
        %v5412 = vld [vmem:[%s8 + $0x20] sm:$0xff]
        %v5413 = vld [vmem:[%s8 + $0x28] sm:$0xff]
        %v5414 = vld [vmem:[%s8 + $0x30] sm:$0xff]
        %v5415 = vld [vmem:[%s8 + $0x38] sm:$0xff]
        %v5416 = vld [vmem:[%s8 + $0x40] sm:$0xff]
        %v5417 = vld [vmem:[%s8 + $0x48] sm:$0xff]
        %v5418 = vld [vmem:[%s8 + $0x50] sm:$0xff]
        %v5419 = vld [vmem:[%s8 + $0x58] sm:$0xff]
        %v5420 = vld [vmem:[%s8 + $0x60] sm:$0xff]
        %v5421 = vld [vmem:[%s8 + $0x68] sm:$0xff]
        %v5422 = vld [vmem:[%s8 + $0x70] sm:$0xff]
        %v5423 = vld [vmem:[%s8 + $0x78] sm:$0xff]
        %v5424 = vld [vmem:[%s8 + $0x80] sm:$0xff]
        %v5425 = vld [vmem:[%s8 + $0x88] sm:$0xff]
        %v5426 = vld [vmem:[%s8 + $0x90] sm:$0xff]
        %v5427 = vld [vmem:[%s8 + $0x98] sm:$0xff]
        %v5428 = vld [vmem:[%s8 + $0xa0] sm:$0xff]
        %v5429 = vld [vmem:[%s8 + $0xa8] sm:$0xff]
        %v5430 = vld [vmem:[%s8 + $0xb0] sm:$0xff]
        %v5431 = vld [vmem:[%s8 + $0xb8] sm:$0xff]
        %v5432 = vld [vmem:[%s8 + $0xc0] sm:$0xff]
        %v5433 = vld [vmem:[%s8 + $0xc8] sm:$0xff]
        %v5434 = vld [vmem:[%s8 + $0xd0] sm:$0xff]
        %v5435 = vld [vmem:[%s8 + $0xd8] sm:$0xff]
        %v5436 = vld [vmem:[%s8 + $0xe0] sm:$0xff]
        %v5437 = vld [vmem:[%s8 + $0xe8] sm:$0xff]
        %v5438 = vld [vmem:[%s8 + $0xf0] sm:$0xff]
        %v5439 = vld [vmem:[%s8 + $0xf8] sm:$0xff]
        %v5440 = vld [vmem:[%s8 + $0x100] sm:$0xff]
        %v5441 = vld [vmem:[%s8 + $0x108] sm:$0xff]
        %v5442 = vld [vmem:[%s8 + $0x110] sm:$0xff]
        %v5443 = vld [vmem:[%s8 + $0x118] sm:$0xff]
        %v5444 = vld [vmem:[%s8 + $0x120] sm:$0xff]
        %v5445 = vld [vmem:[%s8 + $0x128] sm:$0xff]
        %v5446 = vld [vmem:[%s8 + $0x130] sm:$0xff]
        %v5447 = vld [vmem:[%s8 + $0x138] sm:$0xff]
        %v5448 = vld [vmem:[%s8 + $0x140] sm:$0xff]
        %v5449 = vld [vmem:[%s8 + $0x148] sm:$0xff]
        %v5450 = vld [vmem:[%s8 + $0x150] sm:$0xff]
        %v5451 = vld [vmem:[%s8 + $0x158] sm:$0xff]
        %v5452 = vld [vmem:[%s8 + $0x160] sm:$0xff]
        %v5453 = vld [vmem:[%s8 + $0x168] sm:$0xff]
        %v5454 = vld [vmem:[%s8 + $0x170] sm:$0xff]
        %v5455 = vld [vmem:[%s8 + $0x178] sm:$0xff]
        %v5456 = vld [vmem:[%s8 + $0x180] sm:$0xff]
        %v5457 = vld [vmem:[%s8 + $0x188] sm:$0xff]
        %v5458 = vld [vmem:[%s8 + $0x190] sm:$0xff]
        %v5459 = vld [vmem:[%s8 + $0x198] sm:$0xff]
        %v5460 = vld [vmem:[%s8 + $0x1a0] sm:$0xff]
        %v5461 = vld [vmem:[%s8 + $0x1a8] sm:$0xff]
        %v5462 = vld [vmem:[%s8 + $0x1b0] sm:$0xff]
        %v5463 = vld [vmem:[%s8 + $0x1b8] sm:$0xff]
        %v5464 = vld [vmem:[%s8 + $0x1c0] sm:$0xff]
        %v5465 = vld [vmem:[%s8 + $0x1c8] sm:$0xff]
        %v5466 = vld [vmem:[%s8 + $0x1d0] sm:$0xff]
        %v5467 = vld [vmem:[%s8 + $0x1d8] sm:$0xff]
        %v5468 = vld [vmem:[%s8 + $0x1e0] sm:$0xff]
        %v5469 = vld [vmem:[%s8 + $0x1e8] sm:$0xff]
        %v5470 = vld [vmem:[%s8 + $0x1f0] sm:$0xff]
        %v5471 = vld [vmem:[%s8 + $0x1f8] sm:$0xff]
        %v5472 = vld [vmem:[%s9] sm:$0x1]
        %5473 = vmatprep.subr.mxu0 0.0
        %5474 = vmatpush1.msra.mxu0 %v5408
        %5475 = vmatprep.subr.mxu0 0.0
        %5476 = vmatpush1.msra.mxu0 %v5409
        %5477 = vmatprep.subr.mxu0 0.0
        %5478 = vmatpush1.msra.mxu0 %v5410
        %5479 = vmatprep.subr.mxu0 0.0
        %5480 = vmatpush1.msra.mxu0 %v5411
        %5481 = vmatprep.subr.mxu0 0.0
        %5482 = vmatpush1.msra.mxu0 %v5412
        %5483 = vmatprep.subr.mxu0 0.0
        %5484 = vmatpush1.msra.mxu0 %v5413
        %5485 = vmatprep.subr.mxu0 0.0
        %5486 = vmatpush1.msra.mxu0 %v5414
        %5487 = vmatprep.subr.mxu0 0.0
        %5488 = vmatpush1.msra.mxu0 %v5415
        %5489 = vmatprep.subr.mxu0 0.0
        %5490 = vmatpush1.msra.mxu0 %v5416
        %5491 = vmatprep.subr.mxu0 0.0
        %5492 = vmatpush1.msra.mxu0 %v5417
        %5493 = vmatprep.subr.mxu0 0.0
        %5494 = vmatpush1.msra.mxu0 %v5418
        %5495 = vmatprep.subr.mxu0 0.0
        %5496 = vmatpush1.msra.mxu0 %v5419
        %5497 = vmatprep.subr.mxu0 0.0
        %5498 = vmatpush1.msra.mxu0 %v5420
        %5499 = vmatprep.subr.mxu0 0.0
        %5500 = vmatpush1.msra.mxu0 %v5421
        %5501 = vmatprep.subr.mxu0 0.0
        %5502 = vmatpush1.msra.mxu0 %v5422
        %5503 = vmatprep.subr.mxu0 0.0
        %5504 = vmatpush1.msra.mxu0 %v5423
        %5505 = vmatprep.subr.mxu0 0.0
        %5506 = vmatpush1.msra.mxu0 %v5424
        %5507 = vmatprep.subr.mxu0 0.0
        %5508 = vmatpush1.msra.mxu0 %v5425
        %5509 = vmatprep.subr.mxu0 0.0
        %5510 = vmatpush1.msra.mxu0 %v5426
        %5511 = vmatprep.subr.mxu0 0.0
        %5512 = vmatpush1.msra.mxu0 %v5427
        %5513 = vmatprep.subr.mxu0 0.0
        %5514 = vmatpush1.msra.mxu0 %v5428
        %5515 = vmatprep.subr.mxu0 0.0
        %5516 = vmatpush1.msra.mxu0 %v5429
        %5517 = vmatprep.subr.mxu0 0.0
        %5518 = vmatpush1.msra.mxu0 %v5430
        %5519 = vmatprep.subr.mxu0 0.0
        %5520 = vmatpush1.msra.mxu0 %v5431
        %5521 = vmatprep.subr.mxu0 0.0
        %5522 = vmatpush1.msra.mxu0 %v5432
        %5523 = vmatprep.subr.mxu0 0.0
        %5524 = vmatpush1.msra.mxu0 %v5433
        %5525 = vmatprep.subr.mxu0 0.0
        %5526 = vmatpush1.msra.mxu0 %v5434
        %5527 = vmatprep.subr.mxu0 0.0
        %5528 = vmatpush1.msra.mxu0 %v5435
        %5529 = vmatprep.subr.mxu0 0.0
        %5530 = vmatpush1.msra.mxu0 %v5436
        %5531 = vmatprep.subr.mxu0 0.0
        %5532 = vmatpush1.msra.mxu0 %v5437
        %5533 = vmatprep.subr.mxu0 0.0
        %5534 = vmatpush1.msra.mxu0 %v5438
        %5535 = vmatprep.subr.mxu0 0.0
        %5536 = vmatpush1.msra.mxu0 %v5439
        %5537 = vmatprep.mubr.f32.mxu0 %v5405
        %5538 = vmatmul.mubr.f32.gmra.mrb[0].mxu0 %v5404
        %v5539 = vpop.f32.mrb[0].mxu0
        %v5540 = vadd.f32 %v5472, %v5539
        %v5541 = vpop.f32.mrb[0].mxu0
        %5542 = vdwg.mxu0
        %5543 = vmatprep.subr.mxu0 0.0
        %5544 = vmatpush1.msra.mxu0 %v5440
        %5545 = vmatprep.subr.mxu0 0.0
        %5546 = vmatpush1.msra.mxu0 %v5441
        %5547 = vmatprep.subr.mxu0 0.0
        %5548 = vmatpush1.msra.mxu0 %v5442
        %5549 = vmatprep.subr.mxu0 0.0
        %5550 = vmatpush1.msra.mxu0 %v5443
        %5551 = vmatprep.subr.mxu0 0.0
        %5552 = vmatpush1.msra.mxu0 %v5444
        %5553 = vmatprep.subr.mxu0 0.0
        %5554 = vmatpush1.msra.mxu0 %v5445
        %5555 = vmatprep.subr.mxu0 0.0
        %5556 = vmatpush1.msra.mxu0 %v5446
        %5557 = vmatprep.subr.mxu0 0.0
        %5558 = vmatpush1.msra.mxu0 %v5447
        %5559 = vmatprep.subr.mxu0 0.0
        %5560 = vmatpush1.msra.mxu0 %v5448
        %5561 = vmatprep.subr.mxu0 0.0
        %5562 = vmatpush1.msra.mxu0 %v5449
        %5563 = vmatprep.subr.mxu0 0.0
        %5564 = vmatpush1.msra.mxu0 %v5450
        %5565 = vmatprep.subr.mxu0 0.0
        %5566 = vmatpush1.msra.mxu0 %v5451
        %5567 = vmatprep.subr.mxu0 0.0
        %5568 = vmatpush1.msra.mxu0 %v5452
        %5569 = vmatprep.subr.mxu0 0.0
        %5570 = vmatpush1.msra.mxu0 %v5453
        %5571 = vmatprep.subr.mxu0 0.0
        %5572 = vmatpush1.msra.mxu0 %v5454
        %5573 = vmatprep.subr.mxu0 0.0
        %5574 = vmatpush1.msra.mxu0 %v5455
        %5575 = vmatprep.subr.mxu0 0.0
        %5576 = vmatpush1.msra.mxu0 %v5456
        %5577 = vmatprep.subr.mxu0 0.0
        %5578 = vmatpush1.msra.mxu0 %v5457
        %5579 = vmatprep.subr.mxu0 0.0
        %5580 = vmatpush1.msra.mxu0 %v5458
        %5581 = vmatprep.subr.mxu0 0.0
        %5582 = vmatpush1.msra.mxu0 %v5459
        %5583 = vmatprep.subr.mxu0 0.0
        %5584 = vmatpush1.msra.mxu0 %v5460
        %5585 = vmatprep.subr.mxu0 0.0
        %5586 = vmatpush1.msra.mxu0 %v5461
        %5587 = vmatprep.subr.mxu0 0.0
        %5588 = vmatpush1.msra.mxu0 %v5462
        %5589 = vmatprep.subr.mxu0 0.0
        %5590 = vmatpush1.msra.mxu0 %v5463
        %5591 = vmatprep.subr.mxu0 0.0
        %5592 = vmatpush1.msra.mxu0 %v5464
        %5593 = vmatprep.subr.mxu0 0.0
        %5594 = vmatpush1.msra.mxu0 %v5465
        %5595 = vmatprep.subr.mxu0 0.0
        %5596 = vmatpush1.msra.mxu0 %v5466
        %5597 = vmatprep.subr.mxu0 0.0
        %5598 = vmatpush1.msra.mxu0 %v5467
        %5599 = vmatprep.subr.mxu0 0.0
        %5600 = vmatpush1.msra.mxu0 %v5468
        %5601 = vmatprep.subr.mxu0 0.0
        %5602 = vmatpush1.msra.mxu0 %v5469
        %5603 = vmatprep.subr.mxu0 0.0
        %5604 = vmatpush1.msra.mxu0 %v5470
        %5605 = vmatprep.subr.mxu0 0.0
        %5606 = vmatpush1.msra.mxu0 %v5471
        %5607 = vmatprep.mubr.f32.mxu0 %v5407
        %5608 = vmatmul.mubr.f32.gmra.mrb[0].mxu0 %v5406
        %v5609 = vpop.f32.mrb[0].mxu0
        %v5610 = vadd.f32 %v5540, %v5609
        %v5611 = vpop.f32.mrb[0].mxu0
        %5612 = vdwg.mxu0
        %vm5613 = vcmask 73728
        %5614 = vst.msk [vmem:[%s366] sm:$0x1] %vm5613, %v5610
        %s5615 = sand.u32 %s252, 1
        %s5616 = scalar_lea.sflag [#allocation4], %s5615
        %s5617 = sand.u32 %s252, 1
        %s5618 = scalar_lea.vmem [#allocation3], %s5617
        // Predicated region
        $region61: #{resnet1d_forward.9} parent=59 // pred_check
          %p5619 = pneg %p262
        $region62: #{resnet1d_forward.9} parent=59 // pred_check_branch
          %5621 = sbr.rel (%p5619) target = $region64
        $region63: #{resnet1d_forward.9} parent=59 // pred_region
          %s5623 = ssub.s32 16, 16
          %5624 = vsyncadd %s5616, %s5623
          %s5625 = smul.addr %s24, 16
          %s5626 = scalar_lea.hbm %s10, %s5625
          %s5628 = sshll.u32 %s5618, 4
          %s5629 = int_to_ptr.vmem [resolvable:$true] %s5628
          %5631 = dma.vmem_to_hbm [thread:$0]  %s5629, 16, %s5626, %s5616
        $region64: #{resnet1d_forward.9} parent=59 // pred_fallthru
          _
      $region60: #{resnet1d_forward.9} parent=5 // pred_fallthru
        _
      %p5632 = scmp.le.s32.totalorder 2, %s19
      // Predicated region
      $region65: #{resnet1d_forward.9} parent=5 // pred_check
        %p5633 = pneg %p5632
      $region66: #{resnet1d_forward.9} parent=5 // pred_check_branch
        %5635 = sbr.rel (%p5633) target = $region68
      $region67: #{resnet1d_forward.9} parent=5 // pred_region
        %s5636 = ssub.s32 %s19, 2
        // Predicated region
        $region69: #{resnet1d_forward.9} parent=67 // pred_check
          %p5637 = pneg %p268
        $region70: #{resnet1d_forward.9} parent=67 // pred_check_branch
          %5639 = sbr.rel (%p5637) target = $region72
        $region71: #{resnet1d_forward.9} parent=67 // pred_region
          %s5640 = sand.u32 %s253, 1
          %s5641 = scalar_lea.sflag [#allocation4], %s5640
          %s5642 = sand.u32 %s253, 1
          %s5643 = scalar_lea.vmem [#allocation3], %s5642
          %5644 = dma.done %s5641, 16
        $region72: #{resnet1d_forward.9} parent=67 // pred_fallthru
          _
      $region68: #{resnet1d_forward.9} parent=5 // pred_fallthru
        _
    $region6: #{resnet1d_forward.9} parent=1 // loop_footer
      %s23 = sadd.s32 1, %s19
    $region7: #{resnet1d_forward.9} parent=1 // loop_footer_branch
      %18 = sbr.rel target = $region3
    $region8: #{resnet1d_forward.9} parent=1 // loop_exit
      _
    %5645 = vsyncpa [#allocation4], 1
    %s5646 = scalar_lea.sflag [#allocation4], 1
    %5647 = vsyncpa %s5646, 1

</llo_original>
